<compile_context>
chip_gen: v7x
topology: tpu7x:2x2x1
jax: 0.10.0
libtpu: 0.0.40
codegen_flags: <defaults>
</compile_context>

<pallas_src>
import functools
import math

import jax
import jax.numpy as jnp
from jax import lax
from jax.experimental import pallas as pl
from jax.experimental.pallas import tpu as pltpu


# ----------------------------- in-kernel helpers -----------------------------

_SQRT_2_OVER_PI = math.sqrt(2.0 / math.pi)


def _gelu_tanh(x):
    # tanh-form GELU: the transcendental runs on the EUP slot (free alongside
    # VALU/MXU work). Differs from the exact erf GELU by <~1e-3 abs.
    return 0.5 * x * (1.0 + jnp.tanh(_SQRT_2_OVER_PI * (x + 0.044715 * x * x * x)))


def _layer_norm(x, gamma, beta, eps=1e-5):
    mean = jnp.mean(x, axis=-1, keepdims=True)
    var = jnp.mean(jnp.square(x - mean), axis=-1, keepdims=True)
    return (x - mean) * lax.rsqrt(var + eps) * gamma + beta


# --------------------------------- kernel ------------------------------------

def transformer_layer_kernel(x_ref, bias_ref, wqkv_ref, wproj_ref, vecs_ref,
                             bm1_ref, w1_ref, w2_ref, out_ref,
                             *, num_heads, tokens_per_window, mm_dtype,
                             approx_softmax):
    GN, C = x_ref.shape                 # (G*N, C) slab for this grid step
    N = tokens_per_window
    G = GN // N
    H = num_heads
    D = C // H

    x = x_ref[...].astype(jnp.float32)                        # (GN, C)
    vecs = vecs_ref[...].astype(jnp.float32)                  # (6, C)
    g1, b1 = vecs[0:1], vecs[1:2]
    g2, b2 = vecs[2:3], vecs[3:4]
    bproj, bm2 = vecs[4:5], vecs[5:6]

    # ---- attention branch: x + proj(attn(norm1(x))) ----
    y = _layer_norm(x, g1, b1)                                 # norm1 (f32 stats)
    qkv = jnp.dot(y.astype(mm_dtype), wqkv_ref[...],
                  preferred_element_type=jnp.float32)          # (GN, 3C), one matmul
    # q-scale was folded into the Q weight columns in the wrapper.

    # Head split via lane slices (proven lowering) stacked on a LEADING axis
    # (no lane/sublane movement) -> head-batched (H*G, N, D) operands.
    qs, ks, vs = [], [], []
    for h in range(H):                                         # static unroll, small H
        lo = h * D
        qs.append(qkv[:, lo:lo + D].reshape(G, N, D))
        ks.append(qkv[:, C + lo:C + lo + D].reshape(G, N, D))
        vs.append(qkv[:, 2 * C + lo:2 * C + lo + D].reshape(G, N, D))
    q = jnp.stack(qs, axis=0).reshape(H * G, N, D).astype(mm_dtype)
    k = jnp.stack(ks, axis=0).reshape(H * G, N, D).astype(mm_dtype)
    v = jnp.stack(vs, axis=0).reshape(H * G, N, D).astype(mm_dtype)

    bias = bias_ref[...].astype(jnp.float32)                   # (H, N, N)

    # Scores: ONE dot_general batched over (head, window); contract last dims
    # of both operands directly (no k.T / XLU transpose); mm_dtype inputs.
    s = lax.dot_general(q, k, (((2,), (2,)), ((0,), (0,))),
                        preferred_element_type=jnp.float32)    # (H*G, N, N)
    s = s.reshape(H, G, N, N) + bias[:, None]                  # rel-pos bias
    s = s - jnp.max(s, axis=-1, keepdims=True)                 # stable softmax
    p = jnp.exp(s)
    denom = jnp.sum(p, axis=-1, keepdims=True)
    if approx_softmax:
        p = p * pl.reciprocal(denom, approx=True)              # EUP slot
    else:
        p = p / denom
    p = p.reshape(H * G, N, N)

    o = lax.dot_general(p.astype(mm_dtype), v,
                        (((2,), (1,)), ((0,), (0,))),
                        preferred_element_type=jnp.float32)    # (H*G, N, D)
    o = o.reshape(H, G, N, D)
    # Back to (GN, C) with head-major features h*D + d (the proj weight rows
    # were permuted once in the wrapper to match PyTorch's d*H + h interleave).
    o = jnp.concatenate([o[h] for h in range(H)], axis=-1).reshape(GN, C)

    attn = jnp.dot(o.astype(mm_dtype), wproj_ref[...],
                   preferred_element_type=jnp.float32) + bproj
    x1 = x + attn                                              # residual (drop_path = Identity)

    # ---- MLP branch: x1 + fc2(gelu(fc1(norm2(x1)))) ----
    y2 = _layer_norm(x1, g2, b2)                               # norm2
    h1 = jnp.dot(y2.astype(mm_dtype), w1_ref[...],
                 preferred_element_type=jnp.float32) + bm1_ref[...].astype(jnp.float32)
    h1 = _gelu_tanh(h1)
    m = jnp.dot(h1.astype(mm_dtype), w2_ref[...],
                preferred_element_type=jnp.float32) + bm2

    out_ref[...] = (x1 + m).astype(out_ref.dtype)


# --------------------------------- planning ----------------------------------

def _vmem_capacity_bytes():
    """Per-TensorCore VMEM capacity; defaults to 128 MiB (v5e/v6e) off-TPU."""
    try:
        return int(pltpu.get_tpu_info().vmem_capacity_bytes)
    except Exception:
        return 128 << 20


def _plan_tiling(bt, n, c, hm, num_heads, x_itemsize, w_itemsize, weight_buffers):
    """Pick G (windows per grid step) and an explicit scoped-VMEM limit.

    Footprint model counts the resident weights (x weight_buffers), the
    double-buffered x in/out tiles and a conservative f32 working set
    (x, y, qkv, stacked q/k/v, head outputs, attn/x1, mlp hidden, out, scores).
    Generation-aware: ~44 MiB budget on 64-MiB-VMEM TensorCores (v7x-class),
    ~80 MiB on 128-MiB chips (v5e/v6e). Keeps >= 2 grid steps so the parallel
    axis shards across v7x's 2 TensorCores (prefers an even step count).
    """
    vmem_cap = _vmem_capacity_bytes()
    if vmem_cap <= (64 << 20):
        budget = 44 << 20                      # v7x-class TensorCore
    else:
        budget = 80 << 20                      # v5e / v6e (128 MiB physical)
    row_target = 1024                          # feed the 256-deep MXU, amortize step cost

    weight_elems = c * 3 * c + c * c + c * hm + hm * c
    aux_elems = num_heads * n * n + 6 * c + hm
    weights_bytes = weight_buffers * (weight_elems * w_itemsize + aux_elems * 4)

    def footprint(g):
        rows = g * n
        tiles = 2 * 2 * rows * c * x_itemsize          # double-buffered in + out tiles
        acts = 4 * rows * (14 * c + hm)                # f32 activation working set
        scores = 2 * 4 * g * num_heads * n * n         # s and p, f32
        return weights_bytes + tiles + acts + scores

    feasible = [1]
    for g in range(2, bt + 1):
        if bt % g:
            continue
        if bt // g < 2:                                # keep >= 2 grid steps
            continue
        if g * n > row_target or footprint(g) > budget:
            continue
        feasible.append(g)
    even = [g for g in feasible if (bt // g) % 2 == 0]
    g = max(even) if even else max(feasible)

    vmem_limit = int(max(footprint(g) * 1.25 + (8 << 20), 32 << 20))
    vmem_limit = min(vmem_limit, int(vmem_cap * 0.9))
    vmem_limit = max(vmem_limit, 16 << 20)
    return g, vmem_limit


# --------------------------------- wrapper -----------------------------------

def make_relative_position_bias(table, window_size, num_heads):
    """table: ((2Wh-1)*(2Ww-1), H) -> bias (H, N, N), N = Wh*Ww (pure JAX glue)."""
    wh, ww = window_size
    coords = jnp.stack(jnp.meshgrid(jnp.arange(wh), jnp.arange(ww), indexing="ij"))
    coords_flat = coords.reshape(2, -1)                                      # (2, N)
    rel = coords_flat[:, :, None] - coords_flat[:, None, :]                  # (2, N, N)
    rel = rel.transpose(1, 2, 0)                                             # (N, N, 2)
    idx = (rel[..., 0] + wh - 1) * (2 * ww - 1) + (rel[..., 1] + ww - 1)     # (N, N)
    n = wh * ww
    bias = table[idx.reshape(-1)].reshape(n, n, num_heads)                   # (N, N, H)
    return bias.transpose(2, 0, 1)                                           # (H, N, N)


def transformer_layer(x, params, *, num_heads, window_size,
                      matmul_dtype=jnp.bfloat16, weight_buffers=1,
                      approx_softmax=True):
    B, T, N, C = x.shape
    assert C % num_heads == 0
    D = C // num_heads
    Hm = params["w1"].shape[0]           # mlp hidden dim
    scale = D ** (-0.5)
    BT = B * T

    # ---- one-time parameter re-layout (pure JAX glue, lane-dense last dims) ----
    # qkv: torch weight (3C, C); y @ W.T -> columns ordered [3, H, D].
    # Fold the attention scale into the Q out-features (rows [:C]) once here.
    wqkv = jnp.asarray(params["wqkv"]).at[:C].multiply(scale)
    wqkv_t = wqkv.T.astype(matmul_dtype)                                      # (C, 3C)
    # proj: torch multiplies features indexed d*H + h (from permute(0,2,3,4,1));
    # the kernel concatenates heads as h*D + d, so permute the rows once here.
    wproj_t = (jnp.asarray(params["wproj"]).T.reshape(D, num_heads, C)
               .transpose(1, 0, 2).reshape(C, C)).astype(matmul_dtype)        # (C, C)
    rel_bias = make_relative_position_bias(params["rel_table"], window_size,
                                           num_heads).astype(jnp.float32)     # (H, N, N)
    w1_t = jnp.asarray(params["w1"]).T.astype(matmul_dtype)                   # (C, Hm)
    w2_t = jnp.asarray(params["w2"]).T.astype(matmul_dtype)                   # (Hm, C)
    # Pack the six per-channel vectors into one operand (fewer DMAs, less padding).
    vecs = jnp.stack([params["g1"], params["b1"], params["g2"], params["b2"],
                      params["bproj"], params["bm2"]]).astype(jnp.float32)    # (6, C)
    bm1 = jnp.asarray(params["bm1"]).reshape(1, Hm).astype(jnp.float32)

    G, vmem_limit = _plan_tiling(BT, N, C, Hm, num_heads,
                                 jnp.dtype(x.dtype).itemsize,
                                 jnp.dtype(matmul_dtype).itemsize,
                                 weight_buffers)
    steps = BT // G
    GN = G * N
    # Present x/out as a (steps, GN, C) slab; the per-step tile spans the full
    # trailing dims (lane-dense HBM<->VMEM traffic whenever C % 128 == 0) and
    # the kernel sees a ready-made (GN, C) Ref (leading dim squeezed).
    x_slab = x.reshape(steps, GN, C)

    kernel = functools.partial(transformer_layer_kernel,
                               num_heads=num_heads, tokens_per_window=N,
                               mm_dtype=matmul_dtype,
                               approx_softmax=approx_softmax)

    buffered_cls = getattr(pl, "Buffered", None)

    def const_spec(shape):
        # Grid-invariant operand: constant index_map; single-buffer it when the
        # jax build supports pipeline_mode (halves resident-weight VMEM).
        index_map = lambda i: (0,) * len(shape)
        if weight_buffers == 1 and buffered_cls is not None:
            try:
                return pl.BlockSpec(shape, index_map,
                                    pipeline_mode=buffered_cls(1))
            except TypeError:   # older jax without pipeline_mode kwarg
                pass
        return pl.BlockSpec(shape, index_map)

    out = pl.pallas_call(
        kernel,
        out_shape=jax.ShapeDtypeStruct((steps, GN, C), x.dtype),
        grid=(steps,),
        in_specs=[
            pl.BlockSpec((None, GN, C), lambda i: (i, 0, 0)),   # G windows per step
            const_spec((num_heads, N, N)),                      # relative position bias
            const_spec((C, 3 * C)),                             # fused qkv weight (q pre-scaled)
            const_spec((C, C)),                                 # proj weight (row-permuted)
            const_spec((6, C)),                                 # packed gamma/beta/bias vectors
            const_spec((1, Hm)),                                # mlp fc1 bias
            const_spec((C, Hm)),                                # mlp fc1 weight
            const_spec((Hm, C)),                                # mlp fc2 weight
        ],
        out_specs=pl.BlockSpec((None, GN, C), lambda i: (i, 0, 0)),
        compiler_params=pltpu.CompilerParams(
            # Windows are independent -> let v7x shard the grid across its 2 TCs.
            dimension_semantics=("parallel",),
            vmem_limit_bytes=vmem_limit),
    )(x_slab, rel_bias, wqkv_t, wproj_t, vecs, bm1, w1_t, w2_t)

    return out.reshape(B, T, N, C)


# ------------------------- pure-JAX reference (check) -------------------------

def transformer_layer_ref(x, params, *, num_heads, window_size):
    B, T, N, C = x.shape
    D = C // num_heads
    scale = D ** (-0.5)

    def ln(v, g, b):
        m = v.mean(-1, keepdims=True)
        var = ((v - m) ** 2).mean(-1, keepdims=True)
        return (v - m) / jnp.sqrt(var + 1e-5) * g + b

    rel_bias = make_relative_position_bias(params["rel_table"], window_size, num_heads)

    y = ln(x, params["g1"], params["b1"])
    qkv = y @ params["wqkv"].T                                    # (B,T,N,3C)
    qkv = qkv.reshape(B, T, N, 3, num_heads, D).transpose(3, 0, 4, 1, 2, 5)
    q, k, v = qkv[0], qkv[1], qkv[2]                              # (B,H,T,N,D)
    attn = jnp.einsum("bhtnd,bhtmd->bhtnm", q, k) * scale
    attn = attn + rel_bias[None, :, None]
    attn = jax.nn.softmax(attn, axis=-1)
    o = jnp.einsum("bhtnm,bhtmd->bhtnd", attn, v)                 # (B,H,T,N,D)
    o = o.transpose(0, 2, 3, 4, 1).reshape(B, T, N, C)            # (D,H) interleave
    o = o @ params["wproj"].T + params["bproj"]
    x1 = x + o

    y2 = ln(x1, params["g2"], params["b2"])
    h1 = jax.nn.gelu(y2 @ params["w1"].T + params["bm1"], approximate=False)
    m = h1 @ params["w2"].T + params["bm2"]
    return x1 + m


# ----------------------------------- main -------------------------------------

if __name__ == "__main__":
    # Small shapes consistent with the module: window (2,4) -> N = 8 tokens.
    B, T = 2, 4
    dim, num_heads = 32, 4
    window_size = (2, 4)
    N = window_size[0] * window_size[1]
    mlp_ratio = 4.0
    Hm = int(dim * mlp_ratio)

    key = jax.random.PRNGKey(0)
    ks = jax.random.split(key, 10)

    params = {
        # Attention
        "rel_table": 0.02 * jax.random.truncated_normal(
            ks[0], -2.0, 2.0,
            ((2 * window_size[0] - 1) * (2 * window_size[1] - 1), num_heads),
            jnp.float32),
        "wqkv": 0.05 * jax.random.normal(ks[1], (3 * dim, dim), jnp.float32),
        "wproj": 0.05 * jax.random.normal(ks[2], (dim, dim), jnp.float32),
        "bproj": 0.05 * jax.random.normal(ks[3], (dim,), jnp.float32),
        # LayerNorms (PyTorch default init: gamma=1, beta=0)
        "g1": jnp.ones((dim,), jnp.float32), "b1": jnp.zeros((dim,), jnp.float32),
        "g2": jnp.ones((dim,), jnp.float32), "b2": jnp.zeros((dim,), jnp.float32),
        # MLP
        "w1": 0.05 * jax.random.normal(ks[4], (Hm, dim), jnp.float32),
        "bm1": 0.05 * jax.random.normal(ks[5], (Hm,), jnp.float32),
        "w2": 0.05 * jax.random.normal(ks[6], (dim, Hm), jnp.float32),
        "bm2": 0.05 * jax.random.normal(ks[7], (dim,), jnp.float32),
    }

    x = jax.random.normal(ks[8], (B, T, N, dim), jnp.float32)

    # f32 matmuls keep the 5e-3 check tight; the production default is bf16
    # (f32 accumulation via preferred_element_type) on v5e/v6e/v7x.
    run = functools.partial(transformer_layer, x, params,
                            num_heads=num_heads, window_size=window_size,
                            matmul_dtype=jnp.float32)
    try:
        out = jax.block_until_ready(run(weight_buffers=1))
    except Exception:
        # Fallback for jax builds whose Mosaic pallas_call pipeline rejects
        # single-buffered pipeline_mode on the invariant weight operands.
        out = jax.block_until_ready(run(weight_buffers=2))

    ref = transformer_layer_ref(x, params, num_heads=num_heads, window_size=window_size)
    assert out.shape == (B, T, N, dim)
    # Tolerance accounts for tanh-GELU (vs exact erf) and approx reciprocal.
    assert jnp.allclose(out, ref, atol=5e-3, rtol=5e-3), \
        f"max abs err {jnp.max(jnp.abs(out - ref))}"

    print("KERNEL_OK")
</pallas_src>

<mosaic_0001>
module attributes {stable_mosaic.version = 11 : i64} {
  func.func @transformer_layer_kernel(%arg0: i32, %arg1: memref<1x32x32xf32, #tpu.memory_space<vmem>>, %arg2: memref<4x8x8xf32, #tpu.memory_space<vmem>>, %arg3: memref<32x96xf32, #tpu.memory_space<vmem>>, %arg4: memref<32x32xf32, #tpu.memory_space<vmem>>, %arg5: memref<6x32xf32, #tpu.memory_space<vmem>>, %arg6: memref<1x128xf32, #tpu.memory_space<vmem>>, %arg7: memref<32x128xf32, #tpu.memory_space<vmem>>, %arg8: memref<128x32xf32, #tpu.memory_space<vmem>>, %arg9: memref<1x32x32xf32, #tpu.memory_space<vmem>>) attributes {dimension_semantics = [#tpu.dimension_semantics<parallel>], iteration_bounds = array<i64: 2>, scalar_prefetch = 0 : i64, scratch_operands = 0 : i64, tpu.core_type = #tpu.core_type<tc>, window_params = [{transform_indices = @transform_0, window_bounds = array<i64: 1, 32, 32>}, {pipeline_mode = #tpu.pipeline_mode<synchronous>, transform_indices = @transform_1, window_bounds = array<i64: 4, 8, 8>}, {pipeline_mode = #tpu.pipeline_mode<synchronous>, transform_indices = @transform_2, window_bounds = array<i64: 32, 96>}, {pipeline_mode = #tpu.pipeline_mode<synchronous>, transform_indices = @transform_3, window_bounds = array<i64: 32, 32>}, {pipeline_mode = #tpu.pipeline_mode<synchronous>, transform_indices = @transform_4, window_bounds = array<i64: 6, 32>}, {pipeline_mode = #tpu.pipeline_mode<synchronous>, transform_indices = @transform_5, window_bounds = array<i64: 1, 128>}, {pipeline_mode = #tpu.pipeline_mode<synchronous>, transform_indices = @transform_6, window_bounds = array<i64: 32, 128>}, {pipeline_mode = #tpu.pipeline_mode<synchronous>, transform_indices = @transform_7, window_bounds = array<i64: 128, 32>}, {transform_indices = @transform_8, window_bounds = array<i64: 1, 32, 32>}]} {
    %c0 = arith.constant 0 : index
    %c0_0 = arith.constant 0 : index
    %c0_1 = arith.constant 0 : index
    %0 = vector.load %arg1[%c0, %c0_0, %c0_1] : memref<1x32x32xf32, #tpu.memory_space<vmem>>, vector<1x32x32xf32>
    %1 = vector.shape_cast %0 : vector<1x32x32xf32> to vector<32x32xf32>
    %c0_2 = arith.constant 0 : index
    %c0_3 = arith.constant 0 : index
    %2 = vector.load %arg5[%c0_2, %c0_3] : memref<6x32xf32, #tpu.memory_space<vmem>>, vector<6x32xf32>
    %3 = vector.extract_strided_slice %2 {offsets = [0, 0], sizes = [1, 32], strides = [1, 1]} : vector<6x32xf32> to vector<1x32xf32>
    %4 = vector.extract_strided_slice %2 {offsets = [1, 0], sizes = [1, 32], strides = [1, 1]} : vector<6x32xf32> to vector<1x32xf32>
    %5 = vector.extract_strided_slice %2 {offsets = [2, 0], sizes = [1, 32], strides = [1, 1]} : vector<6x32xf32> to vector<1x32xf32>
    %6 = vector.extract_strided_slice %2 {offsets = [3, 0], sizes = [1, 32], strides = [1, 1]} : vector<6x32xf32> to vector<1x32xf32>
    %7 = vector.extract_strided_slice %2 {offsets = [4, 0], sizes = [1, 32], strides = [1, 1]} : vector<6x32xf32> to vector<1x32xf32>
    %8 = vector.extract_strided_slice %2 {offsets = [5, 0], sizes = [1, 32], strides = [1, 1]} : vector<6x32xf32> to vector<1x32xf32>
    %cst = arith.constant dense<0.000000e+00> : vector<32xf32>
    %9 = vector.multi_reduction <add>, %1, %cst [1] : vector<32x32xf32> to vector<32xf32>
    %10 = vector.shape_cast %9 : vector<32xf32> to vector<32x1xf32>
    %cst_4 = arith.constant 3.200000e+01 : f32
    %11 = vector.broadcast %cst_4 : f32 to vector<32x1xf32>
    %12 = arith.divf %10, %11 : vector<32x1xf32>
    %13 = vector.broadcast %12 : vector<32x1xf32> to vector<32x32xf32>
    %14 = arith.subf %1, %13 : vector<32x32xf32>
    %15 = arith.mulf %14, %14 : vector<32x32xf32>
    %cst_5 = arith.constant dense<0.000000e+00> : vector<32xf32>
    %16 = vector.multi_reduction <add>, %15, %cst_5 [1] : vector<32x32xf32> to vector<32xf32>
    %17 = vector.shape_cast %16 : vector<32xf32> to vector<32x1xf32>
    %cst_6 = arith.constant 3.200000e+01 : f32
    %18 = vector.broadcast %cst_6 : f32 to vector<32x1xf32>
    %19 = arith.divf %17, %18 : vector<32x1xf32>
    %20 = vector.broadcast %12 : vector<32x1xf32> to vector<32x32xf32>
    %21 = arith.subf %1, %20 : vector<32x32xf32>
    %cst_7 = arith.constant 9.99999974E-6 : f32
    %22 = vector.broadcast %cst_7 : f32 to vector<32x1xf32>
    %23 = arith.addf %19, %22 : vector<32x1xf32>
    %24 = math.rsqrt %23 : vector<32x1xf32>
    %25 = vector.broadcast %24 : vector<32x1xf32> to vector<32x32xf32>
    %26 = arith.mulf %21, %25 : vector<32x32xf32>
    %27 = vector.broadcast %3 : vector<1x32xf32> to vector<32x32xf32>
    %28 = arith.mulf %26, %27 : vector<32x32xf32>
    %29 = vector.broadcast %4 : vector<1x32xf32> to vector<32x32xf32>
    %30 = arith.addf %28, %29 : vector<32x32xf32>
    %c0_8 = arith.constant 0 : index
    %c0_9 = arith.constant 0 : index
    %31 = vector.load %arg3[%c0_8, %c0_9] : memref<32x96xf32, #tpu.memory_space<vmem>>, vector<32x96xf32>
    %cst_10 = arith.constant dense<0.000000e+00> : vector<32x96xf32>
    %32 = tpu.matmul %30, %31, %cst_10 {dimension_numbers = #tpu.dot_dimension_numbers<[1], [0], [0], [1], [0, 0, 1, 1], [], []>} : vector<32x32xf32>, vector<32x96xf32>, vector<32x96xf32> -> vector<32x96xf32>
    %33 = vector.extract_strided_slice %32 {offsets = [0, 0], sizes = [32, 8], strides = [1, 1]} : vector<32x96xf32> to vector<32x8xf32>
    %34 = vector.shape_cast %33 : vector<32x8xf32> to vector<4x8x8xf32>
    %35 = vector.extract_strided_slice %32 {offsets = [0, 32], sizes = [32, 8], strides = [1, 1]} : vector<32x96xf32> to vector<32x8xf32>
    %36 = vector.shape_cast %35 : vector<32x8xf32> to vector<4x8x8xf32>
    %37 = vector.extract_strided_slice %32 {offsets = [0, 64], sizes = [32, 8], strides = [1, 1]} : vector<32x96xf32> to vector<32x8xf32>
    %38 = vector.shape_cast %37 : vector<32x8xf32> to vector<4x8x8xf32>
    %39 = vector.extract_strided_slice %32 {offsets = [0, 8], sizes = [32, 8], strides = [1, 1]} : vector<32x96xf32> to vector<32x8xf32>
    %40 = vector.shape_cast %39 : vector<32x8xf32> to vector<4x8x8xf32>
    %41 = vector.extract_strided_slice %32 {offsets = [0, 40], sizes = [32, 8], strides = [1, 1]} : vector<32x96xf32> to vector<32x8xf32>
    %42 = vector.shape_cast %41 : vector<32x8xf32> to vector<4x8x8xf32>
    %43 = vector.extract_strided_slice %32 {offsets = [0, 72], sizes = [32, 8], strides = [1, 1]} : vector<32x96xf32> to vector<32x8xf32>
    %44 = vector.shape_cast %43 : vector<32x8xf32> to vector<4x8x8xf32>
    %45 = vector.extract_strided_slice %32 {offsets = [0, 16], sizes = [32, 8], strides = [1, 1]} : vector<32x96xf32> to vector<32x8xf32>
    %46 = vector.shape_cast %45 : vector<32x8xf32> to vector<4x8x8xf32>
    %47 = vector.extract_strided_slice %32 {offsets = [0, 48], sizes = [32, 8], strides = [1, 1]} : vector<32x96xf32> to vector<32x8xf32>
    %48 = vector.shape_cast %47 : vector<32x8xf32> to vector<4x8x8xf32>
    %49 = vector.extract_strided_slice %32 {offsets = [0, 80], sizes = [32, 8], strides = [1, 1]} : vector<32x96xf32> to vector<32x8xf32>
    %50 = vector.shape_cast %49 : vector<32x8xf32> to vector<4x8x8xf32>
    %51 = vector.extract_strided_slice %32 {offsets = [0, 24], sizes = [32, 8], strides = [1, 1]} : vector<32x96xf32> to vector<32x8xf32>
    %52 = vector.shape_cast %51 : vector<32x8xf32> to vector<4x8x8xf32>
    %53 = vector.extract_strided_slice %32 {offsets = [0, 56], sizes = [32, 8], strides = [1, 1]} : vector<32x96xf32> to vector<32x8xf32>
    %54 = vector.shape_cast %53 : vector<32x8xf32> to vector<4x8x8xf32>
    %55 = vector.extract_strided_slice %32 {offsets = [0, 88], sizes = [32, 8], strides = [1, 1]} : vector<32x96xf32> to vector<32x8xf32>
    %56 = vector.shape_cast %55 : vector<32x8xf32> to vector<4x8x8xf32>
    %57 = vector.shape_cast %34 : vector<4x8x8xf32> to vector<1x4x8x8xf32>
    %58 = vector.shape_cast %40 : vector<4x8x8xf32> to vector<1x4x8x8xf32>
    %59 = vector.shape_cast %46 : vector<4x8x8xf32> to vector<1x4x8x8xf32>
    %60 = vector.shape_cast %52 : vector<4x8x8xf32> to vector<1x4x8x8xf32>
    %61 = tpu.concatenate %57, %58, %59, %60 in 0 : vector<1x4x8x8xf32>, vector<1x4x8x8xf32>, vector<1x4x8x8xf32>, vector<1x4x8x8xf32> -> vector<4x4x8x8xf32>
    %62 = vector.shape_cast %61 : vector<4x4x8x8xf32> to vector<16x8x8xf32>
    %63 = vector.shape_cast %36 : vector<4x8x8xf32> to vector<1x4x8x8xf32>
    %64 = vector.shape_cast %42 : vector<4x8x8xf32> to vector<1x4x8x8xf32>
    %65 = vector.shape_cast %48 : vector<4x8x8xf32> to vector<1x4x8x8xf32>
    %66 = vector.shape_cast %54 : vector<4x8x8xf32> to vector<1x4x8x8xf32>
    %67 = tpu.concatenate %63, %64, %65, %66 in 0 : vector<1x4x8x8xf32>, vector<1x4x8x8xf32>, vector<1x4x8x8xf32>, vector<1x4x8x8xf32> -> vector<4x4x8x8xf32>
    %68 = vector.shape_cast %67 : vector<4x4x8x8xf32> to vector<16x8x8xf32>
    %69 = vector.shape_cast %38 : vector<4x8x8xf32> to vector<1x4x8x8xf32>
    %70 = vector.shape_cast %44 : vector<4x8x8xf32> to vector<1x4x8x8xf32>
    %71 = vector.shape_cast %50 : vector<4x8x8xf32> to vector<1x4x8x8xf32>
    %72 = vector.shape_cast %56 : vector<4x8x8xf32> to vector<1x4x8x8xf32>
    %73 = tpu.concatenate %69, %70, %71, %72 in 0 : vector<1x4x8x8xf32>, vector<1x4x8x8xf32>, vector<1x4x8x8xf32>, vector<1x4x8x8xf32> -> vector<4x4x8x8xf32>
    %74 = vector.shape_cast %73 : vector<4x4x8x8xf32> to vector<16x8x8xf32>
    %c0_11 = arith.constant 0 : index
    %c0_12 = arith.constant 0 : index
    %c0_13 = arith.constant 0 : index
    %75 = vector.load %arg2[%c0_11, %c0_12, %c0_13] : memref<4x8x8xf32, #tpu.memory_space<vmem>>, vector<4x8x8xf32>
    %cst_14 = arith.constant dense<0.000000e+00> : vector<16x8x8xf32>
    %76 = tpu.matmul %62, %68, %cst_14 {dimension_numbers = #tpu.dot_dimension_numbers<[2], [2], [1], [1], [0, 0, 0, 1, 1, 1], [0], [0]>} : vector<16x8x8xf32>, vector<16x8x8xf32>, vector<16x8x8xf32> -> vector<16x8x8xf32>
    %77 = vector.shape_cast %76 : vector<16x8x8xf32> to vector<4x4x8x8xf32>
    %78 = vector.shape_cast %75 : vector<4x8x8xf32> to vector<4x1x8x8xf32>
    %79 = vector.broadcast %78 : vector<4x1x8x8xf32> to vector<4x4x8x8xf32>
    %80 = arith.addf %77, %79 : vector<4x4x8x8xf32>
    %cst_15 = arith.constant dense<0xFF800000> : vector<4x4x8xf32>
    %81 = vector.multi_reduction <maximumf>, %80, %cst_15 [3] : vector<4x4x8x8xf32> to vector<4x4x8xf32>
    %82 = vector.shape_cast %81 : vector<4x4x8xf32> to vector<4x4x8x1xf32>
    %83 = vector.broadcast %82 : vector<4x4x8x1xf32> to vector<4x4x8x8xf32>
    %84 = arith.subf %80, %83 : vector<4x4x8x8xf32>
    %85 = math.exp %84 : vector<4x4x8x8xf32>
    %cst_16 = arith.constant dense<0.000000e+00> : vector<4x4x8xf32>
    %86 = vector.multi_reduction <add>, %85, %cst_16 [3] : vector<4x4x8x8xf32> to vector<4x4x8xf32>
    %87 = vector.shape_cast %86 : vector<4x4x8xf32> to vector<4x4x8x1xf32>
    %88 = tpu.reciprocal %87 {approx = true} : vector<4x4x8x1xf32> -> vector<4x4x8x1xf32>
    %89 = vector.broadcast %88 : vector<4x4x8x1xf32> to vector<4x4x8x8xf32>
    %90 = arith.mulf %85, %89 : vector<4x4x8x8xf32>
    %91 = vector.shape_cast %90 : vector<4x4x8x8xf32> to vector<16x8x8xf32>
    %cst_17 = arith.constant dense<0.000000e+00> : vector<16x8x8xf32>
    %92 = tpu.matmul %91, %74, %cst_17 {dimension_numbers = #tpu.dot_dimension_numbers<[2], [1], [1], [2], [0, 0, 0, 1, 1, 2], [0], [0]>} : vector<16x8x8xf32>, vector<16x8x8xf32>, vector<16x8x8xf32> -> vector<16x8x8xf32>
    %93 = vector.shape_cast %92 : vector<16x8x8xf32> to vector<4x4x8x8xf32>
    %94 = vector.extract_strided_slice %93 {offsets = [0, 0, 0, 0], sizes = [1, 4, 8, 8], strides = [1, 1, 1, 1]} : vector<4x4x8x8xf32> to vector<1x4x8x8xf32>
    %95 = vector.shape_cast %94 : vector<1x4x8x8xf32> to vector<4x8x8xf32>
    %96 = vector.extract_strided_slice %93 {offsets = [1, 0, 0, 0], sizes = [1, 4, 8, 8], strides = [1, 1, 1, 1]} : vector<4x4x8x8xf32> to vector<1x4x8x8xf32>
    %97 = vector.shape_cast %96 : vector<1x4x8x8xf32> to vector<4x8x8xf32>
    %98 = vector.extract_strided_slice %93 {offsets = [2, 0, 0, 0], sizes = [1, 4, 8, 8], strides = [1, 1, 1, 1]} : vector<4x4x8x8xf32> to vector<1x4x8x8xf32>
    %99 = vector.shape_cast %98 : vector<1x4x8x8xf32> to vector<4x8x8xf32>
    %100 = vector.extract_strided_slice %93 {offsets = [3, 0, 0, 0], sizes = [1, 4, 8, 8], strides = [1, 1, 1, 1]} : vector<4x4x8x8xf32> to vector<1x4x8x8xf32>
    %101 = vector.shape_cast %100 : vector<1x4x8x8xf32> to vector<4x8x8xf32>
    %102 = tpu.concatenate %95, %97, %99, %101 in 2 : vector<4x8x8xf32>, vector<4x8x8xf32>, vector<4x8x8xf32>, vector<4x8x8xf32> -> vector<4x8x32xf32>
    %103 = vector.shape_cast %102 : vector<4x8x32xf32> to vector<32x32xf32>
    %c0_18 = arith.constant 0 : index
    %c0_19 = arith.constant 0 : index
    %104 = vector.load %arg4[%c0_18, %c0_19] : memref<32x32xf32, #tpu.memory_space<vmem>>, vector<32x32xf32>
    %cst_20 = arith.constant dense<0.000000e+00> : vector<32x32xf32>
    %105 = tpu.matmul %103, %104, %cst_20 {dimension_numbers = #tpu.dot_dimension_numbers<[1], [0], [0], [1], [0, 0, 1, 1], [], []>} : vector<32x32xf32>, vector<32x32xf32>, vector<32x32xf32> -> vector<32x32xf32>
    %106 = vector.broadcast %7 : vector<1x32xf32> to vector<32x32xf32>
    %107 = arith.addf %105, %106 : vector<32x32xf32>
    %108 = arith.addf %1, %107 : vector<32x32xf32>
    %cst_21 = arith.constant dense<0.000000e+00> : vector<32xf32>
    %109 = vector.multi_reduction <add>, %108, %cst_21 [1] : vector<32x32xf32> to vector<32xf32>
    %110 = vector.shape_cast %109 : vector<32xf32> to vector<32x1xf32>
    %cst_22 = arith.constant 3.200000e+01 : f32
    %111 = vector.broadcast %cst_22 : f32 to vector<32x1xf32>
    %112 = arith.divf %110, %111 : vector<32x1xf32>
    %113 = vector.broadcast %112 : vector<32x1xf32> to vector<32x32xf32>
    %114 = arith.subf %108, %113 : vector<32x32xf32>
    %115 = arith.mulf %114, %114 : vector<32x32xf32>
    %cst_23 = arith.constant dense<0.000000e+00> : vector<32xf32>
    %116 = vector.multi_reduction <add>, %115, %cst_23 [1] : vector<32x32xf32> to vector<32xf32>
    %117 = vector.shape_cast %116 : vector<32xf32> to vector<32x1xf32>
    %cst_24 = arith.constant 3.200000e+01 : f32
    %118 = vector.broadcast %cst_24 : f32 to vector<32x1xf32>
    %119 = arith.divf %117, %118 : vector<32x1xf32>
    %120 = vector.broadcast %112 : vector<32x1xf32> to vector<32x32xf32>
    %121 = arith.subf %108, %120 : vector<32x32xf32>
    %cst_25 = arith.constant 9.99999974E-6 : f32
    %122 = vector.broadcast %cst_25 : f32 to vector<32x1xf32>
    %123 = arith.addf %119, %122 : vector<32x1xf32>
    %124 = math.rsqrt %123 : vector<32x1xf32>
    %125 = vector.broadcast %124 : vector<32x1xf32> to vector<32x32xf32>
    %126 = arith.mulf %121, %125 : vector<32x32xf32>
    %127 = vector.broadcast %5 : vector<1x32xf32> to vector<32x32xf32>
    %128 = arith.mulf %126, %127 : vector<32x32xf32>
    %129 = vector.broadcast %6 : vector<1x32xf32> to vector<32x32xf32>
    %130 = arith.addf %128, %129 : vector<32x32xf32>
    %c0_26 = arith.constant 0 : index
    %c0_27 = arith.constant 0 : index
    %131 = vector.load %arg7[%c0_26, %c0_27] : memref<32x128xf32, #tpu.memory_space<vmem>>, vector<32x128xf32>
    %cst_28 = arith.constant dense<0.000000e+00> : vector<32x128xf32>
    %132 = tpu.matmul %130, %131, %cst_28 {dimension_numbers = #tpu.dot_dimension_numbers<[1], [0], [0], [1], [0, 0, 1, 1], [], []>} : vector<32x32xf32>, vector<32x128xf32>, vector<32x128xf32> -> vector<32x128xf32>
    %c0_29 = arith.constant 0 : index
    %c0_30 = arith.constant 0 : index
    %133 = vector.load %arg6[%c0_29, %c0_30] : memref<1x128xf32, #tpu.memory_space<vmem>>, vector<1x128xf32>
    %134 = vector.broadcast %133 : vector<1x128xf32> to vector<32x128xf32>
    %135 = arith.addf %132, %134 : vector<32x128xf32>
    %cst_31 = arith.constant 5.000000e-01 : f32
    %136 = vector.broadcast %cst_31 : f32 to vector<32x128xf32>
    %137 = arith.mulf %136, %135 : vector<32x128xf32>
    %cst_32 = arith.constant 4.471500e-02 : f32
    %138 = vector.broadcast %cst_32 : f32 to vector<32x128xf32>
    %139 = arith.mulf %138, %135 : vector<32x128xf32>
    %140 = arith.mulf %139, %135 : vector<32x128xf32>
    %141 = arith.mulf %140, %135 : vector<32x128xf32>
    %142 = arith.addf %135, %141 : vector<32x128xf32>
    %cst_33 = arith.constant 0.797884583 : f32
    %143 = vector.broadcast %cst_33 : f32 to vector<32x128xf32>
    %144 = arith.mulf %143, %142 : vector<32x128xf32>
    %145 = math.tanh %144 : vector<32x128xf32>
    %cst_34 = arith.constant 1.000000e+00 : f32
    %146 = vector.broadcast %cst_34 : f32 to vector<32x128xf32>
    %147 = arith.addf %146, %145 : vector<32x128xf32>
    %148 = arith.mulf %137, %147 : vector<32x128xf32>
    %c0_35 = arith.constant 0 : index
    %c0_36 = arith.constant 0 : index
    %149 = vector.load %arg8[%c0_35, %c0_36] : memref<128x32xf32, #tpu.memory_space<vmem>>, vector<128x32xf32>
    %cst_37 = arith.constant dense<0.000000e+00> : vector<32x32xf32>
    %150 = tpu.matmul %148, %149, %cst_37 {dimension_numbers = #tpu.dot_dimension_numbers<[1], [0], [0], [1], [0, 0, 1, 1], [], []>} : vector<32x128xf32>, vector<128x32xf32>, vector<32x32xf32> -> vector<32x32xf32>
    %151 = vector.broadcast %8 : vector<1x32xf32> to vector<32x32xf32>
    %152 = arith.addf %150, %151 : vector<32x32xf32>
    %153 = arith.addf %108, %152 : vector<32x32xf32>
    %c0_38 = arith.constant 0 : index
    %c0_39 = arith.constant 0 : index
    %c0_40 = arith.constant 0 : index
    %154 = vector.load %arg9[%c0_38, %c0_39, %c0_40] : memref<1x32x32xf32, #tpu.memory_space<vmem>>, vector<1x32x32xf32>
    %155 = vector.shape_cast %154 : vector<1x32x32xf32> to vector<32x32xf32>
    %156 = vector.shape_cast %153 : vector<32x32xf32> to vector<1x32x32xf32>
    tpu.vector_store %arg9[%c0_38, %c0_39, %c0_40], %156 {strides = array<i32>} : memref<1x32x32xf32, #tpu.memory_space<vmem>>, vector<1x32x32xf32>,
    return
  }
  func.func @transform_0(%arg0: i32) -> (i32, i32, i32) {
    %c0_i32 = arith.constant 0 : i32
    %c0_i32_0 = arith.constant 0 : i32
    %c0_i32_1 = arith.constant 0 : i32
    return %arg0, %c0_i32, %c0_i32_0 : i32, i32, i32
  }
  func.func @transform_1(%arg0: i32) -> (i32, i32, i32) {
    %c0_i32 = arith.constant 0 : i32
    %c0_i32_0 = arith.constant 0 : i32
    %c0_i32_1 = arith.constant 0 : i32
    %c0_i32_2 = arith.constant 0 : i32
    return %c0_i32, %c0_i32_0, %c0_i32_1 : i32, i32, i32
  }
  func.func @transform_2(%arg0: i32) -> (i32, i32) {
    %c0_i32 = arith.constant 0 : i32
    %c0_i32_0 = arith.constant 0 : i32
    %c0_i32_1 = arith.constant 0 : i32
    return %c0_i32, %c0_i32_0 : i32, i32
  }
  func.func @transform_3(%arg0: i32) -> (i32, i32) {
    %c0_i32 = arith.constant 0 : i32
    %c0_i32_0 = arith.constant 0 : i32
    %c0_i32_1 = arith.constant 0 : i32
    return %c0_i32, %c0_i32_0 : i32, i32
  }
  func.func @transform_4(%arg0: i32) -> (i32, i32) {
    %c0_i32 = arith.constant 0 : i32
    %c0_i32_0 = arith.constant 0 : i32
    %c0_i32_1 = arith.constant 0 : i32
    return %c0_i32, %c0_i32_0 : i32, i32
  }
  func.func @transform_5(%arg0: i32) -> (i32, i32) {
    %c0_i32 = arith.constant 0 : i32
    %c0_i32_0 = arith.constant 0 : i32
    %c0_i32_1 = arith.constant 0 : i32
    return %c0_i32, %c0_i32_0 : i32, i32
  }
  func.func @transform_6(%arg0: i32) -> (i32, i32) {
    %c0_i32 = arith.constant 0 : i32
    %c0_i32_0 = arith.constant 0 : i32
    %c0_i32_1 = arith.constant 0 : i32
    return %c0_i32, %c0_i32_0 : i32, i32
  }
  func.func @transform_7(%arg0: i32) -> (i32, i32) {
    %c0_i32 = arith.constant 0 : i32
    %c0_i32_0 = arith.constant 0 : i32
    %c0_i32_1 = arith.constant 0 : i32
    return %c0_i32, %c0_i32_0 : i32, i32
  }
  func.func @transform_8(%arg0: i32) -> (i32, i32, i32) {
    %c0_i32 = arith.constant 0 : i32
    %c0_i32_0 = arith.constant 0 : i32
    %c0_i32_1 = arith.constant 0 : i32
    return %arg0, %c0_i32, %c0_i32_0 : i32, i32, i32
  }
}

module attributes {stable_mosaic.version = 11 : i64} {
  func.func @transformer_layer_kernel(%arg0: i32, %arg1: memref<1x32x32xf32, #tpu.memory_space<vmem>>, %arg2: memref<4x8x8xf32, #tpu.memory_space<vmem>>, %arg3: memref<32x96xf32, #tpu.memory_space<vmem>>, %arg4: memref<32x32xf32, #tpu.memory_space<vmem>>, %arg5: memref<6x32xf32, #tpu.memory_space<vmem>>, %arg6: memref<1x128xf32, #tpu.memory_space<vmem>>, %arg7: memref<32x128xf32, #tpu.memory_space<vmem>>, %arg8: memref<128x32xf32, #tpu.memory_space<vmem>>, %arg9: memref<1x32x32xf32, #tpu.memory_space<vmem>>) attributes {dimension_semantics = [#tpu.dimension_semantics<parallel>], iteration_bounds = array<i64: 2>, scalar_prefetch = 0 : i64, scratch_operands = 0 : i64, tpu.core_type = #tpu.core_type<tc>, window_params = [{transform_indices = @transform_0, window_bounds = array<i64: 1, 32, 32>}, {pipeline_mode = #tpu.pipeline_mode<synchronous>, transform_indices = @transform_1, window_bounds = array<i64: 4, 8, 8>}, {pipeline_mode = #tpu.pipeline_mode<synchronous>, transform_indices = @transform_2, window_bounds = array<i64: 32, 96>}, {pipeline_mode = #tpu.pipeline_mode<synchronous>, transform_indices = @transform_3, window_bounds = array<i64: 32, 32>}, {pipeline_mode = #tpu.pipeline_mode<synchronous>, transform_indices = @transform_4, window_bounds = array<i64: 6, 32>}, {pipeline_mode = #tpu.pipeline_mode<synchronous>, transform_indices = @transform_5, window_bounds = array<i64: 1, 128>}, {pipeline_mode = #tpu.pipeline_mode<synchronous>, transform_indices = @transform_6, window_bounds = array<i64: 32, 128>}, {pipeline_mode = #tpu.pipeline_mode<synchronous>, transform_indices = @transform_7, window_bounds = array<i64: 128, 32>}, {transform_indices = @transform_8, window_bounds = array<i64: 1, 32, 32>}]} {
    %c0 = arith.constant 0 : index
    %c0_0 = arith.constant 0 : index
    %c0_1 = arith.constant 0 : index
    %0 = vector.load %arg1[%c0, %c0_0, %c0_1] : memref<1x32x32xf32, #tpu.memory_space<vmem>>, vector<1x32x32xf32>
    %1 = vector.shape_cast %0 : vector<1x32x32xf32> to vector<32x32xf32>
    %c0_2 = arith.constant 0 : index
    %c0_3 = arith.constant 0 : index
    %2 = vector.load %arg5[%c0_2, %c0_3] : memref<6x32xf32, #tpu.memory_space<vmem>>, vector<6x32xf32>
    %3 = vector.extract_strided_slice %2 {offsets = [0, 0], sizes = [1, 32], strides = [1, 1]} : vector<6x32xf32> to vector<1x32xf32>
    %4 = vector.extract_strided_slice %2 {offsets = [1, 0], sizes = [1, 32], strides = [1, 1]} : vector<6x32xf32> to vector<1x32xf32>
    %5 = vector.extract_strided_slice %2 {offsets = [2, 0], sizes = [1, 32], strides = [1, 1]} : vector<6x32xf32> to vector<1x32xf32>
    %6 = vector.extract_strided_slice %2 {offsets = [3, 0], sizes = [1, 32], strides = [1, 1]} : vector<6x32xf32> to vector<1x32xf32>
    %7 = vector.extract_strided_slice %2 {offsets = [4, 0], sizes = [1, 32], strides = [1, 1]} : vector<6x32xf32> to vector<1x32xf32>
    %8 = vector.extract_strided_slice %2 {offsets = [5, 0], sizes = [1, 32], strides = [1, 1]} : vector<6x32xf32> to vector<1x32xf32>
    %cst = arith.constant dense<0.000000e+00> : vector<32xf32>
    %9 = vector.multi_reduction <add>, %1, %cst [1] : vector<32x32xf32> to vector<32xf32>
    %10 = vector.shape_cast %9 : vector<32xf32> to vector<32x1xf32>
    %cst_4 = arith.constant 3.200000e+01 : f32
    %11 = vector.broadcast %cst_4 : f32 to vector<32x1xf32>
    %12 = arith.divf %10, %11 : vector<32x1xf32>
    %13 = vector.broadcast %12 : vector<32x1xf32> to vector<32x32xf32>
    %14 = arith.subf %1, %13 : vector<32x32xf32>
    %15 = arith.mulf %14, %14 : vector<32x32xf32>
    %cst_5 = arith.constant dense<0.000000e+00> : vector<32xf32>
    %16 = vector.multi_reduction <add>, %15, %cst_5 [1] : vector<32x32xf32> to vector<32xf32>
    %17 = vector.shape_cast %16 : vector<32xf32> to vector<32x1xf32>
    %cst_6 = arith.constant 3.200000e+01 : f32
    %18 = vector.broadcast %cst_6 : f32 to vector<32x1xf32>
    %19 = arith.divf %17, %18 : vector<32x1xf32>
    %20 = vector.broadcast %12 : vector<32x1xf32> to vector<32x32xf32>
    %21 = arith.subf %1, %20 : vector<32x32xf32>
    %cst_7 = arith.constant 9.99999974E-6 : f32
    %22 = vector.broadcast %cst_7 : f32 to vector<32x1xf32>
    %23 = arith.addf %19, %22 : vector<32x1xf32>
    %24 = math.rsqrt %23 : vector<32x1xf32>
    %25 = vector.broadcast %24 : vector<32x1xf32> to vector<32x32xf32>
    %26 = arith.mulf %21, %25 : vector<32x32xf32>
    %27 = vector.broadcast %3 : vector<1x32xf32> to vector<32x32xf32>
    %28 = arith.mulf %26, %27 : vector<32x32xf32>
    %29 = vector.broadcast %4 : vector<1x32xf32> to vector<32x32xf32>
    %30 = arith.addf %28, %29 : vector<32x32xf32>
    %c0_8 = arith.constant 0 : index
    %c0_9 = arith.constant 0 : index
    %31 = vector.load %arg3[%c0_8, %c0_9] : memref<32x96xf32, #tpu.memory_space<vmem>>, vector<32x96xf32>
    %cst_10 = arith.constant dense<0.000000e+00> : vector<32x96xf32>
    %32 = tpu.matmul %30, %31, %cst_10 {dimension_numbers = #tpu.dot_dimension_numbers<[1], [0], [0], [1], [0, 0, 1, 1], [], []>} : vector<32x32xf32>, vector<32x96xf32>, vector<32x96xf32> -> vector<32x96xf32>
    %33 = vector.extract_strided_slice %32 {offsets = [0, 0], sizes = [32, 8], strides = [1, 1]} : vector<32x96xf32> to vector<32x8xf32>
    %34 = vector.shape_cast %33 : vector<32x8xf32> to vector<4x8x8xf32>
    %35 = vector.extract_strided_slice %32 {offsets = [0, 32], sizes = [32, 8], strides = [1, 1]} : vector<32x96xf32> to vector<32x8xf32>
    %36 = vector.shape_cast %35 : vector<32x8xf32> to vector<4x8x8xf32>
    %37 = vector.extract_strided_slice %32 {offsets = [0, 64], sizes = [32, 8], strides = [1, 1]} : vector<32x96xf32> to vector<32x8xf32>
    %38 = vector.shape_cast %37 : vector<32x8xf32> to vector<4x8x8xf32>
    %39 = vector.extract_strided_slice %32 {offsets = [0, 8], sizes = [32, 8], strides = [1, 1]} : vector<32x96xf32> to vector<32x8xf32>
    %40 = vector.shape_cast %39 : vector<32x8xf32> to vector<4x8x8xf32>
    %41 = vector.extract_strided_slice %32 {offsets = [0, 40], sizes = [32, 8], strides = [1, 1]} : vector<32x96xf32> to vector<32x8xf32>
    %42 = vector.shape_cast %41 : vector<32x8xf32> to vector<4x8x8xf32>
    %43 = vector.extract_strided_slice %32 {offsets = [0, 72], sizes = [32, 8], strides = [1, 1]} : vector<32x96xf32> to vector<32x8xf32>
    %44 = vector.shape_cast %43 : vector<32x8xf32> to vector<4x8x8xf32>
    %45 = vector.extract_strided_slice %32 {offsets = [0, 16], sizes = [32, 8], strides = [1, 1]} : vector<32x96xf32> to vector<32x8xf32>
    %46 = vector.shape_cast %45 : vector<32x8xf32> to vector<4x8x8xf32>
    %47 = vector.extract_strided_slice %32 {offsets = [0, 48], sizes = [32, 8], strides = [1, 1]} : vector<32x96xf32> to vector<32x8xf32>
    %48 = vector.shape_cast %47 : vector<32x8xf32> to vector<4x8x8xf32>
    %49 = vector.extract_strided_slice %32 {offsets = [0, 80], sizes = [32, 8], strides = [1, 1]} : vector<32x96xf32> to vector<32x8xf32>
    %50 = vector.shape_cast %49 : vector<32x8xf32> to vector<4x8x8xf32>
    %51 = vector.extract_strided_slice %32 {offsets = [0, 24], sizes = [32, 8], strides = [1, 1]} : vector<32x96xf32> to vector<32x8xf32>
    %52 = vector.shape_cast %51 : vector<32x8xf32> to vector<4x8x8xf32>
    %53 = vector.extract_strided_slice %32 {offsets = [0, 56], sizes = [32, 8], strides = [1, 1]} : vector<32x96xf32> to vector<32x8xf32>
    %54 = vector.shape_cast %53 : vector<32x8xf32> to vector<4x8x8xf32>
    %55 = vector.extract_strided_slice %32 {offsets = [0, 88], sizes = [32, 8], strides = [1, 1]} : vector<32x96xf32> to vector<32x8xf32>
    %56 = vector.shape_cast %55 : vector<32x8xf32> to vector<4x8x8xf32>
    %57 = vector.shape_cast %34 : vector<4x8x8xf32> to vector<1x4x8x8xf32>
    %58 = vector.shape_cast %40 : vector<4x8x8xf32> to vector<1x4x8x8xf32>
    %59 = vector.shape_cast %46 : vector<4x8x8xf32> to vector<1x4x8x8xf32>
    %60 = vector.shape_cast %52 : vector<4x8x8xf32> to vector<1x4x8x8xf32>
    %61 = tpu.concatenate %57, %58, %59, %60 in 0 : vector<1x4x8x8xf32>, vector<1x4x8x8xf32>, vector<1x4x8x8xf32>, vector<1x4x8x8xf32> -> vector<4x4x8x8xf32>
    %62 = vector.shape_cast %61 : vector<4x4x8x8xf32> to vector<16x8x8xf32>
    %63 = vector.shape_cast %36 : vector<4x8x8xf32> to vector<1x4x8x8xf32>
    %64 = vector.shape_cast %42 : vector<4x8x8xf32> to vector<1x4x8x8xf32>
    %65 = vector.shape_cast %48 : vector<4x8x8xf32> to vector<1x4x8x8xf32>
    %66 = vector.shape_cast %54 : vector<4x8x8xf32> to vector<1x4x8x8xf32>
    %67 = tpu.concatenate %63, %64, %65, %66 in 0 : vector<1x4x8x8xf32>, vector<1x4x8x8xf32>, vector<1x4x8x8xf32>, vector<1x4x8x8xf32> -> vector<4x4x8x8xf32>
    %68 = vector.shape_cast %67 : vector<4x4x8x8xf32> to vector<16x8x8xf32>
    %69 = vector.shape_cast %38 : vector<4x8x8xf32> to vector<1x4x8x8xf32>
    %70 = vector.shape_cast %44 : vector<4x8x8xf32> to vector<1x4x8x8xf32>
    %71 = vector.shape_cast %50 : vector<4x8x8xf32> to vector<1x4x8x8xf32>
    %72 = vector.shape_cast %56 : vector<4x8x8xf32> to vector<1x4x8x8xf32>
    %73 = tpu.concatenate %69, %70, %71, %72 in 0 : vector<1x4x8x8xf32>, vector<1x4x8x8xf32>, vector<1x4x8x8xf32>, vector<1x4x8x8xf32> -> vector<4x4x8x8xf32>
    %74 = vector.shape_cast %73 : vector<4x4x8x8xf32> to vector<16x8x8xf32>
    %c0_11 = arith.constant 0 : index
    %c0_12 = arith.constant 0 : index
    %c0_13 = arith.constant 0 : index
    %75 = vector.load %arg2[%c0_11, %c0_12, %c0_13] : memref<4x8x8xf32, #tpu.memory_space<vmem>>, vector<4x8x8xf32>
    %cst_14 = arith.constant dense<0.000000e+00> : vector<16x8x8xf32>
    %76 = tpu.matmul %62, %68, %cst_14 {dimension_numbers = #tpu.dot_dimension_numbers<[2], [2], [1], [1], [0, 0, 0, 1, 1, 1], [0], [0]>} : vector<16x8x8xf32>, vector<16x8x8xf32>, vector<16x8x8xf32> -> vector<16x8x8xf32>
    %77 = vector.shape_cast %76 : vector<16x8x8xf32> to vector<4x4x8x8xf32>
    %78 = vector.shape_cast %75 : vector<4x8x8xf32> to vector<4x1x8x8xf32>
    %79 = vector.broadcast %78 : vector<4x1x8x8xf32> to vector<4x4x8x8xf32>
    %80 = arith.addf %77, %79 : vector<4x4x8x8xf32>
    %cst_15 = arith.constant dense<0xFF800000> : vector<4x4x8xf32>
    %81 = vector.multi_reduction <maximumf>, %80, %cst_15 [3] : vector<4x4x8x8xf32> to vector<4x4x8xf32>
    %82 = vector.shape_cast %81 : vector<4x4x8xf32> to vector<4x4x8x1xf32>
    %83 = vector.broadcast %82 : vector<4x4x8x1xf32> to vector<4x4x8x8xf32>
    %84 = arith.subf %80, %83 : vector<4x4x8x8xf32>
    %85 = math.exp %84 : vector<4x4x8x8xf32>
    %cst_16 = arith.constant dense<0.000000e+00> : vector<4x4x8xf32>
    %86 = vector.multi_reduction <add>, %85, %cst_16 [3] : vector<4x4x8x8xf32> to vector<4x4x8xf32>
    %87 = vector.shape_cast %86 : vector<4x4x8xf32> to vector<4x4x8x1xf32>
    %88 = tpu.reciprocal %87 {approx = true} : vector<4x4x8x1xf32> -> vector<4x4x8x1xf32>
    %89 = vector.broadcast %88 : vector<4x4x8x1xf32> to vector<4x4x8x8xf32>
    %90 = arith.mulf %85, %89 : vector<4x4x8x8xf32>
    %91 = vector.shape_cast %90 : vector<4x4x8x8xf32> to vector<16x8x8xf32>
    %cst_17 = arith.constant dense<0.000000e+00> : vector<16x8x8xf32>
    %92 = tpu.matmul %91, %74, %cst_17 {dimension_numbers = #tpu.dot_dimension_numbers<[2], [1], [1], [2], [0, 0, 0, 1, 1, 2], [0], [0]>} : vector<16x8x8xf32>, vector<16x8x8xf32>, vector<16x8x8xf32> -> vector<16x8x8xf32>
    %93 = vector.shape_cast %92 : vector<16x8x8xf32> to vector<4x4x8x8xf32>
    %94 = vector.extract_strided_slice %93 {offsets = [0, 0, 0, 0], sizes = [1, 4, 8, 8], strides = [1, 1, 1, 1]} : vector<4x4x8x8xf32> to vector<1x4x8x8xf32>
    %95 = vector.shape_cast %94 : vector<1x4x8x8xf32> to vector<4x8x8xf32>
    %96 = vector.extract_strided_slice %93 {offsets = [1, 0, 0, 0], sizes = [1, 4, 8, 8], strides = [1, 1, 1, 1]} : vector<4x4x8x8xf32> to vector<1x4x8x8xf32>
    %97 = vector.shape_cast %96 : vector<1x4x8x8xf32> to vector<4x8x8xf32>
    %98 = vector.extract_strided_slice %93 {offsets = [2, 0, 0, 0], sizes = [1, 4, 8, 8], strides = [1, 1, 1, 1]} : vector<4x4x8x8xf32> to vector<1x4x8x8xf32>
    %99 = vector.shape_cast %98 : vector<1x4x8x8xf32> to vector<4x8x8xf32>
    %100 = vector.extract_strided_slice %93 {offsets = [3, 0, 0, 0], sizes = [1, 4, 8, 8], strides = [1, 1, 1, 1]} : vector<4x4x8x8xf32> to vector<1x4x8x8xf32>
    %101 = vector.shape_cast %100 : vector<1x4x8x8xf32> to vector<4x8x8xf32>
    %102 = tpu.concatenate %95, %97, %99, %101 in 2 : vector<4x8x8xf32>, vector<4x8x8xf32>, vector<4x8x8xf32>, vector<4x8x8xf32> -> vector<4x8x32xf32>
    %103 = vector.shape_cast %102 : vector<4x8x32xf32> to vector<32x32xf32>
    %c0_18 = arith.constant 0 : index
    %c0_19 = arith.constant 0 : index
    %104 = vector.load %arg4[%c0_18, %c0_19] : memref<32x32xf32, #tpu.memory_space<vmem>>, vector<32x32xf32>
    %cst_20 = arith.constant dense<0.000000e+00> : vector<32x32xf32>
    %105 = tpu.matmul %103, %104, %cst_20 {dimension_numbers = #tpu.dot_dimension_numbers<[1], [0], [0], [1], [0, 0, 1, 1], [], []>} : vector<32x32xf32>, vector<32x32xf32>, vector<32x32xf32> -> vector<32x32xf32>
    %106 = vector.broadcast %7 : vector<1x32xf32> to vector<32x32xf32>
    %107 = arith.addf %105, %106 : vector<32x32xf32>
    %108 = arith.addf %1, %107 : vector<32x32xf32>
    %cst_21 = arith.constant dense<0.000000e+00> : vector<32xf32>
    %109 = vector.multi_reduction <add>, %108, %cst_21 [1] : vector<32x32xf32> to vector<32xf32>
    %110 = vector.shape_cast %109 : vector<32xf32> to vector<32x1xf32>
    %cst_22 = arith.constant 3.200000e+01 : f32
    %111 = vector.broadcast %cst_22 : f32 to vector<32x1xf32>
    %112 = arith.divf %110, %111 : vector<32x1xf32>
    %113 = vector.broadcast %112 : vector<32x1xf32> to vector<32x32xf32>
    %114 = arith.subf %108, %113 : vector<32x32xf32>
    %115 = arith.mulf %114, %114 : vector<32x32xf32>
    %cst_23 = arith.constant dense<0.000000e+00> : vector<32xf32>
    %116 = vector.multi_reduction <add>, %115, %cst_23 [1] : vector<32x32xf32> to vector<32xf32>
    %117 = vector.shape_cast %116 : vector<32xf32> to vector<32x1xf32>
    %cst_24 = arith.constant 3.200000e+01 : f32
    %118 = vector.broadcast %cst_24 : f32 to vector<32x1xf32>
    %119 = arith.divf %117, %118 : vector<32x1xf32>
    %120 = vector.broadcast %112 : vector<32x1xf32> to vector<32x32xf32>
    %121 = arith.subf %108, %120 : vector<32x32xf32>
    %cst_25 = arith.constant 9.99999974E-6 : f32
    %122 = vector.broadcast %cst_25 : f32 to vector<32x1xf32>
    %123 = arith.addf %119, %122 : vector<32x1xf32>
    %124 = math.rsqrt %123 : vector<32x1xf32>
    %125 = vector.broadcast %124 : vector<32x1xf32> to vector<32x32xf32>
    %126 = arith.mulf %121, %125 : vector<32x32xf32>
    %127 = vector.broadcast %5 : vector<1x32xf32> to vector<32x32xf32>
    %128 = arith.mulf %126, %127 : vector<32x32xf32>
    %129 = vector.broadcast %6 : vector<1x32xf32> to vector<32x32xf32>
    %130 = arith.addf %128, %129 : vector<32x32xf32>
    %c0_26 = arith.constant 0 : index
    %c0_27 = arith.constant 0 : index
    %131 = vector.load %arg7[%c0_26, %c0_27] : memref<32x128xf32, #tpu.memory_space<vmem>>, vector<32x128xf32>
    %cst_28 = arith.constant dense<0.000000e+00> : vector<32x128xf32>
    %132 = tpu.matmul %130, %131, %cst_28 {dimension_numbers = #tpu.dot_dimension_numbers<[1], [0], [0], [1], [0, 0, 1, 1], [], []>} : vector<32x32xf32>, vector<32x128xf32>, vector<32x128xf32> -> vector<32x128xf32>
    %c0_29 = arith.constant 0 : index
    %c0_30 = arith.constant 0 : index
    %133 = vector.load %arg6[%c0_29, %c0_30] : memref<1x128xf32, #tpu.memory_space<vmem>>, vector<1x128xf32>
    %134 = vector.broadcast %133 : vector<1x128xf32> to vector<32x128xf32>
    %135 = arith.addf %132, %134 : vector<32x128xf32>
    %cst_31 = arith.constant 5.000000e-01 : f32
    %136 = vector.broadcast %cst_31 : f32 to vector<32x128xf32>
    %137 = arith.mulf %136, %135 : vector<32x128xf32>
    %cst_32 = arith.constant 4.471500e-02 : f32
    %138 = vector.broadcast %cst_32 : f32 to vector<32x128xf32>
    %139 = arith.mulf %138, %135 : vector<32x128xf32>
    %140 = arith.mulf %139, %135 : vector<32x128xf32>
    %141 = arith.mulf %140, %135 : vector<32x128xf32>
    %142 = arith.addf %135, %141 : vector<32x128xf32>
    %cst_33 = arith.constant 0.797884583 : f32
    %143 = vector.broadcast %cst_33 : f32 to vector<32x128xf32>
    %144 = arith.mulf %143, %142 : vector<32x128xf32>
    %145 = math.tanh %144 : vector<32x128xf32>
    %cst_34 = arith.constant 1.000000e+00 : f32
    %146 = vector.broadcast %cst_34 : f32 to vector<32x128xf32>
    %147 = arith.addf %146, %145 : vector<32x128xf32>
    %148 = arith.mulf %137, %147 : vector<32x128xf32>
    %c0_35 = arith.constant 0 : index
    %c0_36 = arith.constant 0 : index
    %149 = vector.load %arg8[%c0_35, %c0_36] : memref<128x32xf32, #tpu.memory_space<vmem>>, vector<128x32xf32>
    %cst_37 = arith.constant dense<0.000000e+00> : vector<32x32xf32>
    %150 = tpu.matmul %148, %149, %cst_37 {dimension_numbers = #tpu.dot_dimension_numbers<[1], [0], [0], [1], [0, 0, 1, 1], [], []>} : vector<32x128xf32>, vector<128x32xf32>, vector<32x32xf32> -> vector<32x32xf32>
    %151 = vector.broadcast %8 : vector<1x32xf32> to vector<32x32xf32>
    %152 = arith.addf %150, %151 : vector<32x32xf32>
    %153 = arith.addf %108, %152 : vector<32x32xf32>
    %c0_38 = arith.constant 0 : index
    %c0_39 = arith.constant 0 : index
    %c0_40 = arith.constant 0 : index
    %154 = vector.load %arg9[%c0_38, %c0_39, %c0_40] : memref<1x32x32xf32, #tpu.memory_space<vmem>>, vector<1x32x32xf32>
    %155 = vector.shape_cast %154 : vector<1x32x32xf32> to vector<32x32xf32>
    %156 = vector.shape_cast %153 : vector<32x32xf32> to vector<1x32x32xf32>
    tpu.vector_store %arg9[%c0_38, %c0_39, %c0_40], %156 {strides = array<i32>} : memref<1x32x32xf32, #tpu.memory_space<vmem>>, vector<1x32x32xf32>,
    return
  }
  func.func @transform_0(%arg0: i32) -> (i32, i32, i32) {
    %c0_i32 = arith.constant 0 : i32
    %c0_i32_0 = arith.constant 0 : i32
    %c0_i32_1 = arith.constant 0 : i32
    return %arg0, %c0_i32, %c0_i32_0 : i32, i32, i32
  }
  func.func @transform_1(%arg0: i32) -> (i32, i32, i32) {
    %c0_i32 = arith.constant 0 : i32
    %c0_i32_0 = arith.constant 0 : i32
    %c0_i32_1 = arith.constant 0 : i32
    %c0_i32_2 = arith.constant 0 : i32
    return %c0_i32, %c0_i32_0, %c0_i32_1 : i32, i32, i32
  }
  func.func @transform_2(%arg0: i32) -> (i32, i32) {
    %c0_i32 = arith.constant 0 : i32
    %c0_i32_0 = arith.constant 0 : i32
    %c0_i32_1 = arith.constant 0 : i32
    return %c0_i32, %c0_i32_0 : i32, i32
  }
  func.func @transform_3(%arg0: i32) -> (i32, i32) {
    %c0_i32 = arith.constant 0 : i32
    %c0_i32_0 = arith.constant 0 : i32
    %c0_i32_1 = arith.constant 0 : i32
    return %c0_i32, %c0_i32_0 : i32, i32
  }
  func.func @transform_4(%arg0: i32) -> (i32, i32) {
    %c0_i32 = arith.constant 0 : i32
    %c0_i32_0 = arith.constant 0 : i32
    %c0_i32_1 = arith.constant 0 : i32
    return %c0_i32, %c0_i32_0 : i32, i32
  }
  func.func @transform_5(%arg0: i32) -> (i32, i32) {
    %c0_i32 = arith.constant 0 : i32
    %c0_i32_0 = arith.constant 0 : i32
    %c0_i32_1 = arith.constant 0 : i32
    return %c0_i32, %c0_i32_0 : i32, i32
  }
  func.func @transform_6(%arg0: i32) -> (i32, i32) {
    %c0_i32 = arith.constant 0 : i32
    %c0_i32_0 = arith.constant 0 : i32
    %c0_i32_1 = arith.constant 0 : i32
    return %c0_i32, %c0_i32_0 : i32, i32
  }
  func.func @transform_7(%arg0: i32) -> (i32, i32) {
    %c0_i32 = arith.constant 0 : i32
    %c0_i32_0 = arith.constant 0 : i32
    %c0_i32_1 = arith.constant 0 : i32
    return %c0_i32, %c0_i32_0 : i32, i32
  }
  func.func @transform_8(%arg0: i32) -> (i32, i32, i32) {
    %c0_i32 = arith.constant 0 : i32
    %c0_i32_0 = arith.constant 0 : i32
    %c0_i32_1 = arith.constant 0 : i32
    return %arg0, %c0_i32, %c0_i32_0 : i32, i32, i32
  }
}

</mosaic_0001>

<llo_original>
// kernel: tpu_custom_call.1
$region0: #{tpu_custom_call.1}
  #allocation0 [shape = 'u32[]', space=smem, size = 0x4, offset = 0x4, fixed_abs, tag = 'smem constant byte address 0x4 - core index']
  #allocation1 [shape = 'u32[144,128]{1,0:T(1,128)}', space=vmem, size = 0x12000, scoped, tag = 'internal scratch']
  %s0 = inlined_call_operand.vmem [shape: f32[2,32,32], index: 0, kind: input, shape index: {}]
  %s1 = inlined_call_operand.vmem [shape: f32[4,8,8], index: 1, kind: input, shape index: {}]
  %s2 = inlined_call_operand.vmem [shape: f32[32,96], index: 2, kind: input, shape index: {}]
  %s3 = inlined_call_operand.vmem [shape: f32[32,32], index: 3, kind: input, shape index: {}]
  %s4 = inlined_call_operand.vmem [shape: f32[6,32], index: 4, kind: input, shape index: {}]
  %s5 = inlined_call_operand.vmem [shape: f32[1,128], index: 5, kind: input, shape index: {}]
  %s6 = inlined_call_operand.hbm [shape: f32[32,128], index: 6, kind: input, shape index: {}]
  %s7 = inlined_call_operand.vmem [shape: f32[128,32], index: 7, kind: input, shape index: {}]
  %s8 = inlined_call_operand.hbm [shape: f32[2,32,32], index: 8, kind: output, shape index: {}]
  %s9 = sld [smem:[#allocation0]]
  $region69: #{tpu_custom_call.1} parent=0
    _
  %s11 = ssub.s32 1, %s9
  %s12 = scalar_select 0, %s11, %s9
  $region1: #{tpu_custom_call.1} parent=0
    #allocation2 [shape = 'u8[16384]{0}', space=vmem, size = 0x4000, scoped, tag = 'input window, operand 6, single buffered']
    #allocation3 [shape = 's32[2]{0}', space=sflag, size = 0x8, scoped, tag = 'scoped memory for tpu_custom_call.1']
    #allocation4 [shape = 's32[2]{0}', space=sflag, size = 0x8, scoped, tag = 'scoped memory for tpu_custom_call.1']
    #allocation5 [shape = 'u8[32768]{0}', space=vmem, size = 0x8000, scoped, tag = 'output window, operand 0']
    %13 = vsyncpa [#allocation3], 0
    %14 = vsyncpa [#allocation4], 0
    %s15 = scalar_lea.sflag [#allocation4], 1
    %16 = vsyncpa %s15, 0
    loop: start=0, step=1, limit=4
    $region2: #{tpu_custom_call.1} parent=1 // loop_pre_header
      _
    $region3: #{tpu_custom_call.1} parent=1 // loop_header
      %s18 = sphi 0, %s22
      %p19 = scmp.ge.s32.totalorder %s18, 4
      %s28 = sphi 0, %s30
      %s31 = sphi 0, %s28
      %s32 = sphi 0, %s31
      %s48 = sphi 0, %s32
      %s52 = sphi 0, %s52
      %s54 = sphi 0, %s52
      %s55 = sphi 0, %s54
      %s69 = sphi 0, %s55
      %s73 = sphi 0, %s73
      %s75 = sphi 0, %s73
      %s76 = sphi 0, %s75
      %s90 = sphi 0, %s76
      %s94 = sphi 0, %s94
      %s96 = sphi 0, %s94
      %s97 = sphi 0, %s96
      %s111 = sphi 0, %s97
      %s115 = sphi 0, %s115
      %s117 = sphi 0, %s115
      %s118 = sphi 0, %s117
      %s132 = sphi 0, %s118
      %s136 = sphi 0, %s136
      %s138 = sphi 0, %s136
      %s139 = sphi 0, %s138
      %s153 = sphi 0, %s139
      %s157 = sphi 0, %s157
      %s159 = sphi 0, %s157
      %s160 = sphi 0, %s159
      %s174 = sphi 0, %s160
      %s178 = sphi 0, %s178
      %s180 = sphi 0, %s178
      %s181 = sphi 0, %s180
      %s195 = sphi 0, %s181
      %s201 = sphi 0, %s203
      %s204 = sphi 0, %s201
      %s205 = sphi 0, %s204
      %s221 = sphi 0, %s205
    $region4: #{tpu_custom_call.1} parent=1 // loop_header_branch
      %21 = sbr.rel (%p19) target = $region8
    $region5: #{tpu_custom_call.1} parent=1 // loop_body
      %s23 = ssub.s32 %s18, 1
      %s24 = ssub.s32 %s18, 2
      %s25 = sadd.s32 %s18, 1
      %s26 = ssub.s32 %s18, %s25
      %p27 = scmp.eq.s32.totalorder %s26, 0
      %s29 = sadd.s32 %s28, 1
      %s30 = scalar_select %p27, %s28, %s29
      %p33 = pneg %p27
      %p34 = scmp.eq.s32.totalorder %s18, 1
      %p35 = por %p33, %p34
      %p36 = scmp.ne.s32.totalorder %s28, %s31
      %p37 = scmp.eq.s32.totalorder %s18, 0
      %p38 = por %p36, %p37
      %p39 = scmp.ne.s32.totalorder %s28, %s31
      %p40 = scmp.eq.s32.totalorder %s23, 1
      %p41 = por %p39, %p40
      %p42 = scmp.ne.s32.totalorder %s31, %s32
      %p43 = scmp.eq.s32.totalorder %s23, 0
      %p44 = por %p42, %p43
      %p45 = scmp.ne.s32.totalorder %s31, %s32
      %p46 = scmp.eq.s32.totalorder %s24, 1
      %p47 = por %p45, %p46
      %p49 = scmp.ne.s32.totalorder %s32, %s48
      %p50 = scmp.eq.s32.totalorder %s24, 0
      %p51 = por %p49, %p50
      %s53 = sadd.s32 %s52, 1
      %p56 = scmp.eq.s32.totalorder %s18, 1
      %p57 = scmp.ne.s32.totalorder %s52, %s54
      %p58 = scmp.eq.s32.totalorder %s18, 0
      %p59 = por %p57, %p58
      %p60 = scmp.ne.s32.totalorder %s52, %s54
      %p61 = scmp.eq.s32.totalorder %s23, 1
      %p62 = por %p60, %p61
      %p63 = scmp.ne.s32.totalorder %s54, %s55
      %p64 = scmp.eq.s32.totalorder %s23, 0
      %p65 = por %p63, %p64
      %p66 = scmp.ne.s32.totalorder %s54, %s55
      %p67 = scmp.eq.s32.totalorder %s24, 1
      %p68 = por %p66, %p67
      %p70 = scmp.ne.s32.totalorder %s55, %s69
      %p71 = scmp.eq.s32.totalorder %s24, 0
      %p72 = por %p70, %p71
      %s74 = sadd.s32 %s73, 1
      %p77 = scmp.eq.s32.totalorder %s18, 1
      %p78 = scmp.ne.s32.totalorder %s73, %s75
      %p79 = scmp.eq.s32.totalorder %s18, 0
      %p80 = por %p78, %p79
      %p81 = scmp.ne.s32.totalorder %s73, %s75
      %p82 = scmp.eq.s32.totalorder %s23, 1
      %p83 = por %p81, %p82
      %p84 = scmp.ne.s32.totalorder %s75, %s76
      %p85 = scmp.eq.s32.totalorder %s23, 0
      %p86 = por %p84, %p85
      %p87 = scmp.ne.s32.totalorder %s75, %s76
      %p88 = scmp.eq.s32.totalorder %s24, 1
      %p89 = por %p87, %p88
      %p91 = scmp.ne.s32.totalorder %s76, %s90
      %p92 = scmp.eq.s32.totalorder %s24, 0
      %p93 = por %p91, %p92
      %s95 = sadd.s32 %s94, 1
      %p98 = scmp.eq.s32.totalorder %s18, 1
      %p99 = scmp.ne.s32.totalorder %s94, %s96
      %p100 = scmp.eq.s32.totalorder %s18, 0
      %p101 = por %p99, %p100
      %p102 = scmp.ne.s32.totalorder %s94, %s96
      %p103 = scmp.eq.s32.totalorder %s23, 1
      %p104 = por %p102, %p103
      %p105 = scmp.ne.s32.totalorder %s96, %s97
      %p106 = scmp.eq.s32.totalorder %s23, 0
      %p107 = por %p105, %p106
      %p108 = scmp.ne.s32.totalorder %s96, %s97
      %p109 = scmp.eq.s32.totalorder %s24, 1
      %p110 = por %p108, %p109
      %p112 = scmp.ne.s32.totalorder %s97, %s111
      %p113 = scmp.eq.s32.totalorder %s24, 0
      %p114 = por %p112, %p113
      %s116 = sadd.s32 %s115, 1
      %p119 = scmp.eq.s32.totalorder %s18, 1
      %p120 = scmp.ne.s32.totalorder %s115, %s117
      %p121 = scmp.eq.s32.totalorder %s18, 0
      %p122 = por %p120, %p121
      %p123 = scmp.ne.s32.totalorder %s115, %s117
      %p124 = scmp.eq.s32.totalorder %s23, 1
      %p125 = por %p123, %p124
      %p126 = scmp.ne.s32.totalorder %s117, %s118
      %p127 = scmp.eq.s32.totalorder %s23, 0
      %p128 = por %p126, %p127
      %p129 = scmp.ne.s32.totalorder %s117, %s118
      %p130 = scmp.eq.s32.totalorder %s24, 1
      %p131 = por %p129, %p130
      %p133 = scmp.ne.s32.totalorder %s118, %s132
      %p134 = scmp.eq.s32.totalorder %s24, 0
      %p135 = por %p133, %p134
      %s137 = sadd.s32 %s136, 1
      %p140 = scmp.eq.s32.totalorder %s18, 1
      %p141 = scmp.ne.s32.totalorder %s136, %s138
      %p142 = scmp.eq.s32.totalorder %s18, 0
      %p143 = por %p141, %p142
      %p144 = scmp.ne.s32.totalorder %s136, %s138
      %p145 = scmp.eq.s32.totalorder %s23, 1
      %p146 = por %p144, %p145
      %p147 = scmp.ne.s32.totalorder %s138, %s139
      %p148 = scmp.eq.s32.totalorder %s23, 0
      %p149 = por %p147, %p148
      %p150 = scmp.ne.s32.totalorder %s138, %s139
      %p151 = scmp.eq.s32.totalorder %s24, 1
      %p152 = por %p150, %p151
      %p154 = scmp.ne.s32.totalorder %s139, %s153
      %p155 = scmp.eq.s32.totalorder %s24, 0
      %p156 = por %p154, %p155
      %s158 = sadd.s32 %s157, 1
      %p161 = scmp.eq.s32.totalorder %s18, 1
      %p162 = scmp.ne.s32.totalorder %s157, %s159
      %p163 = scmp.eq.s32.totalorder %s18, 0
      %p164 = por %p162, %p163
      %p165 = scmp.ne.s32.totalorder %s157, %s159
      %p166 = scmp.eq.s32.totalorder %s23, 1
      %p167 = por %p165, %p166
      %p168 = scmp.ne.s32.totalorder %s159, %s160
      %p169 = scmp.eq.s32.totalorder %s23, 0
      %p170 = por %p168, %p169
      %p171 = scmp.ne.s32.totalorder %s159, %s160
      %p172 = scmp.eq.s32.totalorder %s24, 1
      %p173 = por %p171, %p172
      %p175 = scmp.ne.s32.totalorder %s160, %s174
      %p176 = scmp.eq.s32.totalorder %s24, 0
      %p177 = por %p175, %p176
      %s179 = sadd.s32 %s178, 1
      %p182 = scmp.eq.s32.totalorder %s18, 1
      %p183 = scmp.ne.s32.totalorder %s178, %s180
      %p184 = scmp.eq.s32.totalorder %s18, 0
      %p185 = por %p183, %p184
      %p186 = scmp.ne.s32.totalorder %s178, %s180
      %p187 = scmp.eq.s32.totalorder %s23, 1
      %p188 = por %p186, %p187
      %p189 = scmp.ne.s32.totalorder %s180, %s181
      %p190 = scmp.eq.s32.totalorder %s23, 0
      %p191 = por %p189, %p190
      %p192 = scmp.ne.s32.totalorder %s180, %s181
      %p193 = scmp.eq.s32.totalorder %s24, 1
      %p194 = por %p192, %p193
      %p196 = scmp.ne.s32.totalorder %s181, %s195
      %p197 = scmp.eq.s32.totalorder %s24, 0
      %p198 = por %p196, %p197
      %s199 = ssub.s32 %s18, %s25
      %p200 = scmp.eq.s32.totalorder %s199, 0
      %s202 = sadd.s32 %s201, 1
      %s203 = scalar_select %p200, %s201, %s202
      %p206 = pneg %p200
      %p207 = scmp.eq.s32.totalorder %s18, 1
      %p208 = por %p206, %p207
      %p209 = scmp.ne.s32.totalorder %s201, %s204
      %p210 = scmp.eq.s32.totalorder %s18, 0
      %p211 = por %p209, %p210
      %p212 = scmp.ne.s32.totalorder %s201, %s204
      %p213 = scmp.eq.s32.totalorder %s23, 1
      %p214 = por %p212, %p213
      %p215 = scmp.ne.s32.totalorder %s204, %s205
      %p216 = scmp.eq.s32.totalorder %s23, 0
      %p217 = por %p215, %p216
      %p218 = scmp.ne.s32.totalorder %s204, %s205
      %p219 = scmp.eq.s32.totalorder %s24, 1
      %p220 = por %p218, %p219
      %p222 = scmp.ne.s32.totalorder %s205, %s221
      %p223 = scmp.eq.s32.totalorder %s24, 0
      %p224 = por %p222, %p223
      %p225 = scmp.le.s32.totalorder 1, %s18
      %p226 = scmp.lt.s32.totalorder %s18, 3
      %p227 = pnand %p225, %p226
      %p228 = pneg %p227
      // Predicated region
      $region9: #{tpu_custom_call.1} parent=5 // pred_check
        _
      $region10: #{tpu_custom_call.1} parent=5 // pred_check_branch
        %230 = sbr.rel (%p227) target = $region12
      $region11: #{tpu_custom_call.1} parent=5 // pred_region
        %s231 = ssub.s32 %s18, 1
        // Predicated region
        $region13: #{tpu_custom_call.1} parent=11 // pred_check
          %p232 = pneg %p65
        $region14: #{tpu_custom_call.1} parent=11 // pred_check_branch
          %234 = sbr.rel (%p232) target = $region16
        $region15: #{tpu_custom_call.1} parent=11 // pred_region
          _
        $region16: #{tpu_custom_call.1} parent=11 // pred_fallthru
          _
        // Predicated region
        $region17: #{tpu_custom_call.1} parent=11 // pred_check
          %p235 = pneg %p86
        $region18: #{tpu_custom_call.1} parent=11 // pred_check_branch
          %237 = sbr.rel (%p235) target = $region20
        $region19: #{tpu_custom_call.1} parent=11 // pred_region
          _
        $region20: #{tpu_custom_call.1} parent=11 // pred_fallthru
          _
        // Predicated region
        $region21: #{tpu_custom_call.1} parent=11 // pred_check
          %p238 = pneg %p107
        $region22: #{tpu_custom_call.1} parent=11 // pred_check_branch
          %240 = sbr.rel (%p238) target = $region24
        $region23: #{tpu_custom_call.1} parent=11 // pred_region
          _
        $region24: #{tpu_custom_call.1} parent=11 // pred_fallthru
          _
        // Predicated region
        $region25: #{tpu_custom_call.1} parent=11 // pred_check
          %p241 = pneg %p128
        $region26: #{tpu_custom_call.1} parent=11 // pred_check_branch
          %243 = sbr.rel (%p241) target = $region28
        $region27: #{tpu_custom_call.1} parent=11 // pred_region
          _
        $region28: #{tpu_custom_call.1} parent=11 // pred_fallthru
          _
        // Predicated region
        $region29: #{tpu_custom_call.1} parent=11 // pred_check
          %p244 = pneg %p149
        $region30: #{tpu_custom_call.1} parent=11 // pred_check_branch
          %246 = sbr.rel (%p244) target = $region32
        $region31: #{tpu_custom_call.1} parent=11 // pred_region
          _
        $region32: #{tpu_custom_call.1} parent=11 // pred_fallthru
          _
        // Predicated region
        $region33: #{tpu_custom_call.1} parent=11 // pred_check
          %p247 = pneg %p170
        $region34: #{tpu_custom_call.1} parent=11 // pred_check_branch
          %249 = sbr.rel (%p247) target = $region36
        $region35: #{tpu_custom_call.1} parent=11 // pred_region
          %s251 = ssub.s32 512, 512
          %252 = vsyncadd [#allocation3], %s251
          %s253 = sshll.u32 [#allocation2], 4
          %s254 = int_to_ptr.vmem [resolvable:$true] %s253
          %259 = dma.hbm_to_vmem [thread:$0]  %s6, 512, %s254, [#allocation3], 128, 128, 8
        $region36: #{tpu_custom_call.1} parent=11 // pred_fallthru
          _
        // Predicated region
        $region37: #{tpu_custom_call.1} parent=11 // pred_check
          %p260 = pneg %p191
        $region38: #{tpu_custom_call.1} parent=11 // pred_check_branch
          %262 = sbr.rel (%p260) target = $region40
        $region39: #{tpu_custom_call.1} parent=11 // pred_region
          _
        $region40: #{tpu_custom_call.1} parent=11 // pred_fallthru
          _
      $region12: #{tpu_custom_call.1} parent=5 // pred_fallthru
        _
      %p263 = scmp.lt.s32.totalorder %s18, 2
      // Predicated region
      $region41: #{tpu_custom_call.1} parent=5 // pred_check
        %p264 = pneg %p263
      $region42: #{tpu_custom_call.1} parent=5 // pred_check_branch
        %266 = sbr.rel (%p264) target = $region44
      $region43: #{tpu_custom_call.1} parent=5 // pred_region
        // Predicated region
        $region45: #{tpu_custom_call.1} parent=43 // pred_check
          %p267 = pneg %p38
        $region46: #{tpu_custom_call.1} parent=43 // pred_check_branch
          %269 = sbr.rel (%p267) target = $region48
        $region47: #{tpu_custom_call.1} parent=43 // pred_region
          %p270 = scmp.lt.s32.totalorder %s18, 1
          %s271 = scalar_select %p270, %s18, 1
          %s272 = smul.addr %s271, 4
          %s273 = smul.addr %s272, 8
          %s274 = scalar_lea.vmem %s0, %s273
        $region48: #{tpu_custom_call.1} parent=43 // pred_fallthru
          _
      $region44: #{tpu_custom_call.1} parent=5 // pred_fallthru
        _
      %p275 = scmp.le.s32.totalorder 1, %s18
      %p276 = scmp.lt.s32.totalorder %s18, 3
      %p277 = pnand %p275, %p276
      %p278 = pneg %p277
      // Predicated region
      $region49: #{tpu_custom_call.1} parent=5 // pred_check
        _
      $region50: #{tpu_custom_call.1} parent=5 // pred_check_branch
        %280 = sbr.rel (%p277) target = $region52
      $region51: #{tpu_custom_call.1} parent=5 // pred_region
        %s281 = ssub.s32 %s18, 1
        // Predicated region
        $region53: #{tpu_custom_call.1} parent=51 // pred_check
          %p282 = pneg %p170
        $region54: #{tpu_custom_call.1} parent=51 // pred_check_branch
          %284 = sbr.rel (%p282) target = $region56
        $region55: #{tpu_custom_call.1} parent=51 // pred_region
          %285 = dma.done [#allocation3], 512
        $region56: #{tpu_custom_call.1} parent=51 // pred_fallthru
          _
        %p286 = scmp.lt.s32.totalorder %s23, 1
        %s287 = scalar_select %p286, %s23, 1
        %s288 = smul.addr %s287, 4
        %s289 = smul.addr %s288, 8
        %s290 = scalar_lea.vmem %s0, %s289
        %p291 = pneg %p44
        %p292 = pneg %p41
        %p293 = pneg %p65
        %p294 = pneg %p62
        %p295 = pneg %p86
        %p296 = pneg %p83
        %p297 = pneg %p107
        %p298 = pneg %p104
        %p299 = pneg %p128
        %p300 = pneg %p125
        %p301 = pneg %p149
        %p302 = pneg %p146
        %p303 = pneg %p170
        %p304 = pneg %p167
        %p305 = pneg %p191
        %p306 = pneg %p188
        %p307 = pneg %p217
        %p308 = pneg %p214
        %s309 = sand.u32 %s204, 1
        %s310 = scalar_lea.sflag [#allocation4], %s309
        %s311 = sand.u32 %s204, 1
        %s312 = smul.addr %s311, 32
        %s313 = scalar_lea.vmem [#allocation5], %s312
        %p314 = scmp.lt.s32.totalorder %s23, 1
        %s315 = scalar_select %p314, %s23, 1
        %s316 = smul.addr %s315, 4
        %s317 = smul.addr %s316, 8
        %s318 = scalar_lea.vmem %s0, %s317
        %v319 = vld [vmem:[%s318] sm:$0xff]
        %v320 = vld [vmem:[%s318 + $0x8] sm:$0xff]
        %v321 = vld [vmem:[%s318 + $0x10] sm:$0xff]
        %v322 = vld [vmem:[%s318 + $0x18] sm:$0xff]
        %v323 = vld [vmem:[%s4] sm:$0x3f]
        %vm324 = vcmask 261120
        %v325 = vsel %vm324, %v319, 0.0
        %326 = vadd.xlane.f32.xlu0 %v325
        %v327 = vpop.xlane.xlu0 %326
        %v328 = vsel %vm324, %v320, 0.0
        %329 = vadd.xlane.f32.xlu0 %v328
        %v330 = vpop.xlane.xlu0 %329
        %v331 = vsel %vm324, %v321, 0.0
        %332 = vadd.xlane.f32.xlu0 %v331
        %v333 = vpop.xlane.xlu0 %332
        %v334 = vsel %vm324, %v322, 0.0
        %335 = vadd.xlane.f32.xlu0 %v334
        %v336 = vpop.xlane.xlu0 %335
        %v337 = vrcp.pop 32.0
        %v338 = vmul.f32 %v327, %v337
        %v339 = vmul.f32 %v330, %v337
        %v340 = vmul.f32 %v333, %v337
        %v341 = vmul.f32 %v336, %v337
        %v342 = vsub.f32 %v319, %v338
        %v343 = vsub.f32 %v320, %v339
        %v344 = vsub.f32 %v321, %v340
        %v345 = vsub.f32 %v322, %v341
        %v346 = vmul.f32 %v342, %v342
        %v347 = vmul.f32 %v343, %v343
        %v348 = vmul.f32 %v344, %v344
        %v349 = vmul.f32 %v345, %v345
        %v350 = vsel %vm324, %v346, 0.0
        %351 = vadd.xlane.f32.xlu0 %v350
        %v352 = vpop.xlane.xlu0 %351
        %v353 = vsel %vm324, %v347, 0.0
        %354 = vadd.xlane.f32.xlu0 %v353
        %v355 = vpop.xlane.xlu0 %354
        %v356 = vsel %vm324, %v348, 0.0
        %357 = vadd.xlane.f32.xlu0 %v356
        %v358 = vpop.xlane.xlu0 %357
        %v359 = vsel %vm324, %v349, 0.0
        %360 = vadd.xlane.f32.xlu0 %v359
        %v361 = vpop.xlane.xlu0 %360
        %v362 = vmul.f32 %v352, %v337
        %v363 = vmul.f32 %v355, %v337
        %v364 = vmul.f32 %v358, %v337
        %v365 = vmul.f32 %v361, %v337
        %v366 = vadd.f32 %v362, 1e-05
        %v367 = vadd.f32 %v363, 1e-05
        %v368 = vadd.f32 %v364, 1e-05
        %v369 = vadd.f32 %v365, 1e-05
        %v370 = vrsqrt.pop %v366
        %v371 = vrsqrt.pop %v367
        %v372 = vrsqrt.pop %v368
        %v373 = vrsqrt.pop %v369
        %v374 = vmul.f32 %v342, %v370
        %v375 = vmul.f32 %v343, %v371
        %v376 = vmul.f32 %v344, %v372
        %v377 = vmul.f32 %v345, %v373
        %v378 = vlaneseq
        %v379 = vshrl.u32 %v378, 7
        %v380 = vsub.s32 0, %v379
        %v381 = vrot.slane %v323, %v380
        %v382 = vmul.f32 %v374, %v381
        %v383 = vmul.f32 %v375, %v381
        %v384 = vmul.f32 %v376, %v381
        %v385 = vmul.f32 %v377, %v381
        %v386 = vlaneseq
        %v387 = vshrl.u32 %v386, 7
        %v388 = vsub.s32 1, %v387
        %v389 = vrot.slane %v323, %v388
        %v390 = vadd.f32 %v382, %v389
        %v391 = vadd.f32 %v383, %v389
        %v392 = vadd.f32 %v384, %v389
        %v393 = vadd.f32 %v385, %v389
        %v394 = vld [vmem:[%s2] sm:$0xff]
        %v395 = vld [vmem:[%s2 + $0x8] sm:$0xff]
        %v396 = vld [vmem:[%s2 + $0x10] sm:$0xff]
        %v397 = vld [vmem:[%s2 + $0x18] sm:$0xff]
        %v399 = vsel %vm324, %v390, 0
        %v402 = vsel %vm324, %v391, 0
        %v405 = vsel %vm324, %v392, 0
        %v408 = vsel %vm324, %v393, 0
        %410 = vmatprep.subr.mxu0 0.0
        %411 = vmatpush1.msra.mxu0 %v394
        %412 = vmatprep.subr.mxu0 0.0
        %413 = vmatpush1.msra.mxu0 %v395
        %414 = vmatprep.subr.mxu0 0.0
        %415 = vmatpush1.msra.mxu0 %v396
        %416 = vmatprep.subr.mxu0 0.0
        %417 = vmatpush1.msra.mxu0 %v397
        %418 = vmatprep.subr.mxu0 0.0
        %419 = vmatpush1.msra.mxu0 0.0
        %420 = vmatprep.subr.mxu0 0.0
        %421 = vmatpush1.msra.mxu0 0.0
        %422 = vmatprep.subr.mxu0 0.0
        %423 = vmatpush1.msra.mxu0 0.0
        %424 = vmatprep.subr.mxu0 0.0
        %425 = vmatpush1.msra.mxu0 0.0
        %426 = vmatprep.subr.mxu0 0.0
        %427 = vmatpush1.msra.mxu0 0.0
        %428 = vmatprep.subr.mxu0 0.0
        %429 = vmatpush1.msra.mxu0 0.0
        %430 = vmatprep.subr.mxu0 0.0
        %431 = vmatpush1.msra.mxu0 0.0
        %432 = vmatprep.subr.mxu0 0.0
        %433 = vmatpush1.msra.mxu0 0.0
        %434 = vmatprep.subr.mxu0 0.0
        %435 = vmatpush1.msra.mxu0 0.0
        %436 = vmatprep.subr.mxu0 0.0
        %437 = vmatpush1.msra.mxu0 0.0
        %438 = vmatprep.subr.mxu0 0.0
        %439 = vmatpush1.msra.mxu0 0.0
        %440 = vmatprep.subr.mxu0 0.0
        %441 = vmatpush1.msra.mxu0 0.0
        %442 = vmatprep.subr.mxu0 0.0
        %443 = vmatpush1.msra.mxu0 0.0
        %444 = vmatprep.subr.mxu0 0.0
        %445 = vmatpush1.msra.mxu0 0.0
        %446 = vmatprep.subr.mxu0 0.0
        %447 = vmatpush1.msra.mxu0 0.0
        %448 = vmatprep.subr.mxu0 0.0
        %449 = vmatpush1.msra.mxu0 0.0
        %450 = vmatprep.subr.mxu0 0.0
        %451 = vmatpush1.msra.mxu0 0.0
        %452 = vmatprep.subr.mxu0 0.0
        %453 = vmatpush1.msra.mxu0 0.0
        %454 = vmatprep.subr.mxu0 0.0
        %455 = vmatpush1.msra.mxu0 0.0
        %456 = vmatprep.subr.mxu0 0.0
        %457 = vmatpush1.msra.mxu0 0.0
        %458 = vmatprep.subr.mxu0 0.0
        %459 = vmatpush1.msra.mxu0 0.0
        %460 = vmatprep.subr.mxu0 0.0
        %461 = vmatpush1.msra.mxu0 0.0
        %462 = vmatprep.subr.mxu0 0.0
        %463 = vmatpush1.msra.mxu0 0.0
        %464 = vmatprep.subr.mxu0 0.0
        %465 = vmatpush1.msra.mxu0 0.0
        %466 = vmatprep.subr.mxu0 0.0
        %467 = vmatpush1.msra.mxu0 0.0
        %468 = vmatprep.subr.mxu0 0.0
        %469 = vmatpush1.msra.mxu0 0.0
        %470 = vmatprep.subr.mxu0 0.0
        %471 = vmatpush1.msra.mxu0 0.0
        %472 = vmatprep.subr.mxu0 0.0
        %473 = vmatpush1.msra.mxu0 0.0
        %474 = vmatprep.mubr.f32.mxu0 0.0
        %475 = vmatmul.mubr.f32.gmra.mrb[0].mxu0 %v399
        %v476 = vpop.f32.mrb[0].mxu0
        %v477 = vadd.f32 0.0, %v476
        %v478 = vpop.f32.mrb[0].mxu0
        %479 = vmatprep.mubr.f32.mxu0 0.0
        %480 = vmatmul.mubr.f32.gmra.mrb[0].mxu0 %v402
        %v481 = vpop.f32.mrb[0].mxu0
        %v482 = vadd.f32 0.0, %v481
        %v483 = vpop.f32.mrb[0].mxu0
        %484 = vmatprep.mubr.f32.mxu0 0.0
        %485 = vmatmul.mubr.f32.gmra.mrb[0].mxu0 %v405
        %v486 = vpop.f32.mrb[0].mxu0
        %v487 = vadd.f32 0.0, %v486
        %v488 = vpop.f32.mrb[0].mxu0
        %489 = vmatprep.mubr.f32.mxu0 0.0
        %490 = vmatmul.mubr.f32.gmra.mrb[0].mxu0 %v408
        %v491 = vpop.f32.mrb[0].mxu0
        %v492 = vadd.f32 0.0, %v491
        %v493 = vpop.f32.mrb[0].mxu0
        %494 = vdwg.mxu0
        %499 = vrot.lane.b32.xlu0 %v477, 120
        %v500 = vpop.permute.xlu0 %499
        %501 = vrot.lane.b32.xlu0 %v482, 120
        %v502 = vpop.permute.xlu0 %501
        %503 = vrot.lane.b32.xlu0 %v487, 120
        %v504 = vpop.permute.xlu0 %503
        %505 = vrot.lane.b32.xlu0 %v492, 120
        %v506 = vpop.permute.xlu0 %505
        %507 = vrot.lane.b32.xlu0 %v477, 112
        %v508 = vpop.permute.xlu0 %507
        %509 = vrot.lane.b32.xlu0 %v482, 112
        %v510 = vpop.permute.xlu0 %509
        %511 = vrot.lane.b32.xlu0 %v487, 112
        %v512 = vpop.permute.xlu0 %511
        %513 = vrot.lane.b32.xlu0 %v492, 112
        %v514 = vpop.permute.xlu0 %513
        %515 = vrot.lane.b32.xlu0 %v477, 104
        %v516 = vpop.permute.xlu0 %515
        %517 = vrot.lane.b32.xlu0 %v482, 104
        %v518 = vpop.permute.xlu0 %517
        %519 = vrot.lane.b32.xlu0 %v487, 104
        %v520 = vpop.permute.xlu0 %519
        %521 = vrot.lane.b32.xlu0 %v492, 104
        %v522 = vpop.permute.xlu0 %521
        %v523 = vld [vmem:[%s1] sm:$0xff]
        %v524 = vld [vmem:[%s1 + $0x8] sm:$0xff]
        %v525 = vld [vmem:[%s1 + $0x10] sm:$0xff]
        %v526 = vld [vmem:[%s1 + $0x18] sm:$0xff]
        %527 = vrot.lane.b32.xlu0 %v477, 96
        %v528 = vpop.permute.xlu0 %527
        %vm529 = vcmask 64512
        %v530 = vsel %vm529, %v477, 0
        %v532 = vsel %vm529, %v528, 0
        %534 = vmatprep.subr.mxu0 0.0
        %535 = vmatpush1.xpose.msra.mxu0 %v532
        %536 = vmatprep.subr.mxu0 0.0
        %537 = vmatpush1.xpose.msra.mxu0 0.0
        %538 = vmatprep.subr.mxu0 0.0
        %539 = vmatpush1.xpose.msra.mxu0 0.0
        %540 = vmatprep.subr.mxu0 0.0
        %541 = vmatpush1.xpose.msra.mxu0 0.0
        %542 = vmatprep.subr.mxu0 0.0
        %543 = vmatpush1.xpose.msra.mxu0 0.0
        %544 = vmatprep.subr.mxu0 0.0
        %545 = vmatpush1.xpose.msra.mxu0 0.0
        %546 = vmatprep.subr.mxu0 0.0
        %547 = vmatpush1.xpose.msra.mxu0 0.0
        %548 = vmatprep.subr.mxu0 0.0
        %549 = vmatpush1.xpose.msra.mxu0 0.0
        %550 = vmatprep.subr.mxu0 0.0
        %551 = vmatpush1.xpose.msra.mxu0 0.0
        %552 = vmatprep.subr.mxu0 0.0
        %553 = vmatpush1.xpose.msra.mxu0 0.0
        %554 = vmatprep.subr.mxu0 0.0
        %555 = vmatpush1.xpose.msra.mxu0 0.0
        %556 = vmatprep.subr.mxu0 0.0
        %557 = vmatpush1.xpose.msra.mxu0 0.0
        %558 = vmatprep.subr.mxu0 0.0
        %559 = vmatpush1.xpose.msra.mxu0 0.0
        %560 = vmatprep.subr.mxu0 0.0
        %561 = vmatpush1.xpose.msra.mxu0 0.0
        %562 = vmatprep.subr.mxu0 0.0
        %563 = vmatpush1.xpose.msra.mxu0 0.0
        %564 = vmatprep.subr.mxu0 0.0
        %565 = vmatpush1.xpose.msra.mxu0 0.0
        %566 = vmatprep.subr.mxu0 0.0
        %567 = vmatpush1.xpose.msra.mxu0 0.0
        %568 = vmatprep.subr.mxu0 0.0
        %569 = vmatpush1.xpose.msra.mxu0 0.0
        %570 = vmatprep.subr.mxu0 0.0
        %571 = vmatpush1.xpose.msra.mxu0 0.0
        %572 = vmatprep.subr.mxu0 0.0
        %573 = vmatpush1.xpose.msra.mxu0 0.0
        %574 = vmatprep.subr.mxu0 0.0
        %575 = vmatpush1.xpose.msra.mxu0 0.0
        %576 = vmatprep.subr.mxu0 0.0
        %577 = vmatpush1.xpose.msra.mxu0 0.0
        %578 = vmatprep.subr.mxu0 0.0
        %579 = vmatpush1.xpose.msra.mxu0 0.0
        %580 = vmatprep.subr.mxu0 0.0
        %581 = vmatpush1.xpose.msra.mxu0 0.0
        %582 = vmatprep.subr.mxu0 0.0
        %583 = vmatpush1.xpose.msra.mxu0 0.0
        %584 = vmatprep.subr.mxu0 0.0
        %585 = vmatpush1.xpose.msra.mxu0 0.0
        %586 = vmatprep.subr.mxu0 0.0
        %587 = vmatpush1.xpose.msra.mxu0 0.0
        %588 = vmatprep.subr.mxu0 0.0
        %589 = vmatpush1.xpose.msra.mxu0 0.0
        %590 = vmatprep.subr.mxu0 0.0
        %591 = vmatpush1.xpose.msra.mxu0 0.0
        %592 = vmatprep.subr.mxu0 0.0
        %593 = vmatpush1.xpose.msra.mxu0 0.0
        %594 = vmatprep.subr.mxu0 0.0
        %595 = vmatpush1.xpose.msra.mxu0 0.0
        %596 = vmatprep.subr.mxu0 0.0
        %597 = vmatpush1.xpose.msra.mxu0 0.0
        %598 = vmatprep.mubr.f32.mxu0 0.0
        %599 = vmatmul.mubr.f32.gmra.mrb[0].mxu0 %v530
        %v600 = vpop.f32.mrb[0].mxu0
        %v601 = vadd.f32 0.0, %v600
        %v602 = vpop.f32.mrb[0].mxu0
        %603 = vdwg.mxu0
        %604 = vrot.lane.b32.xlu0 %v482, 96
        %v605 = vpop.permute.xlu0 %604
        %v606 = vsel %vm529, %v482, 0
        %v608 = vsel %vm529, %v605, 0
        %610 = vmatprep.subr.mxu0 0.0
        %611 = vmatpush1.xpose.msra.mxu0 %v608
        %612 = vmatprep.subr.mxu0 0.0
        %613 = vmatpush1.xpose.msra.mxu0 0.0
        %614 = vmatprep.subr.mxu0 0.0
        %615 = vmatpush1.xpose.msra.mxu0 0.0
        %616 = vmatprep.subr.mxu0 0.0
        %617 = vmatpush1.xpose.msra.mxu0 0.0
        %618 = vmatprep.subr.mxu0 0.0
        %619 = vmatpush1.xpose.msra.mxu0 0.0
        %620 = vmatprep.subr.mxu0 0.0
        %621 = vmatpush1.xpose.msra.mxu0 0.0
        %622 = vmatprep.subr.mxu0 0.0
        %623 = vmatpush1.xpose.msra.mxu0 0.0
        %624 = vmatprep.subr.mxu0 0.0
        %625 = vmatpush1.xpose.msra.mxu0 0.0
        %626 = vmatprep.subr.mxu0 0.0
        %627 = vmatpush1.xpose.msra.mxu0 0.0
        %628 = vmatprep.subr.mxu0 0.0
        %629 = vmatpush1.xpose.msra.mxu0 0.0
        %630 = vmatprep.subr.mxu0 0.0
        %631 = vmatpush1.xpose.msra.mxu0 0.0
        %632 = vmatprep.subr.mxu0 0.0
        %633 = vmatpush1.xpose.msra.mxu0 0.0
        %634 = vmatprep.subr.mxu0 0.0
        %635 = vmatpush1.xpose.msra.mxu0 0.0
        %636 = vmatprep.subr.mxu0 0.0
        %637 = vmatpush1.xpose.msra.mxu0 0.0
        %638 = vmatprep.subr.mxu0 0.0
        %639 = vmatpush1.xpose.msra.mxu0 0.0
        %640 = vmatprep.subr.mxu0 0.0
        %641 = vmatpush1.xpose.msra.mxu0 0.0
        %642 = vmatprep.subr.mxu0 0.0
        %643 = vmatpush1.xpose.msra.mxu0 0.0
        %644 = vmatprep.subr.mxu0 0.0
        %645 = vmatpush1.xpose.msra.mxu0 0.0
        %646 = vmatprep.subr.mxu0 0.0
        %647 = vmatpush1.xpose.msra.mxu0 0.0
        %648 = vmatprep.subr.mxu0 0.0
        %649 = vmatpush1.xpose.msra.mxu0 0.0
        %650 = vmatprep.subr.mxu0 0.0
        %651 = vmatpush1.xpose.msra.mxu0 0.0
        %652 = vmatprep.subr.mxu0 0.0
        %653 = vmatpush1.xpose.msra.mxu0 0.0
        %654 = vmatprep.subr.mxu0 0.0
        %655 = vmatpush1.xpose.msra.mxu0 0.0
        %656 = vmatprep.subr.mxu0 0.0
        %657 = vmatpush1.xpose.msra.mxu0 0.0
        %658 = vmatprep.subr.mxu0 0.0
        %659 = vmatpush1.xpose.msra.mxu0 0.0
        %660 = vmatprep.subr.mxu0 0.0
        %661 = vmatpush1.xpose.msra.mxu0 0.0
        %662 = vmatprep.subr.mxu0 0.0
        %663 = vmatpush1.xpose.msra.mxu0 0.0
        %664 = vmatprep.subr.mxu0 0.0
        %665 = vmatpush1.xpose.msra.mxu0 0.0
        %666 = vmatprep.subr.mxu0 0.0
        %667 = vmatpush1.xpose.msra.mxu0 0.0
        %668 = vmatprep.subr.mxu0 0.0
        %669 = vmatpush1.xpose.msra.mxu0 0.0
        %670 = vmatprep.subr.mxu0 0.0
        %671 = vmatpush1.xpose.msra.mxu0 0.0
        %672 = vmatprep.subr.mxu0 0.0
        %673 = vmatpush1.xpose.msra.mxu0 0.0
        %674 = vmatprep.mubr.f32.mxu0 0.0
        %675 = vmatmul.mubr.f32.gmra.mrb[0].mxu0 %v606
        %v676 = vpop.f32.mrb[0].mxu0
        %v677 = vadd.f32 0.0, %v676
        %v678 = vpop.f32.mrb[0].mxu0
        %679 = vdwg.mxu0
        %680 = vrot.lane.b32.xlu0 %v487, 96
        %v681 = vpop.permute.xlu0 %680
        %v682 = vsel %vm529, %v487, 0
        %v684 = vsel %vm529, %v681, 0
        %686 = vmatprep.subr.mxu0 0.0
        %687 = vmatpush1.xpose.msra.mxu0 %v684
        %688 = vmatprep.subr.mxu0 0.0
        %689 = vmatpush1.xpose.msra.mxu0 0.0
        %690 = vmatprep.subr.mxu0 0.0
        %691 = vmatpush1.xpose.msra.mxu0 0.0
        %692 = vmatprep.subr.mxu0 0.0
        %693 = vmatpush1.xpose.msra.mxu0 0.0
        %694 = vmatprep.subr.mxu0 0.0
        %695 = vmatpush1.xpose.msra.mxu0 0.0
        %696 = vmatprep.subr.mxu0 0.0
        %697 = vmatpush1.xpose.msra.mxu0 0.0
        %698 = vmatprep.subr.mxu0 0.0
        %699 = vmatpush1.xpose.msra.mxu0 0.0
        %700 = vmatprep.subr.mxu0 0.0
        %701 = vmatpush1.xpose.msra.mxu0 0.0
        %702 = vmatprep.subr.mxu0 0.0
        %703 = vmatpush1.xpose.msra.mxu0 0.0
        %704 = vmatprep.subr.mxu0 0.0
        %705 = vmatpush1.xpose.msra.mxu0 0.0
        %706 = vmatprep.subr.mxu0 0.0
        %707 = vmatpush1.xpose.msra.mxu0 0.0
        %708 = vmatprep.subr.mxu0 0.0
        %709 = vmatpush1.xpose.msra.mxu0 0.0
        %710 = vmatprep.subr.mxu0 0.0
        %711 = vmatpush1.xpose.msra.mxu0 0.0
        %712 = vmatprep.subr.mxu0 0.0
        %713 = vmatpush1.xpose.msra.mxu0 0.0
        %714 = vmatprep.subr.mxu0 0.0
        %715 = vmatpush1.xpose.msra.mxu0 0.0
        %716 = vmatprep.subr.mxu0 0.0
        %717 = vmatpush1.xpose.msra.mxu0 0.0
        %718 = vmatprep.subr.mxu0 0.0
        %719 = vmatpush1.xpose.msra.mxu0 0.0
        %720 = vmatprep.subr.mxu0 0.0
        %721 = vmatpush1.xpose.msra.mxu0 0.0
        %722 = vmatprep.subr.mxu0 0.0
        %723 = vmatpush1.xpose.msra.mxu0 0.0
        %724 = vmatprep.subr.mxu0 0.0
        %725 = vmatpush1.xpose.msra.mxu0 0.0
        %726 = vmatprep.subr.mxu0 0.0
        %727 = vmatpush1.xpose.msra.mxu0 0.0
        %728 = vmatprep.subr.mxu0 0.0
        %729 = vmatpush1.xpose.msra.mxu0 0.0
        %730 = vmatprep.subr.mxu0 0.0
        %731 = vmatpush1.xpose.msra.mxu0 0.0
        %732 = vmatprep.subr.mxu0 0.0
        %733 = vmatpush1.xpose.msra.mxu0 0.0
        %734 = vmatprep.subr.mxu0 0.0
        %735 = vmatpush1.xpose.msra.mxu0 0.0
        %736 = vmatprep.subr.mxu0 0.0
        %737 = vmatpush1.xpose.msra.mxu0 0.0
        %738 = vmatprep.subr.mxu0 0.0
        %739 = vmatpush1.xpose.msra.mxu0 0.0
        %740 = vmatprep.subr.mxu0 0.0
        %741 = vmatpush1.xpose.msra.mxu0 0.0
        %742 = vmatprep.subr.mxu0 0.0
        %743 = vmatpush1.xpose.msra.mxu0 0.0
        %744 = vmatprep.subr.mxu0 0.0
        %745 = vmatpush1.xpose.msra.mxu0 0.0
        %746 = vmatprep.subr.mxu0 0.0
        %747 = vmatpush1.xpose.msra.mxu0 0.0
        %748 = vmatprep.subr.mxu0 0.0
        %749 = vmatpush1.xpose.msra.mxu0 0.0
        %750 = vmatprep.mubr.f32.mxu0 0.0
        %751 = vmatmul.mubr.f32.gmra.mrb[0].mxu0 %v682
        %v752 = vpop.f32.mrb[0].mxu0
        %v753 = vadd.f32 0.0, %v752
        %v754 = vpop.f32.mrb[0].mxu0
        %755 = vdwg.mxu0
        %756 = vrot.lane.b32.xlu0 %v492, 96
        %v757 = vpop.permute.xlu0 %756
        %v758 = vsel %vm529, %v492, 0
        %v760 = vsel %vm529, %v757, 0
        %762 = vmatprep.subr.mxu0 0.0
        %763 = vmatpush1.xpose.msra.mxu0 %v760
        %764 = vmatprep.subr.mxu0 0.0
        %765 = vmatpush1.xpose.msra.mxu0 0.0
        %766 = vmatprep.subr.mxu0 0.0
        %767 = vmatpush1.xpose.msra.mxu0 0.0
        %768 = vmatprep.subr.mxu0 0.0
        %769 = vmatpush1.xpose.msra.mxu0 0.0
        %770 = vmatprep.subr.mxu0 0.0
        %771 = vmatpush1.xpose.msra.mxu0 0.0
        %772 = vmatprep.subr.mxu0 0.0
        %773 = vmatpush1.xpose.msra.mxu0 0.0
        %774 = vmatprep.subr.mxu0 0.0
        %775 = vmatpush1.xpose.msra.mxu0 0.0
        %776 = vmatprep.subr.mxu0 0.0
        %777 = vmatpush1.xpose.msra.mxu0 0.0
        %778 = vmatprep.subr.mxu0 0.0
        %779 = vmatpush1.xpose.msra.mxu0 0.0
        %780 = vmatprep.subr.mxu0 0.0
        %781 = vmatpush1.xpose.msra.mxu0 0.0
        %782 = vmatprep.subr.mxu0 0.0
        %783 = vmatpush1.xpose.msra.mxu0 0.0
        %784 = vmatprep.subr.mxu0 0.0
        %785 = vmatpush1.xpose.msra.mxu0 0.0
        %786 = vmatprep.subr.mxu0 0.0
        %787 = vmatpush1.xpose.msra.mxu0 0.0
        %788 = vmatprep.subr.mxu0 0.0
        %789 = vmatpush1.xpose.msra.mxu0 0.0
        %790 = vmatprep.subr.mxu0 0.0
        %791 = vmatpush1.xpose.msra.mxu0 0.0
        %792 = vmatprep.subr.mxu0 0.0
        %793 = vmatpush1.xpose.msra.mxu0 0.0
        %794 = vmatprep.subr.mxu0 0.0
        %795 = vmatpush1.xpose.msra.mxu0 0.0
        %796 = vmatprep.subr.mxu0 0.0
        %797 = vmatpush1.xpose.msra.mxu0 0.0
        %798 = vmatprep.subr.mxu0 0.0
        %799 = vmatpush1.xpose.msra.mxu0 0.0
        %800 = vmatprep.subr.mxu0 0.0
        %801 = vmatpush1.xpose.msra.mxu0 0.0
        %802 = vmatprep.subr.mxu0 0.0
        %803 = vmatpush1.xpose.msra.mxu0 0.0
        %804 = vmatprep.subr.mxu0 0.0
        %805 = vmatpush1.xpose.msra.mxu0 0.0
        %806 = vmatprep.subr.mxu0 0.0
        %807 = vmatpush1.xpose.msra.mxu0 0.0
        %808 = vmatprep.subr.mxu0 0.0
        %809 = vmatpush1.xpose.msra.mxu0 0.0
        %810 = vmatprep.subr.mxu0 0.0
        %811 = vmatpush1.xpose.msra.mxu0 0.0
        %812 = vmatprep.subr.mxu0 0.0
        %813 = vmatpush1.xpose.msra.mxu0 0.0
        %814 = vmatprep.subr.mxu0 0.0
        %815 = vmatpush1.xpose.msra.mxu0 0.0
        %816 = vmatprep.subr.mxu0 0.0
        %817 = vmatpush1.xpose.msra.mxu0 0.0
        %818 = vmatprep.subr.mxu0 0.0
        %819 = vmatpush1.xpose.msra.mxu0 0.0
        %820 = vmatprep.subr.mxu0 0.0
        %821 = vmatpush1.xpose.msra.mxu0 0.0
        %822 = vmatprep.subr.mxu0 0.0
        %823 = vmatpush1.xpose.msra.mxu0 0.0
        %824 = vmatprep.subr.mxu0 0.0
        %825 = vmatpush1.xpose.msra.mxu0 0.0
        %826 = vmatprep.mubr.f32.mxu0 0.0
        %827 = vmatmul.mubr.f32.gmra.mrb[0].mxu0 %v758
        %v828 = vpop.f32.mrb[0].mxu0
        %v829 = vadd.f32 0.0, %v828
        %v830 = vpop.f32.mrb[0].mxu0
        %831 = vdwg.mxu0
        %832 = vrot.lane.b32.xlu0 %v500, 96
        %v833 = vpop.permute.xlu0 %832
        %v834 = vsel %vm529, %v500, 0
        %v836 = vsel %vm529, %v833, 0
        %838 = vmatprep.subr.mxu0 0.0
        %839 = vmatpush1.xpose.msra.mxu0 %v836
        %840 = vmatprep.subr.mxu0 0.0
        %841 = vmatpush1.xpose.msra.mxu0 0.0
        %842 = vmatprep.subr.mxu0 0.0
        %843 = vmatpush1.xpose.msra.mxu0 0.0
        %844 = vmatprep.subr.mxu0 0.0
        %845 = vmatpush1.xpose.msra.mxu0 0.0
        %846 = vmatprep.subr.mxu0 0.0
        %847 = vmatpush1.xpose.msra.mxu0 0.0
        %848 = vmatprep.subr.mxu0 0.0
        %849 = vmatpush1.xpose.msra.mxu0 0.0
        %850 = vmatprep.subr.mxu0 0.0
        %851 = vmatpush1.xpose.msra.mxu0 0.0
        %852 = vmatprep.subr.mxu0 0.0
        %853 = vmatpush1.xpose.msra.mxu0 0.0
        %854 = vmatprep.subr.mxu0 0.0
        %855 = vmatpush1.xpose.msra.mxu0 0.0
        %856 = vmatprep.subr.mxu0 0.0
        %857 = vmatpush1.xpose.msra.mxu0 0.0
        %858 = vmatprep.subr.mxu0 0.0
        %859 = vmatpush1.xpose.msra.mxu0 0.0
        %860 = vmatprep.subr.mxu0 0.0
        %861 = vmatpush1.xpose.msra.mxu0 0.0
        %862 = vmatprep.subr.mxu0 0.0
        %863 = vmatpush1.xpose.msra.mxu0 0.0
        %864 = vmatprep.subr.mxu0 0.0
        %865 = vmatpush1.xpose.msra.mxu0 0.0
        %866 = vmatprep.subr.mxu0 0.0
        %867 = vmatpush1.xpose.msra.mxu0 0.0
        %868 = vmatprep.subr.mxu0 0.0
        %869 = vmatpush1.xpose.msra.mxu0 0.0
        %870 = vmatprep.subr.mxu0 0.0
        %871 = vmatpush1.xpose.msra.mxu0 0.0
        %872 = vmatprep.subr.mxu0 0.0
        %873 = vmatpush1.xpose.msra.mxu0 0.0
        %874 = vmatprep.subr.mxu0 0.0
        %875 = vmatpush1.xpose.msra.mxu0 0.0
        %876 = vmatprep.subr.mxu0 0.0
        %877 = vmatpush1.xpose.msra.mxu0 0.0
        %878 = vmatprep.subr.mxu0 0.0
        %879 = vmatpush1.xpose.msra.mxu0 0.0
        %880 = vmatprep.subr.mxu0 0.0
        %881 = vmatpush1.xpose.msra.mxu0 0.0
        %882 = vmatprep.subr.mxu0 0.0
        %883 = vmatpush1.xpose.msra.mxu0 0.0
        %884 = vmatprep.subr.mxu0 0.0
        %885 = vmatpush1.xpose.msra.mxu0 0.0
        %886 = vmatprep.subr.mxu0 0.0
        %887 = vmatpush1.xpose.msra.mxu0 0.0
        %888 = vmatprep.subr.mxu0 0.0
        %889 = vmatpush1.xpose.msra.mxu0 0.0
        %890 = vmatprep.subr.mxu0 0.0
        %891 = vmatpush1.xpose.msra.mxu0 0.0
        %892 = vmatprep.subr.mxu0 0.0
        %893 = vmatpush1.xpose.msra.mxu0 0.0
        %894 = vmatprep.subr.mxu0 0.0
        %895 = vmatpush1.xpose.msra.mxu0 0.0
        %896 = vmatprep.subr.mxu0 0.0
        %897 = vmatpush1.xpose.msra.mxu0 0.0
        %898 = vmatprep.subr.mxu0 0.0
        %899 = vmatpush1.xpose.msra.mxu0 0.0
        %900 = vmatprep.subr.mxu0 0.0
        %901 = vmatpush1.xpose.msra.mxu0 0.0
        %902 = vmatprep.mubr.f32.mxu0 0.0
        %903 = vmatmul.mubr.f32.gmra.mrb[0].mxu0 %v834
        %v904 = vpop.f32.mrb[0].mxu0
        %v905 = vadd.f32 0.0, %v904
        %v906 = vpop.f32.mrb[0].mxu0
        %907 = vdwg.mxu0
        %908 = vrot.lane.b32.xlu0 %v502, 96
        %v909 = vpop.permute.xlu0 %908
        %v910 = vsel %vm529, %v502, 0
        %v912 = vsel %vm529, %v909, 0
        %914 = vmatprep.subr.mxu0 0.0
        %915 = vmatpush1.xpose.msra.mxu0 %v912
        %916 = vmatprep.subr.mxu0 0.0
        %917 = vmatpush1.xpose.msra.mxu0 0.0
        %918 = vmatprep.subr.mxu0 0.0
        %919 = vmatpush1.xpose.msra.mxu0 0.0
        %920 = vmatprep.subr.mxu0 0.0
        %921 = vmatpush1.xpose.msra.mxu0 0.0
        %922 = vmatprep.subr.mxu0 0.0
        %923 = vmatpush1.xpose.msra.mxu0 0.0
        %924 = vmatprep.subr.mxu0 0.0
        %925 = vmatpush1.xpose.msra.mxu0 0.0
        %926 = vmatprep.subr.mxu0 0.0
        %927 = vmatpush1.xpose.msra.mxu0 0.0
        %928 = vmatprep.subr.mxu0 0.0
        %929 = vmatpush1.xpose.msra.mxu0 0.0
        %930 = vmatprep.subr.mxu0 0.0
        %931 = vmatpush1.xpose.msra.mxu0 0.0
        %932 = vmatprep.subr.mxu0 0.0
        %933 = vmatpush1.xpose.msra.mxu0 0.0
        %934 = vmatprep.subr.mxu0 0.0
        %935 = vmatpush1.xpose.msra.mxu0 0.0
        %936 = vmatprep.subr.mxu0 0.0
        %937 = vmatpush1.xpose.msra.mxu0 0.0
        %938 = vmatprep.subr.mxu0 0.0
        %939 = vmatpush1.xpose.msra.mxu0 0.0
        %940 = vmatprep.subr.mxu0 0.0
        %941 = vmatpush1.xpose.msra.mxu0 0.0
        %942 = vmatprep.subr.mxu0 0.0
        %943 = vmatpush1.xpose.msra.mxu0 0.0
        %944 = vmatprep.subr.mxu0 0.0
        %945 = vmatpush1.xpose.msra.mxu0 0.0
        %946 = vmatprep.subr.mxu0 0.0
        %947 = vmatpush1.xpose.msra.mxu0 0.0
        %948 = vmatprep.subr.mxu0 0.0
        %949 = vmatpush1.xpose.msra.mxu0 0.0
        %950 = vmatprep.subr.mxu0 0.0
        %951 = vmatpush1.xpose.msra.mxu0 0.0
        %952 = vmatprep.subr.mxu0 0.0
        %953 = vmatpush1.xpose.msra.mxu0 0.0
        %954 = vmatprep.subr.mxu0 0.0
        %955 = vmatpush1.xpose.msra.mxu0 0.0
        %956 = vmatprep.subr.mxu0 0.0
        %957 = vmatpush1.xpose.msra.mxu0 0.0
        %958 = vmatprep.subr.mxu0 0.0
        %959 = vmatpush1.xpose.msra.mxu0 0.0
        %960 = vmatprep.subr.mxu0 0.0
        %961 = vmatpush1.xpose.msra.mxu0 0.0
        %962 = vmatprep.subr.mxu0 0.0
        %963 = vmatpush1.xpose.msra.mxu0 0.0
        %964 = vmatprep.subr.mxu0 0.0
        %965 = vmatpush1.xpose.msra.mxu0 0.0
        %966 = vmatprep.subr.mxu0 0.0
        %967 = vmatpush1.xpose.msra.mxu0 0.0
        %968 = vmatprep.subr.mxu0 0.0
        %969 = vmatpush1.xpose.msra.mxu0 0.0
        %970 = vmatprep.subr.mxu0 0.0
        %971 = vmatpush1.xpose.msra.mxu0 0.0
        %972 = vmatprep.subr.mxu0 0.0
        %973 = vmatpush1.xpose.msra.mxu0 0.0
        %974 = vmatprep.subr.mxu0 0.0
        %975 = vmatpush1.xpose.msra.mxu0 0.0
        %976 = vmatprep.subr.mxu0 0.0
        %977 = vmatpush1.xpose.msra.mxu0 0.0
        %978 = vmatprep.mubr.f32.mxu0 0.0
        %979 = vmatmul.mubr.f32.gmra.mrb[0].mxu0 %v910
        %v980 = vpop.f32.mrb[0].mxu0
        %v981 = vadd.f32 0.0, %v980
        %v982 = vpop.f32.mrb[0].mxu0
        %983 = vdwg.mxu0
        %984 = vrot.lane.b32.xlu0 %v504, 96
        %v985 = vpop.permute.xlu0 %984
        %v986 = vsel %vm529, %v504, 0
        %v988 = vsel %vm529, %v985, 0
        %990 = vmatprep.subr.mxu0 0.0
        %991 = vmatpush1.xpose.msra.mxu0 %v988
        %992 = vmatprep.subr.mxu0 0.0
        %993 = vmatpush1.xpose.msra.mxu0 0.0
        %994 = vmatprep.subr.mxu0 0.0
        %995 = vmatpush1.xpose.msra.mxu0 0.0
        %996 = vmatprep.subr.mxu0 0.0
        %997 = vmatpush1.xpose.msra.mxu0 0.0
        %998 = vmatprep.subr.mxu0 0.0
        %999 = vmatpush1.xpose.msra.mxu0 0.0
        %1000 = vmatprep.subr.mxu0 0.0
        %1001 = vmatpush1.xpose.msra.mxu0 0.0
        %1002 = vmatprep.subr.mxu0 0.0
        %1003 = vmatpush1.xpose.msra.mxu0 0.0
        %1004 = vmatprep.subr.mxu0 0.0
        %1005 = vmatpush1.xpose.msra.mxu0 0.0
        %1006 = vmatprep.subr.mxu0 0.0
        %1007 = vmatpush1.xpose.msra.mxu0 0.0
        %1008 = vmatprep.subr.mxu0 0.0
        %1009 = vmatpush1.xpose.msra.mxu0 0.0
        %1010 = vmatprep.subr.mxu0 0.0
        %1011 = vmatpush1.xpose.msra.mxu0 0.0
        %1012 = vmatprep.subr.mxu0 0.0
        %1013 = vmatpush1.xpose.msra.mxu0 0.0
        %1014 = vmatprep.subr.mxu0 0.0
        %1015 = vmatpush1.xpose.msra.mxu0 0.0
        %1016 = vmatprep.subr.mxu0 0.0
        %1017 = vmatpush1.xpose.msra.mxu0 0.0
        %1018 = vmatprep.subr.mxu0 0.0
        %1019 = vmatpush1.xpose.msra.mxu0 0.0
        %1020 = vmatprep.subr.mxu0 0.0
        %1021 = vmatpush1.xpose.msra.mxu0 0.0
        %1022 = vmatprep.subr.mxu0 0.0
        %1023 = vmatpush1.xpose.msra.mxu0 0.0
        %1024 = vmatprep.subr.mxu0 0.0
        %1025 = vmatpush1.xpose.msra.mxu0 0.0
        %1026 = vmatprep.subr.mxu0 0.0
        %1027 = vmatpush1.xpose.msra.mxu0 0.0
        %1028 = vmatprep.subr.mxu0 0.0
        %1029 = vmatpush1.xpose.msra.mxu0 0.0
        %1030 = vmatprep.subr.mxu0 0.0
        %1031 = vmatpush1.xpose.msra.mxu0 0.0
        %1032 = vmatprep.subr.mxu0 0.0
        %1033 = vmatpush1.xpose.msra.mxu0 0.0
        %1034 = vmatprep.subr.mxu0 0.0
        %1035 = vmatpush1.xpose.msra.mxu0 0.0
        %1036 = vmatprep.subr.mxu0 0.0
        %1037 = vmatpush1.xpose.msra.mxu0 0.0
        %1038 = vmatprep.subr.mxu0 0.0
        %1039 = vmatpush1.xpose.msra.mxu0 0.0
        %1040 = vmatprep.subr.mxu0 0.0
        %1041 = vmatpush1.xpose.msra.mxu0 0.0
        %1042 = vmatprep.subr.mxu0 0.0
        %1043 = vmatpush1.xpose.msra.mxu0 0.0
        %1044 = vmatprep.subr.mxu0 0.0
        %1045 = vmatpush1.xpose.msra.mxu0 0.0
        %1046 = vmatprep.subr.mxu0 0.0
        %1047 = vmatpush1.xpose.msra.mxu0 0.0
        %1048 = vmatprep.subr.mxu0 0.0
        %1049 = vmatpush1.xpose.msra.mxu0 0.0
        %1050 = vmatprep.subr.mxu0 0.0
        %1051 = vmatpush1.xpose.msra.mxu0 0.0
        %1052 = vmatprep.subr.mxu0 0.0
        %1053 = vmatpush1.xpose.msra.mxu0 0.0
        %1054 = vmatprep.mubr.f32.mxu0 0.0
        %1055 = vmatmul.mubr.f32.gmra.mrb[0].mxu0 %v986
        %v1056 = vpop.f32.mrb[0].mxu0
        %v1057 = vadd.f32 0.0, %v1056
        %v1058 = vpop.f32.mrb[0].mxu0
        %1059 = vdwg.mxu0
        %1060 = vrot.lane.b32.xlu0 %v506, 96
        %v1061 = vpop.permute.xlu0 %1060
        %v1062 = vsel %vm529, %v506, 0
        %v1064 = vsel %vm529, %v1061, 0
        %1066 = vmatprep.subr.mxu0 0.0
        %1067 = vmatpush1.xpose.msra.mxu0 %v1064
        %1068 = vmatprep.subr.mxu0 0.0
        %1069 = vmatpush1.xpose.msra.mxu0 0.0
        %1070 = vmatprep.subr.mxu0 0.0
        %1071 = vmatpush1.xpose.msra.mxu0 0.0
        %1072 = vmatprep.subr.mxu0 0.0
        %1073 = vmatpush1.xpose.msra.mxu0 0.0
        %1074 = vmatprep.subr.mxu0 0.0
        %1075 = vmatpush1.xpose.msra.mxu0 0.0
        %1076 = vmatprep.subr.mxu0 0.0
        %1077 = vmatpush1.xpose.msra.mxu0 0.0
        %1078 = vmatprep.subr.mxu0 0.0
        %1079 = vmatpush1.xpose.msra.mxu0 0.0
        %1080 = vmatprep.subr.mxu0 0.0
        %1081 = vmatpush1.xpose.msra.mxu0 0.0
        %1082 = vmatprep.subr.mxu0 0.0
        %1083 = vmatpush1.xpose.msra.mxu0 0.0
        %1084 = vmatprep.subr.mxu0 0.0
        %1085 = vmatpush1.xpose.msra.mxu0 0.0
        %1086 = vmatprep.subr.mxu0 0.0
        %1087 = vmatpush1.xpose.msra.mxu0 0.0
        %1088 = vmatprep.subr.mxu0 0.0
        %1089 = vmatpush1.xpose.msra.mxu0 0.0
        %1090 = vmatprep.subr.mxu0 0.0
        %1091 = vmatpush1.xpose.msra.mxu0 0.0
        %1092 = vmatprep.subr.mxu0 0.0
        %1093 = vmatpush1.xpose.msra.mxu0 0.0
        %1094 = vmatprep.subr.mxu0 0.0
        %1095 = vmatpush1.xpose.msra.mxu0 0.0
        %1096 = vmatprep.subr.mxu0 0.0
        %1097 = vmatpush1.xpose.msra.mxu0 0.0
        %1098 = vmatprep.subr.mxu0 0.0
        %1099 = vmatpush1.xpose.msra.mxu0 0.0
        %1100 = vmatprep.subr.mxu0 0.0
        %1101 = vmatpush1.xpose.msra.mxu0 0.0
        %1102 = vmatprep.subr.mxu0 0.0
        %1103 = vmatpush1.xpose.msra.mxu0 0.0
        %1104 = vmatprep.subr.mxu0 0.0
        %1105 = vmatpush1.xpose.msra.mxu0 0.0
        %1106 = vmatprep.subr.mxu0 0.0
        %1107 = vmatpush1.xpose.msra.mxu0 0.0
        %1108 = vmatprep.subr.mxu0 0.0
        %1109 = vmatpush1.xpose.msra.mxu0 0.0
        %1110 = vmatprep.subr.mxu0 0.0
        %1111 = vmatpush1.xpose.msra.mxu0 0.0
        %1112 = vmatprep.subr.mxu0 0.0
        %1113 = vmatpush1.xpose.msra.mxu0 0.0
        %1114 = vmatprep.subr.mxu0 0.0
        %1115 = vmatpush1.xpose.msra.mxu0 0.0
        %1116 = vmatprep.subr.mxu0 0.0
        %1117 = vmatpush1.xpose.msra.mxu0 0.0
        %1118 = vmatprep.subr.mxu0 0.0
        %1119 = vmatpush1.xpose.msra.mxu0 0.0
        %1120 = vmatprep.subr.mxu0 0.0
        %1121 = vmatpush1.xpose.msra.mxu0 0.0
        %1122 = vmatprep.subr.mxu0 0.0
        %1123 = vmatpush1.xpose.msra.mxu0 0.0
        %1124 = vmatprep.subr.mxu0 0.0
        %1125 = vmatpush1.xpose.msra.mxu0 0.0
        %1126 = vmatprep.subr.mxu0 0.0
        %1127 = vmatpush1.xpose.msra.mxu0 0.0
        %1128 = vmatprep.subr.mxu0 0.0
        %1129 = vmatpush1.xpose.msra.mxu0 0.0
        %1130 = vmatprep.mubr.f32.mxu0 0.0
        %1131 = vmatmul.mubr.f32.gmra.mrb[0].mxu0 %v1062
        %v1132 = vpop.f32.mrb[0].mxu0
        %v1133 = vadd.f32 0.0, %v1132
        %v1134 = vpop.f32.mrb[0].mxu0
        %1135 = vdwg.mxu0
        %1136 = vrot.lane.b32.xlu0 %v508, 96
        %v1137 = vpop.permute.xlu0 %1136
        %v1138 = vsel %vm529, %v508, 0
        %v1140 = vsel %vm529, %v1137, 0
        %1142 = vmatprep.subr.mxu0 0.0
        %1143 = vmatpush1.xpose.msra.mxu0 %v1140
        %1144 = vmatprep.subr.mxu0 0.0
        %1145 = vmatpush1.xpose.msra.mxu0 0.0
        %1146 = vmatprep.subr.mxu0 0.0
        %1147 = vmatpush1.xpose.msra.mxu0 0.0
        %1148 = vmatprep.subr.mxu0 0.0
        %1149 = vmatpush1.xpose.msra.mxu0 0.0
        %1150 = vmatprep.subr.mxu0 0.0
        %1151 = vmatpush1.xpose.msra.mxu0 0.0
        %1152 = vmatprep.subr.mxu0 0.0
        %1153 = vmatpush1.xpose.msra.mxu0 0.0
        %1154 = vmatprep.subr.mxu0 0.0
        %1155 = vmatpush1.xpose.msra.mxu0 0.0
        %1156 = vmatprep.subr.mxu0 0.0
        %1157 = vmatpush1.xpose.msra.mxu0 0.0
        %1158 = vmatprep.subr.mxu0 0.0
        %1159 = vmatpush1.xpose.msra.mxu0 0.0
        %1160 = vmatprep.subr.mxu0 0.0
        %1161 = vmatpush1.xpose.msra.mxu0 0.0
        %1162 = vmatprep.subr.mxu0 0.0
        %1163 = vmatpush1.xpose.msra.mxu0 0.0
        %1164 = vmatprep.subr.mxu0 0.0
        %1165 = vmatpush1.xpose.msra.mxu0 0.0
        %1166 = vmatprep.subr.mxu0 0.0
        %1167 = vmatpush1.xpose.msra.mxu0 0.0
        %1168 = vmatprep.subr.mxu0 0.0
        %1169 = vmatpush1.xpose.msra.mxu0 0.0
        %1170 = vmatprep.subr.mxu0 0.0
        %1171 = vmatpush1.xpose.msra.mxu0 0.0
        %1172 = vmatprep.subr.mxu0 0.0
        %1173 = vmatpush1.xpose.msra.mxu0 0.0
        %1174 = vmatprep.subr.mxu0 0.0
        %1175 = vmatpush1.xpose.msra.mxu0 0.0
        %1176 = vmatprep.subr.mxu0 0.0
        %1177 = vmatpush1.xpose.msra.mxu0 0.0
        %1178 = vmatprep.subr.mxu0 0.0
        %1179 = vmatpush1.xpose.msra.mxu0 0.0
        %1180 = vmatprep.subr.mxu0 0.0
        %1181 = vmatpush1.xpose.msra.mxu0 0.0
        %1182 = vmatprep.subr.mxu0 0.0
        %1183 = vmatpush1.xpose.msra.mxu0 0.0
        %1184 = vmatprep.subr.mxu0 0.0
        %1185 = vmatpush1.xpose.msra.mxu0 0.0
        %1186 = vmatprep.subr.mxu0 0.0
        %1187 = vmatpush1.xpose.msra.mxu0 0.0
        %1188 = vmatprep.subr.mxu0 0.0
        %1189 = vmatpush1.xpose.msra.mxu0 0.0
        %1190 = vmatprep.subr.mxu0 0.0
        %1191 = vmatpush1.xpose.msra.mxu0 0.0
        %1192 = vmatprep.subr.mxu0 0.0
        %1193 = vmatpush1.xpose.msra.mxu0 0.0
        %1194 = vmatprep.subr.mxu0 0.0
        %1195 = vmatpush1.xpose.msra.mxu0 0.0
        %1196 = vmatprep.subr.mxu0 0.0
        %1197 = vmatpush1.xpose.msra.mxu0 0.0
        %1198 = vmatprep.subr.mxu0 0.0
        %1199 = vmatpush1.xpose.msra.mxu0 0.0
        %1200 = vmatprep.subr.mxu0 0.0
        %1201 = vmatpush1.xpose.msra.mxu0 0.0
        %1202 = vmatprep.subr.mxu0 0.0
        %1203 = vmatpush1.xpose.msra.mxu0 0.0
        %1204 = vmatprep.subr.mxu0 0.0
        %1205 = vmatpush1.xpose.msra.mxu0 0.0
        %1206 = vmatprep.mubr.f32.mxu0 0.0
        %1207 = vmatmul.mubr.f32.gmra.mrb[0].mxu0 %v1138
        %v1208 = vpop.f32.mrb[0].mxu0
        %v1209 = vadd.f32 0.0, %v1208
        %v1210 = vpop.f32.mrb[0].mxu0
        %1211 = vdwg.mxu0
        %1212 = vrot.lane.b32.xlu0 %v510, 96
        %v1213 = vpop.permute.xlu0 %1212
        %v1214 = vsel %vm529, %v510, 0
        %v1216 = vsel %vm529, %v1213, 0
        %1218 = vmatprep.subr.mxu0 0.0
        %1219 = vmatpush1.xpose.msra.mxu0 %v1216
        %1220 = vmatprep.subr.mxu0 0.0
        %1221 = vmatpush1.xpose.msra.mxu0 0.0
        %1222 = vmatprep.subr.mxu0 0.0
        %1223 = vmatpush1.xpose.msra.mxu0 0.0
        %1224 = vmatprep.subr.mxu0 0.0
        %1225 = vmatpush1.xpose.msra.mxu0 0.0
        %1226 = vmatprep.subr.mxu0 0.0
        %1227 = vmatpush1.xpose.msra.mxu0 0.0
        %1228 = vmatprep.subr.mxu0 0.0
        %1229 = vmatpush1.xpose.msra.mxu0 0.0
        %1230 = vmatprep.subr.mxu0 0.0
        %1231 = vmatpush1.xpose.msra.mxu0 0.0
        %1232 = vmatprep.subr.mxu0 0.0
        %1233 = vmatpush1.xpose.msra.mxu0 0.0
        %1234 = vmatprep.subr.mxu0 0.0
        %1235 = vmatpush1.xpose.msra.mxu0 0.0
        %1236 = vmatprep.subr.mxu0 0.0
        %1237 = vmatpush1.xpose.msra.mxu0 0.0
        %1238 = vmatprep.subr.mxu0 0.0
        %1239 = vmatpush1.xpose.msra.mxu0 0.0
        %1240 = vmatprep.subr.mxu0 0.0
        %1241 = vmatpush1.xpose.msra.mxu0 0.0
        %1242 = vmatprep.subr.mxu0 0.0
        %1243 = vmatpush1.xpose.msra.mxu0 0.0
        %1244 = vmatprep.subr.mxu0 0.0
        %1245 = vmatpush1.xpose.msra.mxu0 0.0
        %1246 = vmatprep.subr.mxu0 0.0
        %1247 = vmatpush1.xpose.msra.mxu0 0.0
        %1248 = vmatprep.subr.mxu0 0.0
        %1249 = vmatpush1.xpose.msra.mxu0 0.0
        %1250 = vmatprep.subr.mxu0 0.0
        %1251 = vmatpush1.xpose.msra.mxu0 0.0
        %1252 = vmatprep.subr.mxu0 0.0
        %1253 = vmatpush1.xpose.msra.mxu0 0.0
        %1254 = vmatprep.subr.mxu0 0.0
        %1255 = vmatpush1.xpose.msra.mxu0 0.0
        %1256 = vmatprep.subr.mxu0 0.0
        %1257 = vmatpush1.xpose.msra.mxu0 0.0
        %1258 = vmatprep.subr.mxu0 0.0
        %1259 = vmatpush1.xpose.msra.mxu0 0.0
        %1260 = vmatprep.subr.mxu0 0.0
        %1261 = vmatpush1.xpose.msra.mxu0 0.0
        %1262 = vmatprep.subr.mxu0 0.0
        %1263 = vmatpush1.xpose.msra.mxu0 0.0
        %1264 = vmatprep.subr.mxu0 0.0
        %1265 = vmatpush1.xpose.msra.mxu0 0.0
        %1266 = vmatprep.subr.mxu0 0.0
        %1267 = vmatpush1.xpose.msra.mxu0 0.0
        %1268 = vmatprep.subr.mxu0 0.0
        %1269 = vmatpush1.xpose.msra.mxu0 0.0
        %1270 = vmatprep.subr.mxu0 0.0
        %1271 = vmatpush1.xpose.msra.mxu0 0.0
        %1272 = vmatprep.subr.mxu0 0.0
        %1273 = vmatpush1.xpose.msra.mxu0 0.0
        %1274 = vmatprep.subr.mxu0 0.0
        %1275 = vmatpush1.xpose.msra.mxu0 0.0
        %1276 = vmatprep.subr.mxu0 0.0
        %1277 = vmatpush1.xpose.msra.mxu0 0.0
        %1278 = vmatprep.subr.mxu0 0.0
        %1279 = vmatpush1.xpose.msra.mxu0 0.0
        %1280 = vmatprep.subr.mxu0 0.0
        %1281 = vmatpush1.xpose.msra.mxu0 0.0
        %1282 = vmatprep.mubr.f32.mxu0 0.0
        %1283 = vmatmul.mubr.f32.gmra.mrb[0].mxu0 %v1214
        %v1284 = vpop.f32.mrb[0].mxu0
        %v1285 = vadd.f32 0.0, %v1284
        %v1286 = vpop.f32.mrb[0].mxu0
        %1287 = vdwg.mxu0
        %1288 = vrot.lane.b32.xlu0 %v512, 96
        %v1289 = vpop.permute.xlu0 %1288
        %v1290 = vsel %vm529, %v512, 0
        %v1292 = vsel %vm529, %v1289, 0
        %1294 = vmatprep.subr.mxu0 0.0
        %1295 = vmatpush1.xpose.msra.mxu0 %v1292
        %1296 = vmatprep.subr.mxu0 0.0
        %1297 = vmatpush1.xpose.msra.mxu0 0.0
        %1298 = vmatprep.subr.mxu0 0.0
        %1299 = vmatpush1.xpose.msra.mxu0 0.0
        %1300 = vmatprep.subr.mxu0 0.0
        %1301 = vmatpush1.xpose.msra.mxu0 0.0
        %1302 = vmatprep.subr.mxu0 0.0
        %1303 = vmatpush1.xpose.msra.mxu0 0.0
        %1304 = vmatprep.subr.mxu0 0.0
        %1305 = vmatpush1.xpose.msra.mxu0 0.0
        %1306 = vmatprep.subr.mxu0 0.0
        %1307 = vmatpush1.xpose.msra.mxu0 0.0
        %1308 = vmatprep.subr.mxu0 0.0
        %1309 = vmatpush1.xpose.msra.mxu0 0.0
        %1310 = vmatprep.subr.mxu0 0.0
        %1311 = vmatpush1.xpose.msra.mxu0 0.0
        %1312 = vmatprep.subr.mxu0 0.0
        %1313 = vmatpush1.xpose.msra.mxu0 0.0
        %1314 = vmatprep.subr.mxu0 0.0
        %1315 = vmatpush1.xpose.msra.mxu0 0.0
        %1316 = vmatprep.subr.mxu0 0.0
        %1317 = vmatpush1.xpose.msra.mxu0 0.0
        %1318 = vmatprep.subr.mxu0 0.0
        %1319 = vmatpush1.xpose.msra.mxu0 0.0
        %1320 = vmatprep.subr.mxu0 0.0
        %1321 = vmatpush1.xpose.msra.mxu0 0.0
        %1322 = vmatprep.subr.mxu0 0.0
        %1323 = vmatpush1.xpose.msra.mxu0 0.0
        %1324 = vmatprep.subr.mxu0 0.0
        %1325 = vmatpush1.xpose.msra.mxu0 0.0
        %1326 = vmatprep.subr.mxu0 0.0
        %1327 = vmatpush1.xpose.msra.mxu0 0.0
        %1328 = vmatprep.subr.mxu0 0.0
        %1329 = vmatpush1.xpose.msra.mxu0 0.0
        %1330 = vmatprep.subr.mxu0 0.0
        %1331 = vmatpush1.xpose.msra.mxu0 0.0
        %1332 = vmatprep.subr.mxu0 0.0
        %1333 = vmatpush1.xpose.msra.mxu0 0.0
        %1334 = vmatprep.subr.mxu0 0.0
        %1335 = vmatpush1.xpose.msra.mxu0 0.0
        %1336 = vmatprep.subr.mxu0 0.0
        %1337 = vmatpush1.xpose.msra.mxu0 0.0
        %1338 = vmatprep.subr.mxu0 0.0
        %1339 = vmatpush1.xpose.msra.mxu0 0.0
        %1340 = vmatprep.subr.mxu0 0.0
        %1341 = vmatpush1.xpose.msra.mxu0 0.0
        %1342 = vmatprep.subr.mxu0 0.0
        %1343 = vmatpush1.xpose.msra.mxu0 0.0
        %1344 = vmatprep.subr.mxu0 0.0
        %1345 = vmatpush1.xpose.msra.mxu0 0.0
        %1346 = vmatprep.subr.mxu0 0.0
        %1347 = vmatpush1.xpose.msra.mxu0 0.0
        %1348 = vmatprep.subr.mxu0 0.0
        %1349 = vmatpush1.xpose.msra.mxu0 0.0
        %1350 = vmatprep.subr.mxu0 0.0
        %1351 = vmatpush1.xpose.msra.mxu0 0.0
        %1352 = vmatprep.subr.mxu0 0.0
        %1353 = vmatpush1.xpose.msra.mxu0 0.0
        %1354 = vmatprep.subr.mxu0 0.0
        %1355 = vmatpush1.xpose.msra.mxu0 0.0
        %1356 = vmatprep.subr.mxu0 0.0
        %1357 = vmatpush1.xpose.msra.mxu0 0.0
        %1358 = vmatprep.mubr.f32.mxu0 0.0
        %1359 = vmatmul.mubr.f32.gmra.mrb[0].mxu0 %v1290
        %v1360 = vpop.f32.mrb[0].mxu0
        %v1361 = vadd.f32 0.0, %v1360
        %v1362 = vpop.f32.mrb[0].mxu0
        %1363 = vdwg.mxu0
        %1364 = vrot.lane.b32.xlu0 %v514, 96
        %v1365 = vpop.permute.xlu0 %1364
        %v1366 = vsel %vm529, %v514, 0
        %v1368 = vsel %vm529, %v1365, 0
        %1370 = vmatprep.subr.mxu0 0.0
        %1371 = vmatpush1.xpose.msra.mxu0 %v1368
        %1372 = vmatprep.subr.mxu0 0.0
        %1373 = vmatpush1.xpose.msra.mxu0 0.0
        %1374 = vmatprep.subr.mxu0 0.0
        %1375 = vmatpush1.xpose.msra.mxu0 0.0
        %1376 = vmatprep.subr.mxu0 0.0
        %1377 = vmatpush1.xpose.msra.mxu0 0.0
        %1378 = vmatprep.subr.mxu0 0.0
        %1379 = vmatpush1.xpose.msra.mxu0 0.0
        %1380 = vmatprep.subr.mxu0 0.0
        %1381 = vmatpush1.xpose.msra.mxu0 0.0
        %1382 = vmatprep.subr.mxu0 0.0
        %1383 = vmatpush1.xpose.msra.mxu0 0.0
        %1384 = vmatprep.subr.mxu0 0.0
        %1385 = vmatpush1.xpose.msra.mxu0 0.0
        %1386 = vmatprep.subr.mxu0 0.0
        %1387 = vmatpush1.xpose.msra.mxu0 0.0
        %1388 = vmatprep.subr.mxu0 0.0
        %1389 = vmatpush1.xpose.msra.mxu0 0.0
        %1390 = vmatprep.subr.mxu0 0.0
        %1391 = vmatpush1.xpose.msra.mxu0 0.0
        %1392 = vmatprep.subr.mxu0 0.0
        %1393 = vmatpush1.xpose.msra.mxu0 0.0
        %1394 = vmatprep.subr.mxu0 0.0
        %1395 = vmatpush1.xpose.msra.mxu0 0.0
        %1396 = vmatprep.subr.mxu0 0.0
        %1397 = vmatpush1.xpose.msra.mxu0 0.0
        %1398 = vmatprep.subr.mxu0 0.0
        %1399 = vmatpush1.xpose.msra.mxu0 0.0
        %1400 = vmatprep.subr.mxu0 0.0
        %1401 = vmatpush1.xpose.msra.mxu0 0.0
        %1402 = vmatprep.subr.mxu0 0.0
        %1403 = vmatpush1.xpose.msra.mxu0 0.0
        %1404 = vmatprep.subr.mxu0 0.0
        %1405 = vmatpush1.xpose.msra.mxu0 0.0
        %1406 = vmatprep.subr.mxu0 0.0
        %1407 = vmatpush1.xpose.msra.mxu0 0.0
        %1408 = vmatprep.subr.mxu0 0.0
        %1409 = vmatpush1.xpose.msra.mxu0 0.0
        %1410 = vmatprep.subr.mxu0 0.0
        %1411 = vmatpush1.xpose.msra.mxu0 0.0
        %1412 = vmatprep.subr.mxu0 0.0
        %1413 = vmatpush1.xpose.msra.mxu0 0.0
        %1414 = vmatprep.subr.mxu0 0.0
        %1415 = vmatpush1.xpose.msra.mxu0 0.0
        %1416 = vmatprep.subr.mxu0 0.0
        %1417 = vmatpush1.xpose.msra.mxu0 0.0
        %1418 = vmatprep.subr.mxu0 0.0
        %1419 = vmatpush1.xpose.msra.mxu0 0.0
        %1420 = vmatprep.subr.mxu0 0.0
        %1421 = vmatpush1.xpose.msra.mxu0 0.0
        %1422 = vmatprep.subr.mxu0 0.0
        %1423 = vmatpush1.xpose.msra.mxu0 0.0
        %1424 = vmatprep.subr.mxu0 0.0
        %1425 = vmatpush1.xpose.msra.mxu0 0.0
        %1426 = vmatprep.subr.mxu0 0.0
        %1427 = vmatpush1.xpose.msra.mxu0 0.0
        %1428 = vmatprep.subr.mxu0 0.0
        %1429 = vmatpush1.xpose.msra.mxu0 0.0
        %1430 = vmatprep.subr.mxu0 0.0
        %1431 = vmatpush1.xpose.msra.mxu0 0.0
        %1432 = vmatprep.subr.mxu0 0.0
        %1433 = vmatpush1.xpose.msra.mxu0 0.0
        %1434 = vmatprep.mubr.f32.mxu0 0.0
        %1435 = vmatmul.mubr.f32.gmra.mrb[0].mxu0 %v1366
        %v1436 = vpop.f32.mrb[0].mxu0
        %v1437 = vadd.f32 0.0, %v1436
        %v1438 = vpop.f32.mrb[0].mxu0
        %1439 = vdwg.mxu0
        %1440 = vrot.lane.b32.xlu0 %v516, 96
        %v1441 = vpop.permute.xlu0 %1440
        %v1442 = vsel %vm529, %v516, 0
        %v1444 = vsel %vm529, %v1441, 0
        %1446 = vmatprep.subr.mxu0 0.0
        %1447 = vmatpush1.xpose.msra.mxu0 %v1444
        %1448 = vmatprep.subr.mxu0 0.0
        %1449 = vmatpush1.xpose.msra.mxu0 0.0
        %1450 = vmatprep.subr.mxu0 0.0
        %1451 = vmatpush1.xpose.msra.mxu0 0.0
        %1452 = vmatprep.subr.mxu0 0.0
        %1453 = vmatpush1.xpose.msra.mxu0 0.0
        %1454 = vmatprep.subr.mxu0 0.0
        %1455 = vmatpush1.xpose.msra.mxu0 0.0
        %1456 = vmatprep.subr.mxu0 0.0
        %1457 = vmatpush1.xpose.msra.mxu0 0.0
        %1458 = vmatprep.subr.mxu0 0.0
        %1459 = vmatpush1.xpose.msra.mxu0 0.0
        %1460 = vmatprep.subr.mxu0 0.0
        %1461 = vmatpush1.xpose.msra.mxu0 0.0
        %1462 = vmatprep.subr.mxu0 0.0
        %1463 = vmatpush1.xpose.msra.mxu0 0.0
        %1464 = vmatprep.subr.mxu0 0.0
        %1465 = vmatpush1.xpose.msra.mxu0 0.0
        %1466 = vmatprep.subr.mxu0 0.0
        %1467 = vmatpush1.xpose.msra.mxu0 0.0
        %1468 = vmatprep.subr.mxu0 0.0
        %1469 = vmatpush1.xpose.msra.mxu0 0.0
        %1470 = vmatprep.subr.mxu0 0.0
        %1471 = vmatpush1.xpose.msra.mxu0 0.0
        %1472 = vmatprep.subr.mxu0 0.0
        %1473 = vmatpush1.xpose.msra.mxu0 0.0
        %1474 = vmatprep.subr.mxu0 0.0
        %1475 = vmatpush1.xpose.msra.mxu0 0.0
        %1476 = vmatprep.subr.mxu0 0.0
        %1477 = vmatpush1.xpose.msra.mxu0 0.0
        %1478 = vmatprep.subr.mxu0 0.0
        %1479 = vmatpush1.xpose.msra.mxu0 0.0
        %1480 = vmatprep.subr.mxu0 0.0
        %1481 = vmatpush1.xpose.msra.mxu0 0.0
        %1482 = vmatprep.subr.mxu0 0.0
        %1483 = vmatpush1.xpose.msra.mxu0 0.0
        %1484 = vmatprep.subr.mxu0 0.0
        %1485 = vmatpush1.xpose.msra.mxu0 0.0
        %1486 = vmatprep.subr.mxu0 0.0
        %1487 = vmatpush1.xpose.msra.mxu0 0.0
        %1488 = vmatprep.subr.mxu0 0.0
        %1489 = vmatpush1.xpose.msra.mxu0 0.0
        %1490 = vmatprep.subr.mxu0 0.0
        %1491 = vmatpush1.xpose.msra.mxu0 0.0
        %1492 = vmatprep.subr.mxu0 0.0
        %1493 = vmatpush1.xpose.msra.mxu0 0.0
        %1494 = vmatprep.subr.mxu0 0.0
        %1495 = vmatpush1.xpose.msra.mxu0 0.0
        %1496 = vmatprep.subr.mxu0 0.0
        %1497 = vmatpush1.xpose.msra.mxu0 0.0
        %1498 = vmatprep.subr.mxu0 0.0
        %1499 = vmatpush1.xpose.msra.mxu0 0.0
        %1500 = vmatprep.subr.mxu0 0.0
        %1501 = vmatpush1.xpose.msra.mxu0 0.0
        %1502 = vmatprep.subr.mxu0 0.0
        %1503 = vmatpush1.xpose.msra.mxu0 0.0
        %1504 = vmatprep.subr.mxu0 0.0
        %1505 = vmatpush1.xpose.msra.mxu0 0.0
        %1506 = vmatprep.subr.mxu0 0.0
        %1507 = vmatpush1.xpose.msra.mxu0 0.0
        %1508 = vmatprep.subr.mxu0 0.0
        %1509 = vmatpush1.xpose.msra.mxu0 0.0
        %1510 = vmatprep.mubr.f32.mxu0 0.0
        %1511 = vmatmul.mubr.f32.gmra.mrb[0].mxu0 %v1442
        %v1512 = vpop.f32.mrb[0].mxu0
        %v1513 = vadd.f32 0.0, %v1512
        %v1514 = vpop.f32.mrb[0].mxu0
        %1515 = vdwg.mxu0
        %1516 = vrot.lane.b32.xlu0 %v518, 96
        %v1517 = vpop.permute.xlu0 %1516
        %v1518 = vsel %vm529, %v518, 0
        %v1520 = vsel %vm529, %v1517, 0
        %1522 = vmatprep.subr.mxu0 0.0
        %1523 = vmatpush1.xpose.msra.mxu0 %v1520
        %1524 = vmatprep.subr.mxu0 0.0
        %1525 = vmatpush1.xpose.msra.mxu0 0.0
        %1526 = vmatprep.subr.mxu0 0.0
        %1527 = vmatpush1.xpose.msra.mxu0 0.0
        %1528 = vmatprep.subr.mxu0 0.0
        %1529 = vmatpush1.xpose.msra.mxu0 0.0
        %1530 = vmatprep.subr.mxu0 0.0
        %1531 = vmatpush1.xpose.msra.mxu0 0.0
        %1532 = vmatprep.subr.mxu0 0.0
        %1533 = vmatpush1.xpose.msra.mxu0 0.0
        %1534 = vmatprep.subr.mxu0 0.0
        %1535 = vmatpush1.xpose.msra.mxu0 0.0
        %1536 = vmatprep.subr.mxu0 0.0
        %1537 = vmatpush1.xpose.msra.mxu0 0.0
        %1538 = vmatprep.subr.mxu0 0.0
        %1539 = vmatpush1.xpose.msra.mxu0 0.0
        %1540 = vmatprep.subr.mxu0 0.0
        %1541 = vmatpush1.xpose.msra.mxu0 0.0
        %1542 = vmatprep.subr.mxu0 0.0
        %1543 = vmatpush1.xpose.msra.mxu0 0.0
        %1544 = vmatprep.subr.mxu0 0.0
        %1545 = vmatpush1.xpose.msra.mxu0 0.0
        %1546 = vmatprep.subr.mxu0 0.0
        %1547 = vmatpush1.xpose.msra.mxu0 0.0
        %1548 = vmatprep.subr.mxu0 0.0
        %1549 = vmatpush1.xpose.msra.mxu0 0.0
        %1550 = vmatprep.subr.mxu0 0.0
        %1551 = vmatpush1.xpose.msra.mxu0 0.0
        %1552 = vmatprep.subr.mxu0 0.0
        %1553 = vmatpush1.xpose.msra.mxu0 0.0
        %1554 = vmatprep.subr.mxu0 0.0
        %1555 = vmatpush1.xpose.msra.mxu0 0.0
        %1556 = vmatprep.subr.mxu0 0.0
        %1557 = vmatpush1.xpose.msra.mxu0 0.0
        %1558 = vmatprep.subr.mxu0 0.0
        %1559 = vmatpush1.xpose.msra.mxu0 0.0
        %1560 = vmatprep.subr.mxu0 0.0
        %1561 = vmatpush1.xpose.msra.mxu0 0.0
        %1562 = vmatprep.subr.mxu0 0.0
        %1563 = vmatpush1.xpose.msra.mxu0 0.0
        %1564 = vmatprep.subr.mxu0 0.0
        %1565 = vmatpush1.xpose.msra.mxu0 0.0
        %1566 = vmatprep.subr.mxu0 0.0
        %1567 = vmatpush1.xpose.msra.mxu0 0.0
        %1568 = vmatprep.subr.mxu0 0.0
        %1569 = vmatpush1.xpose.msra.mxu0 0.0
        %1570 = vmatprep.subr.mxu0 0.0
        %1571 = vmatpush1.xpose.msra.mxu0 0.0
        %1572 = vmatprep.subr.mxu0 0.0
        %1573 = vmatpush1.xpose.msra.mxu0 0.0
        %1574 = vmatprep.subr.mxu0 0.0
        %1575 = vmatpush1.xpose.msra.mxu0 0.0
        %1576 = vmatprep.subr.mxu0 0.0
        %1577 = vmatpush1.xpose.msra.mxu0 0.0
        %1578 = vmatprep.subr.mxu0 0.0
        %1579 = vmatpush1.xpose.msra.mxu0 0.0
        %1580 = vmatprep.subr.mxu0 0.0
        %1581 = vmatpush1.xpose.msra.mxu0 0.0
        %1582 = vmatprep.subr.mxu0 0.0
        %1583 = vmatpush1.xpose.msra.mxu0 0.0
        %1584 = vmatprep.subr.mxu0 0.0
        %1585 = vmatpush1.xpose.msra.mxu0 0.0
        %1586 = vmatprep.mubr.f32.mxu0 0.0
        %1587 = vmatmul.mubr.f32.gmra.mrb[0].mxu0 %v1518
        %v1588 = vpop.f32.mrb[0].mxu0
        %v1589 = vadd.f32 0.0, %v1588
        %v1590 = vpop.f32.mrb[0].mxu0
        %1591 = vdwg.mxu0
        %1592 = vrot.lane.b32.xlu0 %v520, 96
        %v1593 = vpop.permute.xlu0 %1592
        %v1594 = vsel %vm529, %v520, 0
        %v1596 = vsel %vm529, %v1593, 0
        %1598 = vmatprep.subr.mxu0 0.0
        %1599 = vmatpush1.xpose.msra.mxu0 %v1596
        %1600 = vmatprep.subr.mxu0 0.0
        %1601 = vmatpush1.xpose.msra.mxu0 0.0
        %1602 = vmatprep.subr.mxu0 0.0
        %1603 = vmatpush1.xpose.msra.mxu0 0.0
        %1604 = vmatprep.subr.mxu0 0.0
        %1605 = vmatpush1.xpose.msra.mxu0 0.0
        %1606 = vmatprep.subr.mxu0 0.0
        %1607 = vmatpush1.xpose.msra.mxu0 0.0
        %1608 = vmatprep.subr.mxu0 0.0
        %1609 = vmatpush1.xpose.msra.mxu0 0.0
        %1610 = vmatprep.subr.mxu0 0.0
        %1611 = vmatpush1.xpose.msra.mxu0 0.0
        %1612 = vmatprep.subr.mxu0 0.0
        %1613 = vmatpush1.xpose.msra.mxu0 0.0
        %1614 = vmatprep.subr.mxu0 0.0
        %1615 = vmatpush1.xpose.msra.mxu0 0.0
        %1616 = vmatprep.subr.mxu0 0.0
        %1617 = vmatpush1.xpose.msra.mxu0 0.0
        %1618 = vmatprep.subr.mxu0 0.0
        %1619 = vmatpush1.xpose.msra.mxu0 0.0
        %1620 = vmatprep.subr.mxu0 0.0
        %1621 = vmatpush1.xpose.msra.mxu0 0.0
        %1622 = vmatprep.subr.mxu0 0.0
        %1623 = vmatpush1.xpose.msra.mxu0 0.0
        %1624 = vmatprep.subr.mxu0 0.0
        %1625 = vmatpush1.xpose.msra.mxu0 0.0
        %1626 = vmatprep.subr.mxu0 0.0
        %1627 = vmatpush1.xpose.msra.mxu0 0.0
        %1628 = vmatprep.subr.mxu0 0.0
        %1629 = vmatpush1.xpose.msra.mxu0 0.0
        %1630 = vmatprep.subr.mxu0 0.0
        %1631 = vmatpush1.xpose.msra.mxu0 0.0
        %1632 = vmatprep.subr.mxu0 0.0
        %1633 = vmatpush1.xpose.msra.mxu0 0.0
        %1634 = vmatprep.subr.mxu0 0.0
        %1635 = vmatpush1.xpose.msra.mxu0 0.0
        %1636 = vmatprep.subr.mxu0 0.0
        %1637 = vmatpush1.xpose.msra.mxu0 0.0
        %1638 = vmatprep.subr.mxu0 0.0
        %1639 = vmatpush1.xpose.msra.mxu0 0.0
        %1640 = vmatprep.subr.mxu0 0.0
        %1641 = vmatpush1.xpose.msra.mxu0 0.0
        %1642 = vmatprep.subr.mxu0 0.0
        %1643 = vmatpush1.xpose.msra.mxu0 0.0
        %1644 = vmatprep.subr.mxu0 0.0
        %1645 = vmatpush1.xpose.msra.mxu0 0.0
        %1646 = vmatprep.subr.mxu0 0.0
        %1647 = vmatpush1.xpose.msra.mxu0 0.0
        %1648 = vmatprep.subr.mxu0 0.0
        %1649 = vmatpush1.xpose.msra.mxu0 0.0
        %1650 = vmatprep.subr.mxu0 0.0
        %1651 = vmatpush1.xpose.msra.mxu0 0.0
        %1652 = vmatprep.subr.mxu0 0.0
        %1653 = vmatpush1.xpose.msra.mxu0 0.0
        %1654 = vmatprep.subr.mxu0 0.0
        %1655 = vmatpush1.xpose.msra.mxu0 0.0
        %1656 = vmatprep.subr.mxu0 0.0
        %1657 = vmatpush1.xpose.msra.mxu0 0.0
        %1658 = vmatprep.subr.mxu0 0.0
        %1659 = vmatpush1.xpose.msra.mxu0 0.0
        %1660 = vmatprep.subr.mxu0 0.0
        %1661 = vmatpush1.xpose.msra.mxu0 0.0
        %1662 = vmatprep.mubr.f32.mxu0 0.0
        %1663 = vmatmul.mubr.f32.gmra.mrb[0].mxu0 %v1594
        %v1664 = vpop.f32.mrb[0].mxu0
        %v1665 = vadd.f32 0.0, %v1664
        %v1666 = vpop.f32.mrb[0].mxu0
        %1667 = vdwg.mxu0
        %1668 = vrot.lane.b32.xlu0 %v522, 96
        %v1669 = vpop.permute.xlu0 %1668
        %v1670 = vsel %vm529, %v522, 0
        %v1672 = vsel %vm529, %v1669, 0
        %1674 = vmatprep.subr.mxu0 0.0
        %1675 = vmatpush1.xpose.msra.mxu0 %v1672
        %1676 = vmatprep.subr.mxu0 0.0
        %1677 = vmatpush1.xpose.msra.mxu0 0.0
        %1678 = vmatprep.subr.mxu0 0.0
        %1679 = vmatpush1.xpose.msra.mxu0 0.0
        %1680 = vmatprep.subr.mxu0 0.0
        %1681 = vmatpush1.xpose.msra.mxu0 0.0
        %1682 = vmatprep.subr.mxu0 0.0
        %1683 = vmatpush1.xpose.msra.mxu0 0.0
        %1684 = vmatprep.subr.mxu0 0.0
        %1685 = vmatpush1.xpose.msra.mxu0 0.0
        %1686 = vmatprep.subr.mxu0 0.0
        %1687 = vmatpush1.xpose.msra.mxu0 0.0
        %1688 = vmatprep.subr.mxu0 0.0
        %1689 = vmatpush1.xpose.msra.mxu0 0.0
        %1690 = vmatprep.subr.mxu0 0.0
        %1691 = vmatpush1.xpose.msra.mxu0 0.0
        %1692 = vmatprep.subr.mxu0 0.0
        %1693 = vmatpush1.xpose.msra.mxu0 0.0
        %1694 = vmatprep.subr.mxu0 0.0
        %1695 = vmatpush1.xpose.msra.mxu0 0.0
        %1696 = vmatprep.subr.mxu0 0.0
        %1697 = vmatpush1.xpose.msra.mxu0 0.0
        %1698 = vmatprep.subr.mxu0 0.0
        %1699 = vmatpush1.xpose.msra.mxu0 0.0
        %1700 = vmatprep.subr.mxu0 0.0
        %1701 = vmatpush1.xpose.msra.mxu0 0.0
        %1702 = vmatprep.subr.mxu0 0.0
        %1703 = vmatpush1.xpose.msra.mxu0 0.0
        %1704 = vmatprep.subr.mxu0 0.0
        %1705 = vmatpush1.xpose.msra.mxu0 0.0
        %1706 = vmatprep.subr.mxu0 0.0
        %1707 = vmatpush1.xpose.msra.mxu0 0.0
        %1708 = vmatprep.subr.mxu0 0.0
        %1709 = vmatpush1.xpose.msra.mxu0 0.0
        %1710 = vmatprep.subr.mxu0 0.0
        %1711 = vmatpush1.xpose.msra.mxu0 0.0
        %1712 = vmatprep.subr.mxu0 0.0
        %1713 = vmatpush1.xpose.msra.mxu0 0.0
        %1714 = vmatprep.subr.mxu0 0.0
        %1715 = vmatpush1.xpose.msra.mxu0 0.0
        %1716 = vmatprep.subr.mxu0 0.0
        %1717 = vmatpush1.xpose.msra.mxu0 0.0
        %1718 = vmatprep.subr.mxu0 0.0
        %1719 = vmatpush1.xpose.msra.mxu0 0.0
        %1720 = vmatprep.subr.mxu0 0.0
        %1721 = vmatpush1.xpose.msra.mxu0 0.0
        %1722 = vmatprep.subr.mxu0 0.0
        %1723 = vmatpush1.xpose.msra.mxu0 0.0
        %1724 = vmatprep.subr.mxu0 0.0
        %1725 = vmatpush1.xpose.msra.mxu0 0.0
        %1726 = vmatprep.subr.mxu0 0.0
        %1727 = vmatpush1.xpose.msra.mxu0 0.0
        %1728 = vmatprep.subr.mxu0 0.0
        %1729 = vmatpush1.xpose.msra.mxu0 0.0
        %1730 = vmatprep.subr.mxu0 0.0
        %1731 = vmatpush1.xpose.msra.mxu0 0.0
        %1732 = vmatprep.subr.mxu0 0.0
        %1733 = vmatpush1.xpose.msra.mxu0 0.0
        %1734 = vmatprep.subr.mxu0 0.0
        %1735 = vmatpush1.xpose.msra.mxu0 0.0
        %1736 = vmatprep.subr.mxu0 0.0
        %1737 = vmatpush1.xpose.msra.mxu0 0.0
        %1738 = vmatprep.mubr.f32.mxu0 0.0
        %1739 = vmatmul.mubr.f32.gmra.mrb[0].mxu0 %v1670
        %v1740 = vpop.f32.mrb[0].mxu0
        %v1741 = vadd.f32 0.0, %v1740
        %v1742 = vpop.f32.mrb[0].mxu0
        %1743 = vdwg.mxu0
        %v1744 = vadd.f32 %v601, %v523
        %v1745 = vadd.f32 %v677, %v523
        %v1746 = vadd.f32 %v753, %v523
        %v1747 = vadd.f32 %v829, %v523
        %v1748 = vadd.f32 %v905, %v524
        %v1749 = vadd.f32 %v981, %v524
        %v1750 = vadd.f32 %v1057, %v524
        %v1751 = vadd.f32 %v1133, %v524
        %v1752 = vadd.f32 %v1209, %v525
        %v1753 = vadd.f32 %v1285, %v525
        %v1754 = vadd.f32 %v1361, %v525
        %v1755 = vadd.f32 %v1437, %v525
        %v1756 = vadd.f32 %v1513, %v526
        %v1757 = vadd.f32 %v1589, %v526
        %v1758 = vadd.f32 %v1665, %v526
        %v1759 = vadd.f32 %v1741, %v526
        %v1760 = vsel %vm529, %v1744, -inf
        %1761 = vmax.xlane.f32.xlu0 %v1760
        %v1762 = vpop.xlane.xlu0 %1761
        %v1763 = vsel %vm529, %v1745, -inf
        %1764 = vmax.xlane.f32.xlu0 %v1763
        %v1765 = vpop.xlane.xlu0 %1764
        %v1766 = vsel %vm529, %v1746, -inf
        %1767 = vmax.xlane.f32.xlu0 %v1766
        %v1768 = vpop.xlane.xlu0 %1767
        %v1769 = vsel %vm529, %v1747, -inf
        %1770 = vmax.xlane.f32.xlu0 %v1769
        %v1771 = vpop.xlane.xlu0 %1770
        %v1772 = vsel %vm529, %v1748, -inf
        %1773 = vmax.xlane.f32.xlu0 %v1772
        %v1774 = vpop.xlane.xlu0 %1773
        %v1775 = vsel %vm529, %v1749, -inf
        %1776 = vmax.xlane.f32.xlu0 %v1775
        %v1777 = vpop.xlane.xlu0 %1776
        %v1778 = vsel %vm529, %v1750, -inf
        %1779 = vmax.xlane.f32.xlu0 %v1778
        %v1780 = vpop.xlane.xlu0 %1779
        %v1781 = vsel %vm529, %v1751, -inf
        %1782 = vmax.xlane.f32.xlu0 %v1781
        %v1783 = vpop.xlane.xlu0 %1782
        %v1784 = vsel %vm529, %v1752, -inf
        %1785 = vmax.xlane.f32.xlu0 %v1784
        %v1786 = vpop.xlane.xlu0 %1785
        %v1787 = vsel %vm529, %v1753, -inf
        %1788 = vmax.xlane.f32.xlu0 %v1787
        %v1789 = vpop.xlane.xlu0 %1788
        %v1790 = vsel %vm529, %v1754, -inf
        %1791 = vmax.xlane.f32.xlu0 %v1790
        %v1792 = vpop.xlane.xlu0 %1791
        %v1793 = vsel %vm529, %v1755, -inf
        %1794 = vmax.xlane.f32.xlu0 %v1793
        %v1795 = vpop.xlane.xlu0 %1794
        %v1796 = vsel %vm529, %v1756, -inf
        %1797 = vmax.xlane.f32.xlu0 %v1796
        %v1798 = vpop.xlane.xlu0 %1797
        %v1799 = vsel %vm529, %v1757, -inf
        %1800 = vmax.xlane.f32.xlu0 %v1799
        %v1801 = vpop.xlane.xlu0 %1800
        %v1802 = vsel %vm529, %v1758, -inf
        %1803 = vmax.xlane.f32.xlu0 %v1802
        %v1804 = vpop.xlane.xlu0 %1803
        %v1805 = vsel %vm529, %v1759, -inf
        %1806 = vmax.xlane.f32.xlu0 %v1805
        %v1807 = vpop.xlane.xlu0 %1806
        %v1808 = vsub.f32 %v1744, %v1762
        %v1809 = vsub.f32 %v1745, %v1765
        %v1810 = vsub.f32 %v1746, %v1768
        %v1811 = vsub.f32 %v1747, %v1771
        %v1812 = vsub.f32 %v1748, %v1774
        %v1813 = vsub.f32 %v1749, %v1777
        %v1814 = vsub.f32 %v1750, %v1780
        %v1815 = vsub.f32 %v1751, %v1783
        %v1816 = vsub.f32 %v1752, %v1786
        %v1817 = vsub.f32 %v1753, %v1789
        %v1818 = vsub.f32 %v1754, %v1792
        %v1819 = vsub.f32 %v1755, %v1795
        %v1820 = vsub.f32 %v1756, %v1798
        %v1821 = vsub.f32 %v1757, %v1801
        %v1822 = vsub.f32 %v1758, %v1804
        %v1823 = vsub.f32 %v1759, %v1807
        %v1824 = vmul.f32 %v1808, 1.442695
        %v1825 = vpow.pop %v1824
        %v1826 = vmul.f32 %v1809, 1.442695
        %v1827 = vpow.pop %v1826
        %v1828 = vmul.f32 %v1810, 1.442695
        %v1829 = vpow.pop %v1828
        %v1830 = vmul.f32 %v1811, 1.442695
        %v1831 = vpow.pop %v1830
        %v1832 = vmul.f32 %v1812, 1.442695
        %v1833 = vpow.pop %v1832
        %v1834 = vmul.f32 %v1813, 1.442695
        %v1835 = vpow.pop %v1834
        %v1836 = vmul.f32 %v1814, 1.442695
        %v1837 = vpow.pop %v1836
        %v1838 = vmul.f32 %v1815, 1.442695
        %v1839 = vpow.pop %v1838
        %v1840 = vmul.f32 %v1816, 1.442695
        %v1841 = vpow.pop %v1840
        %v1842 = vmul.f32 %v1817, 1.442695
        %v1843 = vpow.pop %v1842
        %v1844 = vmul.f32 %v1818, 1.442695
        %v1845 = vpow.pop %v1844
        %v1846 = vmul.f32 %v1819, 1.442695
        %v1847 = vpow.pop %v1846
        %v1848 = vmul.f32 %v1820, 1.442695
        %v1849 = vpow.pop %v1848
        %v1850 = vmul.f32 %v1821, 1.442695
        %v1851 = vpow.pop %v1850
        %v1852 = vmul.f32 %v1822, 1.442695
        %v1853 = vpow.pop %v1852
        %v1854 = vmul.f32 %v1823, 1.442695
        %v1855 = vpow.pop %v1854
        %v1856 = vsel %vm529, %v1825, 0.0
        %1857 = vadd.xlane.f32.xlu0 %v1856
        %v1858 = vpop.xlane.xlu0 %1857
        %v1859 = vsel %vm529, %v1827, 0.0
        %1860 = vadd.xlane.f32.xlu0 %v1859
        %v1861 = vpop.xlane.xlu0 %1860
        %v1862 = vsel %vm529, %v1829, 0.0
        %1863 = vadd.xlane.f32.xlu0 %v1862
        %v1864 = vpop.xlane.xlu0 %1863
        %v1865 = vsel %vm529, %v1831, 0.0
        %1866 = vadd.xlane.f32.xlu0 %v1865
        %v1867 = vpop.xlane.xlu0 %1866
        %v1868 = vsel %vm529, %v1833, 0.0
        %1869 = vadd.xlane.f32.xlu0 %v1868
        %v1870 = vpop.xlane.xlu0 %1869
        %v1871 = vsel %vm529, %v1835, 0.0
        %1872 = vadd.xlane.f32.xlu0 %v1871
        %v1873 = vpop.xlane.xlu0 %1872
        %v1874 = vsel %vm529, %v1837, 0.0
        %1875 = vadd.xlane.f32.xlu0 %v1874
        %v1876 = vpop.xlane.xlu0 %1875
        %v1877 = vsel %vm529, %v1839, 0.0
        %1878 = vadd.xlane.f32.xlu0 %v1877
        %v1879 = vpop.xlane.xlu0 %1878
        %v1880 = vsel %vm529, %v1841, 0.0
        %1881 = vadd.xlane.f32.xlu0 %v1880
        %v1882 = vpop.xlane.xlu0 %1881
        %v1883 = vsel %vm529, %v1843, 0.0
        %1884 = vadd.xlane.f32.xlu0 %v1883
        %v1885 = vpop.xlane.xlu0 %1884
        %v1886 = vsel %vm529, %v1845, 0.0
        %1887 = vadd.xlane.f32.xlu0 %v1886
        %v1888 = vpop.xlane.xlu0 %1887
        %v1889 = vsel %vm529, %v1847, 0.0
        %1890 = vadd.xlane.f32.xlu0 %v1889
        %v1891 = vpop.xlane.xlu0 %1890
        %v1892 = vsel %vm529, %v1849, 0.0
        %1893 = vadd.xlane.f32.xlu0 %v1892
        %v1894 = vpop.xlane.xlu0 %1893
        %v1895 = vsel %vm529, %v1851, 0.0
        %1896 = vadd.xlane.f32.xlu0 %v1895
        %v1897 = vpop.xlane.xlu0 %1896
        %v1898 = vsel %vm529, %v1853, 0.0
        %1899 = vadd.xlane.f32.xlu0 %v1898
        %v1900 = vpop.xlane.xlu0 %1899
        %v1901 = vsel %vm529, %v1855, 0.0
        %1902 = vadd.xlane.f32.xlu0 %v1901
        %v1903 = vpop.xlane.xlu0 %1902
        %v1904 = vrcp.pop %v1858
        %v1905 = vrcp.pop %v1861
        %v1906 = vrcp.pop %v1864
        %v1907 = vrcp.pop %v1867
        %v1908 = vrcp.pop %v1870
        %v1909 = vrcp.pop %v1873
        %v1910 = vrcp.pop %v1876
        %v1911 = vrcp.pop %v1879
        %v1912 = vrcp.pop %v1882
        %v1913 = vrcp.pop %v1885
        %v1914 = vrcp.pop %v1888
        %v1915 = vrcp.pop %v1891
        %v1916 = vrcp.pop %v1894
        %v1917 = vrcp.pop %v1897
        %v1918 = vrcp.pop %v1900
        %v1919 = vrcp.pop %v1903
        %v1920 = vmul.f32 %v1825, %v1904
        %v1921 = vmul.f32 %v1827, %v1905
        %v1922 = vmul.f32 %v1829, %v1906
        %v1923 = vmul.f32 %v1831, %v1907
        %v1924 = vmul.f32 %v1833, %v1908
        %v1925 = vmul.f32 %v1835, %v1909
        %v1926 = vmul.f32 %v1837, %v1910
        %v1927 = vmul.f32 %v1839, %v1911
        %v1928 = vmul.f32 %v1841, %v1912
        %v1929 = vmul.f32 %v1843, %v1913
        %v1930 = vmul.f32 %v1845, %v1914
        %v1931 = vmul.f32 %v1847, %v1915
        %v1932 = vmul.f32 %v1849, %v1916
        %v1933 = vmul.f32 %v1851, %v1917
        %v1934 = vmul.f32 %v1853, %v1918
        %v1935 = vmul.f32 %v1855, %v1919
        %1936 = vrot.lane.b32.xlu0 %v477, 64
        %v1937 = vpop.permute.xlu0 %1936
        %v1940 = vsel %vm529, %v1920, 0
        %1942 = vmatprep.subr.mxu0 0.0
        %1943 = vmatpush1.msra.mxu0 %v1937
        %1944 = vmatprep.subr.mxu0 0.0
        %1945 = vmatpush1.msra.mxu0 0.0
        %1946 = vmatprep.subr.mxu0 0.0
        %1947 = vmatpush1.msra.mxu0 0.0
        %1948 = vmatprep.subr.mxu0 0.0
        %1949 = vmatpush1.msra.mxu0 0.0
        %1950 = vmatprep.subr.mxu0 0.0
        %1951 = vmatpush1.msra.mxu0 0.0
        %1952 = vmatprep.subr.mxu0 0.0
        %1953 = vmatpush1.msra.mxu0 0.0
        %1954 = vmatprep.subr.mxu0 0.0
        %1955 = vmatpush1.msra.mxu0 0.0
        %1956 = vmatprep.subr.mxu0 0.0
        %1957 = vmatpush1.msra.mxu0 0.0
        %1958 = vmatprep.subr.mxu0 0.0
        %1959 = vmatpush1.msra.mxu0 0.0
        %1960 = vmatprep.subr.mxu0 0.0
        %1961 = vmatpush1.msra.mxu0 0.0
        %1962 = vmatprep.subr.mxu0 0.0
        %1963 = vmatpush1.msra.mxu0 0.0
        %1964 = vmatprep.subr.mxu0 0.0
        %1965 = vmatpush1.msra.mxu0 0.0
        %1966 = vmatprep.subr.mxu0 0.0
        %1967 = vmatpush1.msra.mxu0 0.0
        %1968 = vmatprep.subr.mxu0 0.0
        %1969 = vmatpush1.msra.mxu0 0.0
        %1970 = vmatprep.subr.mxu0 0.0
        %1971 = vmatpush1.msra.mxu0 0.0
        %1972 = vmatprep.subr.mxu0 0.0
        %1973 = vmatpush1.msra.mxu0 0.0
        %1974 = vmatprep.subr.mxu0 0.0
        %1975 = vmatpush1.msra.mxu0 0.0
        %1976 = vmatprep.subr.mxu0 0.0
        %1977 = vmatpush1.msra.mxu0 0.0
        %1978 = vmatprep.subr.mxu0 0.0
        %1979 = vmatpush1.msra.mxu0 0.0
        %1980 = vmatprep.subr.mxu0 0.0
        %1981 = vmatpush1.msra.mxu0 0.0
        %1982 = vmatprep.subr.mxu0 0.0
        %1983 = vmatpush1.msra.mxu0 0.0
        %1984 = vmatprep.subr.mxu0 0.0
        %1985 = vmatpush1.msra.mxu0 0.0
        %1986 = vmatprep.subr.mxu0 0.0
        %1987 = vmatpush1.msra.mxu0 0.0
        %1988 = vmatprep.subr.mxu0 0.0
        %1989 = vmatpush1.msra.mxu0 0.0
        %1990 = vmatprep.subr.mxu0 0.0
        %1991 = vmatpush1.msra.mxu0 0.0
        %1992 = vmatprep.subr.mxu0 0.0
        %1993 = vmatpush1.msra.mxu0 0.0
        %1994 = vmatprep.subr.mxu0 0.0
        %1995 = vmatpush1.msra.mxu0 0.0
        %1996 = vmatprep.subr.mxu0 0.0
        %1997 = vmatpush1.msra.mxu0 0.0
        %1998 = vmatprep.subr.mxu0 0.0
        %1999 = vmatpush1.msra.mxu0 0.0
        %2000 = vmatprep.subr.mxu0 0.0
        %2001 = vmatpush1.msra.mxu0 0.0
        %2002 = vmatprep.subr.mxu0 0.0
        %2003 = vmatpush1.msra.mxu0 0.0
        %2004 = vmatprep.subr.mxu0 0.0
        %2005 = vmatpush1.msra.mxu0 0.0
        %2006 = vmatprep.mubr.f32.mxu0 0.0
        %2007 = vmatmul.mubr.f32.gmra.mrb[0].mxu0 %v1940
        %v2008 = vpop.f32.mrb[0].mxu0
        %v2009 = vadd.f32 0.0, %v2008
        %v2010 = vpop.f32.mrb[0].mxu0
        %2011 = vdwg.mxu0
        %2012 = vrot.lane.b32.xlu0 %v482, 64
        %v2013 = vpop.permute.xlu0 %2012
        %v2016 = vsel %vm529, %v1921, 0
        %2018 = vmatprep.subr.mxu0 0.0
        %2019 = vmatpush1.msra.mxu0 %v2013
        %2020 = vmatprep.subr.mxu0 0.0
        %2021 = vmatpush1.msra.mxu0 0.0
        %2022 = vmatprep.subr.mxu0 0.0
        %2023 = vmatpush1.msra.mxu0 0.0
        %2024 = vmatprep.subr.mxu0 0.0
        %2025 = vmatpush1.msra.mxu0 0.0
        %2026 = vmatprep.subr.mxu0 0.0
        %2027 = vmatpush1.msra.mxu0 0.0
        %2028 = vmatprep.subr.mxu0 0.0
        %2029 = vmatpush1.msra.mxu0 0.0
        %2030 = vmatprep.subr.mxu0 0.0
        %2031 = vmatpush1.msra.mxu0 0.0
        %2032 = vmatprep.subr.mxu0 0.0
        %2033 = vmatpush1.msra.mxu0 0.0
        %2034 = vmatprep.subr.mxu0 0.0
        %2035 = vmatpush1.msra.mxu0 0.0
        %2036 = vmatprep.subr.mxu0 0.0
        %2037 = vmatpush1.msra.mxu0 0.0
        %2038 = vmatprep.subr.mxu0 0.0
        %2039 = vmatpush1.msra.mxu0 0.0
        %2040 = vmatprep.subr.mxu0 0.0
        %2041 = vmatpush1.msra.mxu0 0.0
        %2042 = vmatprep.subr.mxu0 0.0
        %2043 = vmatpush1.msra.mxu0 0.0
        %2044 = vmatprep.subr.mxu0 0.0
        %2045 = vmatpush1.msra.mxu0 0.0
        %2046 = vmatprep.subr.mxu0 0.0
        %2047 = vmatpush1.msra.mxu0 0.0
        %2048 = vmatprep.subr.mxu0 0.0
        %2049 = vmatpush1.msra.mxu0 0.0
        %2050 = vmatprep.subr.mxu0 0.0
        %2051 = vmatpush1.msra.mxu0 0.0
        %2052 = vmatprep.subr.mxu0 0.0
        %2053 = vmatpush1.msra.mxu0 0.0
        %2054 = vmatprep.subr.mxu0 0.0
        %2055 = vmatpush1.msra.mxu0 0.0
        %2056 = vmatprep.subr.mxu0 0.0
        %2057 = vmatpush1.msra.mxu0 0.0
        %2058 = vmatprep.subr.mxu0 0.0
        %2059 = vmatpush1.msra.mxu0 0.0
        %2060 = vmatprep.subr.mxu0 0.0
        %2061 = vmatpush1.msra.mxu0 0.0
        %2062 = vmatprep.subr.mxu0 0.0
        %2063 = vmatpush1.msra.mxu0 0.0
        %2064 = vmatprep.subr.mxu0 0.0
        %2065 = vmatpush1.msra.mxu0 0.0
        %2066 = vmatprep.subr.mxu0 0.0
        %2067 = vmatpush1.msra.mxu0 0.0
        %2068 = vmatprep.subr.mxu0 0.0
        %2069 = vmatpush1.msra.mxu0 0.0
        %2070 = vmatprep.subr.mxu0 0.0
        %2071 = vmatpush1.msra.mxu0 0.0
        %2072 = vmatprep.subr.mxu0 0.0
        %2073 = vmatpush1.msra.mxu0 0.0
        %2074 = vmatprep.subr.mxu0 0.0
        %2075 = vmatpush1.msra.mxu0 0.0
        %2076 = vmatprep.subr.mxu0 0.0
        %2077 = vmatpush1.msra.mxu0 0.0
        %2078 = vmatprep.subr.mxu0 0.0
        %2079 = vmatpush1.msra.mxu0 0.0
        %2080 = vmatprep.subr.mxu0 0.0
        %2081 = vmatpush1.msra.mxu0 0.0
        %2082 = vmatprep.mubr.f32.mxu0 0.0
        %2083 = vmatmul.mubr.f32.gmra.mrb[0].mxu0 %v2016
        %v2084 = vpop.f32.mrb[0].mxu0
        %v2085 = vadd.f32 0.0, %v2084
        %v2086 = vpop.f32.mrb[0].mxu0
        %2087 = vdwg.mxu0
        %2088 = vrot.lane.b32.xlu0 %v487, 64
        %v2089 = vpop.permute.xlu0 %2088
        %v2092 = vsel %vm529, %v1922, 0
        %2094 = vmatprep.subr.mxu0 0.0
        %2095 = vmatpush1.msra.mxu0 %v2089
        %2096 = vmatprep.subr.mxu0 0.0
        %2097 = vmatpush1.msra.mxu0 0.0
        %2098 = vmatprep.subr.mxu0 0.0
        %2099 = vmatpush1.msra.mxu0 0.0
        %2100 = vmatprep.subr.mxu0 0.0
        %2101 = vmatpush1.msra.mxu0 0.0
        %2102 = vmatprep.subr.mxu0 0.0
        %2103 = vmatpush1.msra.mxu0 0.0
        %2104 = vmatprep.subr.mxu0 0.0
        %2105 = vmatpush1.msra.mxu0 0.0
        %2106 = vmatprep.subr.mxu0 0.0
        %2107 = vmatpush1.msra.mxu0 0.0
        %2108 = vmatprep.subr.mxu0 0.0
        %2109 = vmatpush1.msra.mxu0 0.0
        %2110 = vmatprep.subr.mxu0 0.0
        %2111 = vmatpush1.msra.mxu0 0.0
        %2112 = vmatprep.subr.mxu0 0.0
        %2113 = vmatpush1.msra.mxu0 0.0
        %2114 = vmatprep.subr.mxu0 0.0
        %2115 = vmatpush1.msra.mxu0 0.0
        %2116 = vmatprep.subr.mxu0 0.0
        %2117 = vmatpush1.msra.mxu0 0.0
        %2118 = vmatprep.subr.mxu0 0.0
        %2119 = vmatpush1.msra.mxu0 0.0
        %2120 = vmatprep.subr.mxu0 0.0
        %2121 = vmatpush1.msra.mxu0 0.0
        %2122 = vmatprep.subr.mxu0 0.0
        %2123 = vmatpush1.msra.mxu0 0.0
        %2124 = vmatprep.subr.mxu0 0.0
        %2125 = vmatpush1.msra.mxu0 0.0
        %2126 = vmatprep.subr.mxu0 0.0
        %2127 = vmatpush1.msra.mxu0 0.0
        %2128 = vmatprep.subr.mxu0 0.0
        %2129 = vmatpush1.msra.mxu0 0.0
        %2130 = vmatprep.subr.mxu0 0.0
        %2131 = vmatpush1.msra.mxu0 0.0
        %2132 = vmatprep.subr.mxu0 0.0
        %2133 = vmatpush1.msra.mxu0 0.0
        %2134 = vmatprep.subr.mxu0 0.0
        %2135 = vmatpush1.msra.mxu0 0.0
        %2136 = vmatprep.subr.mxu0 0.0
        %2137 = vmatpush1.msra.mxu0 0.0
        %2138 = vmatprep.subr.mxu0 0.0
        %2139 = vmatpush1.msra.mxu0 0.0
        %2140 = vmatprep.subr.mxu0 0.0
        %2141 = vmatpush1.msra.mxu0 0.0
        %2142 = vmatprep.subr.mxu0 0.0
        %2143 = vmatpush1.msra.mxu0 0.0
        %2144 = vmatprep.subr.mxu0 0.0
        %2145 = vmatpush1.msra.mxu0 0.0
        %2146 = vmatprep.subr.mxu0 0.0
        %2147 = vmatpush1.msra.mxu0 0.0
        %2148 = vmatprep.subr.mxu0 0.0
        %2149 = vmatpush1.msra.mxu0 0.0
        %2150 = vmatprep.subr.mxu0 0.0
        %2151 = vmatpush1.msra.mxu0 0.0
        %2152 = vmatprep.subr.mxu0 0.0
        %2153 = vmatpush1.msra.mxu0 0.0
        %2154 = vmatprep.subr.mxu0 0.0
        %2155 = vmatpush1.msra.mxu0 0.0
        %2156 = vmatprep.subr.mxu0 0.0
        %2157 = vmatpush1.msra.mxu0 0.0
        %2158 = vmatprep.mubr.f32.mxu0 0.0
        %2159 = vmatmul.mubr.f32.gmra.mrb[0].mxu0 %v2092
        %v2160 = vpop.f32.mrb[0].mxu0
        %v2161 = vadd.f32 0.0, %v2160
        %v2162 = vpop.f32.mrb[0].mxu0
        %2163 = vdwg.mxu0
        %2164 = vrot.lane.b32.xlu0 %v492, 64
        %v2165 = vpop.permute.xlu0 %2164
        %v2168 = vsel %vm529, %v1923, 0
        %2170 = vmatprep.subr.mxu0 0.0
        %2171 = vmatpush1.msra.mxu0 %v2165
        %2172 = vmatprep.subr.mxu0 0.0
        %2173 = vmatpush1.msra.mxu0 0.0
        %2174 = vmatprep.subr.mxu0 0.0
        %2175 = vmatpush1.msra.mxu0 0.0
        %2176 = vmatprep.subr.mxu0 0.0
        %2177 = vmatpush1.msra.mxu0 0.0
        %2178 = vmatprep.subr.mxu0 0.0
        %2179 = vmatpush1.msra.mxu0 0.0
        %2180 = vmatprep.subr.mxu0 0.0
        %2181 = vmatpush1.msra.mxu0 0.0
        %2182 = vmatprep.subr.mxu0 0.0
        %2183 = vmatpush1.msra.mxu0 0.0
        %2184 = vmatprep.subr.mxu0 0.0
        %2185 = vmatpush1.msra.mxu0 0.0
        %2186 = vmatprep.subr.mxu0 0.0
        %2187 = vmatpush1.msra.mxu0 0.0
        %2188 = vmatprep.subr.mxu0 0.0
        %2189 = vmatpush1.msra.mxu0 0.0
        %2190 = vmatprep.subr.mxu0 0.0
        %2191 = vmatpush1.msra.mxu0 0.0
        %2192 = vmatprep.subr.mxu0 0.0
        %2193 = vmatpush1.msra.mxu0 0.0
        %2194 = vmatprep.subr.mxu0 0.0
        %2195 = vmatpush1.msra.mxu0 0.0
        %2196 = vmatprep.subr.mxu0 0.0
        %2197 = vmatpush1.msra.mxu0 0.0
        %2198 = vmatprep.subr.mxu0 0.0
        %2199 = vmatpush1.msra.mxu0 0.0
        %2200 = vmatprep.subr.mxu0 0.0
        %2201 = vmatpush1.msra.mxu0 0.0
        %2202 = vmatprep.subr.mxu0 0.0
        %2203 = vmatpush1.msra.mxu0 0.0
        %2204 = vmatprep.subr.mxu0 0.0
        %2205 = vmatpush1.msra.mxu0 0.0
        %2206 = vmatprep.subr.mxu0 0.0
        %2207 = vmatpush1.msra.mxu0 0.0
        %2208 = vmatprep.subr.mxu0 0.0
        %2209 = vmatpush1.msra.mxu0 0.0
        %2210 = vmatprep.subr.mxu0 0.0
        %2211 = vmatpush1.msra.mxu0 0.0
        %2212 = vmatprep.subr.mxu0 0.0
        %2213 = vmatpush1.msra.mxu0 0.0
        %2214 = vmatprep.subr.mxu0 0.0
        %2215 = vmatpush1.msra.mxu0 0.0
        %2216 = vmatprep.subr.mxu0 0.0
        %2217 = vmatpush1.msra.mxu0 0.0
        %2218 = vmatprep.subr.mxu0 0.0
        %2219 = vmatpush1.msra.mxu0 0.0
        %2220 = vmatprep.subr.mxu0 0.0
        %2221 = vmatpush1.msra.mxu0 0.0
        %2222 = vmatprep.subr.mxu0 0.0
        %2223 = vmatpush1.msra.mxu0 0.0
        %2224 = vmatprep.subr.mxu0 0.0
        %2225 = vmatpush1.msra.mxu0 0.0
        %2226 = vmatprep.subr.mxu0 0.0
        %2227 = vmatpush1.msra.mxu0 0.0
        %2228 = vmatprep.subr.mxu0 0.0
        %2229 = vmatpush1.msra.mxu0 0.0
        %2230 = vmatprep.subr.mxu0 0.0
        %2231 = vmatpush1.msra.mxu0 0.0
        %2232 = vmatprep.subr.mxu0 0.0
        %2233 = vmatpush1.msra.mxu0 0.0
        %2234 = vmatprep.mubr.f32.mxu0 0.0
        %2235 = vmatmul.mubr.f32.gmra.mrb[0].mxu0 %v2168
        %v2236 = vpop.f32.mrb[0].mxu0
        %v2237 = vadd.f32 0.0, %v2236
        %v2238 = vpop.f32.mrb[0].mxu0
        %2239 = vdwg.mxu0
        %2240 = vrot.lane.b32.xlu0 %v500, 64
        %v2241 = vpop.permute.xlu0 %2240
        %v2244 = vsel %vm529, %v1924, 0
        %2246 = vmatprep.subr.mxu0 0.0
        %2247 = vmatpush1.msra.mxu0 %v2241
        %2248 = vmatprep.subr.mxu0 0.0
        %2249 = vmatpush1.msra.mxu0 0.0
        %2250 = vmatprep.subr.mxu0 0.0
        %2251 = vmatpush1.msra.mxu0 0.0
        %2252 = vmatprep.subr.mxu0 0.0
        %2253 = vmatpush1.msra.mxu0 0.0
        %2254 = vmatprep.subr.mxu0 0.0
        %2255 = vmatpush1.msra.mxu0 0.0
        %2256 = vmatprep.subr.mxu0 0.0
        %2257 = vmatpush1.msra.mxu0 0.0
        %2258 = vmatprep.subr.mxu0 0.0
        %2259 = vmatpush1.msra.mxu0 0.0
        %2260 = vmatprep.subr.mxu0 0.0
        %2261 = vmatpush1.msra.mxu0 0.0
        %2262 = vmatprep.subr.mxu0 0.0
        %2263 = vmatpush1.msra.mxu0 0.0
        %2264 = vmatprep.subr.mxu0 0.0
        %2265 = vmatpush1.msra.mxu0 0.0
        %2266 = vmatprep.subr.mxu0 0.0
        %2267 = vmatpush1.msra.mxu0 0.0
        %2268 = vmatprep.subr.mxu0 0.0
        %2269 = vmatpush1.msra.mxu0 0.0
        %2270 = vmatprep.subr.mxu0 0.0
        %2271 = vmatpush1.msra.mxu0 0.0
        %2272 = vmatprep.subr.mxu0 0.0
        %2273 = vmatpush1.msra.mxu0 0.0
        %2274 = vmatprep.subr.mxu0 0.0
        %2275 = vmatpush1.msra.mxu0 0.0
        %2276 = vmatprep.subr.mxu0 0.0
        %2277 = vmatpush1.msra.mxu0 0.0
        %2278 = vmatprep.subr.mxu0 0.0
        %2279 = vmatpush1.msra.mxu0 0.0
        %2280 = vmatprep.subr.mxu0 0.0
        %2281 = vmatpush1.msra.mxu0 0.0
        %2282 = vmatprep.subr.mxu0 0.0
        %2283 = vmatpush1.msra.mxu0 0.0
        %2284 = vmatprep.subr.mxu0 0.0
        %2285 = vmatpush1.msra.mxu0 0.0
        %2286 = vmatprep.subr.mxu0 0.0
        %2287 = vmatpush1.msra.mxu0 0.0
        %2288 = vmatprep.subr.mxu0 0.0
        %2289 = vmatpush1.msra.mxu0 0.0
        %2290 = vmatprep.subr.mxu0 0.0
        %2291 = vmatpush1.msra.mxu0 0.0
        %2292 = vmatprep.subr.mxu0 0.0
        %2293 = vmatpush1.msra.mxu0 0.0
        %2294 = vmatprep.subr.mxu0 0.0
        %2295 = vmatpush1.msra.mxu0 0.0
        %2296 = vmatprep.subr.mxu0 0.0
        %2297 = vmatpush1.msra.mxu0 0.0
        %2298 = vmatprep.subr.mxu0 0.0
        %2299 = vmatpush1.msra.mxu0 0.0
        %2300 = vmatprep.subr.mxu0 0.0
        %2301 = vmatpush1.msra.mxu0 0.0
        %2302 = vmatprep.subr.mxu0 0.0
        %2303 = vmatpush1.msra.mxu0 0.0
        %2304 = vmatprep.subr.mxu0 0.0
        %2305 = vmatpush1.msra.mxu0 0.0
        %2306 = vmatprep.subr.mxu0 0.0
        %2307 = vmatpush1.msra.mxu0 0.0
        %2308 = vmatprep.subr.mxu0 0.0
        %2309 = vmatpush1.msra.mxu0 0.0
        %2310 = vmatprep.mubr.f32.mxu0 0.0
        %2311 = vmatmul.mubr.f32.gmra.mrb[0].mxu0 %v2244
        %v2312 = vpop.f32.mrb[0].mxu0
        %v2313 = vadd.f32 0.0, %v2312
        %v2314 = vpop.f32.mrb[0].mxu0
        %2315 = vdwg.mxu0
        %2316 = vrot.lane.b32.xlu0 %v502, 64
        %v2317 = vpop.permute.xlu0 %2316
        %v2320 = vsel %vm529, %v1925, 0
        %2322 = vmatprep.subr.mxu0 0.0
        %2323 = vmatpush1.msra.mxu0 %v2317
        %2324 = vmatprep.subr.mxu0 0.0
        %2325 = vmatpush1.msra.mxu0 0.0
        %2326 = vmatprep.subr.mxu0 0.0
        %2327 = vmatpush1.msra.mxu0 0.0
        %2328 = vmatprep.subr.mxu0 0.0
        %2329 = vmatpush1.msra.mxu0 0.0
        %2330 = vmatprep.subr.mxu0 0.0
        %2331 = vmatpush1.msra.mxu0 0.0
        %2332 = vmatprep.subr.mxu0 0.0
        %2333 = vmatpush1.msra.mxu0 0.0
        %2334 = vmatprep.subr.mxu0 0.0
        %2335 = vmatpush1.msra.mxu0 0.0
        %2336 = vmatprep.subr.mxu0 0.0
        %2337 = vmatpush1.msra.mxu0 0.0
        %2338 = vmatprep.subr.mxu0 0.0
        %2339 = vmatpush1.msra.mxu0 0.0
        %2340 = vmatprep.subr.mxu0 0.0
        %2341 = vmatpush1.msra.mxu0 0.0
        %2342 = vmatprep.subr.mxu0 0.0
        %2343 = vmatpush1.msra.mxu0 0.0
        %2344 = vmatprep.subr.mxu0 0.0
        %2345 = vmatpush1.msra.mxu0 0.0
        %2346 = vmatprep.subr.mxu0 0.0
        %2347 = vmatpush1.msra.mxu0 0.0
        %2348 = vmatprep.subr.mxu0 0.0
        %2349 = vmatpush1.msra.mxu0 0.0
        %2350 = vmatprep.subr.mxu0 0.0
        %2351 = vmatpush1.msra.mxu0 0.0
        %2352 = vmatprep.subr.mxu0 0.0
        %2353 = vmatpush1.msra.mxu0 0.0
        %2354 = vmatprep.subr.mxu0 0.0
        %2355 = vmatpush1.msra.mxu0 0.0
        %2356 = vmatprep.subr.mxu0 0.0
        %2357 = vmatpush1.msra.mxu0 0.0
        %2358 = vmatprep.subr.mxu0 0.0
        %2359 = vmatpush1.msra.mxu0 0.0
        %2360 = vmatprep.subr.mxu0 0.0
        %2361 = vmatpush1.msra.mxu0 0.0
        %2362 = vmatprep.subr.mxu0 0.0
        %2363 = vmatpush1.msra.mxu0 0.0
        %2364 = vmatprep.subr.mxu0 0.0
        %2365 = vmatpush1.msra.mxu0 0.0
        %2366 = vmatprep.subr.mxu0 0.0
        %2367 = vmatpush1.msra.mxu0 0.0
        %2368 = vmatprep.subr.mxu0 0.0
        %2369 = vmatpush1.msra.mxu0 0.0
        %2370 = vmatprep.subr.mxu0 0.0
        %2371 = vmatpush1.msra.mxu0 0.0
        %2372 = vmatprep.subr.mxu0 0.0
        %2373 = vmatpush1.msra.mxu0 0.0
        %2374 = vmatprep.subr.mxu0 0.0
        %2375 = vmatpush1.msra.mxu0 0.0
        %2376 = vmatprep.subr.mxu0 0.0
        %2377 = vmatpush1.msra.mxu0 0.0
        %2378 = vmatprep.subr.mxu0 0.0
        %2379 = vmatpush1.msra.mxu0 0.0
        %2380 = vmatprep.subr.mxu0 0.0
        %2381 = vmatpush1.msra.mxu0 0.0
        %2382 = vmatprep.subr.mxu0 0.0
        %2383 = vmatpush1.msra.mxu0 0.0
        %2384 = vmatprep.subr.mxu0 0.0
        %2385 = vmatpush1.msra.mxu0 0.0
        %2386 = vmatprep.mubr.f32.mxu0 0.0
        %2387 = vmatmul.mubr.f32.gmra.mrb[0].mxu0 %v2320
        %v2388 = vpop.f32.mrb[0].mxu0
        %v2389 = vadd.f32 0.0, %v2388
        %v2390 = vpop.f32.mrb[0].mxu0
        %2391 = vdwg.mxu0
        %2392 = vrot.lane.b32.xlu0 %v504, 64
        %v2393 = vpop.permute.xlu0 %2392
        %v2396 = vsel %vm529, %v1926, 0
        %2398 = vmatprep.subr.mxu0 0.0
        %2399 = vmatpush1.msra.mxu0 %v2393
        %2400 = vmatprep.subr.mxu0 0.0
        %2401 = vmatpush1.msra.mxu0 0.0
        %2402 = vmatprep.subr.mxu0 0.0
        %2403 = vmatpush1.msra.mxu0 0.0
        %2404 = vmatprep.subr.mxu0 0.0
        %2405 = vmatpush1.msra.mxu0 0.0
        %2406 = vmatprep.subr.mxu0 0.0
        %2407 = vmatpush1.msra.mxu0 0.0
        %2408 = vmatprep.subr.mxu0 0.0
        %2409 = vmatpush1.msra.mxu0 0.0
        %2410 = vmatprep.subr.mxu0 0.0
        %2411 = vmatpush1.msra.mxu0 0.0
        %2412 = vmatprep.subr.mxu0 0.0
        %2413 = vmatpush1.msra.mxu0 0.0
        %2414 = vmatprep.subr.mxu0 0.0
        %2415 = vmatpush1.msra.mxu0 0.0
        %2416 = vmatprep.subr.mxu0 0.0
        %2417 = vmatpush1.msra.mxu0 0.0
        %2418 = vmatprep.subr.mxu0 0.0
        %2419 = vmatpush1.msra.mxu0 0.0
        %2420 = vmatprep.subr.mxu0 0.0
        %2421 = vmatpush1.msra.mxu0 0.0
        %2422 = vmatprep.subr.mxu0 0.0
        %2423 = vmatpush1.msra.mxu0 0.0
        %2424 = vmatprep.subr.mxu0 0.0
        %2425 = vmatpush1.msra.mxu0 0.0
        %2426 = vmatprep.subr.mxu0 0.0
        %2427 = vmatpush1.msra.mxu0 0.0
        %2428 = vmatprep.subr.mxu0 0.0
        %2429 = vmatpush1.msra.mxu0 0.0
        %2430 = vmatprep.subr.mxu0 0.0
        %2431 = vmatpush1.msra.mxu0 0.0
        %2432 = vmatprep.subr.mxu0 0.0
        %2433 = vmatpush1.msra.mxu0 0.0
        %2434 = vmatprep.subr.mxu0 0.0
        %2435 = vmatpush1.msra.mxu0 0.0
        %2436 = vmatprep.subr.mxu0 0.0
        %2437 = vmatpush1.msra.mxu0 0.0
        %2438 = vmatprep.subr.mxu0 0.0
        %2439 = vmatpush1.msra.mxu0 0.0
        %2440 = vmatprep.subr.mxu0 0.0
        %2441 = vmatpush1.msra.mxu0 0.0
        %2442 = vmatprep.subr.mxu0 0.0
        %2443 = vmatpush1.msra.mxu0 0.0
        %2444 = vmatprep.subr.mxu0 0.0
        %2445 = vmatpush1.msra.mxu0 0.0
        %2446 = vmatprep.subr.mxu0 0.0
        %2447 = vmatpush1.msra.mxu0 0.0
        %2448 = vmatprep.subr.mxu0 0.0
        %2449 = vmatpush1.msra.mxu0 0.0
        %2450 = vmatprep.subr.mxu0 0.0
        %2451 = vmatpush1.msra.mxu0 0.0
        %2452 = vmatprep.subr.mxu0 0.0
        %2453 = vmatpush1.msra.mxu0 0.0
        %2454 = vmatprep.subr.mxu0 0.0
        %2455 = vmatpush1.msra.mxu0 0.0
        %2456 = vmatprep.subr.mxu0 0.0
        %2457 = vmatpush1.msra.mxu0 0.0
        %2458 = vmatprep.subr.mxu0 0.0
        %2459 = vmatpush1.msra.mxu0 0.0
        %2460 = vmatprep.subr.mxu0 0.0
        %2461 = vmatpush1.msra.mxu0 0.0
        %2462 = vmatprep.mubr.f32.mxu0 0.0
        %2463 = vmatmul.mubr.f32.gmra.mrb[0].mxu0 %v2396
        %v2464 = vpop.f32.mrb[0].mxu0
        %v2465 = vadd.f32 0.0, %v2464
        %v2466 = vpop.f32.mrb[0].mxu0
        %2467 = vdwg.mxu0
        %2468 = vrot.lane.b32.xlu0 %v506, 64
        %v2469 = vpop.permute.xlu0 %2468
        %v2472 = vsel %vm529, %v1927, 0
        %2474 = vmatprep.subr.mxu0 0.0
        %2475 = vmatpush1.msra.mxu0 %v2469
        %2476 = vmatprep.subr.mxu0 0.0
        %2477 = vmatpush1.msra.mxu0 0.0
        %2478 = vmatprep.subr.mxu0 0.0
        %2479 = vmatpush1.msra.mxu0 0.0
        %2480 = vmatprep.subr.mxu0 0.0
        %2481 = vmatpush1.msra.mxu0 0.0
        %2482 = vmatprep.subr.mxu0 0.0
        %2483 = vmatpush1.msra.mxu0 0.0
        %2484 = vmatprep.subr.mxu0 0.0
        %2485 = vmatpush1.msra.mxu0 0.0
        %2486 = vmatprep.subr.mxu0 0.0
        %2487 = vmatpush1.msra.mxu0 0.0
        %2488 = vmatprep.subr.mxu0 0.0
        %2489 = vmatpush1.msra.mxu0 0.0
        %2490 = vmatprep.subr.mxu0 0.0
        %2491 = vmatpush1.msra.mxu0 0.0
        %2492 = vmatprep.subr.mxu0 0.0
        %2493 = vmatpush1.msra.mxu0 0.0
        %2494 = vmatprep.subr.mxu0 0.0
        %2495 = vmatpush1.msra.mxu0 0.0
        %2496 = vmatprep.subr.mxu0 0.0
        %2497 = vmatpush1.msra.mxu0 0.0
        %2498 = vmatprep.subr.mxu0 0.0
        %2499 = vmatpush1.msra.mxu0 0.0
        %2500 = vmatprep.subr.mxu0 0.0
        %2501 = vmatpush1.msra.mxu0 0.0
        %2502 = vmatprep.subr.mxu0 0.0
        %2503 = vmatpush1.msra.mxu0 0.0
        %2504 = vmatprep.subr.mxu0 0.0
        %2505 = vmatpush1.msra.mxu0 0.0
        %2506 = vmatprep.subr.mxu0 0.0
        %2507 = vmatpush1.msra.mxu0 0.0
        %2508 = vmatprep.subr.mxu0 0.0
        %2509 = vmatpush1.msra.mxu0 0.0
        %2510 = vmatprep.subr.mxu0 0.0
        %2511 = vmatpush1.msra.mxu0 0.0
        %2512 = vmatprep.subr.mxu0 0.0
        %2513 = vmatpush1.msra.mxu0 0.0
        %2514 = vmatprep.subr.mxu0 0.0
        %2515 = vmatpush1.msra.mxu0 0.0
        %2516 = vmatprep.subr.mxu0 0.0
        %2517 = vmatpush1.msra.mxu0 0.0
        %2518 = vmatprep.subr.mxu0 0.0
        %2519 = vmatpush1.msra.mxu0 0.0
        %2520 = vmatprep.subr.mxu0 0.0
        %2521 = vmatpush1.msra.mxu0 0.0
        %2522 = vmatprep.subr.mxu0 0.0
        %2523 = vmatpush1.msra.mxu0 0.0
        %2524 = vmatprep.subr.mxu0 0.0
        %2525 = vmatpush1.msra.mxu0 0.0
        %2526 = vmatprep.subr.mxu0 0.0
        %2527 = vmatpush1.msra.mxu0 0.0
        %2528 = vmatprep.subr.mxu0 0.0
        %2529 = vmatpush1.msra.mxu0 0.0
        %2530 = vmatprep.subr.mxu0 0.0
        %2531 = vmatpush1.msra.mxu0 0.0
        %2532 = vmatprep.subr.mxu0 0.0
        %2533 = vmatpush1.msra.mxu0 0.0
        %2534 = vmatprep.subr.mxu0 0.0
        %2535 = vmatpush1.msra.mxu0 0.0
        %2536 = vmatprep.subr.mxu0 0.0
        %2537 = vmatpush1.msra.mxu0 0.0
        %2538 = vmatprep.mubr.f32.mxu0 0.0
        %2539 = vmatmul.mubr.f32.gmra.mrb[0].mxu0 %v2472
        %v2540 = vpop.f32.mrb[0].mxu0
        %v2541 = vadd.f32 0.0, %v2540
        %v2542 = vpop.f32.mrb[0].mxu0
        %2543 = vdwg.mxu0
        %2544 = vrot.lane.b32.xlu0 %v508, 64
        %v2545 = vpop.permute.xlu0 %2544
        %v2548 = vsel %vm529, %v1928, 0
        %2550 = vmatprep.subr.mxu0 0.0
        %2551 = vmatpush1.msra.mxu0 %v2545
        %2552 = vmatprep.subr.mxu0 0.0
        %2553 = vmatpush1.msra.mxu0 0.0
        %2554 = vmatprep.subr.mxu0 0.0
        %2555 = vmatpush1.msra.mxu0 0.0
        %2556 = vmatprep.subr.mxu0 0.0
        %2557 = vmatpush1.msra.mxu0 0.0
        %2558 = vmatprep.subr.mxu0 0.0
        %2559 = vmatpush1.msra.mxu0 0.0
        %2560 = vmatprep.subr.mxu0 0.0
        %2561 = vmatpush1.msra.mxu0 0.0
        %2562 = vmatprep.subr.mxu0 0.0
        %2563 = vmatpush1.msra.mxu0 0.0
        %2564 = vmatprep.subr.mxu0 0.0
        %2565 = vmatpush1.msra.mxu0 0.0
        %2566 = vmatprep.subr.mxu0 0.0
        %2567 = vmatpush1.msra.mxu0 0.0
        %2568 = vmatprep.subr.mxu0 0.0
        %2569 = vmatpush1.msra.mxu0 0.0
        %2570 = vmatprep.subr.mxu0 0.0
        %2571 = vmatpush1.msra.mxu0 0.0
        %2572 = vmatprep.subr.mxu0 0.0
        %2573 = vmatpush1.msra.mxu0 0.0
        %2574 = vmatprep.subr.mxu0 0.0
        %2575 = vmatpush1.msra.mxu0 0.0
        %2576 = vmatprep.subr.mxu0 0.0
        %2577 = vmatpush1.msra.mxu0 0.0
        %2578 = vmatprep.subr.mxu0 0.0
        %2579 = vmatpush1.msra.mxu0 0.0
        %2580 = vmatprep.subr.mxu0 0.0
        %2581 = vmatpush1.msra.mxu0 0.0
        %2582 = vmatprep.subr.mxu0 0.0
        %2583 = vmatpush1.msra.mxu0 0.0
        %2584 = vmatprep.subr.mxu0 0.0
        %2585 = vmatpush1.msra.mxu0 0.0
        %2586 = vmatprep.subr.mxu0 0.0
        %2587 = vmatpush1.msra.mxu0 0.0
        %2588 = vmatprep.subr.mxu0 0.0
        %2589 = vmatpush1.msra.mxu0 0.0
        %2590 = vmatprep.subr.mxu0 0.0
        %2591 = vmatpush1.msra.mxu0 0.0
        %2592 = vmatprep.subr.mxu0 0.0
        %2593 = vmatpush1.msra.mxu0 0.0
        %2594 = vmatprep.subr.mxu0 0.0
        %2595 = vmatpush1.msra.mxu0 0.0
        %2596 = vmatprep.subr.mxu0 0.0
        %2597 = vmatpush1.msra.mxu0 0.0
        %2598 = vmatprep.subr.mxu0 0.0
        %2599 = vmatpush1.msra.mxu0 0.0
        %2600 = vmatprep.subr.mxu0 0.0
        %2601 = vmatpush1.msra.mxu0 0.0
        %2602 = vmatprep.subr.mxu0 0.0
        %2603 = vmatpush1.msra.mxu0 0.0
        %2604 = vmatprep.subr.mxu0 0.0
        %2605 = vmatpush1.msra.mxu0 0.0
        %2606 = vmatprep.subr.mxu0 0.0
        %2607 = vmatpush1.msra.mxu0 0.0
        %2608 = vmatprep.subr.mxu0 0.0
        %2609 = vmatpush1.msra.mxu0 0.0
        %2610 = vmatprep.subr.mxu0 0.0
        %2611 = vmatpush1.msra.mxu0 0.0
        %2612 = vmatprep.subr.mxu0 0.0
        %2613 = vmatpush1.msra.mxu0 0.0
        %2614 = vmatprep.mubr.f32.mxu0 0.0
        %2615 = vmatmul.mubr.f32.gmra.mrb[0].mxu0 %v2548
        %v2616 = vpop.f32.mrb[0].mxu0
        %v2617 = vadd.f32 0.0, %v2616
        %v2618 = vpop.f32.mrb[0].mxu0
        %2619 = vdwg.mxu0
        %2620 = vrot.lane.b32.xlu0 %v510, 64
        %v2621 = vpop.permute.xlu0 %2620
        %v2624 = vsel %vm529, %v1929, 0
        %2626 = vmatprep.subr.mxu0 0.0
        %2627 = vmatpush1.msra.mxu0 %v2621
        %2628 = vmatprep.subr.mxu0 0.0
        %2629 = vmatpush1.msra.mxu0 0.0
        %2630 = vmatprep.subr.mxu0 0.0
        %2631 = vmatpush1.msra.mxu0 0.0
        %2632 = vmatprep.subr.mxu0 0.0
        %2633 = vmatpush1.msra.mxu0 0.0
        %2634 = vmatprep.subr.mxu0 0.0
        %2635 = vmatpush1.msra.mxu0 0.0
        %2636 = vmatprep.subr.mxu0 0.0
        %2637 = vmatpush1.msra.mxu0 0.0
        %2638 = vmatprep.subr.mxu0 0.0
        %2639 = vmatpush1.msra.mxu0 0.0
        %2640 = vmatprep.subr.mxu0 0.0
        %2641 = vmatpush1.msra.mxu0 0.0
        %2642 = vmatprep.subr.mxu0 0.0
        %2643 = vmatpush1.msra.mxu0 0.0
        %2644 = vmatprep.subr.mxu0 0.0
        %2645 = vmatpush1.msra.mxu0 0.0
        %2646 = vmatprep.subr.mxu0 0.0
        %2647 = vmatpush1.msra.mxu0 0.0
        %2648 = vmatprep.subr.mxu0 0.0
        %2649 = vmatpush1.msra.mxu0 0.0
        %2650 = vmatprep.subr.mxu0 0.0
        %2651 = vmatpush1.msra.mxu0 0.0
        %2652 = vmatprep.subr.mxu0 0.0
        %2653 = vmatpush1.msra.mxu0 0.0
        %2654 = vmatprep.subr.mxu0 0.0
        %2655 = vmatpush1.msra.mxu0 0.0
        %2656 = vmatprep.subr.mxu0 0.0
        %2657 = vmatpush1.msra.mxu0 0.0
        %2658 = vmatprep.subr.mxu0 0.0
        %2659 = vmatpush1.msra.mxu0 0.0
        %2660 = vmatprep.subr.mxu0 0.0
        %2661 = vmatpush1.msra.mxu0 0.0
        %2662 = vmatprep.subr.mxu0 0.0
        %2663 = vmatpush1.msra.mxu0 0.0
        %2664 = vmatprep.subr.mxu0 0.0
        %2665 = vmatpush1.msra.mxu0 0.0
        %2666 = vmatprep.subr.mxu0 0.0
        %2667 = vmatpush1.msra.mxu0 0.0
        %2668 = vmatprep.subr.mxu0 0.0
        %2669 = vmatpush1.msra.mxu0 0.0
        %2670 = vmatprep.subr.mxu0 0.0
        %2671 = vmatpush1.msra.mxu0 0.0
        %2672 = vmatprep.subr.mxu0 0.0
        %2673 = vmatpush1.msra.mxu0 0.0
        %2674 = vmatprep.subr.mxu0 0.0
        %2675 = vmatpush1.msra.mxu0 0.0
        %2676 = vmatprep.subr.mxu0 0.0
        %2677 = vmatpush1.msra.mxu0 0.0
        %2678 = vmatprep.subr.mxu0 0.0
        %2679 = vmatpush1.msra.mxu0 0.0
        %2680 = vmatprep.subr.mxu0 0.0
        %2681 = vmatpush1.msra.mxu0 0.0
        %2682 = vmatprep.subr.mxu0 0.0
        %2683 = vmatpush1.msra.mxu0 0.0
        %2684 = vmatprep.subr.mxu0 0.0
        %2685 = vmatpush1.msra.mxu0 0.0
        %2686 = vmatprep.subr.mxu0 0.0
        %2687 = vmatpush1.msra.mxu0 0.0
        %2688 = vmatprep.subr.mxu0 0.0
        %2689 = vmatpush1.msra.mxu0 0.0
        %2690 = vmatprep.mubr.f32.mxu0 0.0
        %2691 = vmatmul.mubr.f32.gmra.mrb[0].mxu0 %v2624
        %v2692 = vpop.f32.mrb[0].mxu0
        %v2693 = vadd.f32 0.0, %v2692
        %v2694 = vpop.f32.mrb[0].mxu0
        %2695 = vdwg.mxu0
        %2696 = vrot.lane.b32.xlu0 %v512, 64
        %v2697 = vpop.permute.xlu0 %2696
        %v2700 = vsel %vm529, %v1930, 0
        %2702 = vmatprep.subr.mxu0 0.0
        %2703 = vmatpush1.msra.mxu0 %v2697
        %2704 = vmatprep.subr.mxu0 0.0
        %2705 = vmatpush1.msra.mxu0 0.0
        %2706 = vmatprep.subr.mxu0 0.0
        %2707 = vmatpush1.msra.mxu0 0.0
        %2708 = vmatprep.subr.mxu0 0.0
        %2709 = vmatpush1.msra.mxu0 0.0
        %2710 = vmatprep.subr.mxu0 0.0
        %2711 = vmatpush1.msra.mxu0 0.0
        %2712 = vmatprep.subr.mxu0 0.0
        %2713 = vmatpush1.msra.mxu0 0.0
        %2714 = vmatprep.subr.mxu0 0.0
        %2715 = vmatpush1.msra.mxu0 0.0
        %2716 = vmatprep.subr.mxu0 0.0
        %2717 = vmatpush1.msra.mxu0 0.0
        %2718 = vmatprep.subr.mxu0 0.0
        %2719 = vmatpush1.msra.mxu0 0.0
        %2720 = vmatprep.subr.mxu0 0.0
        %2721 = vmatpush1.msra.mxu0 0.0
        %2722 = vmatprep.subr.mxu0 0.0
        %2723 = vmatpush1.msra.mxu0 0.0
        %2724 = vmatprep.subr.mxu0 0.0
        %2725 = vmatpush1.msra.mxu0 0.0
        %2726 = vmatprep.subr.mxu0 0.0
        %2727 = vmatpush1.msra.mxu0 0.0
        %2728 = vmatprep.subr.mxu0 0.0
        %2729 = vmatpush1.msra.mxu0 0.0
        %2730 = vmatprep.subr.mxu0 0.0
        %2731 = vmatpush1.msra.mxu0 0.0
        %2732 = vmatprep.subr.mxu0 0.0
        %2733 = vmatpush1.msra.mxu0 0.0
        %2734 = vmatprep.subr.mxu0 0.0
        %2735 = vmatpush1.msra.mxu0 0.0
        %2736 = vmatprep.subr.mxu0 0.0
        %2737 = vmatpush1.msra.mxu0 0.0
        %2738 = vmatprep.subr.mxu0 0.0
        %2739 = vmatpush1.msra.mxu0 0.0
        %2740 = vmatprep.subr.mxu0 0.0
        %2741 = vmatpush1.msra.mxu0 0.0
        %2742 = vmatprep.subr.mxu0 0.0
        %2743 = vmatpush1.msra.mxu0 0.0
        %2744 = vmatprep.subr.mxu0 0.0
        %2745 = vmatpush1.msra.mxu0 0.0
        %2746 = vmatprep.subr.mxu0 0.0
        %2747 = vmatpush1.msra.mxu0 0.0
        %2748 = vmatprep.subr.mxu0 0.0
        %2749 = vmatpush1.msra.mxu0 0.0
        %2750 = vmatprep.subr.mxu0 0.0
        %2751 = vmatpush1.msra.mxu0 0.0
        %2752 = vmatprep.subr.mxu0 0.0
        %2753 = vmatpush1.msra.mxu0 0.0
        %2754 = vmatprep.subr.mxu0 0.0
        %2755 = vmatpush1.msra.mxu0 0.0
        %2756 = vmatprep.subr.mxu0 0.0
        %2757 = vmatpush1.msra.mxu0 0.0
        %2758 = vmatprep.subr.mxu0 0.0
        %2759 = vmatpush1.msra.mxu0 0.0
        %2760 = vmatprep.subr.mxu0 0.0
        %2761 = vmatpush1.msra.mxu0 0.0
        %2762 = vmatprep.subr.mxu0 0.0
        %2763 = vmatpush1.msra.mxu0 0.0
        %2764 = vmatprep.subr.mxu0 0.0
        %2765 = vmatpush1.msra.mxu0 0.0
        %2766 = vmatprep.mubr.f32.mxu0 0.0
        %2767 = vmatmul.mubr.f32.gmra.mrb[0].mxu0 %v2700
        %v2768 = vpop.f32.mrb[0].mxu0
        %v2769 = vadd.f32 0.0, %v2768
        %v2770 = vpop.f32.mrb[0].mxu0
        %2771 = vdwg.mxu0
        %2772 = vrot.lane.b32.xlu0 %v514, 64
        %v2773 = vpop.permute.xlu0 %2772
        %v2776 = vsel %vm529, %v1931, 0
        %2778 = vmatprep.subr.mxu0 0.0
        %2779 = vmatpush1.msra.mxu0 %v2773
        %2780 = vmatprep.subr.mxu0 0.0
        %2781 = vmatpush1.msra.mxu0 0.0
        %2782 = vmatprep.subr.mxu0 0.0
        %2783 = vmatpush1.msra.mxu0 0.0
        %2784 = vmatprep.subr.mxu0 0.0
        %2785 = vmatpush1.msra.mxu0 0.0
        %2786 = vmatprep.subr.mxu0 0.0
        %2787 = vmatpush1.msra.mxu0 0.0
        %2788 = vmatprep.subr.mxu0 0.0
        %2789 = vmatpush1.msra.mxu0 0.0
        %2790 = vmatprep.subr.mxu0 0.0
        %2791 = vmatpush1.msra.mxu0 0.0
        %2792 = vmatprep.subr.mxu0 0.0
        %2793 = vmatpush1.msra.mxu0 0.0
        %2794 = vmatprep.subr.mxu0 0.0
        %2795 = vmatpush1.msra.mxu0 0.0
        %2796 = vmatprep.subr.mxu0 0.0
        %2797 = vmatpush1.msra.mxu0 0.0
        %2798 = vmatprep.subr.mxu0 0.0
        %2799 = vmatpush1.msra.mxu0 0.0
        %2800 = vmatprep.subr.mxu0 0.0
        %2801 = vmatpush1.msra.mxu0 0.0
        %2802 = vmatprep.subr.mxu0 0.0
        %2803 = vmatpush1.msra.mxu0 0.0
        %2804 = vmatprep.subr.mxu0 0.0
        %2805 = vmatpush1.msra.mxu0 0.0
        %2806 = vmatprep.subr.mxu0 0.0
        %2807 = vmatpush1.msra.mxu0 0.0
        %2808 = vmatprep.subr.mxu0 0.0
        %2809 = vmatpush1.msra.mxu0 0.0
        %2810 = vmatprep.subr.mxu0 0.0
        %2811 = vmatpush1.msra.mxu0 0.0
        %2812 = vmatprep.subr.mxu0 0.0
        %2813 = vmatpush1.msra.mxu0 0.0
        %2814 = vmatprep.subr.mxu0 0.0
        %2815 = vmatpush1.msra.mxu0 0.0
        %2816 = vmatprep.subr.mxu0 0.0
        %2817 = vmatpush1.msra.mxu0 0.0
        %2818 = vmatprep.subr.mxu0 0.0
        %2819 = vmatpush1.msra.mxu0 0.0
        %2820 = vmatprep.subr.mxu0 0.0
        %2821 = vmatpush1.msra.mxu0 0.0
        %2822 = vmatprep.subr.mxu0 0.0
        %2823 = vmatpush1.msra.mxu0 0.0
        %2824 = vmatprep.subr.mxu0 0.0
        %2825 = vmatpush1.msra.mxu0 0.0
        %2826 = vmatprep.subr.mxu0 0.0
        %2827 = vmatpush1.msra.mxu0 0.0
        %2828 = vmatprep.subr.mxu0 0.0
        %2829 = vmatpush1.msra.mxu0 0.0
        %2830 = vmatprep.subr.mxu0 0.0
        %2831 = vmatpush1.msra.mxu0 0.0
        %2832 = vmatprep.subr.mxu0 0.0
        %2833 = vmatpush1.msra.mxu0 0.0
        %2834 = vmatprep.subr.mxu0 0.0
        %2835 = vmatpush1.msra.mxu0 0.0
        %2836 = vmatprep.subr.mxu0 0.0
        %2837 = vmatpush1.msra.mxu0 0.0
        %2838 = vmatprep.subr.mxu0 0.0
        %2839 = vmatpush1.msra.mxu0 0.0
        %2840 = vmatprep.subr.mxu0 0.0
        %2841 = vmatpush1.msra.mxu0 0.0
        %2842 = vmatprep.mubr.f32.mxu0 0.0
        %2843 = vmatmul.mubr.f32.gmra.mrb[0].mxu0 %v2776
        %v2844 = vpop.f32.mrb[0].mxu0
        %v2845 = vadd.f32 0.0, %v2844
        %v2846 = vpop.f32.mrb[0].mxu0
        %2847 = vdwg.mxu0
        %2848 = vrot.lane.b32.xlu0 %v516, 64
        %v2849 = vpop.permute.xlu0 %2848
        %v2852 = vsel %vm529, %v1932, 0
        %2854 = vmatprep.subr.mxu0 0.0
        %2855 = vmatpush1.msra.mxu0 %v2849
        %2856 = vmatprep.subr.mxu0 0.0
        %2857 = vmatpush1.msra.mxu0 0.0
        %2858 = vmatprep.subr.mxu0 0.0
        %2859 = vmatpush1.msra.mxu0 0.0
        %2860 = vmatprep.subr.mxu0 0.0
        %2861 = vmatpush1.msra.mxu0 0.0
        %2862 = vmatprep.subr.mxu0 0.0
        %2863 = vmatpush1.msra.mxu0 0.0
        %2864 = vmatprep.subr.mxu0 0.0
        %2865 = vmatpush1.msra.mxu0 0.0
        %2866 = vmatprep.subr.mxu0 0.0
        %2867 = vmatpush1.msra.mxu0 0.0
        %2868 = vmatprep.subr.mxu0 0.0
        %2869 = vmatpush1.msra.mxu0 0.0
        %2870 = vmatprep.subr.mxu0 0.0
        %2871 = vmatpush1.msra.mxu0 0.0
        %2872 = vmatprep.subr.mxu0 0.0
        %2873 = vmatpush1.msra.mxu0 0.0
        %2874 = vmatprep.subr.mxu0 0.0
        %2875 = vmatpush1.msra.mxu0 0.0
        %2876 = vmatprep.subr.mxu0 0.0
        %2877 = vmatpush1.msra.mxu0 0.0
        %2878 = vmatprep.subr.mxu0 0.0
        %2879 = vmatpush1.msra.mxu0 0.0
        %2880 = vmatprep.subr.mxu0 0.0
        %2881 = vmatpush1.msra.mxu0 0.0
        %2882 = vmatprep.subr.mxu0 0.0
        %2883 = vmatpush1.msra.mxu0 0.0
        %2884 = vmatprep.subr.mxu0 0.0
        %2885 = vmatpush1.msra.mxu0 0.0
        %2886 = vmatprep.subr.mxu0 0.0
        %2887 = vmatpush1.msra.mxu0 0.0
        %2888 = vmatprep.subr.mxu0 0.0
        %2889 = vmatpush1.msra.mxu0 0.0
        %2890 = vmatprep.subr.mxu0 0.0
        %2891 = vmatpush1.msra.mxu0 0.0
        %2892 = vmatprep.subr.mxu0 0.0
        %2893 = vmatpush1.msra.mxu0 0.0
        %2894 = vmatprep.subr.mxu0 0.0
        %2895 = vmatpush1.msra.mxu0 0.0
        %2896 = vmatprep.subr.mxu0 0.0
        %2897 = vmatpush1.msra.mxu0 0.0
        %2898 = vmatprep.subr.mxu0 0.0
        %2899 = vmatpush1.msra.mxu0 0.0
        %2900 = vmatprep.subr.mxu0 0.0
        %2901 = vmatpush1.msra.mxu0 0.0
        %2902 = vmatprep.subr.mxu0 0.0
        %2903 = vmatpush1.msra.mxu0 0.0
        %2904 = vmatprep.subr.mxu0 0.0
        %2905 = vmatpush1.msra.mxu0 0.0
        %2906 = vmatprep.subr.mxu0 0.0
        %2907 = vmatpush1.msra.mxu0 0.0
        %2908 = vmatprep.subr.mxu0 0.0
        %2909 = vmatpush1.msra.mxu0 0.0
        %2910 = vmatprep.subr.mxu0 0.0
        %2911 = vmatpush1.msra.mxu0 0.0
        %2912 = vmatprep.subr.mxu0 0.0
        %2913 = vmatpush1.msra.mxu0 0.0
        %2914 = vmatprep.subr.mxu0 0.0
        %2915 = vmatpush1.msra.mxu0 0.0
        %2916 = vmatprep.subr.mxu0 0.0
        %2917 = vmatpush1.msra.mxu0 0.0
        %2918 = vmatprep.mubr.f32.mxu0 0.0
        %2919 = vmatmul.mubr.f32.gmra.mrb[0].mxu0 %v2852
        %v2920 = vpop.f32.mrb[0].mxu0
        %v2921 = vadd.f32 0.0, %v2920
        %v2922 = vpop.f32.mrb[0].mxu0
        %2923 = vdwg.mxu0
        %2924 = vrot.lane.b32.xlu0 %v518, 64
        %v2925 = vpop.permute.xlu0 %2924
        %v2928 = vsel %vm529, %v1933, 0
        %2930 = vmatprep.subr.mxu0 0.0
        %2931 = vmatpush1.msra.mxu0 %v2925
        %2932 = vmatprep.subr.mxu0 0.0
        %2933 = vmatpush1.msra.mxu0 0.0
        %2934 = vmatprep.subr.mxu0 0.0
        %2935 = vmatpush1.msra.mxu0 0.0
        %2936 = vmatprep.subr.mxu0 0.0
        %2937 = vmatpush1.msra.mxu0 0.0
        %2938 = vmatprep.subr.mxu0 0.0
        %2939 = vmatpush1.msra.mxu0 0.0
        %2940 = vmatprep.subr.mxu0 0.0
        %2941 = vmatpush1.msra.mxu0 0.0
        %2942 = vmatprep.subr.mxu0 0.0
        %2943 = vmatpush1.msra.mxu0 0.0
        %2944 = vmatprep.subr.mxu0 0.0
        %2945 = vmatpush1.msra.mxu0 0.0
        %2946 = vmatprep.subr.mxu0 0.0
        %2947 = vmatpush1.msra.mxu0 0.0
        %2948 = vmatprep.subr.mxu0 0.0
        %2949 = vmatpush1.msra.mxu0 0.0
        %2950 = vmatprep.subr.mxu0 0.0
        %2951 = vmatpush1.msra.mxu0 0.0
        %2952 = vmatprep.subr.mxu0 0.0
        %2953 = vmatpush1.msra.mxu0 0.0
        %2954 = vmatprep.subr.mxu0 0.0
        %2955 = vmatpush1.msra.mxu0 0.0
        %2956 = vmatprep.subr.mxu0 0.0
        %2957 = vmatpush1.msra.mxu0 0.0
        %2958 = vmatprep.subr.mxu0 0.0
        %2959 = vmatpush1.msra.mxu0 0.0
        %2960 = vmatprep.subr.mxu0 0.0
        %2961 = vmatpush1.msra.mxu0 0.0
        %2962 = vmatprep.subr.mxu0 0.0
        %2963 = vmatpush1.msra.mxu0 0.0
        %2964 = vmatprep.subr.mxu0 0.0
        %2965 = vmatpush1.msra.mxu0 0.0
        %2966 = vmatprep.subr.mxu0 0.0
        %2967 = vmatpush1.msra.mxu0 0.0
        %2968 = vmatprep.subr.mxu0 0.0
        %2969 = vmatpush1.msra.mxu0 0.0
        %2970 = vmatprep.subr.mxu0 0.0
        %2971 = vmatpush1.msra.mxu0 0.0
        %2972 = vmatprep.subr.mxu0 0.0
        %2973 = vmatpush1.msra.mxu0 0.0
        %2974 = vmatprep.subr.mxu0 0.0
        %2975 = vmatpush1.msra.mxu0 0.0
        %2976 = vmatprep.subr.mxu0 0.0
        %2977 = vmatpush1.msra.mxu0 0.0
        %2978 = vmatprep.subr.mxu0 0.0
        %2979 = vmatpush1.msra.mxu0 0.0
        %2980 = vmatprep.subr.mxu0 0.0
        %2981 = vmatpush1.msra.mxu0 0.0
        %2982 = vmatprep.subr.mxu0 0.0
        %2983 = vmatpush1.msra.mxu0 0.0
        %2984 = vmatprep.subr.mxu0 0.0
        %2985 = vmatpush1.msra.mxu0 0.0
        %2986 = vmatprep.subr.mxu0 0.0
        %2987 = vmatpush1.msra.mxu0 0.0
        %2988 = vmatprep.subr.mxu0 0.0
        %2989 = vmatpush1.msra.mxu0 0.0
        %2990 = vmatprep.subr.mxu0 0.0
        %2991 = vmatpush1.msra.mxu0 0.0
        %2992 = vmatprep.subr.mxu0 0.0
        %2993 = vmatpush1.msra.mxu0 0.0
        %2994 = vmatprep.mubr.f32.mxu0 0.0
        %2995 = vmatmul.mubr.f32.gmra.mrb[0].mxu0 %v2928
        %v2996 = vpop.f32.mrb[0].mxu0
        %v2997 = vadd.f32 0.0, %v2996
        %v2998 = vpop.f32.mrb[0].mxu0
        %2999 = vdwg.mxu0
        %3000 = vrot.lane.b32.xlu0 %v520, 64
        %v3001 = vpop.permute.xlu0 %3000
        %v3004 = vsel %vm529, %v1934, 0
        %3006 = vmatprep.subr.mxu0 0.0
        %3007 = vmatpush1.msra.mxu0 %v3001
        %3008 = vmatprep.subr.mxu0 0.0
        %3009 = vmatpush1.msra.mxu0 0.0
        %3010 = vmatprep.subr.mxu0 0.0
        %3011 = vmatpush1.msra.mxu0 0.0
        %3012 = vmatprep.subr.mxu0 0.0
        %3013 = vmatpush1.msra.mxu0 0.0
        %3014 = vmatprep.subr.mxu0 0.0
        %3015 = vmatpush1.msra.mxu0 0.0
        %3016 = vmatprep.subr.mxu0 0.0
        %3017 = vmatpush1.msra.mxu0 0.0
        %3018 = vmatprep.subr.mxu0 0.0
        %3019 = vmatpush1.msra.mxu0 0.0
        %3020 = vmatprep.subr.mxu0 0.0
        %3021 = vmatpush1.msra.mxu0 0.0
        %3022 = vmatprep.subr.mxu0 0.0
        %3023 = vmatpush1.msra.mxu0 0.0
        %3024 = vmatprep.subr.mxu0 0.0
        %3025 = vmatpush1.msra.mxu0 0.0
        %3026 = vmatprep.subr.mxu0 0.0
        %3027 = vmatpush1.msra.mxu0 0.0
        %3028 = vmatprep.subr.mxu0 0.0
        %3029 = vmatpush1.msra.mxu0 0.0
        %3030 = vmatprep.subr.mxu0 0.0
        %3031 = vmatpush1.msra.mxu0 0.0
        %3032 = vmatprep.subr.mxu0 0.0
        %3033 = vmatpush1.msra.mxu0 0.0
        %3034 = vmatprep.subr.mxu0 0.0
        %3035 = vmatpush1.msra.mxu0 0.0
        %3036 = vmatprep.subr.mxu0 0.0
        %3037 = vmatpush1.msra.mxu0 0.0
        %3038 = vmatprep.subr.mxu0 0.0
        %3039 = vmatpush1.msra.mxu0 0.0
        %3040 = vmatprep.subr.mxu0 0.0
        %3041 = vmatpush1.msra.mxu0 0.0
        %3042 = vmatprep.subr.mxu0 0.0
        %3043 = vmatpush1.msra.mxu0 0.0
        %3044 = vmatprep.subr.mxu0 0.0
        %3045 = vmatpush1.msra.mxu0 0.0
        %3046 = vmatprep.subr.mxu0 0.0
        %3047 = vmatpush1.msra.mxu0 0.0
        %3048 = vmatprep.subr.mxu0 0.0
        %3049 = vmatpush1.msra.mxu0 0.0
        %3050 = vmatprep.subr.mxu0 0.0
        %3051 = vmatpush1.msra.mxu0 0.0
        %3052 = vmatprep.subr.mxu0 0.0
        %3053 = vmatpush1.msra.mxu0 0.0
        %3054 = vmatprep.subr.mxu0 0.0
        %3055 = vmatpush1.msra.mxu0 0.0
        %3056 = vmatprep.subr.mxu0 0.0
        %3057 = vmatpush1.msra.mxu0 0.0
        %3058 = vmatprep.subr.mxu0 0.0
        %3059 = vmatpush1.msra.mxu0 0.0
        %3060 = vmatprep.subr.mxu0 0.0
        %3061 = vmatpush1.msra.mxu0 0.0
        %3062 = vmatprep.subr.mxu0 0.0
        %3063 = vmatpush1.msra.mxu0 0.0
        %3064 = vmatprep.subr.mxu0 0.0
        %3065 = vmatpush1.msra.mxu0 0.0
        %3066 = vmatprep.subr.mxu0 0.0
        %3067 = vmatpush1.msra.mxu0 0.0
        %3068 = vmatprep.subr.mxu0 0.0
        %3069 = vmatpush1.msra.mxu0 0.0
        %3070 = vmatprep.mubr.f32.mxu0 0.0
        %3071 = vmatmul.mubr.f32.gmra.mrb[0].mxu0 %v3004
        %v3072 = vpop.f32.mrb[0].mxu0
        %v3073 = vadd.f32 0.0, %v3072
        %v3074 = vpop.f32.mrb[0].mxu0
        %3075 = vdwg.mxu0
        %3076 = vrot.lane.b32.xlu0 %v522, 64
        %v3077 = vpop.permute.xlu0 %3076
        %v3080 = vsel %vm529, %v1935, 0
        %3082 = vmatprep.subr.mxu0 0.0
        %3083 = vmatpush1.msra.mxu0 %v3077
        %3084 = vmatprep.subr.mxu0 0.0
        %3085 = vmatpush1.msra.mxu0 0.0
        %3086 = vmatprep.subr.mxu0 0.0
        %3087 = vmatpush1.msra.mxu0 0.0
        %3088 = vmatprep.subr.mxu0 0.0
        %3089 = vmatpush1.msra.mxu0 0.0
        %3090 = vmatprep.subr.mxu0 0.0
        %3091 = vmatpush1.msra.mxu0 0.0
        %3092 = vmatprep.subr.mxu0 0.0
        %3093 = vmatpush1.msra.mxu0 0.0
        %3094 = vmatprep.subr.mxu0 0.0
        %3095 = vmatpush1.msra.mxu0 0.0
        %3096 = vmatprep.subr.mxu0 0.0
        %3097 = vmatpush1.msra.mxu0 0.0
        %3098 = vmatprep.subr.mxu0 0.0
        %3099 = vmatpush1.msra.mxu0 0.0
        %3100 = vmatprep.subr.mxu0 0.0
        %3101 = vmatpush1.msra.mxu0 0.0
        %3102 = vmatprep.subr.mxu0 0.0
        %3103 = vmatpush1.msra.mxu0 0.0
        %3104 = vmatprep.subr.mxu0 0.0
        %3105 = vmatpush1.msra.mxu0 0.0
        %3106 = vmatprep.subr.mxu0 0.0
        %3107 = vmatpush1.msra.mxu0 0.0
        %3108 = vmatprep.subr.mxu0 0.0
        %3109 = vmatpush1.msra.mxu0 0.0
        %3110 = vmatprep.subr.mxu0 0.0
        %3111 = vmatpush1.msra.mxu0 0.0
        %3112 = vmatprep.subr.mxu0 0.0
        %3113 = vmatpush1.msra.mxu0 0.0
        %3114 = vmatprep.subr.mxu0 0.0
        %3115 = vmatpush1.msra.mxu0 0.0
        %3116 = vmatprep.subr.mxu0 0.0
        %3117 = vmatpush1.msra.mxu0 0.0
        %3118 = vmatprep.subr.mxu0 0.0
        %3119 = vmatpush1.msra.mxu0 0.0
        %3120 = vmatprep.subr.mxu0 0.0
        %3121 = vmatpush1.msra.mxu0 0.0
        %3122 = vmatprep.subr.mxu0 0.0
        %3123 = vmatpush1.msra.mxu0 0.0
        %3124 = vmatprep.subr.mxu0 0.0
        %3125 = vmatpush1.msra.mxu0 0.0
        %3126 = vmatprep.subr.mxu0 0.0
        %3127 = vmatpush1.msra.mxu0 0.0
        %3128 = vmatprep.subr.mxu0 0.0
        %3129 = vmatpush1.msra.mxu0 0.0
        %3130 = vmatprep.subr.mxu0 0.0
        %3131 = vmatpush1.msra.mxu0 0.0
        %3132 = vmatprep.subr.mxu0 0.0
        %3133 = vmatpush1.msra.mxu0 0.0
        %3134 = vmatprep.subr.mxu0 0.0
        %3135 = vmatpush1.msra.mxu0 0.0
        %3136 = vmatprep.subr.mxu0 0.0
        %3137 = vmatpush1.msra.mxu0 0.0
        %3138 = vmatprep.subr.mxu0 0.0
        %3139 = vmatpush1.msra.mxu0 0.0
        %3140 = vmatprep.subr.mxu0 0.0
        %3141 = vmatpush1.msra.mxu0 0.0
        %3142 = vmatprep.subr.mxu0 0.0
        %3143 = vmatpush1.msra.mxu0 0.0
        %3144 = vmatprep.subr.mxu0 0.0
        %3145 = vmatpush1.msra.mxu0 0.0
        %3146 = vmatprep.mubr.f32.mxu0 0.0
        %3147 = vmatmul.mubr.f32.gmra.mrb[0].mxu0 %v3080
        %v3148 = vpop.f32.mrb[0].mxu0
        %v3149 = vadd.f32 0.0, %v3148
        %v3150 = vpop.f32.mrb[0].mxu0
        %3151 = vdwg.mxu0
        %3156 = vrot.lane.b32.xlu0 %v2313, 8
        %v3157 = vpop.permute.xlu0 %3156
        %3158 = vrot.lane.b32.xlu0 %v2389, 8
        %v3159 = vpop.permute.xlu0 %3158
        %3160 = vrot.lane.b32.xlu0 %v2465, 8
        %v3161 = vpop.permute.xlu0 %3160
        %3162 = vrot.lane.b32.xlu0 %v2541, 8
        %v3163 = vpop.permute.xlu0 %3162
        %3172 = vrot.lane.b32.xlu0 %v2617, 16
        %v3173 = vpop.permute.xlu0 %3172
        %3174 = vrot.lane.b32.xlu0 %v2693, 16
        %v3175 = vpop.permute.xlu0 %3174
        %3176 = vrot.lane.b32.xlu0 %v2769, 16
        %v3177 = vpop.permute.xlu0 %3176
        %3178 = vrot.lane.b32.xlu0 %v2845, 16
        %v3179 = vpop.permute.xlu0 %3178
        %3188 = vrot.lane.b32.xlu0 %v2921, 24
        %v3189 = vpop.permute.xlu0 %3188
        %3190 = vrot.lane.b32.xlu0 %v2997, 24
        %v3191 = vpop.permute.xlu0 %3190
        %3192 = vrot.lane.b32.xlu0 %v3073, 24
        %v3193 = vpop.permute.xlu0 %3192
        %3194 = vrot.lane.b32.xlu0 %v3149, 24
        %v3195 = vpop.permute.xlu0 %3194
        %v3200 = vsel %vm529, %v2009, %v3157
        %v3201 = vsel %vm529, %v2085, %v3159
        %v3202 = vsel %vm529, %v2161, %v3161
        %v3203 = vsel %vm529, %v2237, %v3163
        %vm3204 = vcmask 130048
        %v3205 = vsel %vm3204, %v3200, %v3173
        %v3206 = vsel %vm3204, %v3201, %v3175
        %v3207 = vsel %vm3204, %v3202, %v3177
        %v3208 = vsel %vm3204, %v3203, %v3179
        %vm3209 = vcmask 195584
        %v3210 = vsel %vm3209, %v3205, %v3189
        %v3211 = vsel %vm3209, %v3206, %v3191
        %v3212 = vsel %vm3209, %v3207, %v3193
        %v3213 = vsel %vm3209, %v3208, %v3195
        %v3214 = vld [vmem:[%s3] sm:$0xff]
        %v3215 = vld [vmem:[%s3 + $0x8] sm:$0xff]
        %v3216 = vld [vmem:[%s3 + $0x10] sm:$0xff]
        %v3217 = vld [vmem:[%s3 + $0x18] sm:$0xff]
        %v3218 = vlaneseq
        %v3219 = vshrl.u32 %v3218, 7
        %v3220 = vsub.s32 4, %v3219
        %v3221 = vrot.slane %v323, %v3220
        %v3223 = vsel %vm324, %v3210, 0
        %v3226 = vsel %vm324, %v3211, 0
        %v3229 = vsel %vm324, %v3212, 0
        %v3232 = vsel %vm324, %v3213, 0
        %3234 = vmatprep.subr.mxu0 0.0
        %3235 = vmatpush1.msra.mxu0 %v3214
        %3236 = vmatprep.subr.mxu0 0.0
        %3237 = vmatpush1.msra.mxu0 %v3215
        %3238 = vmatprep.subr.mxu0 0.0
        %3239 = vmatpush1.msra.mxu0 %v3216
        %3240 = vmatprep.subr.mxu0 0.0
        %3241 = vmatpush1.msra.mxu0 %v3217
        %3242 = vmatprep.subr.mxu0 0.0
        %3243 = vmatpush1.msra.mxu0 0.0
        %3244 = vmatprep.subr.mxu0 0.0
        %3245 = vmatpush1.msra.mxu0 0.0
        %3246 = vmatprep.subr.mxu0 0.0
        %3247 = vmatpush1.msra.mxu0 0.0
        %3248 = vmatprep.subr.mxu0 0.0
        %3249 = vmatpush1.msra.mxu0 0.0
        %3250 = vmatprep.subr.mxu0 0.0
        %3251 = vmatpush1.msra.mxu0 0.0
        %3252 = vmatprep.subr.mxu0 0.0
        %3253 = vmatpush1.msra.mxu0 0.0
        %3254 = vmatprep.subr.mxu0 0.0
        %3255 = vmatpush1.msra.mxu0 0.0
        %3256 = vmatprep.subr.mxu0 0.0
        %3257 = vmatpush1.msra.mxu0 0.0
        %3258 = vmatprep.subr.mxu0 0.0
        %3259 = vmatpush1.msra.mxu0 0.0
        %3260 = vmatprep.subr.mxu0 0.0
        %3261 = vmatpush1.msra.mxu0 0.0
        %3262 = vmatprep.subr.mxu0 0.0
        %3263 = vmatpush1.msra.mxu0 0.0
        %3264 = vmatprep.subr.mxu0 0.0
        %3265 = vmatpush1.msra.mxu0 0.0
        %3266 = vmatprep.subr.mxu0 0.0
        %3267 = vmatpush1.msra.mxu0 0.0
        %3268 = vmatprep.subr.mxu0 0.0
        %3269 = vmatpush1.msra.mxu0 0.0
        %3270 = vmatprep.subr.mxu0 0.0
        %3271 = vmatpush1.msra.mxu0 0.0
        %3272 = vmatprep.subr.mxu0 0.0
        %3273 = vmatpush1.msra.mxu0 0.0
        %3274 = vmatprep.subr.mxu0 0.0
        %3275 = vmatpush1.msra.mxu0 0.0
        %3276 = vmatprep.subr.mxu0 0.0
        %3277 = vmatpush1.msra.mxu0 0.0
        %3278 = vmatprep.subr.mxu0 0.0
        %3279 = vmatpush1.msra.mxu0 0.0
        %3280 = vmatprep.subr.mxu0 0.0
        %3281 = vmatpush1.msra.mxu0 0.0
        %3282 = vmatprep.subr.mxu0 0.0
        %3283 = vmatpush1.msra.mxu0 0.0
        %3284 = vmatprep.subr.mxu0 0.0
        %3285 = vmatpush1.msra.mxu0 0.0
        %3286 = vmatprep.subr.mxu0 0.0
        %3287 = vmatpush1.msra.mxu0 0.0
        %3288 = vmatprep.subr.mxu0 0.0
        %3289 = vmatpush1.msra.mxu0 0.0
        %3290 = vmatprep.subr.mxu0 0.0
        %3291 = vmatpush1.msra.mxu0 0.0
        %3292 = vmatprep.subr.mxu0 0.0
        %3293 = vmatpush1.msra.mxu0 0.0
        %3294 = vmatprep.subr.mxu0 0.0
        %3295 = vmatpush1.msra.mxu0 0.0
        %3296 = vmatprep.subr.mxu0 0.0
        %3297 = vmatpush1.msra.mxu0 0.0
        %3298 = vmatprep.mubr.f32.mxu0 0.0
        %3299 = vmatmul.mubr.f32.gmra.mrb[0].mxu0 %v3223
        %v3300 = vpop.f32.mrb[0].mxu0
        %v3301 = vadd.f32 %v3221, %v3300
        %v3302 = vpop.f32.mrb[0].mxu0
        %3303 = vmatprep.mubr.f32.mxu0 0.0
        %3304 = vmatmul.mubr.f32.gmra.mrb[0].mxu0 %v3226
        %v3305 = vpop.f32.mrb[0].mxu0
        %v3306 = vadd.f32 %v3221, %v3305
        %v3307 = vpop.f32.mrb[0].mxu0
        %3308 = vmatprep.mubr.f32.mxu0 0.0
        %3309 = vmatmul.mubr.f32.gmra.mrb[0].mxu0 %v3229
        %v3310 = vpop.f32.mrb[0].mxu0
        %v3311 = vadd.f32 %v3221, %v3310
        %v3312 = vpop.f32.mrb[0].mxu0
        %3313 = vmatprep.mubr.f32.mxu0 0.0
        %3314 = vmatmul.mubr.f32.gmra.mrb[0].mxu0 %v3232
        %v3315 = vpop.f32.mrb[0].mxu0
        %v3316 = vadd.f32 %v3221, %v3315
        %v3317 = vpop.f32.mrb[0].mxu0
        %3318 = vdwg.mxu0
        %v3319 = vadd.f32 %v319, %v3301
        %v3320 = vadd.f32 %v320, %v3306
        %v3321 = vadd.f32 %v321, %v3311
        %v3322 = vadd.f32 %v322, %v3316
        %v3323 = vsel %vm324, %v3319, 0.0
        %3324 = vadd.xlane.f32.xlu0 %v3323
        %v3325 = vpop.xlane.xlu0 %3324
        %v3326 = vsel %vm324, %v3320, 0.0
        %3327 = vadd.xlane.f32.xlu0 %v3326
        %v3328 = vpop.xlane.xlu0 %3327
        %v3329 = vsel %vm324, %v3321, 0.0
        %3330 = vadd.xlane.f32.xlu0 %v3329
        %v3331 = vpop.xlane.xlu0 %3330
        %v3332 = vsel %vm324, %v3322, 0.0
        %3333 = vadd.xlane.f32.xlu0 %v3332
        %v3334 = vpop.xlane.xlu0 %3333
        %v3335 = vmul.f32 %v3325, %v337
        %v3336 = vmul.f32 %v3328, %v337
        %v3337 = vmul.f32 %v3331, %v337
        %v3338 = vmul.f32 %v3334, %v337
        %v3339 = vsub.f32 %v3319, %v3335
        %v3340 = vsub.f32 %v3320, %v3336
        %v3341 = vsub.f32 %v3321, %v3337
        %v3342 = vsub.f32 %v3322, %v3338
        %v3343 = vmul.f32 %v3339, %v3339
        %v3344 = vmul.f32 %v3340, %v3340
        %v3345 = vmul.f32 %v3341, %v3341
        %v3346 = vmul.f32 %v3342, %v3342
        %v3347 = vsel %vm324, %v3343, 0.0
        %3348 = vadd.xlane.f32.xlu0 %v3347
        %v3349 = vpop.xlane.xlu0 %3348
        %v3350 = vsel %vm324, %v3344, 0.0
        %3351 = vadd.xlane.f32.xlu0 %v3350
        %v3352 = vpop.xlane.xlu0 %3351
        %v3353 = vsel %vm324, %v3345, 0.0
        %3354 = vadd.xlane.f32.xlu0 %v3353
        %v3355 = vpop.xlane.xlu0 %3354
        %v3356 = vsel %vm324, %v3346, 0.0
        %3357 = vadd.xlane.f32.xlu0 %v3356
        %v3358 = vpop.xlane.xlu0 %3357
        %v3359 = vmul.f32 %v3349, %v337
        %v3360 = vmul.f32 %v3352, %v337
        %v3361 = vmul.f32 %v3355, %v337
        %v3362 = vmul.f32 %v3358, %v337
        %v3363 = vadd.f32 %v3359, 1e-05
        %v3364 = vadd.f32 %v3360, 1e-05
        %v3365 = vadd.f32 %v3361, 1e-05
        %v3366 = vadd.f32 %v3362, 1e-05
        %v3367 = vrsqrt.pop %v3363
        %v3368 = vrsqrt.pop %v3364
        %v3369 = vrsqrt.pop %v3365
        %v3370 = vrsqrt.pop %v3366
        %v3371 = vmul.f32 %v3339, %v3367
        %v3372 = vmul.f32 %v3340, %v3368
        %v3373 = vmul.f32 %v3341, %v3369
        %v3374 = vmul.f32 %v3342, %v3370
        %v3375 = vlaneseq
        %v3376 = vshrl.u32 %v3375, 7
        %v3377 = vsub.s32 2, %v3376
        %v3378 = vrot.slane %v323, %v3377
        %v3379 = vmul.f32 %v3371, %v3378
        %v3380 = vmul.f32 %v3372, %v3378
        %v3381 = vmul.f32 %v3373, %v3378
        %v3382 = vmul.f32 %v3374, %v3378
        %v3383 = vlaneseq
        %v3384 = vshrl.u32 %v3383, 7
        %v3385 = vsub.s32 3, %v3384
        %v3386 = vrot.slane %v323, %v3385
        %v3387 = vadd.f32 %v3379, %v3386
        %v3388 = vadd.f32 %v3380, %v3386
        %v3389 = vadd.f32 %v3381, %v3386
        %v3390 = vadd.f32 %v3382, %v3386
        %v3391 = vld [vmem:[#allocation2] sm:$0xff]
        %v3392 = vld [vmem:[#allocation2 + $0x8] sm:$0xff]
        %v3393 = vld [vmem:[#allocation2 + $0x10] sm:$0xff]
        %v3394 = vld [vmem:[#allocation2 + $0x18] sm:$0xff]
        %v3395 = vld [vmem:[%s5] sm:$0x1]
        %v3397 = vlaneseq
        %v3398 = vshrl.u32 %v3397, 7
        %v3399 = vsub.s32 0, %v3398
        %v3400 = vrot.slane %v3395, %v3399
        %v3403 = vsel %vm324, %v3387, 0
        %v3406 = vsel %vm324, %v3388, 0
        %v3409 = vsel %vm324, %v3389, 0
        %v3412 = vsel %vm324, %v3390, 0
        %3414 = vmatprep.subr.mxu0 0.0
        %3415 = vmatpush1.msra.mxu0 %v3391
        %3416 = vmatprep.subr.mxu0 0.0
        %3417 = vmatpush1.msra.mxu0 %v3392
        %3418 = vmatprep.subr.mxu0 0.0
        %3419 = vmatpush1.msra.mxu0 %v3393
        %3420 = vmatprep.subr.mxu0 0.0
        %3421 = vmatpush1.msra.mxu0 %v3394
        %3422 = vmatprep.subr.mxu0 0.0
        %3423 = vmatpush1.msra.mxu0 0.0
        %3424 = vmatprep.subr.mxu0 0.0
        %3425 = vmatpush1.msra.mxu0 0.0
        %3426 = vmatprep.subr.mxu0 0.0
        %3427 = vmatpush1.msra.mxu0 0.0
        %3428 = vmatprep.subr.mxu0 0.0
        %3429 = vmatpush1.msra.mxu0 0.0
        %3430 = vmatprep.subr.mxu0 0.0
        %3431 = vmatpush1.msra.mxu0 0.0
        %3432 = vmatprep.subr.mxu0 0.0
        %3433 = vmatpush1.msra.mxu0 0.0
        %3434 = vmatprep.subr.mxu0 0.0
        %3435 = vmatpush1.msra.mxu0 0.0
        %3436 = vmatprep.subr.mxu0 0.0
        %3437 = vmatpush1.msra.mxu0 0.0
        %3438 = vmatprep.subr.mxu0 0.0
        %3439 = vmatpush1.msra.mxu0 0.0
        %3440 = vmatprep.subr.mxu0 0.0
        %3441 = vmatpush1.msra.mxu0 0.0
        %3442 = vmatprep.subr.mxu0 0.0
        %3443 = vmatpush1.msra.mxu0 0.0
        %3444 = vmatprep.subr.mxu0 0.0
        %3445 = vmatpush1.msra.mxu0 0.0
        %3446 = vmatprep.subr.mxu0 0.0
        %3447 = vmatpush1.msra.mxu0 0.0
        %3448 = vmatprep.subr.mxu0 0.0
        %3449 = vmatpush1.msra.mxu0 0.0
        %3450 = vmatprep.subr.mxu0 0.0
        %3451 = vmatpush1.msra.mxu0 0.0
        %3452 = vmatprep.subr.mxu0 0.0
        %3453 = vmatpush1.msra.mxu0 0.0
        %3454 = vmatprep.subr.mxu0 0.0
        %3455 = vmatpush1.msra.mxu0 0.0
        %3456 = vmatprep.subr.mxu0 0.0
        %3457 = vmatpush1.msra.mxu0 0.0
        %3458 = vmatprep.subr.mxu0 0.0
        %3459 = vmatpush1.msra.mxu0 0.0
        %3460 = vmatprep.subr.mxu0 0.0
        %3461 = vmatpush1.msra.mxu0 0.0
        %3462 = vmatprep.subr.mxu0 0.0
        %3463 = vmatpush1.msra.mxu0 0.0
        %3464 = vmatprep.subr.mxu0 0.0
        %3465 = vmatpush1.msra.mxu0 0.0
        %3466 = vmatprep.subr.mxu0 0.0
        %3467 = vmatpush1.msra.mxu0 0.0
        %3468 = vmatprep.subr.mxu0 0.0
        %3469 = vmatpush1.msra.mxu0 0.0
        %3470 = vmatprep.subr.mxu0 0.0
        %3471 = vmatpush1.msra.mxu0 0.0
        %3472 = vmatprep.subr.mxu0 0.0
        %3473 = vmatpush1.msra.mxu0 0.0
        %3474 = vmatprep.subr.mxu0 0.0
        %3475 = vmatpush1.msra.mxu0 0.0
        %3476 = vmatprep.subr.mxu0 0.0
        %3477 = vmatpush1.msra.mxu0 0.0
        %3478 = vmatprep.mubr.f32.mxu0 0.0
        %3479 = vmatmul.mubr.f32.gmra.mrb[0].mxu0 %v3403
        %v3480 = vpop.f32.mrb[0].mxu0
        %v3481 = vadd.f32 %v3400, %v3480
        %v3482 = vpop.f32.mrb[0].mxu0
        %3483 = vmatprep.mubr.f32.mxu0 0.0
        %3484 = vmatmul.mubr.f32.gmra.mrb[0].mxu0 %v3406
        %v3485 = vpop.f32.mrb[0].mxu0
        %v3486 = vadd.f32 %v3400, %v3485
        %v3487 = vpop.f32.mrb[0].mxu0
        %3488 = vmatprep.mubr.f32.mxu0 0.0
        %3489 = vmatmul.mubr.f32.gmra.mrb[0].mxu0 %v3409
        %v3490 = vpop.f32.mrb[0].mxu0
        %v3491 = vadd.f32 %v3400, %v3490
        %v3492 = vpop.f32.mrb[0].mxu0
        %3493 = vmatprep.mubr.f32.mxu0 0.0
        %3494 = vmatmul.mubr.f32.gmra.mrb[0].mxu0 %v3412
        %v3495 = vpop.f32.mrb[0].mxu0
        %v3496 = vadd.f32 %v3400, %v3495
        %v3497 = vpop.f32.mrb[0].mxu0
        %3498 = vdwg.mxu0
        %v3499 = vmul.f32 %v3481, 0.5
        %v3500 = vmul.f32 %v3486, 0.5
        %v3501 = vmul.f32 %v3491, 0.5
        %v3502 = vmul.f32 %v3496, 0.5
        %v3503 = vmul.f32 %v3481, 0.044715
        %v3504 = vmul.f32 %v3486, 0.044715
        %v3505 = vmul.f32 %v3491, 0.044715
        %v3506 = vmul.f32 %v3496, 0.044715
        %v3507 = vmul.f32 %v3503, %v3481
        %v3508 = vmul.f32 %v3504, %v3486
        %v3509 = vmul.f32 %v3505, %v3491
        %v3510 = vmul.f32 %v3506, %v3496
        %v3511 = vmul.f32 %v3507, %v3481
        %v3512 = vmul.f32 %v3508, %v3486
        %v3513 = vmul.f32 %v3509, %v3491
        %v3514 = vmul.f32 %v3510, %v3496
        %v3515 = vadd.f32 %v3481, %v3511
        %v3516 = vadd.f32 %v3486, %v3512
        %v3517 = vadd.f32 %v3491, %v3513
        %v3518 = vadd.f32 %v3496, %v3514
        %v3519 = vmul.f32 %v3515, 0.7978846
        %v3520 = vmul.f32 %v3516, 0.7978846
        %v3521 = vmul.f32 %v3517, 0.7978846
        %v3522 = vmul.f32 %v3518, 0.7978846
        %v3523 = vtanh.pop %v3519
        %v3524 = vtanh.pop %v3520
        %v3525 = vtanh.pop %v3521
        %v3526 = vtanh.pop %v3522
        %v3527 = vadd.f32 %v3523, 1.0
        %v3528 = vadd.f32 %v3524, 1.0
        %v3529 = vadd.f32 %v3525, 1.0
        %v3530 = vadd.f32 %v3526, 1.0
        %v3531 = vmul.f32 %v3499, %v3527
        %v3532 = vmul.f32 %v3500, %v3528
        %v3533 = vmul.f32 %v3501, %v3529
        %v3534 = vmul.f32 %v3502, %v3530
        %v3535 = vld [vmem:[%s7] sm:$0xff]
        %v3536 = vld [vmem:[%s7 + $0x8] sm:$0xff]
        %v3537 = vld [vmem:[%s7 + $0x10] sm:$0xff]
        %v3538 = vld [vmem:[%s7 + $0x18] sm:$0xff]
        %v3539 = vld [vmem:[%s7 + $0x20] sm:$0xff]
        %v3540 = vld [vmem:[%s7 + $0x28] sm:$0xff]
        %v3541 = vld [vmem:[%s7 + $0x30] sm:$0xff]
        %v3542 = vld [vmem:[%s7 + $0x38] sm:$0xff]
        %v3543 = vld [vmem:[%s7 + $0x40] sm:$0xff]
        %v3544 = vld [vmem:[%s7 + $0x48] sm:$0xff]
        %v3545 = vld [vmem:[%s7 + $0x50] sm:$0xff]
        %v3546 = vld [vmem:[%s7 + $0x58] sm:$0xff]
        %v3547 = vld [vmem:[%s7 + $0x60] sm:$0xff]
        %v3548 = vld [vmem:[%s7 + $0x68] sm:$0xff]
        %v3549 = vld [vmem:[%s7 + $0x70] sm:$0xff]
        %v3550 = vld [vmem:[%s7 + $0x78] sm:$0xff]
        %v3551 = vlaneseq
        %v3552 = vshrl.u32 %v3551, 7
        %v3553 = vsub.s32 5, %v3552
        %v3554 = vrot.slane %v323, %v3553
        %3555 = vmatprep.subr.mxu0 0.0
        %3556 = vmatpush1.msra.mxu0 %v3535
        %3557 = vmatprep.subr.mxu0 0.0
        %3558 = vmatpush1.msra.mxu0 %v3536
        %3559 = vmatprep.subr.mxu0 0.0
        %3560 = vmatpush1.msra.mxu0 %v3537
        %3561 = vmatprep.subr.mxu0 0.0
        %3562 = vmatpush1.msra.mxu0 %v3538
        %3563 = vmatprep.subr.mxu0 0.0
        %3564 = vmatpush1.msra.mxu0 %v3539
        %3565 = vmatprep.subr.mxu0 0.0
        %3566 = vmatpush1.msra.mxu0 %v3540
        %3567 = vmatprep.subr.mxu0 0.0
        %3568 = vmatpush1.msra.mxu0 %v3541
        %3569 = vmatprep.subr.mxu0 0.0
        %3570 = vmatpush1.msra.mxu0 %v3542
        %3571 = vmatprep.subr.mxu0 0.0
        %3572 = vmatpush1.msra.mxu0 %v3543
        %3573 = vmatprep.subr.mxu0 0.0
        %3574 = vmatpush1.msra.mxu0 %v3544
        %3575 = vmatprep.subr.mxu0 0.0
        %3576 = vmatpush1.msra.mxu0 %v3545
        %3577 = vmatprep.subr.mxu0 0.0
        %3578 = vmatpush1.msra.mxu0 %v3546
        %3579 = vmatprep.subr.mxu0 0.0
        %3580 = vmatpush1.msra.mxu0 %v3547
        %3581 = vmatprep.subr.mxu0 0.0
        %3582 = vmatpush1.msra.mxu0 %v3548
        %3583 = vmatprep.subr.mxu0 0.0
        %3584 = vmatpush1.msra.mxu0 %v3549
        %3585 = vmatprep.subr.mxu0 0.0
        %3586 = vmatpush1.msra.mxu0 %v3550
        %3587 = vmatprep.subr.mxu0 0.0
        %3588 = vmatpush1.msra.mxu0 0.0
        %3589 = vmatprep.subr.mxu0 0.0
        %3590 = vmatpush1.msra.mxu0 0.0
        %3591 = vmatprep.subr.mxu0 0.0
        %3592 = vmatpush1.msra.mxu0 0.0
        %3593 = vmatprep.subr.mxu0 0.0
        %3594 = vmatpush1.msra.mxu0 0.0
        %3595 = vmatprep.subr.mxu0 0.0
        %3596 = vmatpush1.msra.mxu0 0.0
        %3597 = vmatprep.subr.mxu0 0.0
        %3598 = vmatpush1.msra.mxu0 0.0
        %3599 = vmatprep.subr.mxu0 0.0
        %3600 = vmatpush1.msra.mxu0 0.0
        %3601 = vmatprep.subr.mxu0 0.0
        %3602 = vmatpush1.msra.mxu0 0.0
        %3603 = vmatprep.subr.mxu0 0.0
        %3604 = vmatpush1.msra.mxu0 0.0
        %3605 = vmatprep.subr.mxu0 0.0
        %3606 = vmatpush1.msra.mxu0 0.0
        %3607 = vmatprep.subr.mxu0 0.0
        %3608 = vmatpush1.msra.mxu0 0.0
        %3609 = vmatprep.subr.mxu0 0.0
        %3610 = vmatpush1.msra.mxu0 0.0
        %3611 = vmatprep.subr.mxu0 0.0
        %3612 = vmatpush1.msra.mxu0 0.0
        %3613 = vmatprep.subr.mxu0 0.0
        %3614 = vmatpush1.msra.mxu0 0.0
        %3615 = vmatprep.subr.mxu0 0.0
        %3616 = vmatpush1.msra.mxu0 0.0
        %3617 = vmatprep.subr.mxu0 0.0
        %3618 = vmatpush1.msra.mxu0 0.0
        %3619 = vmatprep.mubr.f32.mxu0 0.0
        %3620 = vmatmul.mubr.f32.gmra.mrb[0].mxu0 %v3531
        %v3621 = vpop.f32.mrb[0].mxu0
        %v3622 = vadd.f32 %v3554, %v3621
        %v3623 = vpop.f32.mrb[0].mxu0
        %3624 = vmatprep.mubr.f32.mxu0 0.0
        %3625 = vmatmul.mubr.f32.gmra.mrb[0].mxu0 %v3532
        %v3626 = vpop.f32.mrb[0].mxu0
        %v3627 = vadd.f32 %v3554, %v3626
        %v3628 = vpop.f32.mrb[0].mxu0
        %3629 = vmatprep.mubr.f32.mxu0 0.0
        %3630 = vmatmul.mubr.f32.gmra.mrb[0].mxu0 %v3533
        %v3631 = vpop.f32.mrb[0].mxu0
        %v3632 = vadd.f32 %v3554, %v3631
        %v3633 = vpop.f32.mrb[0].mxu0
        %3634 = vmatprep.mubr.f32.mxu0 0.0
        %3635 = vmatmul.mubr.f32.gmra.mrb[0].mxu0 %v3534
        %v3636 = vpop.f32.mrb[0].mxu0
        %v3637 = vadd.f32 %v3554, %v3636
        %v3638 = vpop.f32.mrb[0].mxu0
        %3639 = vdwg.mxu0
        %v3640 = vadd.f32 %v3319, %v3622
        %v3641 = vadd.f32 %v3320, %v3627
        %v3642 = vadd.f32 %v3321, %v3632
        %v3643 = vadd.f32 %v3322, %v3637
        %3644 = vst.msk [vmem:[%s313] sm:$0xff] %vm324, %v3640
        %3645 = vst.msk [vmem:[%s313 + $0x8] sm:$0xff] %vm324, %v3641
        %3646 = vst.msk [vmem:[%s313 + $0x10] sm:$0xff] %vm324, %v3642
        %3647 = vst.msk [vmem:[%s313 + $0x18] sm:$0xff] %vm324, %v3643
        %s3648 = sand.u32 %s204, 1
        %s3649 = scalar_lea.sflag [#allocation4], %s3648
        %s3650 = sand.u32 %s204, 1
        %s3651 = smul.addr %s3650, 32
        %s3652 = scalar_lea.vmem [#allocation5], %s3651
        // Predicated region
        $region57: #{tpu_custom_call.1} parent=51 // pred_check
          %p3653 = pneg %p214
        $region58: #{tpu_custom_call.1} parent=51 // pred_check_branch
          %3655 = sbr.rel (%p3653) target = $region60
        $region59: #{tpu_custom_call.1} parent=51 // pred_region
          %s3657 = ssub.s32 512, 512
          %3658 = vsyncadd %s3649, %s3657
          %s3659 = smul.addr %s23, 4
          %s3660 = smul.addr %s3659, 128
          %s3661 = scalar_lea.hbm %s8, %s3660
          %s3662 = sshll.u32 %s3652, 4
          %s3663 = int_to_ptr.vmem [resolvable:$true] %s3662
          %3668 = dma.vmem_to_hbm [thread:$0]  %s3663, 512, %s3661, %s3649, 128, 128, 8
        $region60: #{tpu_custom_call.1} parent=51 // pred_fallthru
          _
      $region52: #{tpu_custom_call.1} parent=5 // pred_fallthru
        _
      %p3669 = scmp.le.s32.totalorder 2, %s18
      // Predicated region
      $region61: #{tpu_custom_call.1} parent=5 // pred_check
        %p3670 = pneg %p3669
      $region62: #{tpu_custom_call.1} parent=5 // pred_check_branch
        %3672 = sbr.rel (%p3670) target = $region64
      $region63: #{tpu_custom_call.1} parent=5 // pred_region
        %s3673 = ssub.s32 %s18, 2
        // Predicated region
        $region65: #{tpu_custom_call.1} parent=63 // pred_check
          %p3674 = pneg %p220
        $region66: #{tpu_custom_call.1} parent=63 // pred_check_branch
          %3676 = sbr.rel (%p3674) target = $region68
        $region67: #{tpu_custom_call.1} parent=63 // pred_region
          %s3677 = sand.u32 %s205, 1
          %s3678 = scalar_lea.sflag [#allocation4], %s3677
          %s3679 = sand.u32 %s205, 1
          %s3680 = smul.addr %s3679, 32
          %s3681 = scalar_lea.vmem [#allocation5], %s3680
          %3682 = dma.done %s3678, 512
        $region68: #{tpu_custom_call.1} parent=63 // pred_fallthru
          _
      $region64: #{tpu_custom_call.1} parent=5 // pred_fallthru
        _
    $region6: #{tpu_custom_call.1} parent=1 // loop_footer
      %s22 = sadd.s32 1, %s18
    $region7: #{tpu_custom_call.1} parent=1 // loop_footer_branch
      %17 = sbr.rel target = $region3
    $region8: #{tpu_custom_call.1} parent=1 // loop_exit
      _
    %3683 = vsyncpa [#allocation3], 1
    %s3684 = scalar_lea.sflag [#allocation3], 1
    %3685 = vsyncpa %s3684, 1
    %3686 = vsyncpa [#allocation4], 1
    %s3687 = scalar_lea.sflag [#allocation4], 1
    %3688 = vsyncpa %s3687, 1

// kernel: tpu_custom_call.1
$region0: #{tpu_custom_call.1}
  #allocation0 [shape = 'u32[]', space=smem, size = 0x4, offset = 0x4, fixed_abs, tag = 'smem constant byte address 0x4 - core index']
  #allocation1 [shape = 'u32[144,128]{1,0:T(1,128)}', space=vmem, size = 0x12000, scoped, tag = 'internal scratch']
  %s0 = inlined_call_operand.vmem [shape: f32[2,32,32], index: 0, kind: input, shape index: {}]
  %s1 = inlined_call_operand.vmem [shape: f32[4,8,8], index: 1, kind: input, shape index: {}]
  %s2 = inlined_call_operand.vmem [shape: f32[32,96], index: 2, kind: input, shape index: {}]
  %s3 = inlined_call_operand.vmem [shape: f32[32,32], index: 3, kind: input, shape index: {}]
  %s4 = inlined_call_operand.vmem [shape: f32[6,32], index: 4, kind: input, shape index: {}]
  %s5 = inlined_call_operand.vmem [shape: f32[1,128], index: 5, kind: input, shape index: {}]
  %s6 = inlined_call_operand.hbm [shape: f32[32,128], index: 6, kind: input, shape index: {}]
  %s7 = inlined_call_operand.vmem [shape: f32[128,32], index: 7, kind: input, shape index: {}]
  %s8 = inlined_call_operand.hbm [shape: f32[2,32,32], index: 8, kind: output, shape index: {}]
  %s9 = sld [smem:[#allocation0]]
  $region69: #{tpu_custom_call.1} parent=0
    _
  %s11 = ssub.s32 1, %s9
  %s12 = scalar_select 0, %s11, %s9
  $region1: #{tpu_custom_call.1} parent=0
    #allocation2 [shape = 'u8[16384]{0}', space=vmem, size = 0x4000, scoped, tag = 'input window, operand 6, single buffered']
    #allocation3 [shape = 's32[2]{0}', space=sflag, size = 0x8, scoped, tag = 'scoped memory for tpu_custom_call.1']
    #allocation4 [shape = 's32[2]{0}', space=sflag, size = 0x8, scoped, tag = 'scoped memory for tpu_custom_call.1']
    #allocation5 [shape = 'u8[32768]{0}', space=vmem, size = 0x8000, scoped, tag = 'output window, operand 0']
    %13 = vsyncpa [#allocation3], 0
    %14 = vsyncpa [#allocation4], 0
    %s15 = scalar_lea.sflag [#allocation4], 1
    %16 = vsyncpa %s15, 0
    loop: start=0, step=1, limit=4
    $region2: #{tpu_custom_call.1} parent=1 // loop_pre_header
      _
    $region3: #{tpu_custom_call.1} parent=1 // loop_header
      %s18 = sphi 0, %s22
      %p19 = scmp.ge.s32.totalorder %s18, 4
      %s28 = sphi 0, %s30
      %s31 = sphi 0, %s28
      %s32 = sphi 0, %s31
      %s48 = sphi 0, %s32
      %s52 = sphi 0, %s52
      %s54 = sphi 0, %s52
      %s55 = sphi 0, %s54
      %s69 = sphi 0, %s55
      %s73 = sphi 0, %s73
      %s75 = sphi 0, %s73
      %s76 = sphi 0, %s75
      %s90 = sphi 0, %s76
      %s94 = sphi 0, %s94
      %s96 = sphi 0, %s94
      %s97 = sphi 0, %s96
      %s111 = sphi 0, %s97
      %s115 = sphi 0, %s115
      %s117 = sphi 0, %s115
      %s118 = sphi 0, %s117
      %s132 = sphi 0, %s118
      %s136 = sphi 0, %s136
      %s138 = sphi 0, %s136
      %s139 = sphi 0, %s138
      %s153 = sphi 0, %s139
      %s157 = sphi 0, %s157
      %s159 = sphi 0, %s157
      %s160 = sphi 0, %s159
      %s174 = sphi 0, %s160
      %s178 = sphi 0, %s178
      %s180 = sphi 0, %s178
      %s181 = sphi 0, %s180
      %s195 = sphi 0, %s181
      %s201 = sphi 0, %s203
      %s204 = sphi 0, %s201
      %s205 = sphi 0, %s204
      %s221 = sphi 0, %s205
    $region4: #{tpu_custom_call.1} parent=1 // loop_header_branch
      %21 = sbr.rel (%p19) target = $region8
    $region5: #{tpu_custom_call.1} parent=1 // loop_body
      %s23 = ssub.s32 %s18, 1
      %s24 = ssub.s32 %s18, 2
      %s25 = sadd.s32 %s18, 1
      %s26 = ssub.s32 %s18, %s25
      %p27 = scmp.eq.s32.totalorder %s26, 0
      %s29 = sadd.s32 %s28, 1
      %s30 = scalar_select %p27, %s28, %s29
      %p33 = pneg %p27
      %p34 = scmp.eq.s32.totalorder %s18, 1
      %p35 = por %p33, %p34
      %p36 = scmp.ne.s32.totalorder %s28, %s31
      %p37 = scmp.eq.s32.totalorder %s18, 0
      %p38 = por %p36, %p37
      %p39 = scmp.ne.s32.totalorder %s28, %s31
      %p40 = scmp.eq.s32.totalorder %s23, 1
      %p41 = por %p39, %p40
      %p42 = scmp.ne.s32.totalorder %s31, %s32
      %p43 = scmp.eq.s32.totalorder %s23, 0
      %p44 = por %p42, %p43
      %p45 = scmp.ne.s32.totalorder %s31, %s32
      %p46 = scmp.eq.s32.totalorder %s24, 1
      %p47 = por %p45, %p46
      %p49 = scmp.ne.s32.totalorder %s32, %s48
      %p50 = scmp.eq.s32.totalorder %s24, 0
      %p51 = por %p49, %p50
      %s53 = sadd.s32 %s52, 1
      %p56 = scmp.eq.s32.totalorder %s18, 1
      %p57 = scmp.ne.s32.totalorder %s52, %s54
      %p58 = scmp.eq.s32.totalorder %s18, 0
      %p59 = por %p57, %p58
      %p60 = scmp.ne.s32.totalorder %s52, %s54
      %p61 = scmp.eq.s32.totalorder %s23, 1
      %p62 = por %p60, %p61
      %p63 = scmp.ne.s32.totalorder %s54, %s55
      %p64 = scmp.eq.s32.totalorder %s23, 0
      %p65 = por %p63, %p64
      %p66 = scmp.ne.s32.totalorder %s54, %s55
      %p67 = scmp.eq.s32.totalorder %s24, 1
      %p68 = por %p66, %p67
      %p70 = scmp.ne.s32.totalorder %s55, %s69
      %p71 = scmp.eq.s32.totalorder %s24, 0
      %p72 = por %p70, %p71
      %s74 = sadd.s32 %s73, 1
      %p77 = scmp.eq.s32.totalorder %s18, 1
      %p78 = scmp.ne.s32.totalorder %s73, %s75
      %p79 = scmp.eq.s32.totalorder %s18, 0
      %p80 = por %p78, %p79
      %p81 = scmp.ne.s32.totalorder %s73, %s75
      %p82 = scmp.eq.s32.totalorder %s23, 1
      %p83 = por %p81, %p82
      %p84 = scmp.ne.s32.totalorder %s75, %s76
      %p85 = scmp.eq.s32.totalorder %s23, 0
      %p86 = por %p84, %p85
      %p87 = scmp.ne.s32.totalorder %s75, %s76
      %p88 = scmp.eq.s32.totalorder %s24, 1
      %p89 = por %p87, %p88
      %p91 = scmp.ne.s32.totalorder %s76, %s90
      %p92 = scmp.eq.s32.totalorder %s24, 0
      %p93 = por %p91, %p92
      %s95 = sadd.s32 %s94, 1
      %p98 = scmp.eq.s32.totalorder %s18, 1
      %p99 = scmp.ne.s32.totalorder %s94, %s96
      %p100 = scmp.eq.s32.totalorder %s18, 0
      %p101 = por %p99, %p100
      %p102 = scmp.ne.s32.totalorder %s94, %s96
      %p103 = scmp.eq.s32.totalorder %s23, 1
      %p104 = por %p102, %p103
      %p105 = scmp.ne.s32.totalorder %s96, %s97
      %p106 = scmp.eq.s32.totalorder %s23, 0
      %p107 = por %p105, %p106
      %p108 = scmp.ne.s32.totalorder %s96, %s97
      %p109 = scmp.eq.s32.totalorder %s24, 1
      %p110 = por %p108, %p109
      %p112 = scmp.ne.s32.totalorder %s97, %s111
      %p113 = scmp.eq.s32.totalorder %s24, 0
      %p114 = por %p112, %p113
      %s116 = sadd.s32 %s115, 1
      %p119 = scmp.eq.s32.totalorder %s18, 1
      %p120 = scmp.ne.s32.totalorder %s115, %s117
      %p121 = scmp.eq.s32.totalorder %s18, 0
      %p122 = por %p120, %p121
      %p123 = scmp.ne.s32.totalorder %s115, %s117
      %p124 = scmp.eq.s32.totalorder %s23, 1
      %p125 = por %p123, %p124
      %p126 = scmp.ne.s32.totalorder %s117, %s118
      %p127 = scmp.eq.s32.totalorder %s23, 0
      %p128 = por %p126, %p127
      %p129 = scmp.ne.s32.totalorder %s117, %s118
      %p130 = scmp.eq.s32.totalorder %s24, 1
      %p131 = por %p129, %p130
      %p133 = scmp.ne.s32.totalorder %s118, %s132
      %p134 = scmp.eq.s32.totalorder %s24, 0
      %p135 = por %p133, %p134
      %s137 = sadd.s32 %s136, 1
      %p140 = scmp.eq.s32.totalorder %s18, 1
      %p141 = scmp.ne.s32.totalorder %s136, %s138
      %p142 = scmp.eq.s32.totalorder %s18, 0
      %p143 = por %p141, %p142
      %p144 = scmp.ne.s32.totalorder %s136, %s138
      %p145 = scmp.eq.s32.totalorder %s23, 1
      %p146 = por %p144, %p145
      %p147 = scmp.ne.s32.totalorder %s138, %s139
      %p148 = scmp.eq.s32.totalorder %s23, 0
      %p149 = por %p147, %p148
      %p150 = scmp.ne.s32.totalorder %s138, %s139
      %p151 = scmp.eq.s32.totalorder %s24, 1
      %p152 = por %p150, %p151
      %p154 = scmp.ne.s32.totalorder %s139, %s153
      %p155 = scmp.eq.s32.totalorder %s24, 0
      %p156 = por %p154, %p155
      %s158 = sadd.s32 %s157, 1
      %p161 = scmp.eq.s32.totalorder %s18, 1
      %p162 = scmp.ne.s32.totalorder %s157, %s159
      %p163 = scmp.eq.s32.totalorder %s18, 0
      %p164 = por %p162, %p163
      %p165 = scmp.ne.s32.totalorder %s157, %s159
      %p166 = scmp.eq.s32.totalorder %s23, 1
      %p167 = por %p165, %p166
      %p168 = scmp.ne.s32.totalorder %s159, %s160
      %p169 = scmp.eq.s32.totalorder %s23, 0
      %p170 = por %p168, %p169
      %p171 = scmp.ne.s32.totalorder %s159, %s160
      %p172 = scmp.eq.s32.totalorder %s24, 1
      %p173 = por %p171, %p172
      %p175 = scmp.ne.s32.totalorder %s160, %s174
      %p176 = scmp.eq.s32.totalorder %s24, 0
      %p177 = por %p175, %p176
      %s179 = sadd.s32 %s178, 1
      %p182 = scmp.eq.s32.totalorder %s18, 1
      %p183 = scmp.ne.s32.totalorder %s178, %s180
      %p184 = scmp.eq.s32.totalorder %s18, 0
      %p185 = por %p183, %p184
      %p186 = scmp.ne.s32.totalorder %s178, %s180
      %p187 = scmp.eq.s32.totalorder %s23, 1
      %p188 = por %p186, %p187
      %p189 = scmp.ne.s32.totalorder %s180, %s181
      %p190 = scmp.eq.s32.totalorder %s23, 0
      %p191 = por %p189, %p190
      %p192 = scmp.ne.s32.totalorder %s180, %s181
      %p193 = scmp.eq.s32.totalorder %s24, 1
      %p194 = por %p192, %p193
      %p196 = scmp.ne.s32.totalorder %s181, %s195
      %p197 = scmp.eq.s32.totalorder %s24, 0
      %p198 = por %p196, %p197
      %s199 = ssub.s32 %s18, %s25
      %p200 = scmp.eq.s32.totalorder %s199, 0
      %s202 = sadd.s32 %s201, 1
      %s203 = scalar_select %p200, %s201, %s202
      %p206 = pneg %p200
      %p207 = scmp.eq.s32.totalorder %s18, 1
      %p208 = por %p206, %p207
      %p209 = scmp.ne.s32.totalorder %s201, %s204
      %p210 = scmp.eq.s32.totalorder %s18, 0
      %p211 = por %p209, %p210
      %p212 = scmp.ne.s32.totalorder %s201, %s204
      %p213 = scmp.eq.s32.totalorder %s23, 1
      %p214 = por %p212, %p213
      %p215 = scmp.ne.s32.totalorder %s204, %s205
      %p216 = scmp.eq.s32.totalorder %s23, 0
      %p217 = por %p215, %p216
      %p218 = scmp.ne.s32.totalorder %s204, %s205
      %p219 = scmp.eq.s32.totalorder %s24, 1
      %p220 = por %p218, %p219
      %p222 = scmp.ne.s32.totalorder %s205, %s221
      %p223 = scmp.eq.s32.totalorder %s24, 0
      %p224 = por %p222, %p223
      %p225 = scmp.le.s32.totalorder 1, %s18
      %p226 = scmp.lt.s32.totalorder %s18, 3
      %p227 = pnand %p225, %p226
      %p228 = pneg %p227
      // Predicated region
      $region9: #{tpu_custom_call.1} parent=5 // pred_check
        _
      $region10: #{tpu_custom_call.1} parent=5 // pred_check_branch
        %230 = sbr.rel (%p227) target = $region12
      $region11: #{tpu_custom_call.1} parent=5 // pred_region
        %s231 = ssub.s32 %s18, 1
        // Predicated region
        $region13: #{tpu_custom_call.1} parent=11 // pred_check
          %p232 = pneg %p65
        $region14: #{tpu_custom_call.1} parent=11 // pred_check_branch
          %234 = sbr.rel (%p232) target = $region16
        $region15: #{tpu_custom_call.1} parent=11 // pred_region
          _
        $region16: #{tpu_custom_call.1} parent=11 // pred_fallthru
          _
        // Predicated region
        $region17: #{tpu_custom_call.1} parent=11 // pred_check
          %p235 = pneg %p86
        $region18: #{tpu_custom_call.1} parent=11 // pred_check_branch
          %237 = sbr.rel (%p235) target = $region20
        $region19: #{tpu_custom_call.1} parent=11 // pred_region
          _
        $region20: #{tpu_custom_call.1} parent=11 // pred_fallthru
          _
        // Predicated region
        $region21: #{tpu_custom_call.1} parent=11 // pred_check
          %p238 = pneg %p107
        $region22: #{tpu_custom_call.1} parent=11 // pred_check_branch
          %240 = sbr.rel (%p238) target = $region24
        $region23: #{tpu_custom_call.1} parent=11 // pred_region
          _
        $region24: #{tpu_custom_call.1} parent=11 // pred_fallthru
          _
        // Predicated region
        $region25: #{tpu_custom_call.1} parent=11 // pred_check
          %p241 = pneg %p128
        $region26: #{tpu_custom_call.1} parent=11 // pred_check_branch
          %243 = sbr.rel (%p241) target = $region28
        $region27: #{tpu_custom_call.1} parent=11 // pred_region
          _
        $region28: #{tpu_custom_call.1} parent=11 // pred_fallthru
          _
        // Predicated region
        $region29: #{tpu_custom_call.1} parent=11 // pred_check
          %p244 = pneg %p149
        $region30: #{tpu_custom_call.1} parent=11 // pred_check_branch
          %246 = sbr.rel (%p244) target = $region32
        $region31: #{tpu_custom_call.1} parent=11 // pred_region
          _
        $region32: #{tpu_custom_call.1} parent=11 // pred_fallthru
          _
        // Predicated region
        $region33: #{tpu_custom_call.1} parent=11 // pred_check
          %p247 = pneg %p170
        $region34: #{tpu_custom_call.1} parent=11 // pred_check_branch
          %249 = sbr.rel (%p247) target = $region36
        $region35: #{tpu_custom_call.1} parent=11 // pred_region
          %s251 = ssub.s32 512, 512
          %252 = vsyncadd [#allocation3], %s251
          %s253 = sshll.u32 [#allocation2], 4
          %s254 = int_to_ptr.vmem [resolvable:$true] %s253
          %259 = dma.hbm_to_vmem [thread:$0]  %s6, 512, %s254, [#allocation3], 128, 128, 8
        $region36: #{tpu_custom_call.1} parent=11 // pred_fallthru
          _
        // Predicated region
        $region37: #{tpu_custom_call.1} parent=11 // pred_check
          %p260 = pneg %p191
        $region38: #{tpu_custom_call.1} parent=11 // pred_check_branch
          %262 = sbr.rel (%p260) target = $region40
        $region39: #{tpu_custom_call.1} parent=11 // pred_region
          _
        $region40: #{tpu_custom_call.1} parent=11 // pred_fallthru
          _
      $region12: #{tpu_custom_call.1} parent=5 // pred_fallthru
        _
      %p263 = scmp.lt.s32.totalorder %s18, 2
      // Predicated region
      $region41: #{tpu_custom_call.1} parent=5 // pred_check
        %p264 = pneg %p263
      $region42: #{tpu_custom_call.1} parent=5 // pred_check_branch
        %266 = sbr.rel (%p264) target = $region44
      $region43: #{tpu_custom_call.1} parent=5 // pred_region
        // Predicated region
        $region45: #{tpu_custom_call.1} parent=43 // pred_check
          %p267 = pneg %p38
        $region46: #{tpu_custom_call.1} parent=43 // pred_check_branch
          %269 = sbr.rel (%p267) target = $region48
        $region47: #{tpu_custom_call.1} parent=43 // pred_region
          %p270 = scmp.lt.s32.totalorder %s18, 1
          %s271 = scalar_select %p270, %s18, 1
          %s272 = smul.addr %s271, 4
          %s273 = smul.addr %s272, 8
          %s274 = scalar_lea.vmem %s0, %s273
        $region48: #{tpu_custom_call.1} parent=43 // pred_fallthru
          _
      $region44: #{tpu_custom_call.1} parent=5 // pred_fallthru
        _
      %p275 = scmp.le.s32.totalorder 1, %s18
      %p276 = scmp.lt.s32.totalorder %s18, 3
      %p277 = pnand %p275, %p276
      %p278 = pneg %p277
      // Predicated region
      $region49: #{tpu_custom_call.1} parent=5 // pred_check
        _
      $region50: #{tpu_custom_call.1} parent=5 // pred_check_branch
        %280 = sbr.rel (%p277) target = $region52
      $region51: #{tpu_custom_call.1} parent=5 // pred_region
        %s281 = ssub.s32 %s18, 1
        // Predicated region
        $region53: #{tpu_custom_call.1} parent=51 // pred_check
          %p282 = pneg %p170
        $region54: #{tpu_custom_call.1} parent=51 // pred_check_branch
          %284 = sbr.rel (%p282) target = $region56
        $region55: #{tpu_custom_call.1} parent=51 // pred_region
          %285 = dma.done [#allocation3], 512
        $region56: #{tpu_custom_call.1} parent=51 // pred_fallthru
          _
        %p286 = scmp.lt.s32.totalorder %s23, 1
        %s287 = scalar_select %p286, %s23, 1
        %s288 = smul.addr %s287, 4
        %s289 = smul.addr %s288, 8
        %s290 = scalar_lea.vmem %s0, %s289
        %p291 = pneg %p44
        %p292 = pneg %p41
        %p293 = pneg %p65
        %p294 = pneg %p62
        %p295 = pneg %p86
        %p296 = pneg %p83
        %p297 = pneg %p107
        %p298 = pneg %p104
        %p299 = pneg %p128
        %p300 = pneg %p125
        %p301 = pneg %p149
        %p302 = pneg %p146
        %p303 = pneg %p170
        %p304 = pneg %p167
        %p305 = pneg %p191
        %p306 = pneg %p188
        %p307 = pneg %p217
        %p308 = pneg %p214
        %s309 = sand.u32 %s204, 1
        %s310 = scalar_lea.sflag [#allocation4], %s309
        %s311 = sand.u32 %s204, 1
        %s312 = smul.addr %s311, 32
        %s313 = scalar_lea.vmem [#allocation5], %s312
        %p314 = scmp.lt.s32.totalorder %s23, 1
        %s315 = scalar_select %p314, %s23, 1
        %s316 = smul.addr %s315, 4
        %s317 = smul.addr %s316, 8
        %s318 = scalar_lea.vmem %s0, %s317
        %v319 = vld [vmem:[%s318] sm:$0xff]
        %v320 = vld [vmem:[%s318 + $0x8] sm:$0xff]
        %v321 = vld [vmem:[%s318 + $0x10] sm:$0xff]
        %v322 = vld [vmem:[%s318 + $0x18] sm:$0xff]
        %v323 = vld [vmem:[%s4] sm:$0x3f]
        %vm324 = vcmask 261120
        %v325 = vsel %vm324, %v319, 0.0
        %326 = vadd.xlane.f32.xlu0 %v325
        %v327 = vpop.xlane.xlu0 %326
        %v328 = vsel %vm324, %v320, 0.0
        %329 = vadd.xlane.f32.xlu0 %v328
        %v330 = vpop.xlane.xlu0 %329
        %v331 = vsel %vm324, %v321, 0.0
        %332 = vadd.xlane.f32.xlu0 %v331
        %v333 = vpop.xlane.xlu0 %332
        %v334 = vsel %vm324, %v322, 0.0
        %335 = vadd.xlane.f32.xlu0 %v334
        %v336 = vpop.xlane.xlu0 %335
        %v337 = vrcp.pop 32.0
        %v338 = vmul.f32 %v327, %v337
        %v339 = vmul.f32 %v330, %v337
        %v340 = vmul.f32 %v333, %v337
        %v341 = vmul.f32 %v336, %v337
        %v342 = vsub.f32 %v319, %v338
        %v343 = vsub.f32 %v320, %v339
        %v344 = vsub.f32 %v321, %v340
        %v345 = vsub.f32 %v322, %v341
        %v346 = vmul.f32 %v342, %v342
        %v347 = vmul.f32 %v343, %v343
        %v348 = vmul.f32 %v344, %v344
        %v349 = vmul.f32 %v345, %v345
        %v350 = vsel %vm324, %v346, 0.0
        %351 = vadd.xlane.f32.xlu0 %v350
        %v352 = vpop.xlane.xlu0 %351
        %v353 = vsel %vm324, %v347, 0.0
        %354 = vadd.xlane.f32.xlu0 %v353
        %v355 = vpop.xlane.xlu0 %354
        %v356 = vsel %vm324, %v348, 0.0
        %357 = vadd.xlane.f32.xlu0 %v356
        %v358 = vpop.xlane.xlu0 %357
        %v359 = vsel %vm324, %v349, 0.0
        %360 = vadd.xlane.f32.xlu0 %v359
        %v361 = vpop.xlane.xlu0 %360
        %v362 = vmul.f32 %v352, %v337
        %v363 = vmul.f32 %v355, %v337
        %v364 = vmul.f32 %v358, %v337
        %v365 = vmul.f32 %v361, %v337
        %v366 = vadd.f32 %v362, 1e-05
        %v367 = vadd.f32 %v363, 1e-05
        %v368 = vadd.f32 %v364, 1e-05
        %v369 = vadd.f32 %v365, 1e-05
        %v370 = vrsqrt.pop %v366
        %v371 = vrsqrt.pop %v367
        %v372 = vrsqrt.pop %v368
        %v373 = vrsqrt.pop %v369
        %v374 = vmul.f32 %v342, %v370
        %v375 = vmul.f32 %v343, %v371
        %v376 = vmul.f32 %v344, %v372
        %v377 = vmul.f32 %v345, %v373
        %v378 = vlaneseq
        %v379 = vshrl.u32 %v378, 7
        %v380 = vsub.s32 0, %v379
        %v381 = vrot.slane %v323, %v380
        %v382 = vmul.f32 %v374, %v381
        %v383 = vmul.f32 %v375, %v381
        %v384 = vmul.f32 %v376, %v381
        %v385 = vmul.f32 %v377, %v381
        %v386 = vlaneseq
        %v387 = vshrl.u32 %v386, 7
        %v388 = vsub.s32 1, %v387
        %v389 = vrot.slane %v323, %v388
        %v390 = vadd.f32 %v382, %v389
        %v391 = vadd.f32 %v383, %v389
        %v392 = vadd.f32 %v384, %v389
        %v393 = vadd.f32 %v385, %v389
        %v394 = vld [vmem:[%s2] sm:$0xff]
        %v395 = vld [vmem:[%s2 + $0x8] sm:$0xff]
        %v396 = vld [vmem:[%s2 + $0x10] sm:$0xff]
        %v397 = vld [vmem:[%s2 + $0x18] sm:$0xff]
        %v399 = vsel %vm324, %v390, 0
        %v402 = vsel %vm324, %v391, 0
        %v405 = vsel %vm324, %v392, 0
        %v408 = vsel %vm324, %v393, 0
        %410 = vmatprep.subr.mxu0 0.0
        %411 = vmatpush1.msra.mxu0 %v394
        %412 = vmatprep.subr.mxu0 0.0
        %413 = vmatpush1.msra.mxu0 %v395
        %414 = vmatprep.subr.mxu0 0.0
        %415 = vmatpush1.msra.mxu0 %v396
        %416 = vmatprep.subr.mxu0 0.0
        %417 = vmatpush1.msra.mxu0 %v397
        %418 = vmatprep.subr.mxu0 0.0
        %419 = vmatpush1.msra.mxu0 0.0
        %420 = vmatprep.subr.mxu0 0.0
        %421 = vmatpush1.msra.mxu0 0.0
        %422 = vmatprep.subr.mxu0 0.0
        %423 = vmatpush1.msra.mxu0 0.0
        %424 = vmatprep.subr.mxu0 0.0
        %425 = vmatpush1.msra.mxu0 0.0
        %426 = vmatprep.subr.mxu0 0.0
        %427 = vmatpush1.msra.mxu0 0.0
        %428 = vmatprep.subr.mxu0 0.0
        %429 = vmatpush1.msra.mxu0 0.0
        %430 = vmatprep.subr.mxu0 0.0
        %431 = vmatpush1.msra.mxu0 0.0
        %432 = vmatprep.subr.mxu0 0.0
        %433 = vmatpush1.msra.mxu0 0.0
        %434 = vmatprep.subr.mxu0 0.0
        %435 = vmatpush1.msra.mxu0 0.0
        %436 = vmatprep.subr.mxu0 0.0
        %437 = vmatpush1.msra.mxu0 0.0
        %438 = vmatprep.subr.mxu0 0.0
        %439 = vmatpush1.msra.mxu0 0.0
        %440 = vmatprep.subr.mxu0 0.0
        %441 = vmatpush1.msra.mxu0 0.0
        %442 = vmatprep.subr.mxu0 0.0
        %443 = vmatpush1.msra.mxu0 0.0
        %444 = vmatprep.subr.mxu0 0.0
        %445 = vmatpush1.msra.mxu0 0.0
        %446 = vmatprep.subr.mxu0 0.0
        %447 = vmatpush1.msra.mxu0 0.0
        %448 = vmatprep.subr.mxu0 0.0
        %449 = vmatpush1.msra.mxu0 0.0
        %450 = vmatprep.subr.mxu0 0.0
        %451 = vmatpush1.msra.mxu0 0.0
        %452 = vmatprep.subr.mxu0 0.0
        %453 = vmatpush1.msra.mxu0 0.0
        %454 = vmatprep.subr.mxu0 0.0
        %455 = vmatpush1.msra.mxu0 0.0
        %456 = vmatprep.subr.mxu0 0.0
        %457 = vmatpush1.msra.mxu0 0.0
        %458 = vmatprep.subr.mxu0 0.0
        %459 = vmatpush1.msra.mxu0 0.0
        %460 = vmatprep.subr.mxu0 0.0
        %461 = vmatpush1.msra.mxu0 0.0
        %462 = vmatprep.subr.mxu0 0.0
        %463 = vmatpush1.msra.mxu0 0.0
        %464 = vmatprep.subr.mxu0 0.0
        %465 = vmatpush1.msra.mxu0 0.0
        %466 = vmatprep.subr.mxu0 0.0
        %467 = vmatpush1.msra.mxu0 0.0
        %468 = vmatprep.subr.mxu0 0.0
        %469 = vmatpush1.msra.mxu0 0.0
        %470 = vmatprep.subr.mxu0 0.0
        %471 = vmatpush1.msra.mxu0 0.0
        %472 = vmatprep.subr.mxu0 0.0
        %473 = vmatpush1.msra.mxu0 0.0
        %474 = vmatprep.mubr.f32.mxu0 0.0
        %475 = vmatmul.mubr.f32.gmra.mrb[0].mxu0 %v399
        %v476 = vpop.f32.mrb[0].mxu0
        %v477 = vadd.f32 0.0, %v476
        %v478 = vpop.f32.mrb[0].mxu0
        %479 = vmatprep.mubr.f32.mxu0 0.0
        %480 = vmatmul.mubr.f32.gmra.mrb[0].mxu0 %v402
        %v481 = vpop.f32.mrb[0].mxu0
        %v482 = vadd.f32 0.0, %v481
        %v483 = vpop.f32.mrb[0].mxu0
        %484 = vmatprep.mubr.f32.mxu0 0.0
        %485 = vmatmul.mubr.f32.gmra.mrb[0].mxu0 %v405
        %v486 = vpop.f32.mrb[0].mxu0
        %v487 = vadd.f32 0.0, %v486
        %v488 = vpop.f32.mrb[0].mxu0
        %489 = vmatprep.mubr.f32.mxu0 0.0
        %490 = vmatmul.mubr.f32.gmra.mrb[0].mxu0 %v408
        %v491 = vpop.f32.mrb[0].mxu0
        %v492 = vadd.f32 0.0, %v491
        %v493 = vpop.f32.mrb[0].mxu0
        %494 = vdwg.mxu0
        %499 = vrot.lane.b32.xlu0 %v477, 120
        %v500 = vpop.permute.xlu0 %499
        %501 = vrot.lane.b32.xlu0 %v482, 120
        %v502 = vpop.permute.xlu0 %501
        %503 = vrot.lane.b32.xlu0 %v487, 120
        %v504 = vpop.permute.xlu0 %503
        %505 = vrot.lane.b32.xlu0 %v492, 120
        %v506 = vpop.permute.xlu0 %505
        %507 = vrot.lane.b32.xlu0 %v477, 112
        %v508 = vpop.permute.xlu0 %507
        %509 = vrot.lane.b32.xlu0 %v482, 112
        %v510 = vpop.permute.xlu0 %509
        %511 = vrot.lane.b32.xlu0 %v487, 112
        %v512 = vpop.permute.xlu0 %511
        %513 = vrot.lane.b32.xlu0 %v492, 112
        %v514 = vpop.permute.xlu0 %513
        %515 = vrot.lane.b32.xlu0 %v477, 104
        %v516 = vpop.permute.xlu0 %515
        %517 = vrot.lane.b32.xlu0 %v482, 104
        %v518 = vpop.permute.xlu0 %517
        %519 = vrot.lane.b32.xlu0 %v487, 104
        %v520 = vpop.permute.xlu0 %519
        %521 = vrot.lane.b32.xlu0 %v492, 104
        %v522 = vpop.permute.xlu0 %521
        %v523 = vld [vmem:[%s1] sm:$0xff]
        %v524 = vld [vmem:[%s1 + $0x8] sm:$0xff]
        %v525 = vld [vmem:[%s1 + $0x10] sm:$0xff]
        %v526 = vld [vmem:[%s1 + $0x18] sm:$0xff]
        %527 = vrot.lane.b32.xlu0 %v477, 96
        %v528 = vpop.permute.xlu0 %527
        %vm529 = vcmask 64512
        %v530 = vsel %vm529, %v477, 0
        %v532 = vsel %vm529, %v528, 0
        %534 = vmatprep.subr.mxu0 0.0
        %535 = vmatpush1.xpose.msra.mxu0 %v532
        %536 = vmatprep.subr.mxu0 0.0
        %537 = vmatpush1.xpose.msra.mxu0 0.0
        %538 = vmatprep.subr.mxu0 0.0
        %539 = vmatpush1.xpose.msra.mxu0 0.0
        %540 = vmatprep.subr.mxu0 0.0
        %541 = vmatpush1.xpose.msra.mxu0 0.0
        %542 = vmatprep.subr.mxu0 0.0
        %543 = vmatpush1.xpose.msra.mxu0 0.0
        %544 = vmatprep.subr.mxu0 0.0
        %545 = vmatpush1.xpose.msra.mxu0 0.0
        %546 = vmatprep.subr.mxu0 0.0
        %547 = vmatpush1.xpose.msra.mxu0 0.0
        %548 = vmatprep.subr.mxu0 0.0
        %549 = vmatpush1.xpose.msra.mxu0 0.0
        %550 = vmatprep.subr.mxu0 0.0
        %551 = vmatpush1.xpose.msra.mxu0 0.0
        %552 = vmatprep.subr.mxu0 0.0
        %553 = vmatpush1.xpose.msra.mxu0 0.0
        %554 = vmatprep.subr.mxu0 0.0
        %555 = vmatpush1.xpose.msra.mxu0 0.0
        %556 = vmatprep.subr.mxu0 0.0
        %557 = vmatpush1.xpose.msra.mxu0 0.0
        %558 = vmatprep.subr.mxu0 0.0
        %559 = vmatpush1.xpose.msra.mxu0 0.0
        %560 = vmatprep.subr.mxu0 0.0
        %561 = vmatpush1.xpose.msra.mxu0 0.0
        %562 = vmatprep.subr.mxu0 0.0
        %563 = vmatpush1.xpose.msra.mxu0 0.0
        %564 = vmatprep.subr.mxu0 0.0
        %565 = vmatpush1.xpose.msra.mxu0 0.0
        %566 = vmatprep.subr.mxu0 0.0
        %567 = vmatpush1.xpose.msra.mxu0 0.0
        %568 = vmatprep.subr.mxu0 0.0
        %569 = vmatpush1.xpose.msra.mxu0 0.0
        %570 = vmatprep.subr.mxu0 0.0
        %571 = vmatpush1.xpose.msra.mxu0 0.0
        %572 = vmatprep.subr.mxu0 0.0
        %573 = vmatpush1.xpose.msra.mxu0 0.0
        %574 = vmatprep.subr.mxu0 0.0
        %575 = vmatpush1.xpose.msra.mxu0 0.0
        %576 = vmatprep.subr.mxu0 0.0
        %577 = vmatpush1.xpose.msra.mxu0 0.0
        %578 = vmatprep.subr.mxu0 0.0
        %579 = vmatpush1.xpose.msra.mxu0 0.0
        %580 = vmatprep.subr.mxu0 0.0
        %581 = vmatpush1.xpose.msra.mxu0 0.0
        %582 = vmatprep.subr.mxu0 0.0
        %583 = vmatpush1.xpose.msra.mxu0 0.0
        %584 = vmatprep.subr.mxu0 0.0
        %585 = vmatpush1.xpose.msra.mxu0 0.0
        %586 = vmatprep.subr.mxu0 0.0
        %587 = vmatpush1.xpose.msra.mxu0 0.0
        %588 = vmatprep.subr.mxu0 0.0
        %589 = vmatpush1.xpose.msra.mxu0 0.0
        %590 = vmatprep.subr.mxu0 0.0
        %591 = vmatpush1.xpose.msra.mxu0 0.0
        %592 = vmatprep.subr.mxu0 0.0
        %593 = vmatpush1.xpose.msra.mxu0 0.0
        %594 = vmatprep.subr.mxu0 0.0
        %595 = vmatpush1.xpose.msra.mxu0 0.0
        %596 = vmatprep.subr.mxu0 0.0
        %597 = vmatpush1.xpose.msra.mxu0 0.0
        %598 = vmatprep.mubr.f32.mxu0 0.0
        %599 = vmatmul.mubr.f32.gmra.mrb[0].mxu0 %v530
        %v600 = vpop.f32.mrb[0].mxu0
        %v601 = vadd.f32 0.0, %v600
        %v602 = vpop.f32.mrb[0].mxu0
        %603 = vdwg.mxu0
        %604 = vrot.lane.b32.xlu0 %v482, 96
        %v605 = vpop.permute.xlu0 %604
        %v606 = vsel %vm529, %v482, 0
        %v608 = vsel %vm529, %v605, 0
        %610 = vmatprep.subr.mxu0 0.0
        %611 = vmatpush1.xpose.msra.mxu0 %v608
        %612 = vmatprep.subr.mxu0 0.0
        %613 = vmatpush1.xpose.msra.mxu0 0.0
        %614 = vmatprep.subr.mxu0 0.0
        %615 = vmatpush1.xpose.msra.mxu0 0.0
        %616 = vmatprep.subr.mxu0 0.0
        %617 = vmatpush1.xpose.msra.mxu0 0.0
        %618 = vmatprep.subr.mxu0 0.0
        %619 = vmatpush1.xpose.msra.mxu0 0.0
        %620 = vmatprep.subr.mxu0 0.0
        %621 = vmatpush1.xpose.msra.mxu0 0.0
        %622 = vmatprep.subr.mxu0 0.0
        %623 = vmatpush1.xpose.msra.mxu0 0.0
        %624 = vmatprep.subr.mxu0 0.0
        %625 = vmatpush1.xpose.msra.mxu0 0.0
        %626 = vmatprep.subr.mxu0 0.0
        %627 = vmatpush1.xpose.msra.mxu0 0.0
        %628 = vmatprep.subr.mxu0 0.0
        %629 = vmatpush1.xpose.msra.mxu0 0.0
        %630 = vmatprep.subr.mxu0 0.0
        %631 = vmatpush1.xpose.msra.mxu0 0.0
        %632 = vmatprep.subr.mxu0 0.0
        %633 = vmatpush1.xpose.msra.mxu0 0.0
        %634 = vmatprep.subr.mxu0 0.0
        %635 = vmatpush1.xpose.msra.mxu0 0.0
        %636 = vmatprep.subr.mxu0 0.0
        %637 = vmatpush1.xpose.msra.mxu0 0.0
        %638 = vmatprep.subr.mxu0 0.0
        %639 = vmatpush1.xpose.msra.mxu0 0.0
        %640 = vmatprep.subr.mxu0 0.0
        %641 = vmatpush1.xpose.msra.mxu0 0.0
        %642 = vmatprep.subr.mxu0 0.0
        %643 = vmatpush1.xpose.msra.mxu0 0.0
        %644 = vmatprep.subr.mxu0 0.0
        %645 = vmatpush1.xpose.msra.mxu0 0.0
        %646 = vmatprep.subr.mxu0 0.0
        %647 = vmatpush1.xpose.msra.mxu0 0.0
        %648 = vmatprep.subr.mxu0 0.0
        %649 = vmatpush1.xpose.msra.mxu0 0.0
        %650 = vmatprep.subr.mxu0 0.0
        %651 = vmatpush1.xpose.msra.mxu0 0.0
        %652 = vmatprep.subr.mxu0 0.0
        %653 = vmatpush1.xpose.msra.mxu0 0.0
        %654 = vmatprep.subr.mxu0 0.0
        %655 = vmatpush1.xpose.msra.mxu0 0.0
        %656 = vmatprep.subr.mxu0 0.0
        %657 = vmatpush1.xpose.msra.mxu0 0.0
        %658 = vmatprep.subr.mxu0 0.0
        %659 = vmatpush1.xpose.msra.mxu0 0.0
        %660 = vmatprep.subr.mxu0 0.0
        %661 = vmatpush1.xpose.msra.mxu0 0.0
        %662 = vmatprep.subr.mxu0 0.0
        %663 = vmatpush1.xpose.msra.mxu0 0.0
        %664 = vmatprep.subr.mxu0 0.0
        %665 = vmatpush1.xpose.msra.mxu0 0.0
        %666 = vmatprep.subr.mxu0 0.0
        %667 = vmatpush1.xpose.msra.mxu0 0.0
        %668 = vmatprep.subr.mxu0 0.0
        %669 = vmatpush1.xpose.msra.mxu0 0.0
        %670 = vmatprep.subr.mxu0 0.0
        %671 = vmatpush1.xpose.msra.mxu0 0.0
        %672 = vmatprep.subr.mxu0 0.0
        %673 = vmatpush1.xpose.msra.mxu0 0.0
        %674 = vmatprep.mubr.f32.mxu0 0.0
        %675 = vmatmul.mubr.f32.gmra.mrb[0].mxu0 %v606
        %v676 = vpop.f32.mrb[0].mxu0
        %v677 = vadd.f32 0.0, %v676
        %v678 = vpop.f32.mrb[0].mxu0
        %679 = vdwg.mxu0
        %680 = vrot.lane.b32.xlu0 %v487, 96
        %v681 = vpop.permute.xlu0 %680
        %v682 = vsel %vm529, %v487, 0
        %v684 = vsel %vm529, %v681, 0
        %686 = vmatprep.subr.mxu0 0.0
        %687 = vmatpush1.xpose.msra.mxu0 %v684
        %688 = vmatprep.subr.mxu0 0.0
        %689 = vmatpush1.xpose.msra.mxu0 0.0
        %690 = vmatprep.subr.mxu0 0.0
        %691 = vmatpush1.xpose.msra.mxu0 0.0
        %692 = vmatprep.subr.mxu0 0.0
        %693 = vmatpush1.xpose.msra.mxu0 0.0
        %694 = vmatprep.subr.mxu0 0.0
        %695 = vmatpush1.xpose.msra.mxu0 0.0
        %696 = vmatprep.subr.mxu0 0.0
        %697 = vmatpush1.xpose.msra.mxu0 0.0
        %698 = vmatprep.subr.mxu0 0.0
        %699 = vmatpush1.xpose.msra.mxu0 0.0
        %700 = vmatprep.subr.mxu0 0.0
        %701 = vmatpush1.xpose.msra.mxu0 0.0
        %702 = vmatprep.subr.mxu0 0.0
        %703 = vmatpush1.xpose.msra.mxu0 0.0
        %704 = vmatprep.subr.mxu0 0.0
        %705 = vmatpush1.xpose.msra.mxu0 0.0
        %706 = vmatprep.subr.mxu0 0.0
        %707 = vmatpush1.xpose.msra.mxu0 0.0
        %708 = vmatprep.subr.mxu0 0.0
        %709 = vmatpush1.xpose.msra.mxu0 0.0
        %710 = vmatprep.subr.mxu0 0.0
        %711 = vmatpush1.xpose.msra.mxu0 0.0
        %712 = vmatprep.subr.mxu0 0.0
        %713 = vmatpush1.xpose.msra.mxu0 0.0
        %714 = vmatprep.subr.mxu0 0.0
        %715 = vmatpush1.xpose.msra.mxu0 0.0
        %716 = vmatprep.subr.mxu0 0.0
        %717 = vmatpush1.xpose.msra.mxu0 0.0
        %718 = vmatprep.subr.mxu0 0.0
        %719 = vmatpush1.xpose.msra.mxu0 0.0
        %720 = vmatprep.subr.mxu0 0.0
        %721 = vmatpush1.xpose.msra.mxu0 0.0
        %722 = vmatprep.subr.mxu0 0.0
        %723 = vmatpush1.xpose.msra.mxu0 0.0
        %724 = vmatprep.subr.mxu0 0.0
        %725 = vmatpush1.xpose.msra.mxu0 0.0
        %726 = vmatprep.subr.mxu0 0.0
        %727 = vmatpush1.xpose.msra.mxu0 0.0
        %728 = vmatprep.subr.mxu0 0.0
        %729 = vmatpush1.xpose.msra.mxu0 0.0
        %730 = vmatprep.subr.mxu0 0.0
        %731 = vmatpush1.xpose.msra.mxu0 0.0
        %732 = vmatprep.subr.mxu0 0.0
        %733 = vmatpush1.xpose.msra.mxu0 0.0
        %734 = vmatprep.subr.mxu0 0.0
        %735 = vmatpush1.xpose.msra.mxu0 0.0
        %736 = vmatprep.subr.mxu0 0.0
        %737 = vmatpush1.xpose.msra.mxu0 0.0
        %738 = vmatprep.subr.mxu0 0.0
        %739 = vmatpush1.xpose.msra.mxu0 0.0
        %740 = vmatprep.subr.mxu0 0.0
        %741 = vmatpush1.xpose.msra.mxu0 0.0
        %742 = vmatprep.subr.mxu0 0.0
        %743 = vmatpush1.xpose.msra.mxu0 0.0
        %744 = vmatprep.subr.mxu0 0.0
        %745 = vmatpush1.xpose.msra.mxu0 0.0
        %746 = vmatprep.subr.mxu0 0.0
        %747 = vmatpush1.xpose.msra.mxu0 0.0
        %748 = vmatprep.subr.mxu0 0.0
        %749 = vmatpush1.xpose.msra.mxu0 0.0
        %750 = vmatprep.mubr.f32.mxu0 0.0
        %751 = vmatmul.mubr.f32.gmra.mrb[0].mxu0 %v682
        %v752 = vpop.f32.mrb[0].mxu0
        %v753 = vadd.f32 0.0, %v752
        %v754 = vpop.f32.mrb[0].mxu0
        %755 = vdwg.mxu0
        %756 = vrot.lane.b32.xlu0 %v492, 96
        %v757 = vpop.permute.xlu0 %756
        %v758 = vsel %vm529, %v492, 0
        %v760 = vsel %vm529, %v757, 0
        %762 = vmatprep.subr.mxu0 0.0
        %763 = vmatpush1.xpose.msra.mxu0 %v760
        %764 = vmatprep.subr.mxu0 0.0
        %765 = vmatpush1.xpose.msra.mxu0 0.0
        %766 = vmatprep.subr.mxu0 0.0
        %767 = vmatpush1.xpose.msra.mxu0 0.0
        %768 = vmatprep.subr.mxu0 0.0
        %769 = vmatpush1.xpose.msra.mxu0 0.0
        %770 = vmatprep.subr.mxu0 0.0
        %771 = vmatpush1.xpose.msra.mxu0 0.0
        %772 = vmatprep.subr.mxu0 0.0
        %773 = vmatpush1.xpose.msra.mxu0 0.0
        %774 = vmatprep.subr.mxu0 0.0
        %775 = vmatpush1.xpose.msra.mxu0 0.0
        %776 = vmatprep.subr.mxu0 0.0
        %777 = vmatpush1.xpose.msra.mxu0 0.0
        %778 = vmatprep.subr.mxu0 0.0
        %779 = vmatpush1.xpose.msra.mxu0 0.0
        %780 = vmatprep.subr.mxu0 0.0
        %781 = vmatpush1.xpose.msra.mxu0 0.0
        %782 = vmatprep.subr.mxu0 0.0
        %783 = vmatpush1.xpose.msra.mxu0 0.0
        %784 = vmatprep.subr.mxu0 0.0
        %785 = vmatpush1.xpose.msra.mxu0 0.0
        %786 = vmatprep.subr.mxu0 0.0
        %787 = vmatpush1.xpose.msra.mxu0 0.0
        %788 = vmatprep.subr.mxu0 0.0
        %789 = vmatpush1.xpose.msra.mxu0 0.0
        %790 = vmatprep.subr.mxu0 0.0
        %791 = vmatpush1.xpose.msra.mxu0 0.0
        %792 = vmatprep.subr.mxu0 0.0
        %793 = vmatpush1.xpose.msra.mxu0 0.0
        %794 = vmatprep.subr.mxu0 0.0
        %795 = vmatpush1.xpose.msra.mxu0 0.0
        %796 = vmatprep.subr.mxu0 0.0
        %797 = vmatpush1.xpose.msra.mxu0 0.0
        %798 = vmatprep.subr.mxu0 0.0
        %799 = vmatpush1.xpose.msra.mxu0 0.0
        %800 = vmatprep.subr.mxu0 0.0
        %801 = vmatpush1.xpose.msra.mxu0 0.0
        %802 = vmatprep.subr.mxu0 0.0
        %803 = vmatpush1.xpose.msra.mxu0 0.0
        %804 = vmatprep.subr.mxu0 0.0
        %805 = vmatpush1.xpose.msra.mxu0 0.0
        %806 = vmatprep.subr.mxu0 0.0
        %807 = vmatpush1.xpose.msra.mxu0 0.0
        %808 = vmatprep.subr.mxu0 0.0
        %809 = vmatpush1.xpose.msra.mxu0 0.0
        %810 = vmatprep.subr.mxu0 0.0
        %811 = vmatpush1.xpose.msra.mxu0 0.0
        %812 = vmatprep.subr.mxu0 0.0
        %813 = vmatpush1.xpose.msra.mxu0 0.0
        %814 = vmatprep.subr.mxu0 0.0
        %815 = vmatpush1.xpose.msra.mxu0 0.0
        %816 = vmatprep.subr.mxu0 0.0
        %817 = vmatpush1.xpose.msra.mxu0 0.0
        %818 = vmatprep.subr.mxu0 0.0
        %819 = vmatpush1.xpose.msra.mxu0 0.0
        %820 = vmatprep.subr.mxu0 0.0
        %821 = vmatpush1.xpose.msra.mxu0 0.0
        %822 = vmatprep.subr.mxu0 0.0
        %823 = vmatpush1.xpose.msra.mxu0 0.0
        %824 = vmatprep.subr.mxu0 0.0
        %825 = vmatpush1.xpose.msra.mxu0 0.0
        %826 = vmatprep.mubr.f32.mxu0 0.0
        %827 = vmatmul.mubr.f32.gmra.mrb[0].mxu0 %v758
        %v828 = vpop.f32.mrb[0].mxu0
        %v829 = vadd.f32 0.0, %v828
        %v830 = vpop.f32.mrb[0].mxu0
        %831 = vdwg.mxu0
        %832 = vrot.lane.b32.xlu0 %v500, 96
        %v833 = vpop.permute.xlu0 %832
        %v834 = vsel %vm529, %v500, 0
        %v836 = vsel %vm529, %v833, 0
        %838 = vmatprep.subr.mxu0 0.0
        %839 = vmatpush1.xpose.msra.mxu0 %v836
        %840 = vmatprep.subr.mxu0 0.0
        %841 = vmatpush1.xpose.msra.mxu0 0.0
        %842 = vmatprep.subr.mxu0 0.0
        %843 = vmatpush1.xpose.msra.mxu0 0.0
        %844 = vmatprep.subr.mxu0 0.0
        %845 = vmatpush1.xpose.msra.mxu0 0.0
        %846 = vmatprep.subr.mxu0 0.0
        %847 = vmatpush1.xpose.msra.mxu0 0.0
        %848 = vmatprep.subr.mxu0 0.0
        %849 = vmatpush1.xpose.msra.mxu0 0.0
        %850 = vmatprep.subr.mxu0 0.0
        %851 = vmatpush1.xpose.msra.mxu0 0.0
        %852 = vmatprep.subr.mxu0 0.0
        %853 = vmatpush1.xpose.msra.mxu0 0.0
        %854 = vmatprep.subr.mxu0 0.0
        %855 = vmatpush1.xpose.msra.mxu0 0.0
        %856 = vmatprep.subr.mxu0 0.0
        %857 = vmatpush1.xpose.msra.mxu0 0.0
        %858 = vmatprep.subr.mxu0 0.0
        %859 = vmatpush1.xpose.msra.mxu0 0.0
        %860 = vmatprep.subr.mxu0 0.0
        %861 = vmatpush1.xpose.msra.mxu0 0.0
        %862 = vmatprep.subr.mxu0 0.0
        %863 = vmatpush1.xpose.msra.mxu0 0.0
        %864 = vmatprep.subr.mxu0 0.0
        %865 = vmatpush1.xpose.msra.mxu0 0.0
        %866 = vmatprep.subr.mxu0 0.0
        %867 = vmatpush1.xpose.msra.mxu0 0.0
        %868 = vmatprep.subr.mxu0 0.0
        %869 = vmatpush1.xpose.msra.mxu0 0.0
        %870 = vmatprep.subr.mxu0 0.0
        %871 = vmatpush1.xpose.msra.mxu0 0.0
        %872 = vmatprep.subr.mxu0 0.0
        %873 = vmatpush1.xpose.msra.mxu0 0.0
        %874 = vmatprep.subr.mxu0 0.0
        %875 = vmatpush1.xpose.msra.mxu0 0.0
        %876 = vmatprep.subr.mxu0 0.0
        %877 = vmatpush1.xpose.msra.mxu0 0.0
        %878 = vmatprep.subr.mxu0 0.0
        %879 = vmatpush1.xpose.msra.mxu0 0.0
        %880 = vmatprep.subr.mxu0 0.0
        %881 = vmatpush1.xpose.msra.mxu0 0.0
        %882 = vmatprep.subr.mxu0 0.0
        %883 = vmatpush1.xpose.msra.mxu0 0.0
        %884 = vmatprep.subr.mxu0 0.0
        %885 = vmatpush1.xpose.msra.mxu0 0.0
        %886 = vmatprep.subr.mxu0 0.0
        %887 = vmatpush1.xpose.msra.mxu0 0.0
        %888 = vmatprep.subr.mxu0 0.0
        %889 = vmatpush1.xpose.msra.mxu0 0.0
        %890 = vmatprep.subr.mxu0 0.0
        %891 = vmatpush1.xpose.msra.mxu0 0.0
        %892 = vmatprep.subr.mxu0 0.0
        %893 = vmatpush1.xpose.msra.mxu0 0.0
        %894 = vmatprep.subr.mxu0 0.0
        %895 = vmatpush1.xpose.msra.mxu0 0.0
        %896 = vmatprep.subr.mxu0 0.0
        %897 = vmatpush1.xpose.msra.mxu0 0.0
        %898 = vmatprep.subr.mxu0 0.0
        %899 = vmatpush1.xpose.msra.mxu0 0.0
        %900 = vmatprep.subr.mxu0 0.0
        %901 = vmatpush1.xpose.msra.mxu0 0.0
        %902 = vmatprep.mubr.f32.mxu0 0.0
        %903 = vmatmul.mubr.f32.gmra.mrb[0].mxu0 %v834
        %v904 = vpop.f32.mrb[0].mxu0
        %v905 = vadd.f32 0.0, %v904
        %v906 = vpop.f32.mrb[0].mxu0
        %907 = vdwg.mxu0
        %908 = vrot.lane.b32.xlu0 %v502, 96
        %v909 = vpop.permute.xlu0 %908
        %v910 = vsel %vm529, %v502, 0
        %v912 = vsel %vm529, %v909, 0
        %914 = vmatprep.subr.mxu0 0.0
        %915 = vmatpush1.xpose.msra.mxu0 %v912
        %916 = vmatprep.subr.mxu0 0.0
        %917 = vmatpush1.xpose.msra.mxu0 0.0
        %918 = vmatprep.subr.mxu0 0.0
        %919 = vmatpush1.xpose.msra.mxu0 0.0
        %920 = vmatprep.subr.mxu0 0.0
        %921 = vmatpush1.xpose.msra.mxu0 0.0
        %922 = vmatprep.subr.mxu0 0.0
        %923 = vmatpush1.xpose.msra.mxu0 0.0
        %924 = vmatprep.subr.mxu0 0.0
        %925 = vmatpush1.xpose.msra.mxu0 0.0
        %926 = vmatprep.subr.mxu0 0.0
        %927 = vmatpush1.xpose.msra.mxu0 0.0
        %928 = vmatprep.subr.mxu0 0.0
        %929 = vmatpush1.xpose.msra.mxu0 0.0
        %930 = vmatprep.subr.mxu0 0.0
        %931 = vmatpush1.xpose.msra.mxu0 0.0
        %932 = vmatprep.subr.mxu0 0.0
        %933 = vmatpush1.xpose.msra.mxu0 0.0
        %934 = vmatprep.subr.mxu0 0.0
        %935 = vmatpush1.xpose.msra.mxu0 0.0
        %936 = vmatprep.subr.mxu0 0.0
        %937 = vmatpush1.xpose.msra.mxu0 0.0
        %938 = vmatprep.subr.mxu0 0.0
        %939 = vmatpush1.xpose.msra.mxu0 0.0
        %940 = vmatprep.subr.mxu0 0.0
        %941 = vmatpush1.xpose.msra.mxu0 0.0
        %942 = vmatprep.subr.mxu0 0.0
        %943 = vmatpush1.xpose.msra.mxu0 0.0
        %944 = vmatprep.subr.mxu0 0.0
        %945 = vmatpush1.xpose.msra.mxu0 0.0
        %946 = vmatprep.subr.mxu0 0.0
        %947 = vmatpush1.xpose.msra.mxu0 0.0
        %948 = vmatprep.subr.mxu0 0.0
        %949 = vmatpush1.xpose.msra.mxu0 0.0
        %950 = vmatprep.subr.mxu0 0.0
        %951 = vmatpush1.xpose.msra.mxu0 0.0
        %952 = vmatprep.subr.mxu0 0.0
        %953 = vmatpush1.xpose.msra.mxu0 0.0
        %954 = vmatprep.subr.mxu0 0.0
        %955 = vmatpush1.xpose.msra.mxu0 0.0
        %956 = vmatprep.subr.mxu0 0.0
        %957 = vmatpush1.xpose.msra.mxu0 0.0
        %958 = vmatprep.subr.mxu0 0.0
        %959 = vmatpush1.xpose.msra.mxu0 0.0
        %960 = vmatprep.subr.mxu0 0.0
        %961 = vmatpush1.xpose.msra.mxu0 0.0
        %962 = vmatprep.subr.mxu0 0.0
        %963 = vmatpush1.xpose.msra.mxu0 0.0
        %964 = vmatprep.subr.mxu0 0.0
        %965 = vmatpush1.xpose.msra.mxu0 0.0
        %966 = vmatprep.subr.mxu0 0.0
        %967 = vmatpush1.xpose.msra.mxu0 0.0
        %968 = vmatprep.subr.mxu0 0.0
        %969 = vmatpush1.xpose.msra.mxu0 0.0
        %970 = vmatprep.subr.mxu0 0.0
        %971 = vmatpush1.xpose.msra.mxu0 0.0
        %972 = vmatprep.subr.mxu0 0.0
        %973 = vmatpush1.xpose.msra.mxu0 0.0
        %974 = vmatprep.subr.mxu0 0.0
        %975 = vmatpush1.xpose.msra.mxu0 0.0
        %976 = vmatprep.subr.mxu0 0.0
        %977 = vmatpush1.xpose.msra.mxu0 0.0
        %978 = vmatprep.mubr.f32.mxu0 0.0
        %979 = vmatmul.mubr.f32.gmra.mrb[0].mxu0 %v910
        %v980 = vpop.f32.mrb[0].mxu0
        %v981 = vadd.f32 0.0, %v980
        %v982 = vpop.f32.mrb[0].mxu0
        %983 = vdwg.mxu0
        %984 = vrot.lane.b32.xlu0 %v504, 96
        %v985 = vpop.permute.xlu0 %984
        %v986 = vsel %vm529, %v504, 0
        %v988 = vsel %vm529, %v985, 0
        %990 = vmatprep.subr.mxu0 0.0
        %991 = vmatpush1.xpose.msra.mxu0 %v988
        %992 = vmatprep.subr.mxu0 0.0
        %993 = vmatpush1.xpose.msra.mxu0 0.0
        %994 = vmatprep.subr.mxu0 0.0
        %995 = vmatpush1.xpose.msra.mxu0 0.0
        %996 = vmatprep.subr.mxu0 0.0
        %997 = vmatpush1.xpose.msra.mxu0 0.0
        %998 = vmatprep.subr.mxu0 0.0
        %999 = vmatpush1.xpose.msra.mxu0 0.0
        %1000 = vmatprep.subr.mxu0 0.0
        %1001 = vmatpush1.xpose.msra.mxu0 0.0
        %1002 = vmatprep.subr.mxu0 0.0
        %1003 = vmatpush1.xpose.msra.mxu0 0.0
        %1004 = vmatprep.subr.mxu0 0.0
        %1005 = vmatpush1.xpose.msra.mxu0 0.0
        %1006 = vmatprep.subr.mxu0 0.0
        %1007 = vmatpush1.xpose.msra.mxu0 0.0
        %1008 = vmatprep.subr.mxu0 0.0
        %1009 = vmatpush1.xpose.msra.mxu0 0.0
        %1010 = vmatprep.subr.mxu0 0.0
        %1011 = vmatpush1.xpose.msra.mxu0 0.0
        %1012 = vmatprep.subr.mxu0 0.0
        %1013 = vmatpush1.xpose.msra.mxu0 0.0
        %1014 = vmatprep.subr.mxu0 0.0
        %1015 = vmatpush1.xpose.msra.mxu0 0.0
        %1016 = vmatprep.subr.mxu0 0.0
        %1017 = vmatpush1.xpose.msra.mxu0 0.0
        %1018 = vmatprep.subr.mxu0 0.0
        %1019 = vmatpush1.xpose.msra.mxu0 0.0
        %1020 = vmatprep.subr.mxu0 0.0
        %1021 = vmatpush1.xpose.msra.mxu0 0.0
        %1022 = vmatprep.subr.mxu0 0.0
        %1023 = vmatpush1.xpose.msra.mxu0 0.0
        %1024 = vmatprep.subr.mxu0 0.0
        %1025 = vmatpush1.xpose.msra.mxu0 0.0
        %1026 = vmatprep.subr.mxu0 0.0
        %1027 = vmatpush1.xpose.msra.mxu0 0.0
        %1028 = vmatprep.subr.mxu0 0.0
        %1029 = vmatpush1.xpose.msra.mxu0 0.0
        %1030 = vmatprep.subr.mxu0 0.0
        %1031 = vmatpush1.xpose.msra.mxu0 0.0
        %1032 = vmatprep.subr.mxu0 0.0
        %1033 = vmatpush1.xpose.msra.mxu0 0.0
        %1034 = vmatprep.subr.mxu0 0.0
        %1035 = vmatpush1.xpose.msra.mxu0 0.0
        %1036 = vmatprep.subr.mxu0 0.0
        %1037 = vmatpush1.xpose.msra.mxu0 0.0
        %1038 = vmatprep.subr.mxu0 0.0
        %1039 = vmatpush1.xpose.msra.mxu0 0.0
        %1040 = vmatprep.subr.mxu0 0.0
        %1041 = vmatpush1.xpose.msra.mxu0 0.0
        %1042 = vmatprep.subr.mxu0 0.0
        %1043 = vmatpush1.xpose.msra.mxu0 0.0
        %1044 = vmatprep.subr.mxu0 0.0
        %1045 = vmatpush1.xpose.msra.mxu0 0.0
        %1046 = vmatprep.subr.mxu0 0.0
        %1047 = vmatpush1.xpose.msra.mxu0 0.0
        %1048 = vmatprep.subr.mxu0 0.0
        %1049 = vmatpush1.xpose.msra.mxu0 0.0
        %1050 = vmatprep.subr.mxu0 0.0
        %1051 = vmatpush1.xpose.msra.mxu0 0.0
        %1052 = vmatprep.subr.mxu0 0.0
        %1053 = vmatpush1.xpose.msra.mxu0 0.0
        %1054 = vmatprep.mubr.f32.mxu0 0.0
        %1055 = vmatmul.mubr.f32.gmra.mrb[0].mxu0 %v986
        %v1056 = vpop.f32.mrb[0].mxu0
        %v1057 = vadd.f32 0.0, %v1056
        %v1058 = vpop.f32.mrb[0].mxu0
        %1059 = vdwg.mxu0
        %1060 = vrot.lane.b32.xlu0 %v506, 96
        %v1061 = vpop.permute.xlu0 %1060
        %v1062 = vsel %vm529, %v506, 0
        %v1064 = vsel %vm529, %v1061, 0
        %1066 = vmatprep.subr.mxu0 0.0
        %1067 = vmatpush1.xpose.msra.mxu0 %v1064
        %1068 = vmatprep.subr.mxu0 0.0
        %1069 = vmatpush1.xpose.msra.mxu0 0.0
        %1070 = vmatprep.subr.mxu0 0.0
        %1071 = vmatpush1.xpose.msra.mxu0 0.0
        %1072 = vmatprep.subr.mxu0 0.0
        %1073 = vmatpush1.xpose.msra.mxu0 0.0
        %1074 = vmatprep.subr.mxu0 0.0
        %1075 = vmatpush1.xpose.msra.mxu0 0.0
        %1076 = vmatprep.subr.mxu0 0.0
        %1077 = vmatpush1.xpose.msra.mxu0 0.0
        %1078 = vmatprep.subr.mxu0 0.0
        %1079 = vmatpush1.xpose.msra.mxu0 0.0
        %1080 = vmatprep.subr.mxu0 0.0
        %1081 = vmatpush1.xpose.msra.mxu0 0.0
        %1082 = vmatprep.subr.mxu0 0.0
        %1083 = vmatpush1.xpose.msra.mxu0 0.0
        %1084 = vmatprep.subr.mxu0 0.0
        %1085 = vmatpush1.xpose.msra.mxu0 0.0
        %1086 = vmatprep.subr.mxu0 0.0
        %1087 = vmatpush1.xpose.msra.mxu0 0.0
        %1088 = vmatprep.subr.mxu0 0.0
        %1089 = vmatpush1.xpose.msra.mxu0 0.0
        %1090 = vmatprep.subr.mxu0 0.0
        %1091 = vmatpush1.xpose.msra.mxu0 0.0
        %1092 = vmatprep.subr.mxu0 0.0
        %1093 = vmatpush1.xpose.msra.mxu0 0.0
        %1094 = vmatprep.subr.mxu0 0.0
        %1095 = vmatpush1.xpose.msra.mxu0 0.0
        %1096 = vmatprep.subr.mxu0 0.0
        %1097 = vmatpush1.xpose.msra.mxu0 0.0
        %1098 = vmatprep.subr.mxu0 0.0
        %1099 = vmatpush1.xpose.msra.mxu0 0.0
        %1100 = vmatprep.subr.mxu0 0.0
        %1101 = vmatpush1.xpose.msra.mxu0 0.0
        %1102 = vmatprep.subr.mxu0 0.0
        %1103 = vmatpush1.xpose.msra.mxu0 0.0
        %1104 = vmatprep.subr.mxu0 0.0
        %1105 = vmatpush1.xpose.msra.mxu0 0.0
        %1106 = vmatprep.subr.mxu0 0.0
        %1107 = vmatpush1.xpose.msra.mxu0 0.0
        %1108 = vmatprep.subr.mxu0 0.0
        %1109 = vmatpush1.xpose.msra.mxu0 0.0
        %1110 = vmatprep.subr.mxu0 0.0
        %1111 = vmatpush1.xpose.msra.mxu0 0.0
        %1112 = vmatprep.subr.mxu0 0.0
        %1113 = vmatpush1.xpose.msra.mxu0 0.0
        %1114 = vmatprep.subr.mxu0 0.0
        %1115 = vmatpush1.xpose.msra.mxu0 0.0
        %1116 = vmatprep.subr.mxu0 0.0
        %1117 = vmatpush1.xpose.msra.mxu0 0.0
        %1118 = vmatprep.subr.mxu0 0.0
        %1119 = vmatpush1.xpose.msra.mxu0 0.0
        %1120 = vmatprep.subr.mxu0 0.0
        %1121 = vmatpush1.xpose.msra.mxu0 0.0
        %1122 = vmatprep.subr.mxu0 0.0
        %1123 = vmatpush1.xpose.msra.mxu0 0.0
        %1124 = vmatprep.subr.mxu0 0.0
        %1125 = vmatpush1.xpose.msra.mxu0 0.0
        %1126 = vmatprep.subr.mxu0 0.0
        %1127 = vmatpush1.xpose.msra.mxu0 0.0
        %1128 = vmatprep.subr.mxu0 0.0
        %1129 = vmatpush1.xpose.msra.mxu0 0.0
        %1130 = vmatprep.mubr.f32.mxu0 0.0
        %1131 = vmatmul.mubr.f32.gmra.mrb[0].mxu0 %v1062
        %v1132 = vpop.f32.mrb[0].mxu0
        %v1133 = vadd.f32 0.0, %v1132
        %v1134 = vpop.f32.mrb[0].mxu0
        %1135 = vdwg.mxu0
        %1136 = vrot.lane.b32.xlu0 %v508, 96
        %v1137 = vpop.permute.xlu0 %1136
        %v1138 = vsel %vm529, %v508, 0
        %v1140 = vsel %vm529, %v1137, 0
        %1142 = vmatprep.subr.mxu0 0.0
        %1143 = vmatpush1.xpose.msra.mxu0 %v1140
        %1144 = vmatprep.subr.mxu0 0.0
        %1145 = vmatpush1.xpose.msra.mxu0 0.0
        %1146 = vmatprep.subr.mxu0 0.0
        %1147 = vmatpush1.xpose.msra.mxu0 0.0
        %1148 = vmatprep.subr.mxu0 0.0
        %1149 = vmatpush1.xpose.msra.mxu0 0.0
        %1150 = vmatprep.subr.mxu0 0.0
        %1151 = vmatpush1.xpose.msra.mxu0 0.0
        %1152 = vmatprep.subr.mxu0 0.0
        %1153 = vmatpush1.xpose.msra.mxu0 0.0
        %1154 = vmatprep.subr.mxu0 0.0
        %1155 = vmatpush1.xpose.msra.mxu0 0.0
        %1156 = vmatprep.subr.mxu0 0.0
        %1157 = vmatpush1.xpose.msra.mxu0 0.0
        %1158 = vmatprep.subr.mxu0 0.0
        %1159 = vmatpush1.xpose.msra.mxu0 0.0
        %1160 = vmatprep.subr.mxu0 0.0
        %1161 = vmatpush1.xpose.msra.mxu0 0.0
        %1162 = vmatprep.subr.mxu0 0.0
        %1163 = vmatpush1.xpose.msra.mxu0 0.0
        %1164 = vmatprep.subr.mxu0 0.0
        %1165 = vmatpush1.xpose.msra.mxu0 0.0
        %1166 = vmatprep.subr.mxu0 0.0
        %1167 = vmatpush1.xpose.msra.mxu0 0.0
        %1168 = vmatprep.subr.mxu0 0.0
        %1169 = vmatpush1.xpose.msra.mxu0 0.0
        %1170 = vmatprep.subr.mxu0 0.0
        %1171 = vmatpush1.xpose.msra.mxu0 0.0
        %1172 = vmatprep.subr.mxu0 0.0
        %1173 = vmatpush1.xpose.msra.mxu0 0.0
        %1174 = vmatprep.subr.mxu0 0.0
        %1175 = vmatpush1.xpose.msra.mxu0 0.0
        %1176 = vmatprep.subr.mxu0 0.0
        %1177 = vmatpush1.xpose.msra.mxu0 0.0
        %1178 = vmatprep.subr.mxu0 0.0
        %1179 = vmatpush1.xpose.msra.mxu0 0.0
        %1180 = vmatprep.subr.mxu0 0.0
        %1181 = vmatpush1.xpose.msra.mxu0 0.0
        %1182 = vmatprep.subr.mxu0 0.0
        %1183 = vmatpush1.xpose.msra.mxu0 0.0
        %1184 = vmatprep.subr.mxu0 0.0
        %1185 = vmatpush1.xpose.msra.mxu0 0.0
        %1186 = vmatprep.subr.mxu0 0.0
        %1187 = vmatpush1.xpose.msra.mxu0 0.0
        %1188 = vmatprep.subr.mxu0 0.0
        %1189 = vmatpush1.xpose.msra.mxu0 0.0
        %1190 = vmatprep.subr.mxu0 0.0
        %1191 = vmatpush1.xpose.msra.mxu0 0.0
        %1192 = vmatprep.subr.mxu0 0.0
        %1193 = vmatpush1.xpose.msra.mxu0 0.0
        %1194 = vmatprep.subr.mxu0 0.0
        %1195 = vmatpush1.xpose.msra.mxu0 0.0
        %1196 = vmatprep.subr.mxu0 0.0
        %1197 = vmatpush1.xpose.msra.mxu0 0.0
        %1198 = vmatprep.subr.mxu0 0.0
        %1199 = vmatpush1.xpose.msra.mxu0 0.0
        %1200 = vmatprep.subr.mxu0 0.0
        %1201 = vmatpush1.xpose.msra.mxu0 0.0
        %1202 = vmatprep.subr.mxu0 0.0
        %1203 = vmatpush1.xpose.msra.mxu0 0.0
        %1204 = vmatprep.subr.mxu0 0.0
        %1205 = vmatpush1.xpose.msra.mxu0 0.0
        %1206 = vmatprep.mubr.f32.mxu0 0.0
        %1207 = vmatmul.mubr.f32.gmra.mrb[0].mxu0 %v1138
        %v1208 = vpop.f32.mrb[0].mxu0
        %v1209 = vadd.f32 0.0, %v1208
        %v1210 = vpop.f32.mrb[0].mxu0
        %1211 = vdwg.mxu0
        %1212 = vrot.lane.b32.xlu0 %v510, 96
        %v1213 = vpop.permute.xlu0 %1212
        %v1214 = vsel %vm529, %v510, 0
        %v1216 = vsel %vm529, %v1213, 0
        %1218 = vmatprep.subr.mxu0 0.0
        %1219 = vmatpush1.xpose.msra.mxu0 %v1216
        %1220 = vmatprep.subr.mxu0 0.0
        %1221 = vmatpush1.xpose.msra.mxu0 0.0
        %1222 = vmatprep.subr.mxu0 0.0
        %1223 = vmatpush1.xpose.msra.mxu0 0.0
        %1224 = vmatprep.subr.mxu0 0.0
        %1225 = vmatpush1.xpose.msra.mxu0 0.0
        %1226 = vmatprep.subr.mxu0 0.0
        %1227 = vmatpush1.xpose.msra.mxu0 0.0
        %1228 = vmatprep.subr.mxu0 0.0
        %1229 = vmatpush1.xpose.msra.mxu0 0.0
        %1230 = vmatprep.subr.mxu0 0.0
        %1231 = vmatpush1.xpose.msra.mxu0 0.0
        %1232 = vmatprep.subr.mxu0 0.0
        %1233 = vmatpush1.xpose.msra.mxu0 0.0
        %1234 = vmatprep.subr.mxu0 0.0
        %1235 = vmatpush1.xpose.msra.mxu0 0.0
        %1236 = vmatprep.subr.mxu0 0.0
        %1237 = vmatpush1.xpose.msra.mxu0 0.0
        %1238 = vmatprep.subr.mxu0 0.0
        %1239 = vmatpush1.xpose.msra.mxu0 0.0
        %1240 = vmatprep.subr.mxu0 0.0
        %1241 = vmatpush1.xpose.msra.mxu0 0.0
        %1242 = vmatprep.subr.mxu0 0.0
        %1243 = vmatpush1.xpose.msra.mxu0 0.0
        %1244 = vmatprep.subr.mxu0 0.0
        %1245 = vmatpush1.xpose.msra.mxu0 0.0
        %1246 = vmatprep.subr.mxu0 0.0
        %1247 = vmatpush1.xpose.msra.mxu0 0.0
        %1248 = vmatprep.subr.mxu0 0.0
        %1249 = vmatpush1.xpose.msra.mxu0 0.0
        %1250 = vmatprep.subr.mxu0 0.0
        %1251 = vmatpush1.xpose.msra.mxu0 0.0
        %1252 = vmatprep.subr.mxu0 0.0
        %1253 = vmatpush1.xpose.msra.mxu0 0.0
        %1254 = vmatprep.subr.mxu0 0.0
        %1255 = vmatpush1.xpose.msra.mxu0 0.0
        %1256 = vmatprep.subr.mxu0 0.0
        %1257 = vmatpush1.xpose.msra.mxu0 0.0
        %1258 = vmatprep.subr.mxu0 0.0
        %1259 = vmatpush1.xpose.msra.mxu0 0.0
        %1260 = vmatprep.subr.mxu0 0.0
        %1261 = vmatpush1.xpose.msra.mxu0 0.0
        %1262 = vmatprep.subr.mxu0 0.0
        %1263 = vmatpush1.xpose.msra.mxu0 0.0
        %1264 = vmatprep.subr.mxu0 0.0
        %1265 = vmatpush1.xpose.msra.mxu0 0.0
        %1266 = vmatprep.subr.mxu0 0.0
        %1267 = vmatpush1.xpose.msra.mxu0 0.0
        %1268 = vmatprep.subr.mxu0 0.0
        %1269 = vmatpush1.xpose.msra.mxu0 0.0
        %1270 = vmatprep.subr.mxu0 0.0
        %1271 = vmatpush1.xpose.msra.mxu0 0.0
        %1272 = vmatprep.subr.mxu0 0.0
        %1273 = vmatpush1.xpose.msra.mxu0 0.0
        %1274 = vmatprep.subr.mxu0 0.0
        %1275 = vmatpush1.xpose.msra.mxu0 0.0
        %1276 = vmatprep.subr.mxu0 0.0
        %1277 = vmatpush1.xpose.msra.mxu0 0.0
        %1278 = vmatprep.subr.mxu0 0.0
        %1279 = vmatpush1.xpose.msra.mxu0 0.0
        %1280 = vmatprep.subr.mxu0 0.0
        %1281 = vmatpush1.xpose.msra.mxu0 0.0
        %1282 = vmatprep.mubr.f32.mxu0 0.0
        %1283 = vmatmul.mubr.f32.gmra.mrb[0].mxu0 %v1214
        %v1284 = vpop.f32.mrb[0].mxu0
        %v1285 = vadd.f32 0.0, %v1284
        %v1286 = vpop.f32.mrb[0].mxu0
        %1287 = vdwg.mxu0
        %1288 = vrot.lane.b32.xlu0 %v512, 96
        %v1289 = vpop.permute.xlu0 %1288
        %v1290 = vsel %vm529, %v512, 0
        %v1292 = vsel %vm529, %v1289, 0
        %1294 = vmatprep.subr.mxu0 0.0
        %1295 = vmatpush1.xpose.msra.mxu0 %v1292
        %1296 = vmatprep.subr.mxu0 0.0
        %1297 = vmatpush1.xpose.msra.mxu0 0.0
        %1298 = vmatprep.subr.mxu0 0.0
        %1299 = vmatpush1.xpose.msra.mxu0 0.0
        %1300 = vmatprep.subr.mxu0 0.0
        %1301 = vmatpush1.xpose.msra.mxu0 0.0
        %1302 = vmatprep.subr.mxu0 0.0
        %1303 = vmatpush1.xpose.msra.mxu0 0.0
        %1304 = vmatprep.subr.mxu0 0.0
        %1305 = vmatpush1.xpose.msra.mxu0 0.0
        %1306 = vmatprep.subr.mxu0 0.0
        %1307 = vmatpush1.xpose.msra.mxu0 0.0
        %1308 = vmatprep.subr.mxu0 0.0
        %1309 = vmatpush1.xpose.msra.mxu0 0.0
        %1310 = vmatprep.subr.mxu0 0.0
        %1311 = vmatpush1.xpose.msra.mxu0 0.0
        %1312 = vmatprep.subr.mxu0 0.0
        %1313 = vmatpush1.xpose.msra.mxu0 0.0
        %1314 = vmatprep.subr.mxu0 0.0
        %1315 = vmatpush1.xpose.msra.mxu0 0.0
        %1316 = vmatprep.subr.mxu0 0.0
        %1317 = vmatpush1.xpose.msra.mxu0 0.0
        %1318 = vmatprep.subr.mxu0 0.0
        %1319 = vmatpush1.xpose.msra.mxu0 0.0
        %1320 = vmatprep.subr.mxu0 0.0
        %1321 = vmatpush1.xpose.msra.mxu0 0.0
        %1322 = vmatprep.subr.mxu0 0.0
        %1323 = vmatpush1.xpose.msra.mxu0 0.0
        %1324 = vmatprep.subr.mxu0 0.0
        %1325 = vmatpush1.xpose.msra.mxu0 0.0
        %1326 = vmatprep.subr.mxu0 0.0
        %1327 = vmatpush1.xpose.msra.mxu0 0.0
        %1328 = vmatprep.subr.mxu0 0.0
        %1329 = vmatpush1.xpose.msra.mxu0 0.0
        %1330 = vmatprep.subr.mxu0 0.0
        %1331 = vmatpush1.xpose.msra.mxu0 0.0
        %1332 = vmatprep.subr.mxu0 0.0
        %1333 = vmatpush1.xpose.msra.mxu0 0.0
        %1334 = vmatprep.subr.mxu0 0.0
        %1335 = vmatpush1.xpose.msra.mxu0 0.0
        %1336 = vmatprep.subr.mxu0 0.0
        %1337 = vmatpush1.xpose.msra.mxu0 0.0
        %1338 = vmatprep.subr.mxu0 0.0
        %1339 = vmatpush1.xpose.msra.mxu0 0.0
        %1340 = vmatprep.subr.mxu0 0.0
        %1341 = vmatpush1.xpose.msra.mxu0 0.0
        %1342 = vmatprep.subr.mxu0 0.0
        %1343 = vmatpush1.xpose.msra.mxu0 0.0
        %1344 = vmatprep.subr.mxu0 0.0
        %1345 = vmatpush1.xpose.msra.mxu0 0.0
        %1346 = vmatprep.subr.mxu0 0.0
        %1347 = vmatpush1.xpose.msra.mxu0 0.0
        %1348 = vmatprep.subr.mxu0 0.0
        %1349 = vmatpush1.xpose.msra.mxu0 0.0
        %1350 = vmatprep.subr.mxu0 0.0
        %1351 = vmatpush1.xpose.msra.mxu0 0.0
        %1352 = vmatprep.subr.mxu0 0.0
        %1353 = vmatpush1.xpose.msra.mxu0 0.0
        %1354 = vmatprep.subr.mxu0 0.0
        %1355 = vmatpush1.xpose.msra.mxu0 0.0
        %1356 = vmatprep.subr.mxu0 0.0
        %1357 = vmatpush1.xpose.msra.mxu0 0.0
        %1358 = vmatprep.mubr.f32.mxu0 0.0
        %1359 = vmatmul.mubr.f32.gmra.mrb[0].mxu0 %v1290
        %v1360 = vpop.f32.mrb[0].mxu0
        %v1361 = vadd.f32 0.0, %v1360
        %v1362 = vpop.f32.mrb[0].mxu0
        %1363 = vdwg.mxu0
        %1364 = vrot.lane.b32.xlu0 %v514, 96
        %v1365 = vpop.permute.xlu0 %1364
        %v1366 = vsel %vm529, %v514, 0
        %v1368 = vsel %vm529, %v1365, 0
        %1370 = vmatprep.subr.mxu0 0.0
        %1371 = vmatpush1.xpose.msra.mxu0 %v1368
        %1372 = vmatprep.subr.mxu0 0.0
        %1373 = vmatpush1.xpose.msra.mxu0 0.0
        %1374 = vmatprep.subr.mxu0 0.0
        %1375 = vmatpush1.xpose.msra.mxu0 0.0
        %1376 = vmatprep.subr.mxu0 0.0
        %1377 = vmatpush1.xpose.msra.mxu0 0.0
        %1378 = vmatprep.subr.mxu0 0.0
        %1379 = vmatpush1.xpose.msra.mxu0 0.0
        %1380 = vmatprep.subr.mxu0 0.0
        %1381 = vmatpush1.xpose.msra.mxu0 0.0
        %1382 = vmatprep.subr.mxu0 0.0
        %1383 = vmatpush1.xpose.msra.mxu0 0.0
        %1384 = vmatprep.subr.mxu0 0.0
        %1385 = vmatpush1.xpose.msra.mxu0 0.0
        %1386 = vmatprep.subr.mxu0 0.0
        %1387 = vmatpush1.xpose.msra.mxu0 0.0
        %1388 = vmatprep.subr.mxu0 0.0
        %1389 = vmatpush1.xpose.msra.mxu0 0.0
        %1390 = vmatprep.subr.mxu0 0.0
        %1391 = vmatpush1.xpose.msra.mxu0 0.0
        %1392 = vmatprep.subr.mxu0 0.0
        %1393 = vmatpush1.xpose.msra.mxu0 0.0
        %1394 = vmatprep.subr.mxu0 0.0
        %1395 = vmatpush1.xpose.msra.mxu0 0.0
        %1396 = vmatprep.subr.mxu0 0.0
        %1397 = vmatpush1.xpose.msra.mxu0 0.0
        %1398 = vmatprep.subr.mxu0 0.0
        %1399 = vmatpush1.xpose.msra.mxu0 0.0
        %1400 = vmatprep.subr.mxu0 0.0
        %1401 = vmatpush1.xpose.msra.mxu0 0.0
        %1402 = vmatprep.subr.mxu0 0.0
        %1403 = vmatpush1.xpose.msra.mxu0 0.0
        %1404 = vmatprep.subr.mxu0 0.0
        %1405 = vmatpush1.xpose.msra.mxu0 0.0
        %1406 = vmatprep.subr.mxu0 0.0
        %1407 = vmatpush1.xpose.msra.mxu0 0.0
        %1408 = vmatprep.subr.mxu0 0.0
        %1409 = vmatpush1.xpose.msra.mxu0 0.0
        %1410 = vmatprep.subr.mxu0 0.0
        %1411 = vmatpush1.xpose.msra.mxu0 0.0
        %1412 = vmatprep.subr.mxu0 0.0
        %1413 = vmatpush1.xpose.msra.mxu0 0.0
        %1414 = vmatprep.subr.mxu0 0.0
        %1415 = vmatpush1.xpose.msra.mxu0 0.0
        %1416 = vmatprep.subr.mxu0 0.0
        %1417 = vmatpush1.xpose.msra.mxu0 0.0
        %1418 = vmatprep.subr.mxu0 0.0
        %1419 = vmatpush1.xpose.msra.mxu0 0.0
        %1420 = vmatprep.subr.mxu0 0.0
        %1421 = vmatpush1.xpose.msra.mxu0 0.0
        %1422 = vmatprep.subr.mxu0 0.0
        %1423 = vmatpush1.xpose.msra.mxu0 0.0
        %1424 = vmatprep.subr.mxu0 0.0
        %1425 = vmatpush1.xpose.msra.mxu0 0.0
        %1426 = vmatprep.subr.mxu0 0.0
        %1427 = vmatpush1.xpose.msra.mxu0 0.0
        %1428 = vmatprep.subr.mxu0 0.0
        %1429 = vmatpush1.xpose.msra.mxu0 0.0
        %1430 = vmatprep.subr.mxu0 0.0
        %1431 = vmatpush1.xpose.msra.mxu0 0.0
        %1432 = vmatprep.subr.mxu0 0.0
        %1433 = vmatpush1.xpose.msra.mxu0 0.0
        %1434 = vmatprep.mubr.f32.mxu0 0.0
        %1435 = vmatmul.mubr.f32.gmra.mrb[0].mxu0 %v1366
        %v1436 = vpop.f32.mrb[0].mxu0
        %v1437 = vadd.f32 0.0, %v1436
        %v1438 = vpop.f32.mrb[0].mxu0
        %1439 = vdwg.mxu0
        %1440 = vrot.lane.b32.xlu0 %v516, 96
        %v1441 = vpop.permute.xlu0 %1440
        %v1442 = vsel %vm529, %v516, 0
        %v1444 = vsel %vm529, %v1441, 0
        %1446 = vmatprep.subr.mxu0 0.0
        %1447 = vmatpush1.xpose.msra.mxu0 %v1444
        %1448 = vmatprep.subr.mxu0 0.0
        %1449 = vmatpush1.xpose.msra.mxu0 0.0
        %1450 = vmatprep.subr.mxu0 0.0
        %1451 = vmatpush1.xpose.msra.mxu0 0.0
        %1452 = vmatprep.subr.mxu0 0.0
        %1453 = vmatpush1.xpose.msra.mxu0 0.0
        %1454 = vmatprep.subr.mxu0 0.0
        %1455 = vmatpush1.xpose.msra.mxu0 0.0
        %1456 = vmatprep.subr.mxu0 0.0
        %1457 = vmatpush1.xpose.msra.mxu0 0.0
        %1458 = vmatprep.subr.mxu0 0.0
        %1459 = vmatpush1.xpose.msra.mxu0 0.0
        %1460 = vmatprep.subr.mxu0 0.0
        %1461 = vmatpush1.xpose.msra.mxu0 0.0
        %1462 = vmatprep.subr.mxu0 0.0
        %1463 = vmatpush1.xpose.msra.mxu0 0.0
        %1464 = vmatprep.subr.mxu0 0.0
        %1465 = vmatpush1.xpose.msra.mxu0 0.0
        %1466 = vmatprep.subr.mxu0 0.0
        %1467 = vmatpush1.xpose.msra.mxu0 0.0
        %1468 = vmatprep.subr.mxu0 0.0
        %1469 = vmatpush1.xpose.msra.mxu0 0.0
        %1470 = vmatprep.subr.mxu0 0.0
        %1471 = vmatpush1.xpose.msra.mxu0 0.0
        %1472 = vmatprep.subr.mxu0 0.0
        %1473 = vmatpush1.xpose.msra.mxu0 0.0
        %1474 = vmatprep.subr.mxu0 0.0
        %1475 = vmatpush1.xpose.msra.mxu0 0.0
        %1476 = vmatprep.subr.mxu0 0.0
        %1477 = vmatpush1.xpose.msra.mxu0 0.0
        %1478 = vmatprep.subr.mxu0 0.0
        %1479 = vmatpush1.xpose.msra.mxu0 0.0
        %1480 = vmatprep.subr.mxu0 0.0
        %1481 = vmatpush1.xpose.msra.mxu0 0.0
        %1482 = vmatprep.subr.mxu0 0.0
        %1483 = vmatpush1.xpose.msra.mxu0 0.0
        %1484 = vmatprep.subr.mxu0 0.0
        %1485 = vmatpush1.xpose.msra.mxu0 0.0
        %1486 = vmatprep.subr.mxu0 0.0
        %1487 = vmatpush1.xpose.msra.mxu0 0.0
        %1488 = vmatprep.subr.mxu0 0.0
        %1489 = vmatpush1.xpose.msra.mxu0 0.0
        %1490 = vmatprep.subr.mxu0 0.0
        %1491 = vmatpush1.xpose.msra.mxu0 0.0
        %1492 = vmatprep.subr.mxu0 0.0
        %1493 = vmatpush1.xpose.msra.mxu0 0.0
        %1494 = vmatprep.subr.mxu0 0.0
        %1495 = vmatpush1.xpose.msra.mxu0 0.0
        %1496 = vmatprep.subr.mxu0 0.0
        %1497 = vmatpush1.xpose.msra.mxu0 0.0
        %1498 = vmatprep.subr.mxu0 0.0
        %1499 = vmatpush1.xpose.msra.mxu0 0.0
        %1500 = vmatprep.subr.mxu0 0.0
        %1501 = vmatpush1.xpose.msra.mxu0 0.0
        %1502 = vmatprep.subr.mxu0 0.0
        %1503 = vmatpush1.xpose.msra.mxu0 0.0
        %1504 = vmatprep.subr.mxu0 0.0
        %1505 = vmatpush1.xpose.msra.mxu0 0.0
        %1506 = vmatprep.subr.mxu0 0.0
        %1507 = vmatpush1.xpose.msra.mxu0 0.0
        %1508 = vmatprep.subr.mxu0 0.0
        %1509 = vmatpush1.xpose.msra.mxu0 0.0
        %1510 = vmatprep.mubr.f32.mxu0 0.0
        %1511 = vmatmul.mubr.f32.gmra.mrb[0].mxu0 %v1442
        %v1512 = vpop.f32.mrb[0].mxu0
        %v1513 = vadd.f32 0.0, %v1512
        %v1514 = vpop.f32.mrb[0].mxu0
        %1515 = vdwg.mxu0
        %1516 = vrot.lane.b32.xlu0 %v518, 96
        %v1517 = vpop.permute.xlu0 %1516
        %v1518 = vsel %vm529, %v518, 0
        %v1520 = vsel %vm529, %v1517, 0
        %1522 = vmatprep.subr.mxu0 0.0
        %1523 = vmatpush1.xpose.msra.mxu0 %v1520
        %1524 = vmatprep.subr.mxu0 0.0
        %1525 = vmatpush1.xpose.msra.mxu0 0.0
        %1526 = vmatprep.subr.mxu0 0.0
        %1527 = vmatpush1.xpose.msra.mxu0 0.0
        %1528 = vmatprep.subr.mxu0 0.0
        %1529 = vmatpush1.xpose.msra.mxu0 0.0
        %1530 = vmatprep.subr.mxu0 0.0
        %1531 = vmatpush1.xpose.msra.mxu0 0.0
        %1532 = vmatprep.subr.mxu0 0.0
        %1533 = vmatpush1.xpose.msra.mxu0 0.0
        %1534 = vmatprep.subr.mxu0 0.0
        %1535 = vmatpush1.xpose.msra.mxu0 0.0
        %1536 = vmatprep.subr.mxu0 0.0
        %1537 = vmatpush1.xpose.msra.mxu0 0.0
        %1538 = vmatprep.subr.mxu0 0.0
        %1539 = vmatpush1.xpose.msra.mxu0 0.0
        %1540 = vmatprep.subr.mxu0 0.0
        %1541 = vmatpush1.xpose.msra.mxu0 0.0
        %1542 = vmatprep.subr.mxu0 0.0
        %1543 = vmatpush1.xpose.msra.mxu0 0.0
        %1544 = vmatprep.subr.mxu0 0.0
        %1545 = vmatpush1.xpose.msra.mxu0 0.0
        %1546 = vmatprep.subr.mxu0 0.0
        %1547 = vmatpush1.xpose.msra.mxu0 0.0
        %1548 = vmatprep.subr.mxu0 0.0
        %1549 = vmatpush1.xpose.msra.mxu0 0.0
        %1550 = vmatprep.subr.mxu0 0.0
        %1551 = vmatpush1.xpose.msra.mxu0 0.0
        %1552 = vmatprep.subr.mxu0 0.0
        %1553 = vmatpush1.xpose.msra.mxu0 0.0
        %1554 = vmatprep.subr.mxu0 0.0
        %1555 = vmatpush1.xpose.msra.mxu0 0.0
        %1556 = vmatprep.subr.mxu0 0.0
        %1557 = vmatpush1.xpose.msra.mxu0 0.0
        %1558 = vmatprep.subr.mxu0 0.0
        %1559 = vmatpush1.xpose.msra.mxu0 0.0
        %1560 = vmatprep.subr.mxu0 0.0
        %1561 = vmatpush1.xpose.msra.mxu0 0.0
        %1562 = vmatprep.subr.mxu0 0.0
        %1563 = vmatpush1.xpose.msra.mxu0 0.0
        %1564 = vmatprep.subr.mxu0 0.0
        %1565 = vmatpush1.xpose.msra.mxu0 0.0
        %1566 = vmatprep.subr.mxu0 0.0
        %1567 = vmatpush1.xpose.msra.mxu0 0.0
        %1568 = vmatprep.subr.mxu0 0.0
        %1569 = vmatpush1.xpose.msra.mxu0 0.0
        %1570 = vmatprep.subr.mxu0 0.0
        %1571 = vmatpush1.xpose.msra.mxu0 0.0
        %1572 = vmatprep.subr.mxu0 0.0
        %1573 = vmatpush1.xpose.msra.mxu0 0.0
        %1574 = vmatprep.subr.mxu0 0.0
        %1575 = vmatpush1.xpose.msra.mxu0 0.0
        %1576 = vmatprep.subr.mxu0 0.0
        %1577 = vmatpush1.xpose.msra.mxu0 0.0
        %1578 = vmatprep.subr.mxu0 0.0
        %1579 = vmatpush1.xpose.msra.mxu0 0.0
        %1580 = vmatprep.subr.mxu0 0.0
        %1581 = vmatpush1.xpose.msra.mxu0 0.0
        %1582 = vmatprep.subr.mxu0 0.0
        %1583 = vmatpush1.xpose.msra.mxu0 0.0
        %1584 = vmatprep.subr.mxu0 0.0
        %1585 = vmatpush1.xpose.msra.mxu0 0.0
        %1586 = vmatprep.mubr.f32.mxu0 0.0
        %1587 = vmatmul.mubr.f32.gmra.mrb[0].mxu0 %v1518
        %v1588 = vpop.f32.mrb[0].mxu0
        %v1589 = vadd.f32 0.0, %v1588
        %v1590 = vpop.f32.mrb[0].mxu0
        %1591 = vdwg.mxu0
        %1592 = vrot.lane.b32.xlu0 %v520, 96
        %v1593 = vpop.permute.xlu0 %1592
        %v1594 = vsel %vm529, %v520, 0
        %v1596 = vsel %vm529, %v1593, 0
        %1598 = vmatprep.subr.mxu0 0.0
        %1599 = vmatpush1.xpose.msra.mxu0 %v1596
        %1600 = vmatprep.subr.mxu0 0.0
        %1601 = vmatpush1.xpose.msra.mxu0 0.0
        %1602 = vmatprep.subr.mxu0 0.0
        %1603 = vmatpush1.xpose.msra.mxu0 0.0
        %1604 = vmatprep.subr.mxu0 0.0
        %1605 = vmatpush1.xpose.msra.mxu0 0.0
        %1606 = vmatprep.subr.mxu0 0.0
        %1607 = vmatpush1.xpose.msra.mxu0 0.0
        %1608 = vmatprep.subr.mxu0 0.0
        %1609 = vmatpush1.xpose.msra.mxu0 0.0
        %1610 = vmatprep.subr.mxu0 0.0
        %1611 = vmatpush1.xpose.msra.mxu0 0.0
        %1612 = vmatprep.subr.mxu0 0.0
        %1613 = vmatpush1.xpose.msra.mxu0 0.0
        %1614 = vmatprep.subr.mxu0 0.0
        %1615 = vmatpush1.xpose.msra.mxu0 0.0
        %1616 = vmatprep.subr.mxu0 0.0
        %1617 = vmatpush1.xpose.msra.mxu0 0.0
        %1618 = vmatprep.subr.mxu0 0.0
        %1619 = vmatpush1.xpose.msra.mxu0 0.0
        %1620 = vmatprep.subr.mxu0 0.0
        %1621 = vmatpush1.xpose.msra.mxu0 0.0
        %1622 = vmatprep.subr.mxu0 0.0
        %1623 = vmatpush1.xpose.msra.mxu0 0.0
        %1624 = vmatprep.subr.mxu0 0.0
        %1625 = vmatpush1.xpose.msra.mxu0 0.0
        %1626 = vmatprep.subr.mxu0 0.0
        %1627 = vmatpush1.xpose.msra.mxu0 0.0
        %1628 = vmatprep.subr.mxu0 0.0
        %1629 = vmatpush1.xpose.msra.mxu0 0.0
        %1630 = vmatprep.subr.mxu0 0.0
        %1631 = vmatpush1.xpose.msra.mxu0 0.0
        %1632 = vmatprep.subr.mxu0 0.0
        %1633 = vmatpush1.xpose.msra.mxu0 0.0
        %1634 = vmatprep.subr.mxu0 0.0
        %1635 = vmatpush1.xpose.msra.mxu0 0.0
        %1636 = vmatprep.subr.mxu0 0.0
        %1637 = vmatpush1.xpose.msra.mxu0 0.0
        %1638 = vmatprep.subr.mxu0 0.0
        %1639 = vmatpush1.xpose.msra.mxu0 0.0
        %1640 = vmatprep.subr.mxu0 0.0
        %1641 = vmatpush1.xpose.msra.mxu0 0.0
        %1642 = vmatprep.subr.mxu0 0.0
        %1643 = vmatpush1.xpose.msra.mxu0 0.0
        %1644 = vmatprep.subr.mxu0 0.0
        %1645 = vmatpush1.xpose.msra.mxu0 0.0
        %1646 = vmatprep.subr.mxu0 0.0
        %1647 = vmatpush1.xpose.msra.mxu0 0.0
        %1648 = vmatprep.subr.mxu0 0.0
        %1649 = vmatpush1.xpose.msra.mxu0 0.0
        %1650 = vmatprep.subr.mxu0 0.0
        %1651 = vmatpush1.xpose.msra.mxu0 0.0
        %1652 = vmatprep.subr.mxu0 0.0
        %1653 = vmatpush1.xpose.msra.mxu0 0.0
        %1654 = vmatprep.subr.mxu0 0.0
        %1655 = vmatpush1.xpose.msra.mxu0 0.0
        %1656 = vmatprep.subr.mxu0 0.0
        %1657 = vmatpush1.xpose.msra.mxu0 0.0
        %1658 = vmatprep.subr.mxu0 0.0
        %1659 = vmatpush1.xpose.msra.mxu0 0.0
        %1660 = vmatprep.subr.mxu0 0.0
        %1661 = vmatpush1.xpose.msra.mxu0 0.0
        %1662 = vmatprep.mubr.f32.mxu0 0.0
        %1663 = vmatmul.mubr.f32.gmra.mrb[0].mxu0 %v1594
        %v1664 = vpop.f32.mrb[0].mxu0
        %v1665 = vadd.f32 0.0, %v1664
        %v1666 = vpop.f32.mrb[0].mxu0
        %1667 = vdwg.mxu0
        %1668 = vrot.lane.b32.xlu0 %v522, 96
        %v1669 = vpop.permute.xlu0 %1668
        %v1670 = vsel %vm529, %v522, 0
        %v1672 = vsel %vm529, %v1669, 0
        %1674 = vmatprep.subr.mxu0 0.0
        %1675 = vmatpush1.xpose.msra.mxu0 %v1672
        %1676 = vmatprep.subr.mxu0 0.0
        %1677 = vmatpush1.xpose.msra.mxu0 0.0
        %1678 = vmatprep.subr.mxu0 0.0
        %1679 = vmatpush1.xpose.msra.mxu0 0.0
        %1680 = vmatprep.subr.mxu0 0.0
        %1681 = vmatpush1.xpose.msra.mxu0 0.0
        %1682 = vmatprep.subr.mxu0 0.0
        %1683 = vmatpush1.xpose.msra.mxu0 0.0
        %1684 = vmatprep.subr.mxu0 0.0
        %1685 = vmatpush1.xpose.msra.mxu0 0.0
        %1686 = vmatprep.subr.mxu0 0.0
        %1687 = vmatpush1.xpose.msra.mxu0 0.0
        %1688 = vmatprep.subr.mxu0 0.0
        %1689 = vmatpush1.xpose.msra.mxu0 0.0
        %1690 = vmatprep.subr.mxu0 0.0
        %1691 = vmatpush1.xpose.msra.mxu0 0.0
        %1692 = vmatprep.subr.mxu0 0.0
        %1693 = vmatpush1.xpose.msra.mxu0 0.0
        %1694 = vmatprep.subr.mxu0 0.0
        %1695 = vmatpush1.xpose.msra.mxu0 0.0
        %1696 = vmatprep.subr.mxu0 0.0
        %1697 = vmatpush1.xpose.msra.mxu0 0.0
        %1698 = vmatprep.subr.mxu0 0.0
        %1699 = vmatpush1.xpose.msra.mxu0 0.0
        %1700 = vmatprep.subr.mxu0 0.0
        %1701 = vmatpush1.xpose.msra.mxu0 0.0
        %1702 = vmatprep.subr.mxu0 0.0
        %1703 = vmatpush1.xpose.msra.mxu0 0.0
        %1704 = vmatprep.subr.mxu0 0.0
        %1705 = vmatpush1.xpose.msra.mxu0 0.0
        %1706 = vmatprep.subr.mxu0 0.0
        %1707 = vmatpush1.xpose.msra.mxu0 0.0
        %1708 = vmatprep.subr.mxu0 0.0
        %1709 = vmatpush1.xpose.msra.mxu0 0.0
        %1710 = vmatprep.subr.mxu0 0.0
        %1711 = vmatpush1.xpose.msra.mxu0 0.0
        %1712 = vmatprep.subr.mxu0 0.0
        %1713 = vmatpush1.xpose.msra.mxu0 0.0
        %1714 = vmatprep.subr.mxu0 0.0
        %1715 = vmatpush1.xpose.msra.mxu0 0.0
        %1716 = vmatprep.subr.mxu0 0.0
        %1717 = vmatpush1.xpose.msra.mxu0 0.0
        %1718 = vmatprep.subr.mxu0 0.0
        %1719 = vmatpush1.xpose.msra.mxu0 0.0
        %1720 = vmatprep.subr.mxu0 0.0
        %1721 = vmatpush1.xpose.msra.mxu0 0.0
        %1722 = vmatprep.subr.mxu0 0.0
        %1723 = vmatpush1.xpose.msra.mxu0 0.0
        %1724 = vmatprep.subr.mxu0 0.0
        %1725 = vmatpush1.xpose.msra.mxu0 0.0
        %1726 = vmatprep.subr.mxu0 0.0
        %1727 = vmatpush1.xpose.msra.mxu0 0.0
        %1728 = vmatprep.subr.mxu0 0.0
        %1729 = vmatpush1.xpose.msra.mxu0 0.0
        %1730 = vmatprep.subr.mxu0 0.0
        %1731 = vmatpush1.xpose.msra.mxu0 0.0
        %1732 = vmatprep.subr.mxu0 0.0
        %1733 = vmatpush1.xpose.msra.mxu0 0.0
        %1734 = vmatprep.subr.mxu0 0.0
        %1735 = vmatpush1.xpose.msra.mxu0 0.0
        %1736 = vmatprep.subr.mxu0 0.0
        %1737 = vmatpush1.xpose.msra.mxu0 0.0
        %1738 = vmatprep.mubr.f32.mxu0 0.0
        %1739 = vmatmul.mubr.f32.gmra.mrb[0].mxu0 %v1670
        %v1740 = vpop.f32.mrb[0].mxu0
        %v1741 = vadd.f32 0.0, %v1740
        %v1742 = vpop.f32.mrb[0].mxu0
        %1743 = vdwg.mxu0
        %v1744 = vadd.f32 %v601, %v523
        %v1745 = vadd.f32 %v677, %v523
        %v1746 = vadd.f32 %v753, %v523
        %v1747 = vadd.f32 %v829, %v523
        %v1748 = vadd.f32 %v905, %v524
        %v1749 = vadd.f32 %v981, %v524
        %v1750 = vadd.f32 %v1057, %v524
        %v1751 = vadd.f32 %v1133, %v524
        %v1752 = vadd.f32 %v1209, %v525
        %v1753 = vadd.f32 %v1285, %v525
        %v1754 = vadd.f32 %v1361, %v525
        %v1755 = vadd.f32 %v1437, %v525
        %v1756 = vadd.f32 %v1513, %v526
        %v1757 = vadd.f32 %v1589, %v526
        %v1758 = vadd.f32 %v1665, %v526
        %v1759 = vadd.f32 %v1741, %v526
        %v1760 = vsel %vm529, %v1744, -inf
        %1761 = vmax.xlane.f32.xlu0 %v1760
        %v1762 = vpop.xlane.xlu0 %1761
        %v1763 = vsel %vm529, %v1745, -inf
        %1764 = vmax.xlane.f32.xlu0 %v1763
        %v1765 = vpop.xlane.xlu0 %1764
        %v1766 = vsel %vm529, %v1746, -inf
        %1767 = vmax.xlane.f32.xlu0 %v1766
        %v1768 = vpop.xlane.xlu0 %1767
        %v1769 = vsel %vm529, %v1747, -inf
        %1770 = vmax.xlane.f32.xlu0 %v1769
        %v1771 = vpop.xlane.xlu0 %1770
        %v1772 = vsel %vm529, %v1748, -inf
        %1773 = vmax.xlane.f32.xlu0 %v1772
        %v1774 = vpop.xlane.xlu0 %1773
        %v1775 = vsel %vm529, %v1749, -inf
        %1776 = vmax.xlane.f32.xlu0 %v1775
        %v1777 = vpop.xlane.xlu0 %1776
        %v1778 = vsel %vm529, %v1750, -inf
        %1779 = vmax.xlane.f32.xlu0 %v1778
        %v1780 = vpop.xlane.xlu0 %1779
        %v1781 = vsel %vm529, %v1751, -inf
        %1782 = vmax.xlane.f32.xlu0 %v1781
        %v1783 = vpop.xlane.xlu0 %1782
        %v1784 = vsel %vm529, %v1752, -inf
        %1785 = vmax.xlane.f32.xlu0 %v1784
        %v1786 = vpop.xlane.xlu0 %1785
        %v1787 = vsel %vm529, %v1753, -inf
        %1788 = vmax.xlane.f32.xlu0 %v1787
        %v1789 = vpop.xlane.xlu0 %1788
        %v1790 = vsel %vm529, %v1754, -inf
        %1791 = vmax.xlane.f32.xlu0 %v1790
        %v1792 = vpop.xlane.xlu0 %1791
        %v1793 = vsel %vm529, %v1755, -inf
        %1794 = vmax.xlane.f32.xlu0 %v1793
        %v1795 = vpop.xlane.xlu0 %1794
        %v1796 = vsel %vm529, %v1756, -inf
        %1797 = vmax.xlane.f32.xlu0 %v1796
        %v1798 = vpop.xlane.xlu0 %1797
        %v1799 = vsel %vm529, %v1757, -inf
        %1800 = vmax.xlane.f32.xlu0 %v1799
        %v1801 = vpop.xlane.xlu0 %1800
        %v1802 = vsel %vm529, %v1758, -inf
        %1803 = vmax.xlane.f32.xlu0 %v1802
        %v1804 = vpop.xlane.xlu0 %1803
        %v1805 = vsel %vm529, %v1759, -inf
        %1806 = vmax.xlane.f32.xlu0 %v1805
        %v1807 = vpop.xlane.xlu0 %1806
        %v1808 = vsub.f32 %v1744, %v1762
        %v1809 = vsub.f32 %v1745, %v1765
        %v1810 = vsub.f32 %v1746, %v1768
        %v1811 = vsub.f32 %v1747, %v1771
        %v1812 = vsub.f32 %v1748, %v1774
        %v1813 = vsub.f32 %v1749, %v1777
        %v1814 = vsub.f32 %v1750, %v1780
        %v1815 = vsub.f32 %v1751, %v1783
        %v1816 = vsub.f32 %v1752, %v1786
        %v1817 = vsub.f32 %v1753, %v1789
        %v1818 = vsub.f32 %v1754, %v1792
        %v1819 = vsub.f32 %v1755, %v1795
        %v1820 = vsub.f32 %v1756, %v1798
        %v1821 = vsub.f32 %v1757, %v1801
        %v1822 = vsub.f32 %v1758, %v1804
        %v1823 = vsub.f32 %v1759, %v1807
        %v1824 = vmul.f32 %v1808, 1.442695
        %v1825 = vpow.pop %v1824
        %v1826 = vmul.f32 %v1809, 1.442695
        %v1827 = vpow.pop %v1826
        %v1828 = vmul.f32 %v1810, 1.442695
        %v1829 = vpow.pop %v1828
        %v1830 = vmul.f32 %v1811, 1.442695
        %v1831 = vpow.pop %v1830
        %v1832 = vmul.f32 %v1812, 1.442695
        %v1833 = vpow.pop %v1832
        %v1834 = vmul.f32 %v1813, 1.442695
        %v1835 = vpow.pop %v1834
        %v1836 = vmul.f32 %v1814, 1.442695
        %v1837 = vpow.pop %v1836
        %v1838 = vmul.f32 %v1815, 1.442695
        %v1839 = vpow.pop %v1838
        %v1840 = vmul.f32 %v1816, 1.442695
        %v1841 = vpow.pop %v1840
        %v1842 = vmul.f32 %v1817, 1.442695
        %v1843 = vpow.pop %v1842
        %v1844 = vmul.f32 %v1818, 1.442695
        %v1845 = vpow.pop %v1844
        %v1846 = vmul.f32 %v1819, 1.442695
        %v1847 = vpow.pop %v1846
        %v1848 = vmul.f32 %v1820, 1.442695
        %v1849 = vpow.pop %v1848
        %v1850 = vmul.f32 %v1821, 1.442695
        %v1851 = vpow.pop %v1850
        %v1852 = vmul.f32 %v1822, 1.442695
        %v1853 = vpow.pop %v1852
        %v1854 = vmul.f32 %v1823, 1.442695
        %v1855 = vpow.pop %v1854
        %v1856 = vsel %vm529, %v1825, 0.0
        %1857 = vadd.xlane.f32.xlu0 %v1856
        %v1858 = vpop.xlane.xlu0 %1857
        %v1859 = vsel %vm529, %v1827, 0.0
        %1860 = vadd.xlane.f32.xlu0 %v1859
        %v1861 = vpop.xlane.xlu0 %1860
        %v1862 = vsel %vm529, %v1829, 0.0
        %1863 = vadd.xlane.f32.xlu0 %v1862
        %v1864 = vpop.xlane.xlu0 %1863
        %v1865 = vsel %vm529, %v1831, 0.0
        %1866 = vadd.xlane.f32.xlu0 %v1865
        %v1867 = vpop.xlane.xlu0 %1866
        %v1868 = vsel %vm529, %v1833, 0.0
        %1869 = vadd.xlane.f32.xlu0 %v1868
        %v1870 = vpop.xlane.xlu0 %1869
        %v1871 = vsel %vm529, %v1835, 0.0
        %1872 = vadd.xlane.f32.xlu0 %v1871
        %v1873 = vpop.xlane.xlu0 %1872
        %v1874 = vsel %vm529, %v1837, 0.0
        %1875 = vadd.xlane.f32.xlu0 %v1874
        %v1876 = vpop.xlane.xlu0 %1875
        %v1877 = vsel %vm529, %v1839, 0.0
        %1878 = vadd.xlane.f32.xlu0 %v1877
        %v1879 = vpop.xlane.xlu0 %1878
        %v1880 = vsel %vm529, %v1841, 0.0
        %1881 = vadd.xlane.f32.xlu0 %v1880
        %v1882 = vpop.xlane.xlu0 %1881
        %v1883 = vsel %vm529, %v1843, 0.0
        %1884 = vadd.xlane.f32.xlu0 %v1883
        %v1885 = vpop.xlane.xlu0 %1884
        %v1886 = vsel %vm529, %v1845, 0.0
        %1887 = vadd.xlane.f32.xlu0 %v1886
        %v1888 = vpop.xlane.xlu0 %1887
        %v1889 = vsel %vm529, %v1847, 0.0
        %1890 = vadd.xlane.f32.xlu0 %v1889
        %v1891 = vpop.xlane.xlu0 %1890
        %v1892 = vsel %vm529, %v1849, 0.0
        %1893 = vadd.xlane.f32.xlu0 %v1892
        %v1894 = vpop.xlane.xlu0 %1893
        %v1895 = vsel %vm529, %v1851, 0.0
        %1896 = vadd.xlane.f32.xlu0 %v1895
        %v1897 = vpop.xlane.xlu0 %1896
        %v1898 = vsel %vm529, %v1853, 0.0
        %1899 = vadd.xlane.f32.xlu0 %v1898
        %v1900 = vpop.xlane.xlu0 %1899
        %v1901 = vsel %vm529, %v1855, 0.0
        %1902 = vadd.xlane.f32.xlu0 %v1901
        %v1903 = vpop.xlane.xlu0 %1902
        %v1904 = vrcp.pop %v1858
        %v1905 = vrcp.pop %v1861
        %v1906 = vrcp.pop %v1864
        %v1907 = vrcp.pop %v1867
        %v1908 = vrcp.pop %v1870
        %v1909 = vrcp.pop %v1873
        %v1910 = vrcp.pop %v1876
        %v1911 = vrcp.pop %v1879
        %v1912 = vrcp.pop %v1882
        %v1913 = vrcp.pop %v1885
        %v1914 = vrcp.pop %v1888
        %v1915 = vrcp.pop %v1891
        %v1916 = vrcp.pop %v1894
        %v1917 = vrcp.pop %v1897
        %v1918 = vrcp.pop %v1900
        %v1919 = vrcp.pop %v1903
        %v1920 = vmul.f32 %v1825, %v1904
        %v1921 = vmul.f32 %v1827, %v1905
        %v1922 = vmul.f32 %v1829, %v1906
        %v1923 = vmul.f32 %v1831, %v1907
        %v1924 = vmul.f32 %v1833, %v1908
        %v1925 = vmul.f32 %v1835, %v1909
        %v1926 = vmul.f32 %v1837, %v1910
        %v1927 = vmul.f32 %v1839, %v1911
        %v1928 = vmul.f32 %v1841, %v1912
        %v1929 = vmul.f32 %v1843, %v1913
        %v1930 = vmul.f32 %v1845, %v1914
        %v1931 = vmul.f32 %v1847, %v1915
        %v1932 = vmul.f32 %v1849, %v1916
        %v1933 = vmul.f32 %v1851, %v1917
        %v1934 = vmul.f32 %v1853, %v1918
        %v1935 = vmul.f32 %v1855, %v1919
        %1936 = vrot.lane.b32.xlu0 %v477, 64
        %v1937 = vpop.permute.xlu0 %1936
        %v1940 = vsel %vm529, %v1920, 0
        %1942 = vmatprep.subr.mxu0 0.0
        %1943 = vmatpush1.msra.mxu0 %v1937
        %1944 = vmatprep.subr.mxu0 0.0
        %1945 = vmatpush1.msra.mxu0 0.0
        %1946 = vmatprep.subr.mxu0 0.0
        %1947 = vmatpush1.msra.mxu0 0.0
        %1948 = vmatprep.subr.mxu0 0.0
        %1949 = vmatpush1.msra.mxu0 0.0
        %1950 = vmatprep.subr.mxu0 0.0
        %1951 = vmatpush1.msra.mxu0 0.0
        %1952 = vmatprep.subr.mxu0 0.0
        %1953 = vmatpush1.msra.mxu0 0.0
        %1954 = vmatprep.subr.mxu0 0.0
        %1955 = vmatpush1.msra.mxu0 0.0
        %1956 = vmatprep.subr.mxu0 0.0
        %1957 = vmatpush1.msra.mxu0 0.0
        %1958 = vmatprep.subr.mxu0 0.0
        %1959 = vmatpush1.msra.mxu0 0.0
        %1960 = vmatprep.subr.mxu0 0.0
        %1961 = vmatpush1.msra.mxu0 0.0
        %1962 = vmatprep.subr.mxu0 0.0
        %1963 = vmatpush1.msra.mxu0 0.0
        %1964 = vmatprep.subr.mxu0 0.0
        %1965 = vmatpush1.msra.mxu0 0.0
        %1966 = vmatprep.subr.mxu0 0.0
        %1967 = vmatpush1.msra.mxu0 0.0
        %1968 = vmatprep.subr.mxu0 0.0
        %1969 = vmatpush1.msra.mxu0 0.0
        %1970 = vmatprep.subr.mxu0 0.0
        %1971 = vmatpush1.msra.mxu0 0.0
        %1972 = vmatprep.subr.mxu0 0.0
        %1973 = vmatpush1.msra.mxu0 0.0
        %1974 = vmatprep.subr.mxu0 0.0
        %1975 = vmatpush1.msra.mxu0 0.0
        %1976 = vmatprep.subr.mxu0 0.0
        %1977 = vmatpush1.msra.mxu0 0.0
        %1978 = vmatprep.subr.mxu0 0.0
        %1979 = vmatpush1.msra.mxu0 0.0
        %1980 = vmatprep.subr.mxu0 0.0
        %1981 = vmatpush1.msra.mxu0 0.0
        %1982 = vmatprep.subr.mxu0 0.0
        %1983 = vmatpush1.msra.mxu0 0.0
        %1984 = vmatprep.subr.mxu0 0.0
        %1985 = vmatpush1.msra.mxu0 0.0
        %1986 = vmatprep.subr.mxu0 0.0
        %1987 = vmatpush1.msra.mxu0 0.0
        %1988 = vmatprep.subr.mxu0 0.0
        %1989 = vmatpush1.msra.mxu0 0.0
        %1990 = vmatprep.subr.mxu0 0.0
        %1991 = vmatpush1.msra.mxu0 0.0
        %1992 = vmatprep.subr.mxu0 0.0
        %1993 = vmatpush1.msra.mxu0 0.0
        %1994 = vmatprep.subr.mxu0 0.0
        %1995 = vmatpush1.msra.mxu0 0.0
        %1996 = vmatprep.subr.mxu0 0.0
        %1997 = vmatpush1.msra.mxu0 0.0
        %1998 = vmatprep.subr.mxu0 0.0
        %1999 = vmatpush1.msra.mxu0 0.0
        %2000 = vmatprep.subr.mxu0 0.0
        %2001 = vmatpush1.msra.mxu0 0.0
        %2002 = vmatprep.subr.mxu0 0.0
        %2003 = vmatpush1.msra.mxu0 0.0
        %2004 = vmatprep.subr.mxu0 0.0
        %2005 = vmatpush1.msra.mxu0 0.0
        %2006 = vmatprep.mubr.f32.mxu0 0.0
        %2007 = vmatmul.mubr.f32.gmra.mrb[0].mxu0 %v1940
        %v2008 = vpop.f32.mrb[0].mxu0
        %v2009 = vadd.f32 0.0, %v2008
        %v2010 = vpop.f32.mrb[0].mxu0
        %2011 = vdwg.mxu0
        %2012 = vrot.lane.b32.xlu0 %v482, 64
        %v2013 = vpop.permute.xlu0 %2012
        %v2016 = vsel %vm529, %v1921, 0
        %2018 = vmatprep.subr.mxu0 0.0
        %2019 = vmatpush1.msra.mxu0 %v2013
        %2020 = vmatprep.subr.mxu0 0.0
        %2021 = vmatpush1.msra.mxu0 0.0
        %2022 = vmatprep.subr.mxu0 0.0
        %2023 = vmatpush1.msra.mxu0 0.0
        %2024 = vmatprep.subr.mxu0 0.0
        %2025 = vmatpush1.msra.mxu0 0.0
        %2026 = vmatprep.subr.mxu0 0.0
        %2027 = vmatpush1.msra.mxu0 0.0
        %2028 = vmatprep.subr.mxu0 0.0
        %2029 = vmatpush1.msra.mxu0 0.0
        %2030 = vmatprep.subr.mxu0 0.0
        %2031 = vmatpush1.msra.mxu0 0.0
        %2032 = vmatprep.subr.mxu0 0.0
        %2033 = vmatpush1.msra.mxu0 0.0
        %2034 = vmatprep.subr.mxu0 0.0
        %2035 = vmatpush1.msra.mxu0 0.0
        %2036 = vmatprep.subr.mxu0 0.0
        %2037 = vmatpush1.msra.mxu0 0.0
        %2038 = vmatprep.subr.mxu0 0.0
        %2039 = vmatpush1.msra.mxu0 0.0
        %2040 = vmatprep.subr.mxu0 0.0
        %2041 = vmatpush1.msra.mxu0 0.0
        %2042 = vmatprep.subr.mxu0 0.0
        %2043 = vmatpush1.msra.mxu0 0.0
        %2044 = vmatprep.subr.mxu0 0.0
        %2045 = vmatpush1.msra.mxu0 0.0
        %2046 = vmatprep.subr.mxu0 0.0
        %2047 = vmatpush1.msra.mxu0 0.0
        %2048 = vmatprep.subr.mxu0 0.0
        %2049 = vmatpush1.msra.mxu0 0.0
        %2050 = vmatprep.subr.mxu0 0.0
        %2051 = vmatpush1.msra.mxu0 0.0
        %2052 = vmatprep.subr.mxu0 0.0
        %2053 = vmatpush1.msra.mxu0 0.0
        %2054 = vmatprep.subr.mxu0 0.0
        %2055 = vmatpush1.msra.mxu0 0.0
        %2056 = vmatprep.subr.mxu0 0.0
        %2057 = vmatpush1.msra.mxu0 0.0
        %2058 = vmatprep.subr.mxu0 0.0
        %2059 = vmatpush1.msra.mxu0 0.0
        %2060 = vmatprep.subr.mxu0 0.0
        %2061 = vmatpush1.msra.mxu0 0.0
        %2062 = vmatprep.subr.mxu0 0.0
        %2063 = vmatpush1.msra.mxu0 0.0
        %2064 = vmatprep.subr.mxu0 0.0
        %2065 = vmatpush1.msra.mxu0 0.0
        %2066 = vmatprep.subr.mxu0 0.0
        %2067 = vmatpush1.msra.mxu0 0.0
        %2068 = vmatprep.subr.mxu0 0.0
        %2069 = vmatpush1.msra.mxu0 0.0
        %2070 = vmatprep.subr.mxu0 0.0
        %2071 = vmatpush1.msra.mxu0 0.0
        %2072 = vmatprep.subr.mxu0 0.0
        %2073 = vmatpush1.msra.mxu0 0.0
        %2074 = vmatprep.subr.mxu0 0.0
        %2075 = vmatpush1.msra.mxu0 0.0
        %2076 = vmatprep.subr.mxu0 0.0
        %2077 = vmatpush1.msra.mxu0 0.0
        %2078 = vmatprep.subr.mxu0 0.0
        %2079 = vmatpush1.msra.mxu0 0.0
        %2080 = vmatprep.subr.mxu0 0.0
        %2081 = vmatpush1.msra.mxu0 0.0
        %2082 = vmatprep.mubr.f32.mxu0 0.0
        %2083 = vmatmul.mubr.f32.gmra.mrb[0].mxu0 %v2016
        %v2084 = vpop.f32.mrb[0].mxu0
        %v2085 = vadd.f32 0.0, %v2084
        %v2086 = vpop.f32.mrb[0].mxu0
        %2087 = vdwg.mxu0
        %2088 = vrot.lane.b32.xlu0 %v487, 64
        %v2089 = vpop.permute.xlu0 %2088
        %v2092 = vsel %vm529, %v1922, 0
        %2094 = vmatprep.subr.mxu0 0.0
        %2095 = vmatpush1.msra.mxu0 %v2089
        %2096 = vmatprep.subr.mxu0 0.0
        %2097 = vmatpush1.msra.mxu0 0.0
        %2098 = vmatprep.subr.mxu0 0.0
        %2099 = vmatpush1.msra.mxu0 0.0
        %2100 = vmatprep.subr.mxu0 0.0
        %2101 = vmatpush1.msra.mxu0 0.0
        %2102 = vmatprep.subr.mxu0 0.0
        %2103 = vmatpush1.msra.mxu0 0.0
        %2104 = vmatprep.subr.mxu0 0.0
        %2105 = vmatpush1.msra.mxu0 0.0
        %2106 = vmatprep.subr.mxu0 0.0
        %2107 = vmatpush1.msra.mxu0 0.0
        %2108 = vmatprep.subr.mxu0 0.0
        %2109 = vmatpush1.msra.mxu0 0.0
        %2110 = vmatprep.subr.mxu0 0.0
        %2111 = vmatpush1.msra.mxu0 0.0
        %2112 = vmatprep.subr.mxu0 0.0
        %2113 = vmatpush1.msra.mxu0 0.0
        %2114 = vmatprep.subr.mxu0 0.0
        %2115 = vmatpush1.msra.mxu0 0.0
        %2116 = vmatprep.subr.mxu0 0.0
        %2117 = vmatpush1.msra.mxu0 0.0
        %2118 = vmatprep.subr.mxu0 0.0
        %2119 = vmatpush1.msra.mxu0 0.0
        %2120 = vmatprep.subr.mxu0 0.0
        %2121 = vmatpush1.msra.mxu0 0.0
        %2122 = vmatprep.subr.mxu0 0.0
        %2123 = vmatpush1.msra.mxu0 0.0
        %2124 = vmatprep.subr.mxu0 0.0
        %2125 = vmatpush1.msra.mxu0 0.0
        %2126 = vmatprep.subr.mxu0 0.0
        %2127 = vmatpush1.msra.mxu0 0.0
        %2128 = vmatprep.subr.mxu0 0.0
        %2129 = vmatpush1.msra.mxu0 0.0
        %2130 = vmatprep.subr.mxu0 0.0
        %2131 = vmatpush1.msra.mxu0 0.0
        %2132 = vmatprep.subr.mxu0 0.0
        %2133 = vmatpush1.msra.mxu0 0.0
        %2134 = vmatprep.subr.mxu0 0.0
        %2135 = vmatpush1.msra.mxu0 0.0
        %2136 = vmatprep.subr.mxu0 0.0
        %2137 = vmatpush1.msra.mxu0 0.0
        %2138 = vmatprep.subr.mxu0 0.0
        %2139 = vmatpush1.msra.mxu0 0.0
        %2140 = vmatprep.subr.mxu0 0.0
        %2141 = vmatpush1.msra.mxu0 0.0
        %2142 = vmatprep.subr.mxu0 0.0
        %2143 = vmatpush1.msra.mxu0 0.0
        %2144 = vmatprep.subr.mxu0 0.0
        %2145 = vmatpush1.msra.mxu0 0.0
        %2146 = vmatprep.subr.mxu0 0.0
        %2147 = vmatpush1.msra.mxu0 0.0
        %2148 = vmatprep.subr.mxu0 0.0
        %2149 = vmatpush1.msra.mxu0 0.0
        %2150 = vmatprep.subr.mxu0 0.0
        %2151 = vmatpush1.msra.mxu0 0.0
        %2152 = vmatprep.subr.mxu0 0.0
        %2153 = vmatpush1.msra.mxu0 0.0
        %2154 = vmatprep.subr.mxu0 0.0
        %2155 = vmatpush1.msra.mxu0 0.0
        %2156 = vmatprep.subr.mxu0 0.0
        %2157 = vmatpush1.msra.mxu0 0.0
        %2158 = vmatprep.mubr.f32.mxu0 0.0
        %2159 = vmatmul.mubr.f32.gmra.mrb[0].mxu0 %v2092
        %v2160 = vpop.f32.mrb[0].mxu0
        %v2161 = vadd.f32 0.0, %v2160
        %v2162 = vpop.f32.mrb[0].mxu0
        %2163 = vdwg.mxu0
        %2164 = vrot.lane.b32.xlu0 %v492, 64
        %v2165 = vpop.permute.xlu0 %2164
        %v2168 = vsel %vm529, %v1923, 0
        %2170 = vmatprep.subr.mxu0 0.0
        %2171 = vmatpush1.msra.mxu0 %v2165
        %2172 = vmatprep.subr.mxu0 0.0
        %2173 = vmatpush1.msra.mxu0 0.0
        %2174 = vmatprep.subr.mxu0 0.0
        %2175 = vmatpush1.msra.mxu0 0.0
        %2176 = vmatprep.subr.mxu0 0.0
        %2177 = vmatpush1.msra.mxu0 0.0
        %2178 = vmatprep.subr.mxu0 0.0
        %2179 = vmatpush1.msra.mxu0 0.0
        %2180 = vmatprep.subr.mxu0 0.0
        %2181 = vmatpush1.msra.mxu0 0.0
        %2182 = vmatprep.subr.mxu0 0.0
        %2183 = vmatpush1.msra.mxu0 0.0
        %2184 = vmatprep.subr.mxu0 0.0
        %2185 = vmatpush1.msra.mxu0 0.0
        %2186 = vmatprep.subr.mxu0 0.0
        %2187 = vmatpush1.msra.mxu0 0.0
        %2188 = vmatprep.subr.mxu0 0.0
        %2189 = vmatpush1.msra.mxu0 0.0
        %2190 = vmatprep.subr.mxu0 0.0
        %2191 = vmatpush1.msra.mxu0 0.0
        %2192 = vmatprep.subr.mxu0 0.0
        %2193 = vmatpush1.msra.mxu0 0.0
        %2194 = vmatprep.subr.mxu0 0.0
        %2195 = vmatpush1.msra.mxu0 0.0
        %2196 = vmatprep.subr.mxu0 0.0
        %2197 = vmatpush1.msra.mxu0 0.0
        %2198 = vmatprep.subr.mxu0 0.0
        %2199 = vmatpush1.msra.mxu0 0.0
        %2200 = vmatprep.subr.mxu0 0.0
        %2201 = vmatpush1.msra.mxu0 0.0
        %2202 = vmatprep.subr.mxu0 0.0
        %2203 = vmatpush1.msra.mxu0 0.0
        %2204 = vmatprep.subr.mxu0 0.0
        %2205 = vmatpush1.msra.mxu0 0.0
        %2206 = vmatprep.subr.mxu0 0.0
        %2207 = vmatpush1.msra.mxu0 0.0
        %2208 = vmatprep.subr.mxu0 0.0
        %2209 = vmatpush1.msra.mxu0 0.0
        %2210 = vmatprep.subr.mxu0 0.0
        %2211 = vmatpush1.msra.mxu0 0.0
        %2212 = vmatprep.subr.mxu0 0.0
        %2213 = vmatpush1.msra.mxu0 0.0
        %2214 = vmatprep.subr.mxu0 0.0
        %2215 = vmatpush1.msra.mxu0 0.0
        %2216 = vmatprep.subr.mxu0 0.0
        %2217 = vmatpush1.msra.mxu0 0.0
        %2218 = vmatprep.subr.mxu0 0.0
        %2219 = vmatpush1.msra.mxu0 0.0
        %2220 = vmatprep.subr.mxu0 0.0
        %2221 = vmatpush1.msra.mxu0 0.0
        %2222 = vmatprep.subr.mxu0 0.0
        %2223 = vmatpush1.msra.mxu0 0.0
        %2224 = vmatprep.subr.mxu0 0.0
        %2225 = vmatpush1.msra.mxu0 0.0
        %2226 = vmatprep.subr.mxu0 0.0
        %2227 = vmatpush1.msra.mxu0 0.0
        %2228 = vmatprep.subr.mxu0 0.0
        %2229 = vmatpush1.msra.mxu0 0.0
        %2230 = vmatprep.subr.mxu0 0.0
        %2231 = vmatpush1.msra.mxu0 0.0
        %2232 = vmatprep.subr.mxu0 0.0
        %2233 = vmatpush1.msra.mxu0 0.0
        %2234 = vmatprep.mubr.f32.mxu0 0.0
        %2235 = vmatmul.mubr.f32.gmra.mrb[0].mxu0 %v2168
        %v2236 = vpop.f32.mrb[0].mxu0
        %v2237 = vadd.f32 0.0, %v2236
        %v2238 = vpop.f32.mrb[0].mxu0
        %2239 = vdwg.mxu0
        %2240 = vrot.lane.b32.xlu0 %v500, 64
        %v2241 = vpop.permute.xlu0 %2240
        %v2244 = vsel %vm529, %v1924, 0
        %2246 = vmatprep.subr.mxu0 0.0
        %2247 = vmatpush1.msra.mxu0 %v2241
        %2248 = vmatprep.subr.mxu0 0.0
        %2249 = vmatpush1.msra.mxu0 0.0
        %2250 = vmatprep.subr.mxu0 0.0
        %2251 = vmatpush1.msra.mxu0 0.0
        %2252 = vmatprep.subr.mxu0 0.0
        %2253 = vmatpush1.msra.mxu0 0.0
        %2254 = vmatprep.subr.mxu0 0.0
        %2255 = vmatpush1.msra.mxu0 0.0
        %2256 = vmatprep.subr.mxu0 0.0
        %2257 = vmatpush1.msra.mxu0 0.0
        %2258 = vmatprep.subr.mxu0 0.0
        %2259 = vmatpush1.msra.mxu0 0.0
        %2260 = vmatprep.subr.mxu0 0.0
        %2261 = vmatpush1.msra.mxu0 0.0
        %2262 = vmatprep.subr.mxu0 0.0
        %2263 = vmatpush1.msra.mxu0 0.0
        %2264 = vmatprep.subr.mxu0 0.0
        %2265 = vmatpush1.msra.mxu0 0.0
        %2266 = vmatprep.subr.mxu0 0.0
        %2267 = vmatpush1.msra.mxu0 0.0
        %2268 = vmatprep.subr.mxu0 0.0
        %2269 = vmatpush1.msra.mxu0 0.0
        %2270 = vmatprep.subr.mxu0 0.0
        %2271 = vmatpush1.msra.mxu0 0.0
        %2272 = vmatprep.subr.mxu0 0.0
        %2273 = vmatpush1.msra.mxu0 0.0
        %2274 = vmatprep.subr.mxu0 0.0
        %2275 = vmatpush1.msra.mxu0 0.0
        %2276 = vmatprep.subr.mxu0 0.0
        %2277 = vmatpush1.msra.mxu0 0.0
        %2278 = vmatprep.subr.mxu0 0.0
        %2279 = vmatpush1.msra.mxu0 0.0
        %2280 = vmatprep.subr.mxu0 0.0
        %2281 = vmatpush1.msra.mxu0 0.0
        %2282 = vmatprep.subr.mxu0 0.0
        %2283 = vmatpush1.msra.mxu0 0.0
        %2284 = vmatprep.subr.mxu0 0.0
        %2285 = vmatpush1.msra.mxu0 0.0
        %2286 = vmatprep.subr.mxu0 0.0
        %2287 = vmatpush1.msra.mxu0 0.0
        %2288 = vmatprep.subr.mxu0 0.0
        %2289 = vmatpush1.msra.mxu0 0.0
        %2290 = vmatprep.subr.mxu0 0.0
        %2291 = vmatpush1.msra.mxu0 0.0
        %2292 = vmatprep.subr.mxu0 0.0
        %2293 = vmatpush1.msra.mxu0 0.0
        %2294 = vmatprep.subr.mxu0 0.0
        %2295 = vmatpush1.msra.mxu0 0.0
        %2296 = vmatprep.subr.mxu0 0.0
        %2297 = vmatpush1.msra.mxu0 0.0
        %2298 = vmatprep.subr.mxu0 0.0
        %2299 = vmatpush1.msra.mxu0 0.0
        %2300 = vmatprep.subr.mxu0 0.0
        %2301 = vmatpush1.msra.mxu0 0.0
        %2302 = vmatprep.subr.mxu0 0.0
        %2303 = vmatpush1.msra.mxu0 0.0
        %2304 = vmatprep.subr.mxu0 0.0
        %2305 = vmatpush1.msra.mxu0 0.0
        %2306 = vmatprep.subr.mxu0 0.0
        %2307 = vmatpush1.msra.mxu0 0.0
        %2308 = vmatprep.subr.mxu0 0.0
        %2309 = vmatpush1.msra.mxu0 0.0
        %2310 = vmatprep.mubr.f32.mxu0 0.0
        %2311 = vmatmul.mubr.f32.gmra.mrb[0].mxu0 %v2244
        %v2312 = vpop.f32.mrb[0].mxu0
        %v2313 = vadd.f32 0.0, %v2312
        %v2314 = vpop.f32.mrb[0].mxu0
        %2315 = vdwg.mxu0
        %2316 = vrot.lane.b32.xlu0 %v502, 64
        %v2317 = vpop.permute.xlu0 %2316
        %v2320 = vsel %vm529, %v1925, 0
        %2322 = vmatprep.subr.mxu0 0.0
        %2323 = vmatpush1.msra.mxu0 %v2317
        %2324 = vmatprep.subr.mxu0 0.0
        %2325 = vmatpush1.msra.mxu0 0.0
        %2326 = vmatprep.subr.mxu0 0.0
        %2327 = vmatpush1.msra.mxu0 0.0
        %2328 = vmatprep.subr.mxu0 0.0
        %2329 = vmatpush1.msra.mxu0 0.0
        %2330 = vmatprep.subr.mxu0 0.0
        %2331 = vmatpush1.msra.mxu0 0.0
        %2332 = vmatprep.subr.mxu0 0.0
        %2333 = vmatpush1.msra.mxu0 0.0
        %2334 = vmatprep.subr.mxu0 0.0
        %2335 = vmatpush1.msra.mxu0 0.0
        %2336 = vmatprep.subr.mxu0 0.0
        %2337 = vmatpush1.msra.mxu0 0.0
        %2338 = vmatprep.subr.mxu0 0.0
        %2339 = vmatpush1.msra.mxu0 0.0
        %2340 = vmatprep.subr.mxu0 0.0
        %2341 = vmatpush1.msra.mxu0 0.0
        %2342 = vmatprep.subr.mxu0 0.0
        %2343 = vmatpush1.msra.mxu0 0.0
        %2344 = vmatprep.subr.mxu0 0.0
        %2345 = vmatpush1.msra.mxu0 0.0
        %2346 = vmatprep.subr.mxu0 0.0
        %2347 = vmatpush1.msra.mxu0 0.0
        %2348 = vmatprep.subr.mxu0 0.0
        %2349 = vmatpush1.msra.mxu0 0.0
        %2350 = vmatprep.subr.mxu0 0.0
        %2351 = vmatpush1.msra.mxu0 0.0
        %2352 = vmatprep.subr.mxu0 0.0
        %2353 = vmatpush1.msra.mxu0 0.0
        %2354 = vmatprep.subr.mxu0 0.0
        %2355 = vmatpush1.msra.mxu0 0.0
        %2356 = vmatprep.subr.mxu0 0.0
        %2357 = vmatpush1.msra.mxu0 0.0
        %2358 = vmatprep.subr.mxu0 0.0
        %2359 = vmatpush1.msra.mxu0 0.0
        %2360 = vmatprep.subr.mxu0 0.0
        %2361 = vmatpush1.msra.mxu0 0.0
        %2362 = vmatprep.subr.mxu0 0.0
        %2363 = vmatpush1.msra.mxu0 0.0
        %2364 = vmatprep.subr.mxu0 0.0
        %2365 = vmatpush1.msra.mxu0 0.0
        %2366 = vmatprep.subr.mxu0 0.0
        %2367 = vmatpush1.msra.mxu0 0.0
        %2368 = vmatprep.subr.mxu0 0.0
        %2369 = vmatpush1.msra.mxu0 0.0
        %2370 = vmatprep.subr.mxu0 0.0
        %2371 = vmatpush1.msra.mxu0 0.0
        %2372 = vmatprep.subr.mxu0 0.0
        %2373 = vmatpush1.msra.mxu0 0.0
        %2374 = vmatprep.subr.mxu0 0.0
        %2375 = vmatpush1.msra.mxu0 0.0
        %2376 = vmatprep.subr.mxu0 0.0
        %2377 = vmatpush1.msra.mxu0 0.0
        %2378 = vmatprep.subr.mxu0 0.0
        %2379 = vmatpush1.msra.mxu0 0.0
        %2380 = vmatprep.subr.mxu0 0.0
        %2381 = vmatpush1.msra.mxu0 0.0
        %2382 = vmatprep.subr.mxu0 0.0
        %2383 = vmatpush1.msra.mxu0 0.0
        %2384 = vmatprep.subr.mxu0 0.0
        %2385 = vmatpush1.msra.mxu0 0.0
        %2386 = vmatprep.mubr.f32.mxu0 0.0
        %2387 = vmatmul.mubr.f32.gmra.mrb[0].mxu0 %v2320
        %v2388 = vpop.f32.mrb[0].mxu0
        %v2389 = vadd.f32 0.0, %v2388
        %v2390 = vpop.f32.mrb[0].mxu0
        %2391 = vdwg.mxu0
        %2392 = vrot.lane.b32.xlu0 %v504, 64
        %v2393 = vpop.permute.xlu0 %2392
        %v2396 = vsel %vm529, %v1926, 0
        %2398 = vmatprep.subr.mxu0 0.0
        %2399 = vmatpush1.msra.mxu0 %v2393
        %2400 = vmatprep.subr.mxu0 0.0
        %2401 = vmatpush1.msra.mxu0 0.0
        %2402 = vmatprep.subr.mxu0 0.0
        %2403 = vmatpush1.msra.mxu0 0.0
        %2404 = vmatprep.subr.mxu0 0.0
        %2405 = vmatpush1.msra.mxu0 0.0
        %2406 = vmatprep.subr.mxu0 0.0
        %2407 = vmatpush1.msra.mxu0 0.0
        %2408 = vmatprep.subr.mxu0 0.0
        %2409 = vmatpush1.msra.mxu0 0.0
        %2410 = vmatprep.subr.mxu0 0.0
        %2411 = vmatpush1.msra.mxu0 0.0
        %2412 = vmatprep.subr.mxu0 0.0
        %2413 = vmatpush1.msra.mxu0 0.0
        %2414 = vmatprep.subr.mxu0 0.0
        %2415 = vmatpush1.msra.mxu0 0.0
        %2416 = vmatprep.subr.mxu0 0.0
        %2417 = vmatpush1.msra.mxu0 0.0
        %2418 = vmatprep.subr.mxu0 0.0
        %2419 = vmatpush1.msra.mxu0 0.0
        %2420 = vmatprep.subr.mxu0 0.0
        %2421 = vmatpush1.msra.mxu0 0.0
        %2422 = vmatprep.subr.mxu0 0.0
        %2423 = vmatpush1.msra.mxu0 0.0
        %2424 = vmatprep.subr.mxu0 0.0
        %2425 = vmatpush1.msra.mxu0 0.0
        %2426 = vmatprep.subr.mxu0 0.0
        %2427 = vmatpush1.msra.mxu0 0.0
        %2428 = vmatprep.subr.mxu0 0.0
        %2429 = vmatpush1.msra.mxu0 0.0
        %2430 = vmatprep.subr.mxu0 0.0
        %2431 = vmatpush1.msra.mxu0 0.0
        %2432 = vmatprep.subr.mxu0 0.0
        %2433 = vmatpush1.msra.mxu0 0.0
        %2434 = vmatprep.subr.mxu0 0.0
        %2435 = vmatpush1.msra.mxu0 0.0
        %2436 = vmatprep.subr.mxu0 0.0
        %2437 = vmatpush1.msra.mxu0 0.0
        %2438 = vmatprep.subr.mxu0 0.0
        %2439 = vmatpush1.msra.mxu0 0.0
        %2440 = vmatprep.subr.mxu0 0.0
        %2441 = vmatpush1.msra.mxu0 0.0
        %2442 = vmatprep.subr.mxu0 0.0
        %2443 = vmatpush1.msra.mxu0 0.0
        %2444 = vmatprep.subr.mxu0 0.0
        %2445 = vmatpush1.msra.mxu0 0.0
        %2446 = vmatprep.subr.mxu0 0.0
        %2447 = vmatpush1.msra.mxu0 0.0
        %2448 = vmatprep.subr.mxu0 0.0
        %2449 = vmatpush1.msra.mxu0 0.0
        %2450 = vmatprep.subr.mxu0 0.0
        %2451 = vmatpush1.msra.mxu0 0.0
        %2452 = vmatprep.subr.mxu0 0.0
        %2453 = vmatpush1.msra.mxu0 0.0
        %2454 = vmatprep.subr.mxu0 0.0
        %2455 = vmatpush1.msra.mxu0 0.0
        %2456 = vmatprep.subr.mxu0 0.0
        %2457 = vmatpush1.msra.mxu0 0.0
        %2458 = vmatprep.subr.mxu0 0.0
        %2459 = vmatpush1.msra.mxu0 0.0
        %2460 = vmatprep.subr.mxu0 0.0
        %2461 = vmatpush1.msra.mxu0 0.0
        %2462 = vmatprep.mubr.f32.mxu0 0.0
        %2463 = vmatmul.mubr.f32.gmra.mrb[0].mxu0 %v2396
        %v2464 = vpop.f32.mrb[0].mxu0
        %v2465 = vadd.f32 0.0, %v2464
        %v2466 = vpop.f32.mrb[0].mxu0
        %2467 = vdwg.mxu0
        %2468 = vrot.lane.b32.xlu0 %v506, 64
        %v2469 = vpop.permute.xlu0 %2468
        %v2472 = vsel %vm529, %v1927, 0
        %2474 = vmatprep.subr.mxu0 0.0
        %2475 = vmatpush1.msra.mxu0 %v2469
        %2476 = vmatprep.subr.mxu0 0.0
        %2477 = vmatpush1.msra.mxu0 0.0
        %2478 = vmatprep.subr.mxu0 0.0
        %2479 = vmatpush1.msra.mxu0 0.0
        %2480 = vmatprep.subr.mxu0 0.0
        %2481 = vmatpush1.msra.mxu0 0.0
        %2482 = vmatprep.subr.mxu0 0.0
        %2483 = vmatpush1.msra.mxu0 0.0
        %2484 = vmatprep.subr.mxu0 0.0
        %2485 = vmatpush1.msra.mxu0 0.0
        %2486 = vmatprep.subr.mxu0 0.0
        %2487 = vmatpush1.msra.mxu0 0.0
        %2488 = vmatprep.subr.mxu0 0.0
        %2489 = vmatpush1.msra.mxu0 0.0
        %2490 = vmatprep.subr.mxu0 0.0
        %2491 = vmatpush1.msra.mxu0 0.0
        %2492 = vmatprep.subr.mxu0 0.0
        %2493 = vmatpush1.msra.mxu0 0.0
        %2494 = vmatprep.subr.mxu0 0.0
        %2495 = vmatpush1.msra.mxu0 0.0
        %2496 = vmatprep.subr.mxu0 0.0
        %2497 = vmatpush1.msra.mxu0 0.0
        %2498 = vmatprep.subr.mxu0 0.0
        %2499 = vmatpush1.msra.mxu0 0.0
        %2500 = vmatprep.subr.mxu0 0.0
        %2501 = vmatpush1.msra.mxu0 0.0
        %2502 = vmatprep.subr.mxu0 0.0
        %2503 = vmatpush1.msra.mxu0 0.0
        %2504 = vmatprep.subr.mxu0 0.0
        %2505 = vmatpush1.msra.mxu0 0.0
        %2506 = vmatprep.subr.mxu0 0.0
        %2507 = vmatpush1.msra.mxu0 0.0
        %2508 = vmatprep.subr.mxu0 0.0
        %2509 = vmatpush1.msra.mxu0 0.0
        %2510 = vmatprep.subr.mxu0 0.0
        %2511 = vmatpush1.msra.mxu0 0.0
        %2512 = vmatprep.subr.mxu0 0.0
        %2513 = vmatpush1.msra.mxu0 0.0
        %2514 = vmatprep.subr.mxu0 0.0
        %2515 = vmatpush1.msra.mxu0 0.0
        %2516 = vmatprep.subr.mxu0 0.0
        %2517 = vmatpush1.msra.mxu0 0.0
        %2518 = vmatprep.subr.mxu0 0.0
        %2519 = vmatpush1.msra.mxu0 0.0
        %2520 = vmatprep.subr.mxu0 0.0
        %2521 = vmatpush1.msra.mxu0 0.0
        %2522 = vmatprep.subr.mxu0 0.0
        %2523 = vmatpush1.msra.mxu0 0.0
        %2524 = vmatprep.subr.mxu0 0.0
        %2525 = vmatpush1.msra.mxu0 0.0
        %2526 = vmatprep.subr.mxu0 0.0
        %2527 = vmatpush1.msra.mxu0 0.0
        %2528 = vmatprep.subr.mxu0 0.0
        %2529 = vmatpush1.msra.mxu0 0.0
        %2530 = vmatprep.subr.mxu0 0.0
        %2531 = vmatpush1.msra.mxu0 0.0
        %2532 = vmatprep.subr.mxu0 0.0
        %2533 = vmatpush1.msra.mxu0 0.0
        %2534 = vmatprep.subr.mxu0 0.0
        %2535 = vmatpush1.msra.mxu0 0.0
        %2536 = vmatprep.subr.mxu0 0.0
        %2537 = vmatpush1.msra.mxu0 0.0
        %2538 = vmatprep.mubr.f32.mxu0 0.0
        %2539 = vmatmul.mubr.f32.gmra.mrb[0].mxu0 %v2472
        %v2540 = vpop.f32.mrb[0].mxu0
        %v2541 = vadd.f32 0.0, %v2540
        %v2542 = vpop.f32.mrb[0].mxu0
        %2543 = vdwg.mxu0
        %2544 = vrot.lane.b32.xlu0 %v508, 64
        %v2545 = vpop.permute.xlu0 %2544
        %v2548 = vsel %vm529, %v1928, 0
        %2550 = vmatprep.subr.mxu0 0.0
        %2551 = vmatpush1.msra.mxu0 %v2545
        %2552 = vmatprep.subr.mxu0 0.0
        %2553 = vmatpush1.msra.mxu0 0.0
        %2554 = vmatprep.subr.mxu0 0.0
        %2555 = vmatpush1.msra.mxu0 0.0
        %2556 = vmatprep.subr.mxu0 0.0
        %2557 = vmatpush1.msra.mxu0 0.0
        %2558 = vmatprep.subr.mxu0 0.0
        %2559 = vmatpush1.msra.mxu0 0.0
        %2560 = vmatprep.subr.mxu0 0.0
        %2561 = vmatpush1.msra.mxu0 0.0
        %2562 = vmatprep.subr.mxu0 0.0
        %2563 = vmatpush1.msra.mxu0 0.0
        %2564 = vmatprep.subr.mxu0 0.0
        %2565 = vmatpush1.msra.mxu0 0.0
        %2566 = vmatprep.subr.mxu0 0.0
        %2567 = vmatpush1.msra.mxu0 0.0
        %2568 = vmatprep.subr.mxu0 0.0
        %2569 = vmatpush1.msra.mxu0 0.0
        %2570 = vmatprep.subr.mxu0 0.0
        %2571 = vmatpush1.msra.mxu0 0.0
        %2572 = vmatprep.subr.mxu0 0.0
        %2573 = vmatpush1.msra.mxu0 0.0
        %2574 = vmatprep.subr.mxu0 0.0
        %2575 = vmatpush1.msra.mxu0 0.0
        %2576 = vmatprep.subr.mxu0 0.0
        %2577 = vmatpush1.msra.mxu0 0.0
        %2578 = vmatprep.subr.mxu0 0.0
        %2579 = vmatpush1.msra.mxu0 0.0
        %2580 = vmatprep.subr.mxu0 0.0
        %2581 = vmatpush1.msra.mxu0 0.0
        %2582 = vmatprep.subr.mxu0 0.0
        %2583 = vmatpush1.msra.mxu0 0.0
        %2584 = vmatprep.subr.mxu0 0.0
        %2585 = vmatpush1.msra.mxu0 0.0
        %2586 = vmatprep.subr.mxu0 0.0
        %2587 = vmatpush1.msra.mxu0 0.0
        %2588 = vmatprep.subr.mxu0 0.0
        %2589 = vmatpush1.msra.mxu0 0.0
        %2590 = vmatprep.subr.mxu0 0.0
        %2591 = vmatpush1.msra.mxu0 0.0
        %2592 = vmatprep.subr.mxu0 0.0
        %2593 = vmatpush1.msra.mxu0 0.0
        %2594 = vmatprep.subr.mxu0 0.0
        %2595 = vmatpush1.msra.mxu0 0.0
        %2596 = vmatprep.subr.mxu0 0.0
        %2597 = vmatpush1.msra.mxu0 0.0
        %2598 = vmatprep.subr.mxu0 0.0
        %2599 = vmatpush1.msra.mxu0 0.0
        %2600 = vmatprep.subr.mxu0 0.0
        %2601 = vmatpush1.msra.mxu0 0.0
        %2602 = vmatprep.subr.mxu0 0.0
        %2603 = vmatpush1.msra.mxu0 0.0
        %2604 = vmatprep.subr.mxu0 0.0
        %2605 = vmatpush1.msra.mxu0 0.0
        %2606 = vmatprep.subr.mxu0 0.0
        %2607 = vmatpush1.msra.mxu0 0.0
        %2608 = vmatprep.subr.mxu0 0.0
        %2609 = vmatpush1.msra.mxu0 0.0
        %2610 = vmatprep.subr.mxu0 0.0
        %2611 = vmatpush1.msra.mxu0 0.0
        %2612 = vmatprep.subr.mxu0 0.0
        %2613 = vmatpush1.msra.mxu0 0.0
        %2614 = vmatprep.mubr.f32.mxu0 0.0
        %2615 = vmatmul.mubr.f32.gmra.mrb[0].mxu0 %v2548
        %v2616 = vpop.f32.mrb[0].mxu0
        %v2617 = vadd.f32 0.0, %v2616
        %v2618 = vpop.f32.mrb[0].mxu0
        %2619 = vdwg.mxu0
        %2620 = vrot.lane.b32.xlu0 %v510, 64
        %v2621 = vpop.permute.xlu0 %2620
        %v2624 = vsel %vm529, %v1929, 0
        %2626 = vmatprep.subr.mxu0 0.0
        %2627 = vmatpush1.msra.mxu0 %v2621
        %2628 = vmatprep.subr.mxu0 0.0
        %2629 = vmatpush1.msra.mxu0 0.0
        %2630 = vmatprep.subr.mxu0 0.0
        %2631 = vmatpush1.msra.mxu0 0.0
        %2632 = vmatprep.subr.mxu0 0.0
        %2633 = vmatpush1.msra.mxu0 0.0
        %2634 = vmatprep.subr.mxu0 0.0
        %2635 = vmatpush1.msra.mxu0 0.0
        %2636 = vmatprep.subr.mxu0 0.0
        %2637 = vmatpush1.msra.mxu0 0.0
        %2638 = vmatprep.subr.mxu0 0.0
        %2639 = vmatpush1.msra.mxu0 0.0
        %2640 = vmatprep.subr.mxu0 0.0
        %2641 = vmatpush1.msra.mxu0 0.0
        %2642 = vmatprep.subr.mxu0 0.0
        %2643 = vmatpush1.msra.mxu0 0.0
        %2644 = vmatprep.subr.mxu0 0.0
        %2645 = vmatpush1.msra.mxu0 0.0
        %2646 = vmatprep.subr.mxu0 0.0
        %2647 = vmatpush1.msra.mxu0 0.0
        %2648 = vmatprep.subr.mxu0 0.0
        %2649 = vmatpush1.msra.mxu0 0.0
        %2650 = vmatprep.subr.mxu0 0.0
        %2651 = vmatpush1.msra.mxu0 0.0
        %2652 = vmatprep.subr.mxu0 0.0
        %2653 = vmatpush1.msra.mxu0 0.0
        %2654 = vmatprep.subr.mxu0 0.0
        %2655 = vmatpush1.msra.mxu0 0.0
        %2656 = vmatprep.subr.mxu0 0.0
        %2657 = vmatpush1.msra.mxu0 0.0
        %2658 = vmatprep.subr.mxu0 0.0
        %2659 = vmatpush1.msra.mxu0 0.0
        %2660 = vmatprep.subr.mxu0 0.0
        %2661 = vmatpush1.msra.mxu0 0.0
        %2662 = vmatprep.subr.mxu0 0.0
        %2663 = vmatpush1.msra.mxu0 0.0
        %2664 = vmatprep.subr.mxu0 0.0
        %2665 = vmatpush1.msra.mxu0 0.0
        %2666 = vmatprep.subr.mxu0 0.0
        %2667 = vmatpush1.msra.mxu0 0.0
        %2668 = vmatprep.subr.mxu0 0.0
        %2669 = vmatpush1.msra.mxu0 0.0
        %2670 = vmatprep.subr.mxu0 0.0
        %2671 = vmatpush1.msra.mxu0 0.0
        %2672 = vmatprep.subr.mxu0 0.0
        %2673 = vmatpush1.msra.mxu0 0.0
        %2674 = vmatprep.subr.mxu0 0.0
        %2675 = vmatpush1.msra.mxu0 0.0
        %2676 = vmatprep.subr.mxu0 0.0
        %2677 = vmatpush1.msra.mxu0 0.0
        %2678 = vmatprep.subr.mxu0 0.0
        %2679 = vmatpush1.msra.mxu0 0.0
        %2680 = vmatprep.subr.mxu0 0.0
        %2681 = vmatpush1.msra.mxu0 0.0
        %2682 = vmatprep.subr.mxu0 0.0
        %2683 = vmatpush1.msra.mxu0 0.0
        %2684 = vmatprep.subr.mxu0 0.0
        %2685 = vmatpush1.msra.mxu0 0.0
        %2686 = vmatprep.subr.mxu0 0.0
        %2687 = vmatpush1.msra.mxu0 0.0
        %2688 = vmatprep.subr.mxu0 0.0
        %2689 = vmatpush1.msra.mxu0 0.0
        %2690 = vmatprep.mubr.f32.mxu0 0.0
        %2691 = vmatmul.mubr.f32.gmra.mrb[0].mxu0 %v2624
        %v2692 = vpop.f32.mrb[0].mxu0
        %v2693 = vadd.f32 0.0, %v2692
        %v2694 = vpop.f32.mrb[0].mxu0
        %2695 = vdwg.mxu0
        %2696 = vrot.lane.b32.xlu0 %v512, 64
        %v2697 = vpop.permute.xlu0 %2696
        %v2700 = vsel %vm529, %v1930, 0
        %2702 = vmatprep.subr.mxu0 0.0
        %2703 = vmatpush1.msra.mxu0 %v2697
        %2704 = vmatprep.subr.mxu0 0.0
        %2705 = vmatpush1.msra.mxu0 0.0
        %2706 = vmatprep.subr.mxu0 0.0
        %2707 = vmatpush1.msra.mxu0 0.0
        %2708 = vmatprep.subr.mxu0 0.0
        %2709 = vmatpush1.msra.mxu0 0.0
        %2710 = vmatprep.subr.mxu0 0.0
        %2711 = vmatpush1.msra.mxu0 0.0
        %2712 = vmatprep.subr.mxu0 0.0
        %2713 = vmatpush1.msra.mxu0 0.0
        %2714 = vmatprep.subr.mxu0 0.0
        %2715 = vmatpush1.msra.mxu0 0.0
        %2716 = vmatprep.subr.mxu0 0.0
        %2717 = vmatpush1.msra.mxu0 0.0
        %2718 = vmatprep.subr.mxu0 0.0
        %2719 = vmatpush1.msra.mxu0 0.0
        %2720 = vmatprep.subr.mxu0 0.0
        %2721 = vmatpush1.msra.mxu0 0.0
        %2722 = vmatprep.subr.mxu0 0.0
        %2723 = vmatpush1.msra.mxu0 0.0
        %2724 = vmatprep.subr.mxu0 0.0
        %2725 = vmatpush1.msra.mxu0 0.0
        %2726 = vmatprep.subr.mxu0 0.0
        %2727 = vmatpush1.msra.mxu0 0.0
        %2728 = vmatprep.subr.mxu0 0.0
        %2729 = vmatpush1.msra.mxu0 0.0
        %2730 = vmatprep.subr.mxu0 0.0
        %2731 = vmatpush1.msra.mxu0 0.0
        %2732 = vmatprep.subr.mxu0 0.0
        %2733 = vmatpush1.msra.mxu0 0.0
        %2734 = vmatprep.subr.mxu0 0.0
        %2735 = vmatpush1.msra.mxu0 0.0
        %2736 = vmatprep.subr.mxu0 0.0
        %2737 = vmatpush1.msra.mxu0 0.0
        %2738 = vmatprep.subr.mxu0 0.0
        %2739 = vmatpush1.msra.mxu0 0.0
        %2740 = vmatprep.subr.mxu0 0.0
        %2741 = vmatpush1.msra.mxu0 0.0
        %2742 = vmatprep.subr.mxu0 0.0
        %2743 = vmatpush1.msra.mxu0 0.0
        %2744 = vmatprep.subr.mxu0 0.0
        %2745 = vmatpush1.msra.mxu0 0.0
        %2746 = vmatprep.subr.mxu0 0.0
        %2747 = vmatpush1.msra.mxu0 0.0
        %2748 = vmatprep.subr.mxu0 0.0
        %2749 = vmatpush1.msra.mxu0 0.0
        %2750 = vmatprep.subr.mxu0 0.0
        %2751 = vmatpush1.msra.mxu0 0.0
        %2752 = vmatprep.subr.mxu0 0.0
        %2753 = vmatpush1.msra.mxu0 0.0
        %2754 = vmatprep.subr.mxu0 0.0
        %2755 = vmatpush1.msra.mxu0 0.0
        %2756 = vmatprep.subr.mxu0 0.0
        %2757 = vmatpush1.msra.mxu0 0.0
        %2758 = vmatprep.subr.mxu0 0.0
        %2759 = vmatpush1.msra.mxu0 0.0
        %2760 = vmatprep.subr.mxu0 0.0
        %2761 = vmatpush1.msra.mxu0 0.0
        %2762 = vmatprep.subr.mxu0 0.0
        %2763 = vmatpush1.msra.mxu0 0.0
        %2764 = vmatprep.subr.mxu0 0.0
        %2765 = vmatpush1.msra.mxu0 0.0
        %2766 = vmatprep.mubr.f32.mxu0 0.0
        %2767 = vmatmul.mubr.f32.gmra.mrb[0].mxu0 %v2700
        %v2768 = vpop.f32.mrb[0].mxu0
        %v2769 = vadd.f32 0.0, %v2768
        %v2770 = vpop.f32.mrb[0].mxu0
        %2771 = vdwg.mxu0
        %2772 = vrot.lane.b32.xlu0 %v514, 64
        %v2773 = vpop.permute.xlu0 %2772
        %v2776 = vsel %vm529, %v1931, 0
        %2778 = vmatprep.subr.mxu0 0.0
        %2779 = vmatpush1.msra.mxu0 %v2773
        %2780 = vmatprep.subr.mxu0 0.0
        %2781 = vmatpush1.msra.mxu0 0.0
        %2782 = vmatprep.subr.mxu0 0.0
        %2783 = vmatpush1.msra.mxu0 0.0
        %2784 = vmatprep.subr.mxu0 0.0
        %2785 = vmatpush1.msra.mxu0 0.0
        %2786 = vmatprep.subr.mxu0 0.0
        %2787 = vmatpush1.msra.mxu0 0.0
        %2788 = vmatprep.subr.mxu0 0.0
        %2789 = vmatpush1.msra.mxu0 0.0
        %2790 = vmatprep.subr.mxu0 0.0
        %2791 = vmatpush1.msra.mxu0 0.0
        %2792 = vmatprep.subr.mxu0 0.0
        %2793 = vmatpush1.msra.mxu0 0.0
        %2794 = vmatprep.subr.mxu0 0.0
        %2795 = vmatpush1.msra.mxu0 0.0
        %2796 = vmatprep.subr.mxu0 0.0
        %2797 = vmatpush1.msra.mxu0 0.0
        %2798 = vmatprep.subr.mxu0 0.0
        %2799 = vmatpush1.msra.mxu0 0.0
        %2800 = vmatprep.subr.mxu0 0.0
        %2801 = vmatpush1.msra.mxu0 0.0
        %2802 = vmatprep.subr.mxu0 0.0
        %2803 = vmatpush1.msra.mxu0 0.0
        %2804 = vmatprep.subr.mxu0 0.0
        %2805 = vmatpush1.msra.mxu0 0.0
        %2806 = vmatprep.subr.mxu0 0.0
        %2807 = vmatpush1.msra.mxu0 0.0
        %2808 = vmatprep.subr.mxu0 0.0
        %2809 = vmatpush1.msra.mxu0 0.0
        %2810 = vmatprep.subr.mxu0 0.0
        %2811 = vmatpush1.msra.mxu0 0.0
        %2812 = vmatprep.subr.mxu0 0.0
        %2813 = vmatpush1.msra.mxu0 0.0
        %2814 = vmatprep.subr.mxu0 0.0
        %2815 = vmatpush1.msra.mxu0 0.0
        %2816 = vmatprep.subr.mxu0 0.0
        %2817 = vmatpush1.msra.mxu0 0.0
        %2818 = vmatprep.subr.mxu0 0.0
        %2819 = vmatpush1.msra.mxu0 0.0
        %2820 = vmatprep.subr.mxu0 0.0
        %2821 = vmatpush1.msra.mxu0 0.0
        %2822 = vmatprep.subr.mxu0 0.0
        %2823 = vmatpush1.msra.mxu0 0.0
        %2824 = vmatprep.subr.mxu0 0.0
        %2825 = vmatpush1.msra.mxu0 0.0
        %2826 = vmatprep.subr.mxu0 0.0
        %2827 = vmatpush1.msra.mxu0 0.0
        %2828 = vmatprep.subr.mxu0 0.0
        %2829 = vmatpush1.msra.mxu0 0.0
        %2830 = vmatprep.subr.mxu0 0.0
        %2831 = vmatpush1.msra.mxu0 0.0
        %2832 = vmatprep.subr.mxu0 0.0
        %2833 = vmatpush1.msra.mxu0 0.0
        %2834 = vmatprep.subr.mxu0 0.0
        %2835 = vmatpush1.msra.mxu0 0.0
        %2836 = vmatprep.subr.mxu0 0.0
        %2837 = vmatpush1.msra.mxu0 0.0
        %2838 = vmatprep.subr.mxu0 0.0
        %2839 = vmatpush1.msra.mxu0 0.0
        %2840 = vmatprep.subr.mxu0 0.0
        %2841 = vmatpush1.msra.mxu0 0.0
        %2842 = vmatprep.mubr.f32.mxu0 0.0
        %2843 = vmatmul.mubr.f32.gmra.mrb[0].mxu0 %v2776
        %v2844 = vpop.f32.mrb[0].mxu0
        %v2845 = vadd.f32 0.0, %v2844
        %v2846 = vpop.f32.mrb[0].mxu0
        %2847 = vdwg.mxu0
        %2848 = vrot.lane.b32.xlu0 %v516, 64
        %v2849 = vpop.permute.xlu0 %2848
        %v2852 = vsel %vm529, %v1932, 0
        %2854 = vmatprep.subr.mxu0 0.0
        %2855 = vmatpush1.msra.mxu0 %v2849
        %2856 = vmatprep.subr.mxu0 0.0
        %2857 = vmatpush1.msra.mxu0 0.0
        %2858 = vmatprep.subr.mxu0 0.0
        %2859 = vmatpush1.msra.mxu0 0.0
        %2860 = vmatprep.subr.mxu0 0.0
        %2861 = vmatpush1.msra.mxu0 0.0
        %2862 = vmatprep.subr.mxu0 0.0
        %2863 = vmatpush1.msra.mxu0 0.0
        %2864 = vmatprep.subr.mxu0 0.0
        %2865 = vmatpush1.msra.mxu0 0.0
        %2866 = vmatprep.subr.mxu0 0.0
        %2867 = vmatpush1.msra.mxu0 0.0
        %2868 = vmatprep.subr.mxu0 0.0
        %2869 = vmatpush1.msra.mxu0 0.0
        %2870 = vmatprep.subr.mxu0 0.0
        %2871 = vmatpush1.msra.mxu0 0.0
        %2872 = vmatprep.subr.mxu0 0.0
        %2873 = vmatpush1.msra.mxu0 0.0
        %2874 = vmatprep.subr.mxu0 0.0
        %2875 = vmatpush1.msra.mxu0 0.0
        %2876 = vmatprep.subr.mxu0 0.0
        %2877 = vmatpush1.msra.mxu0 0.0
        %2878 = vmatprep.subr.mxu0 0.0
        %2879 = vmatpush1.msra.mxu0 0.0
        %2880 = vmatprep.subr.mxu0 0.0
        %2881 = vmatpush1.msra.mxu0 0.0
        %2882 = vmatprep.subr.mxu0 0.0
        %2883 = vmatpush1.msra.mxu0 0.0
        %2884 = vmatprep.subr.mxu0 0.0
        %2885 = vmatpush1.msra.mxu0 0.0
        %2886 = vmatprep.subr.mxu0 0.0
        %2887 = vmatpush1.msra.mxu0 0.0
        %2888 = vmatprep.subr.mxu0 0.0
        %2889 = vmatpush1.msra.mxu0 0.0
        %2890 = vmatprep.subr.mxu0 0.0
        %2891 = vmatpush1.msra.mxu0 0.0
        %2892 = vmatprep.subr.mxu0 0.0
        %2893 = vmatpush1.msra.mxu0 0.0
        %2894 = vmatprep.subr.mxu0 0.0
        %2895 = vmatpush1.msra.mxu0 0.0
        %2896 = vmatprep.subr.mxu0 0.0
        %2897 = vmatpush1.msra.mxu0 0.0
        %2898 = vmatprep.subr.mxu0 0.0
        %2899 = vmatpush1.msra.mxu0 0.0
        %2900 = vmatprep.subr.mxu0 0.0
        %2901 = vmatpush1.msra.mxu0 0.0
        %2902 = vmatprep.subr.mxu0 0.0
        %2903 = vmatpush1.msra.mxu0 0.0
        %2904 = vmatprep.subr.mxu0 0.0
        %2905 = vmatpush1.msra.mxu0 0.0
        %2906 = vmatprep.subr.mxu0 0.0
        %2907 = vmatpush1.msra.mxu0 0.0
        %2908 = vmatprep.subr.mxu0 0.0
        %2909 = vmatpush1.msra.mxu0 0.0
        %2910 = vmatprep.subr.mxu0 0.0
        %2911 = vmatpush1.msra.mxu0 0.0
        %2912 = vmatprep.subr.mxu0 0.0
        %2913 = vmatpush1.msra.mxu0 0.0
        %2914 = vmatprep.subr.mxu0 0.0
        %2915 = vmatpush1.msra.mxu0 0.0
        %2916 = vmatprep.subr.mxu0 0.0
        %2917 = vmatpush1.msra.mxu0 0.0
        %2918 = vmatprep.mubr.f32.mxu0 0.0
        %2919 = vmatmul.mubr.f32.gmra.mrb[0].mxu0 %v2852
        %v2920 = vpop.f32.mrb[0].mxu0
        %v2921 = vadd.f32 0.0, %v2920
        %v2922 = vpop.f32.mrb[0].mxu0
        %2923 = vdwg.mxu0
        %2924 = vrot.lane.b32.xlu0 %v518, 64
        %v2925 = vpop.permute.xlu0 %2924
        %v2928 = vsel %vm529, %v1933, 0
        %2930 = vmatprep.subr.mxu0 0.0
        %2931 = vmatpush1.msra.mxu0 %v2925
        %2932 = vmatprep.subr.mxu0 0.0
        %2933 = vmatpush1.msra.mxu0 0.0
        %2934 = vmatprep.subr.mxu0 0.0
        %2935 = vmatpush1.msra.mxu0 0.0
        %2936 = vmatprep.subr.mxu0 0.0
        %2937 = vmatpush1.msra.mxu0 0.0
        %2938 = vmatprep.subr.mxu0 0.0
        %2939 = vmatpush1.msra.mxu0 0.0
        %2940 = vmatprep.subr.mxu0 0.0
        %2941 = vmatpush1.msra.mxu0 0.0
        %2942 = vmatprep.subr.mxu0 0.0
        %2943 = vmatpush1.msra.mxu0 0.0
        %2944 = vmatprep.subr.mxu0 0.0
        %2945 = vmatpush1.msra.mxu0 0.0
        %2946 = vmatprep.subr.mxu0 0.0
        %2947 = vmatpush1.msra.mxu0 0.0
        %2948 = vmatprep.subr.mxu0 0.0
        %2949 = vmatpush1.msra.mxu0 0.0
        %2950 = vmatprep.subr.mxu0 0.0
        %2951 = vmatpush1.msra.mxu0 0.0
        %2952 = vmatprep.subr.mxu0 0.0
        %2953 = vmatpush1.msra.mxu0 0.0
        %2954 = vmatprep.subr.mxu0 0.0
        %2955 = vmatpush1.msra.mxu0 0.0
        %2956 = vmatprep.subr.mxu0 0.0
        %2957 = vmatpush1.msra.mxu0 0.0
        %2958 = vmatprep.subr.mxu0 0.0
        %2959 = vmatpush1.msra.mxu0 0.0
        %2960 = vmatprep.subr.mxu0 0.0
        %2961 = vmatpush1.msra.mxu0 0.0
        %2962 = vmatprep.subr.mxu0 0.0
        %2963 = vmatpush1.msra.mxu0 0.0
        %2964 = vmatprep.subr.mxu0 0.0
        %2965 = vmatpush1.msra.mxu0 0.0
        %2966 = vmatprep.subr.mxu0 0.0
        %2967 = vmatpush1.msra.mxu0 0.0
        %2968 = vmatprep.subr.mxu0 0.0
        %2969 = vmatpush1.msra.mxu0 0.0
        %2970 = vmatprep.subr.mxu0 0.0
        %2971 = vmatpush1.msra.mxu0 0.0
        %2972 = vmatprep.subr.mxu0 0.0
        %2973 = vmatpush1.msra.mxu0 0.0
        %2974 = vmatprep.subr.mxu0 0.0
        %2975 = vmatpush1.msra.mxu0 0.0
        %2976 = vmatprep.subr.mxu0 0.0
        %2977 = vmatpush1.msra.mxu0 0.0
        %2978 = vmatprep.subr.mxu0 0.0
        %2979 = vmatpush1.msra.mxu0 0.0
        %2980 = vmatprep.subr.mxu0 0.0
        %2981 = vmatpush1.msra.mxu0 0.0
        %2982 = vmatprep.subr.mxu0 0.0
        %2983 = vmatpush1.msra.mxu0 0.0
        %2984 = vmatprep.subr.mxu0 0.0
        %2985 = vmatpush1.msra.mxu0 0.0
        %2986 = vmatprep.subr.mxu0 0.0
        %2987 = vmatpush1.msra.mxu0 0.0
        %2988 = vmatprep.subr.mxu0 0.0
        %2989 = vmatpush1.msra.mxu0 0.0
        %2990 = vmatprep.subr.mxu0 0.0
        %2991 = vmatpush1.msra.mxu0 0.0
        %2992 = vmatprep.subr.mxu0 0.0
        %2993 = vmatpush1.msra.mxu0 0.0
        %2994 = vmatprep.mubr.f32.mxu0 0.0
        %2995 = vmatmul.mubr.f32.gmra.mrb[0].mxu0 %v2928
        %v2996 = vpop.f32.mrb[0].mxu0
        %v2997 = vadd.f32 0.0, %v2996
        %v2998 = vpop.f32.mrb[0].mxu0
        %2999 = vdwg.mxu0
        %3000 = vrot.lane.b32.xlu0 %v520, 64
        %v3001 = vpop.permute.xlu0 %3000
        %v3004 = vsel %vm529, %v1934, 0
        %3006 = vmatprep.subr.mxu0 0.0
        %3007 = vmatpush1.msra.mxu0 %v3001
        %3008 = vmatprep.subr.mxu0 0.0
        %3009 = vmatpush1.msra.mxu0 0.0
        %3010 = vmatprep.subr.mxu0 0.0
        %3011 = vmatpush1.msra.mxu0 0.0
        %3012 = vmatprep.subr.mxu0 0.0
        %3013 = vmatpush1.msra.mxu0 0.0
        %3014 = vmatprep.subr.mxu0 0.0
        %3015 = vmatpush1.msra.mxu0 0.0
        %3016 = vmatprep.subr.mxu0 0.0
        %3017 = vmatpush1.msra.mxu0 0.0
        %3018 = vmatprep.subr.mxu0 0.0
        %3019 = vmatpush1.msra.mxu0 0.0
        %3020 = vmatprep.subr.mxu0 0.0
        %3021 = vmatpush1.msra.mxu0 0.0
        %3022 = vmatprep.subr.mxu0 0.0
        %3023 = vmatpush1.msra.mxu0 0.0
        %3024 = vmatprep.subr.mxu0 0.0
        %3025 = vmatpush1.msra.mxu0 0.0
        %3026 = vmatprep.subr.mxu0 0.0
        %3027 = vmatpush1.msra.mxu0 0.0
        %3028 = vmatprep.subr.mxu0 0.0
        %3029 = vmatpush1.msra.mxu0 0.0
        %3030 = vmatprep.subr.mxu0 0.0
        %3031 = vmatpush1.msra.mxu0 0.0
        %3032 = vmatprep.subr.mxu0 0.0
        %3033 = vmatpush1.msra.mxu0 0.0
        %3034 = vmatprep.subr.mxu0 0.0
        %3035 = vmatpush1.msra.mxu0 0.0
        %3036 = vmatprep.subr.mxu0 0.0
        %3037 = vmatpush1.msra.mxu0 0.0
        %3038 = vmatprep.subr.mxu0 0.0
        %3039 = vmatpush1.msra.mxu0 0.0
        %3040 = vmatprep.subr.mxu0 0.0
        %3041 = vmatpush1.msra.mxu0 0.0
        %3042 = vmatprep.subr.mxu0 0.0
        %3043 = vmatpush1.msra.mxu0 0.0
        %3044 = vmatprep.subr.mxu0 0.0
        %3045 = vmatpush1.msra.mxu0 0.0
        %3046 = vmatprep.subr.mxu0 0.0
        %3047 = vmatpush1.msra.mxu0 0.0
        %3048 = vmatprep.subr.mxu0 0.0
        %3049 = vmatpush1.msra.mxu0 0.0
        %3050 = vmatprep.subr.mxu0 0.0
        %3051 = vmatpush1.msra.mxu0 0.0
        %3052 = vmatprep.subr.mxu0 0.0
        %3053 = vmatpush1.msra.mxu0 0.0
        %3054 = vmatprep.subr.mxu0 0.0
        %3055 = vmatpush1.msra.mxu0 0.0
        %3056 = vmatprep.subr.mxu0 0.0
        %3057 = vmatpush1.msra.mxu0 0.0
        %3058 = vmatprep.subr.mxu0 0.0
        %3059 = vmatpush1.msra.mxu0 0.0
        %3060 = vmatprep.subr.mxu0 0.0
        %3061 = vmatpush1.msra.mxu0 0.0
        %3062 = vmatprep.subr.mxu0 0.0
        %3063 = vmatpush1.msra.mxu0 0.0
        %3064 = vmatprep.subr.mxu0 0.0
        %3065 = vmatpush1.msra.mxu0 0.0
        %3066 = vmatprep.subr.mxu0 0.0
        %3067 = vmatpush1.msra.mxu0 0.0
        %3068 = vmatprep.subr.mxu0 0.0
        %3069 = vmatpush1.msra.mxu0 0.0
        %3070 = vmatprep.mubr.f32.mxu0 0.0
        %3071 = vmatmul.mubr.f32.gmra.mrb[0].mxu0 %v3004
        %v3072 = vpop.f32.mrb[0].mxu0
        %v3073 = vadd.f32 0.0, %v3072
        %v3074 = vpop.f32.mrb[0].mxu0
        %3075 = vdwg.mxu0
        %3076 = vrot.lane.b32.xlu0 %v522, 64
        %v3077 = vpop.permute.xlu0 %3076
        %v3080 = vsel %vm529, %v1935, 0
        %3082 = vmatprep.subr.mxu0 0.0
        %3083 = vmatpush1.msra.mxu0 %v3077
        %3084 = vmatprep.subr.mxu0 0.0
        %3085 = vmatpush1.msra.mxu0 0.0
        %3086 = vmatprep.subr.mxu0 0.0
        %3087 = vmatpush1.msra.mxu0 0.0
        %3088 = vmatprep.subr.mxu0 0.0
        %3089 = vmatpush1.msra.mxu0 0.0
        %3090 = vmatprep.subr.mxu0 0.0
        %3091 = vmatpush1.msra.mxu0 0.0
        %3092 = vmatprep.subr.mxu0 0.0
        %3093 = vmatpush1.msra.mxu0 0.0
        %3094 = vmatprep.subr.mxu0 0.0
        %3095 = vmatpush1.msra.mxu0 0.0
        %3096 = vmatprep.subr.mxu0 0.0
        %3097 = vmatpush1.msra.mxu0 0.0
        %3098 = vmatprep.subr.mxu0 0.0
        %3099 = vmatpush1.msra.mxu0 0.0
        %3100 = vmatprep.subr.mxu0 0.0
        %3101 = vmatpush1.msra.mxu0 0.0
        %3102 = vmatprep.subr.mxu0 0.0
        %3103 = vmatpush1.msra.mxu0 0.0
        %3104 = vmatprep.subr.mxu0 0.0
        %3105 = vmatpush1.msra.mxu0 0.0
        %3106 = vmatprep.subr.mxu0 0.0
        %3107 = vmatpush1.msra.mxu0 0.0
        %3108 = vmatprep.subr.mxu0 0.0
        %3109 = vmatpush1.msra.mxu0 0.0
        %3110 = vmatprep.subr.mxu0 0.0
        %3111 = vmatpush1.msra.mxu0 0.0
        %3112 = vmatprep.subr.mxu0 0.0
        %3113 = vmatpush1.msra.mxu0 0.0
        %3114 = vmatprep.subr.mxu0 0.0
        %3115 = vmatpush1.msra.mxu0 0.0
        %3116 = vmatprep.subr.mxu0 0.0
        %3117 = vmatpush1.msra.mxu0 0.0
        %3118 = vmatprep.subr.mxu0 0.0
        %3119 = vmatpush1.msra.mxu0 0.0
        %3120 = vmatprep.subr.mxu0 0.0
        %3121 = vmatpush1.msra.mxu0 0.0
        %3122 = vmatprep.subr.mxu0 0.0
        %3123 = vmatpush1.msra.mxu0 0.0
        %3124 = vmatprep.subr.mxu0 0.0
        %3125 = vmatpush1.msra.mxu0 0.0
        %3126 = vmatprep.subr.mxu0 0.0
        %3127 = vmatpush1.msra.mxu0 0.0
        %3128 = vmatprep.subr.mxu0 0.0
        %3129 = vmatpush1.msra.mxu0 0.0
        %3130 = vmatprep.subr.mxu0 0.0
        %3131 = vmatpush1.msra.mxu0 0.0
        %3132 = vmatprep.subr.mxu0 0.0
        %3133 = vmatpush1.msra.mxu0 0.0
        %3134 = vmatprep.subr.mxu0 0.0
        %3135 = vmatpush1.msra.mxu0 0.0
        %3136 = vmatprep.subr.mxu0 0.0
        %3137 = vmatpush1.msra.mxu0 0.0
        %3138 = vmatprep.subr.mxu0 0.0
        %3139 = vmatpush1.msra.mxu0 0.0
        %3140 = vmatprep.subr.mxu0 0.0
        %3141 = vmatpush1.msra.mxu0 0.0
        %3142 = vmatprep.subr.mxu0 0.0
        %3143 = vmatpush1.msra.mxu0 0.0
        %3144 = vmatprep.subr.mxu0 0.0
        %3145 = vmatpush1.msra.mxu0 0.0
        %3146 = vmatprep.mubr.f32.mxu0 0.0
        %3147 = vmatmul.mubr.f32.gmra.mrb[0].mxu0 %v3080
        %v3148 = vpop.f32.mrb[0].mxu0
        %v3149 = vadd.f32 0.0, %v3148
        %v3150 = vpop.f32.mrb[0].mxu0
        %3151 = vdwg.mxu0
        %3156 = vrot.lane.b32.xlu0 %v2313, 8
        %v3157 = vpop.permute.xlu0 %3156
        %3158 = vrot.lane.b32.xlu0 %v2389, 8
        %v3159 = vpop.permute.xlu0 %3158
        %3160 = vrot.lane.b32.xlu0 %v2465, 8
        %v3161 = vpop.permute.xlu0 %3160
        %3162 = vrot.lane.b32.xlu0 %v2541, 8
        %v3163 = vpop.permute.xlu0 %3162
        %3172 = vrot.lane.b32.xlu0 %v2617, 16
        %v3173 = vpop.permute.xlu0 %3172
        %3174 = vrot.lane.b32.xlu0 %v2693, 16
        %v3175 = vpop.permute.xlu0 %3174
        %3176 = vrot.lane.b32.xlu0 %v2769, 16
        %v3177 = vpop.permute.xlu0 %3176
        %3178 = vrot.lane.b32.xlu0 %v2845, 16
        %v3179 = vpop.permute.xlu0 %3178
        %3188 = vrot.lane.b32.xlu0 %v2921, 24
        %v3189 = vpop.permute.xlu0 %3188
        %3190 = vrot.lane.b32.xlu0 %v2997, 24
        %v3191 = vpop.permute.xlu0 %3190
        %3192 = vrot.lane.b32.xlu0 %v3073, 24
        %v3193 = vpop.permute.xlu0 %3192
        %3194 = vrot.lane.b32.xlu0 %v3149, 24
        %v3195 = vpop.permute.xlu0 %3194
        %v3200 = vsel %vm529, %v2009, %v3157
        %v3201 = vsel %vm529, %v2085, %v3159
        %v3202 = vsel %vm529, %v2161, %v3161
        %v3203 = vsel %vm529, %v2237, %v3163
        %vm3204 = vcmask 130048
        %v3205 = vsel %vm3204, %v3200, %v3173
        %v3206 = vsel %vm3204, %v3201, %v3175
        %v3207 = vsel %vm3204, %v3202, %v3177
        %v3208 = vsel %vm3204, %v3203, %v3179
        %vm3209 = vcmask 195584
        %v3210 = vsel %vm3209, %v3205, %v3189
        %v3211 = vsel %vm3209, %v3206, %v3191
        %v3212 = vsel %vm3209, %v3207, %v3193
        %v3213 = vsel %vm3209, %v3208, %v3195
        %v3214 = vld [vmem:[%s3] sm:$0xff]
        %v3215 = vld [vmem:[%s3 + $0x8] sm:$0xff]
        %v3216 = vld [vmem:[%s3 + $0x10] sm:$0xff]
        %v3217 = vld [vmem:[%s3 + $0x18] sm:$0xff]
        %v3218 = vlaneseq
        %v3219 = vshrl.u32 %v3218, 7
        %v3220 = vsub.s32 4, %v3219
        %v3221 = vrot.slane %v323, %v3220
        %v3223 = vsel %vm324, %v3210, 0
        %v3226 = vsel %vm324, %v3211, 0
        %v3229 = vsel %vm324, %v3212, 0
        %v3232 = vsel %vm324, %v3213, 0
        %3234 = vmatprep.subr.mxu0 0.0
        %3235 = vmatpush1.msra.mxu0 %v3214
        %3236 = vmatprep.subr.mxu0 0.0
        %3237 = vmatpush1.msra.mxu0 %v3215
        %3238 = vmatprep.subr.mxu0 0.0
        %3239 = vmatpush1.msra.mxu0 %v3216
        %3240 = vmatprep.subr.mxu0 0.0
        %3241 = vmatpush1.msra.mxu0 %v3217
        %3242 = vmatprep.subr.mxu0 0.0
        %3243 = vmatpush1.msra.mxu0 0.0
        %3244 = vmatprep.subr.mxu0 0.0
        %3245 = vmatpush1.msra.mxu0 0.0
        %3246 = vmatprep.subr.mxu0 0.0
        %3247 = vmatpush1.msra.mxu0 0.0
        %3248 = vmatprep.subr.mxu0 0.0
        %3249 = vmatpush1.msra.mxu0 0.0
        %3250 = vmatprep.subr.mxu0 0.0
        %3251 = vmatpush1.msra.mxu0 0.0
        %3252 = vmatprep.subr.mxu0 0.0
        %3253 = vmatpush1.msra.mxu0 0.0
        %3254 = vmatprep.subr.mxu0 0.0
        %3255 = vmatpush1.msra.mxu0 0.0
        %3256 = vmatprep.subr.mxu0 0.0
        %3257 = vmatpush1.msra.mxu0 0.0
        %3258 = vmatprep.subr.mxu0 0.0
        %3259 = vmatpush1.msra.mxu0 0.0
        %3260 = vmatprep.subr.mxu0 0.0
        %3261 = vmatpush1.msra.mxu0 0.0
        %3262 = vmatprep.subr.mxu0 0.0
        %3263 = vmatpush1.msra.mxu0 0.0
        %3264 = vmatprep.subr.mxu0 0.0
        %3265 = vmatpush1.msra.mxu0 0.0
        %3266 = vmatprep.subr.mxu0 0.0
        %3267 = vmatpush1.msra.mxu0 0.0
        %3268 = vmatprep.subr.mxu0 0.0
        %3269 = vmatpush1.msra.mxu0 0.0
        %3270 = vmatprep.subr.mxu0 0.0
        %3271 = vmatpush1.msra.mxu0 0.0
        %3272 = vmatprep.subr.mxu0 0.0
        %3273 = vmatpush1.msra.mxu0 0.0
        %3274 = vmatprep.subr.mxu0 0.0
        %3275 = vmatpush1.msra.mxu0 0.0
        %3276 = vmatprep.subr.mxu0 0.0
        %3277 = vmatpush1.msra.mxu0 0.0
        %3278 = vmatprep.subr.mxu0 0.0
        %3279 = vmatpush1.msra.mxu0 0.0
        %3280 = vmatprep.subr.mxu0 0.0
        %3281 = vmatpush1.msra.mxu0 0.0
        %3282 = vmatprep.subr.mxu0 0.0
        %3283 = vmatpush1.msra.mxu0 0.0
        %3284 = vmatprep.subr.mxu0 0.0
        %3285 = vmatpush1.msra.mxu0 0.0
        %3286 = vmatprep.subr.mxu0 0.0
        %3287 = vmatpush1.msra.mxu0 0.0
        %3288 = vmatprep.subr.mxu0 0.0
        %3289 = vmatpush1.msra.mxu0 0.0
        %3290 = vmatprep.subr.mxu0 0.0
        %3291 = vmatpush1.msra.mxu0 0.0
        %3292 = vmatprep.subr.mxu0 0.0
        %3293 = vmatpush1.msra.mxu0 0.0
        %3294 = vmatprep.subr.mxu0 0.0
        %3295 = vmatpush1.msra.mxu0 0.0
        %3296 = vmatprep.subr.mxu0 0.0
        %3297 = vmatpush1.msra.mxu0 0.0
        %3298 = vmatprep.mubr.f32.mxu0 0.0
        %3299 = vmatmul.mubr.f32.gmra.mrb[0].mxu0 %v3223
        %v3300 = vpop.f32.mrb[0].mxu0
        %v3301 = vadd.f32 %v3221, %v3300
        %v3302 = vpop.f32.mrb[0].mxu0
        %3303 = vmatprep.mubr.f32.mxu0 0.0
        %3304 = vmatmul.mubr.f32.gmra.mrb[0].mxu0 %v3226
        %v3305 = vpop.f32.mrb[0].mxu0
        %v3306 = vadd.f32 %v3221, %v3305
        %v3307 = vpop.f32.mrb[0].mxu0
        %3308 = vmatprep.mubr.f32.mxu0 0.0
        %3309 = vmatmul.mubr.f32.gmra.mrb[0].mxu0 %v3229
        %v3310 = vpop.f32.mrb[0].mxu0
        %v3311 = vadd.f32 %v3221, %v3310
        %v3312 = vpop.f32.mrb[0].mxu0
        %3313 = vmatprep.mubr.f32.mxu0 0.0
        %3314 = vmatmul.mubr.f32.gmra.mrb[0].mxu0 %v3232
        %v3315 = vpop.f32.mrb[0].mxu0
        %v3316 = vadd.f32 %v3221, %v3315
        %v3317 = vpop.f32.mrb[0].mxu0
        %3318 = vdwg.mxu0
        %v3319 = vadd.f32 %v319, %v3301
        %v3320 = vadd.f32 %v320, %v3306
        %v3321 = vadd.f32 %v321, %v3311
        %v3322 = vadd.f32 %v322, %v3316
        %v3323 = vsel %vm324, %v3319, 0.0
        %3324 = vadd.xlane.f32.xlu0 %v3323
        %v3325 = vpop.xlane.xlu0 %3324
        %v3326 = vsel %vm324, %v3320, 0.0
        %3327 = vadd.xlane.f32.xlu0 %v3326
        %v3328 = vpop.xlane.xlu0 %3327
        %v3329 = vsel %vm324, %v3321, 0.0
        %3330 = vadd.xlane.f32.xlu0 %v3329
        %v3331 = vpop.xlane.xlu0 %3330
        %v3332 = vsel %vm324, %v3322, 0.0
        %3333 = vadd.xlane.f32.xlu0 %v3332
        %v3334 = vpop.xlane.xlu0 %3333
        %v3335 = vmul.f32 %v3325, %v337
        %v3336 = vmul.f32 %v3328, %v337
        %v3337 = vmul.f32 %v3331, %v337
        %v3338 = vmul.f32 %v3334, %v337
        %v3339 = vsub.f32 %v3319, %v3335
        %v3340 = vsub.f32 %v3320, %v3336
        %v3341 = vsub.f32 %v3321, %v3337
        %v3342 = vsub.f32 %v3322, %v3338
        %v3343 = vmul.f32 %v3339, %v3339
        %v3344 = vmul.f32 %v3340, %v3340
        %v3345 = vmul.f32 %v3341, %v3341
        %v3346 = vmul.f32 %v3342, %v3342
        %v3347 = vsel %vm324, %v3343, 0.0
        %3348 = vadd.xlane.f32.xlu0 %v3347
        %v3349 = vpop.xlane.xlu0 %3348
        %v3350 = vsel %vm324, %v3344, 0.0
        %3351 = vadd.xlane.f32.xlu0 %v3350
        %v3352 = vpop.xlane.xlu0 %3351
        %v3353 = vsel %vm324, %v3345, 0.0
        %3354 = vadd.xlane.f32.xlu0 %v3353
        %v3355 = vpop.xlane.xlu0 %3354
        %v3356 = vsel %vm324, %v3346, 0.0
        %3357 = vadd.xlane.f32.xlu0 %v3356
        %v3358 = vpop.xlane.xlu0 %3357
        %v3359 = vmul.f32 %v3349, %v337
        %v3360 = vmul.f32 %v3352, %v337
        %v3361 = vmul.f32 %v3355, %v337
        %v3362 = vmul.f32 %v3358, %v337
        %v3363 = vadd.f32 %v3359, 1e-05
        %v3364 = vadd.f32 %v3360, 1e-05
        %v3365 = vadd.f32 %v3361, 1e-05
        %v3366 = vadd.f32 %v3362, 1e-05
        %v3367 = vrsqrt.pop %v3363
        %v3368 = vrsqrt.pop %v3364
        %v3369 = vrsqrt.pop %v3365
        %v3370 = vrsqrt.pop %v3366
        %v3371 = vmul.f32 %v3339, %v3367
        %v3372 = vmul.f32 %v3340, %v3368
        %v3373 = vmul.f32 %v3341, %v3369
        %v3374 = vmul.f32 %v3342, %v3370
        %v3375 = vlaneseq
        %v3376 = vshrl.u32 %v3375, 7
        %v3377 = vsub.s32 2, %v3376
        %v3378 = vrot.slane %v323, %v3377
        %v3379 = vmul.f32 %v3371, %v3378
        %v3380 = vmul.f32 %v3372, %v3378
        %v3381 = vmul.f32 %v3373, %v3378
        %v3382 = vmul.f32 %v3374, %v3378
        %v3383 = vlaneseq
        %v3384 = vshrl.u32 %v3383, 7
        %v3385 = vsub.s32 3, %v3384
        %v3386 = vrot.slane %v323, %v3385
        %v3387 = vadd.f32 %v3379, %v3386
        %v3388 = vadd.f32 %v3380, %v3386
        %v3389 = vadd.f32 %v3381, %v3386
        %v3390 = vadd.f32 %v3382, %v3386
        %v3391 = vld [vmem:[#allocation2] sm:$0xff]
        %v3392 = vld [vmem:[#allocation2 + $0x8] sm:$0xff]
        %v3393 = vld [vmem:[#allocation2 + $0x10] sm:$0xff]
        %v3394 = vld [vmem:[#allocation2 + $0x18] sm:$0xff]
        %v3395 = vld [vmem:[%s5] sm:$0x1]
        %v3397 = vlaneseq
        %v3398 = vshrl.u32 %v3397, 7
        %v3399 = vsub.s32 0, %v3398
        %v3400 = vrot.slane %v3395, %v3399
        %v3403 = vsel %vm324, %v3387, 0
        %v3406 = vsel %vm324, %v3388, 0
        %v3409 = vsel %vm324, %v3389, 0
        %v3412 = vsel %vm324, %v3390, 0
        %3414 = vmatprep.subr.mxu0 0.0
        %3415 = vmatpush1.msra.mxu0 %v3391
        %3416 = vmatprep.subr.mxu0 0.0
        %3417 = vmatpush1.msra.mxu0 %v3392
        %3418 = vmatprep.subr.mxu0 0.0
        %3419 = vmatpush1.msra.mxu0 %v3393
        %3420 = vmatprep.subr.mxu0 0.0
        %3421 = vmatpush1.msra.mxu0 %v3394
        %3422 = vmatprep.subr.mxu0 0.0
        %3423 = vmatpush1.msra.mxu0 0.0
        %3424 = vmatprep.subr.mxu0 0.0
        %3425 = vmatpush1.msra.mxu0 0.0
        %3426 = vmatprep.subr.mxu0 0.0
        %3427 = vmatpush1.msra.mxu0 0.0
        %3428 = vmatprep.subr.mxu0 0.0
        %3429 = vmatpush1.msra.mxu0 0.0
        %3430 = vmatprep.subr.mxu0 0.0
        %3431 = vmatpush1.msra.mxu0 0.0
        %3432 = vmatprep.subr.mxu0 0.0
        %3433 = vmatpush1.msra.mxu0 0.0
        %3434 = vmatprep.subr.mxu0 0.0
        %3435 = vmatpush1.msra.mxu0 0.0
        %3436 = vmatprep.subr.mxu0 0.0
        %3437 = vmatpush1.msra.mxu0 0.0
        %3438 = vmatprep.subr.mxu0 0.0
        %3439 = vmatpush1.msra.mxu0 0.0
        %3440 = vmatprep.subr.mxu0 0.0
        %3441 = vmatpush1.msra.mxu0 0.0
        %3442 = vmatprep.subr.mxu0 0.0
        %3443 = vmatpush1.msra.mxu0 0.0
        %3444 = vmatprep.subr.mxu0 0.0
        %3445 = vmatpush1.msra.mxu0 0.0
        %3446 = vmatprep.subr.mxu0 0.0
        %3447 = vmatpush1.msra.mxu0 0.0
        %3448 = vmatprep.subr.mxu0 0.0
        %3449 = vmatpush1.msra.mxu0 0.0
        %3450 = vmatprep.subr.mxu0 0.0
        %3451 = vmatpush1.msra.mxu0 0.0
        %3452 = vmatprep.subr.mxu0 0.0
        %3453 = vmatpush1.msra.mxu0 0.0
        %3454 = vmatprep.subr.mxu0 0.0
        %3455 = vmatpush1.msra.mxu0 0.0
        %3456 = vmatprep.subr.mxu0 0.0
        %3457 = vmatpush1.msra.mxu0 0.0
        %3458 = vmatprep.subr.mxu0 0.0
        %3459 = vmatpush1.msra.mxu0 0.0
        %3460 = vmatprep.subr.mxu0 0.0
        %3461 = vmatpush1.msra.mxu0 0.0
        %3462 = vmatprep.subr.mxu0 0.0
        %3463 = vmatpush1.msra.mxu0 0.0
        %3464 = vmatprep.subr.mxu0 0.0
        %3465 = vmatpush1.msra.mxu0 0.0
        %3466 = vmatprep.subr.mxu0 0.0
        %3467 = vmatpush1.msra.mxu0 0.0
        %3468 = vmatprep.subr.mxu0 0.0
        %3469 = vmatpush1.msra.mxu0 0.0
        %3470 = vmatprep.subr.mxu0 0.0
        %3471 = vmatpush1.msra.mxu0 0.0
        %3472 = vmatprep.subr.mxu0 0.0
        %3473 = vmatpush1.msra.mxu0 0.0
        %3474 = vmatprep.subr.mxu0 0.0
        %3475 = vmatpush1.msra.mxu0 0.0
        %3476 = vmatprep.subr.mxu0 0.0
        %3477 = vmatpush1.msra.mxu0 0.0
        %3478 = vmatprep.mubr.f32.mxu0 0.0
        %3479 = vmatmul.mubr.f32.gmra.mrb[0].mxu0 %v3403
        %v3480 = vpop.f32.mrb[0].mxu0
        %v3481 = vadd.f32 %v3400, %v3480
        %v3482 = vpop.f32.mrb[0].mxu0
        %3483 = vmatprep.mubr.f32.mxu0 0.0
        %3484 = vmatmul.mubr.f32.gmra.mrb[0].mxu0 %v3406
        %v3485 = vpop.f32.mrb[0].mxu0
        %v3486 = vadd.f32 %v3400, %v3485
        %v3487 = vpop.f32.mrb[0].mxu0
        %3488 = vmatprep.mubr.f32.mxu0 0.0
        %3489 = vmatmul.mubr.f32.gmra.mrb[0].mxu0 %v3409
        %v3490 = vpop.f32.mrb[0].mxu0
        %v3491 = vadd.f32 %v3400, %v3490
        %v3492 = vpop.f32.mrb[0].mxu0
        %3493 = vmatprep.mubr.f32.mxu0 0.0
        %3494 = vmatmul.mubr.f32.gmra.mrb[0].mxu0 %v3412
        %v3495 = vpop.f32.mrb[0].mxu0
        %v3496 = vadd.f32 %v3400, %v3495
        %v3497 = vpop.f32.mrb[0].mxu0
        %3498 = vdwg.mxu0
        %v3499 = vmul.f32 %v3481, 0.5
        %v3500 = vmul.f32 %v3486, 0.5
        %v3501 = vmul.f32 %v3491, 0.5
        %v3502 = vmul.f32 %v3496, 0.5
        %v3503 = vmul.f32 %v3481, 0.044715
        %v3504 = vmul.f32 %v3486, 0.044715
        %v3505 = vmul.f32 %v3491, 0.044715
        %v3506 = vmul.f32 %v3496, 0.044715
        %v3507 = vmul.f32 %v3503, %v3481
        %v3508 = vmul.f32 %v3504, %v3486
        %v3509 = vmul.f32 %v3505, %v3491
        %v3510 = vmul.f32 %v3506, %v3496
        %v3511 = vmul.f32 %v3507, %v3481
        %v3512 = vmul.f32 %v3508, %v3486
        %v3513 = vmul.f32 %v3509, %v3491
        %v3514 = vmul.f32 %v3510, %v3496
        %v3515 = vadd.f32 %v3481, %v3511
        %v3516 = vadd.f32 %v3486, %v3512
        %v3517 = vadd.f32 %v3491, %v3513
        %v3518 = vadd.f32 %v3496, %v3514
        %v3519 = vmul.f32 %v3515, 0.7978846
        %v3520 = vmul.f32 %v3516, 0.7978846
        %v3521 = vmul.f32 %v3517, 0.7978846
        %v3522 = vmul.f32 %v3518, 0.7978846
        %v3523 = vtanh.pop %v3519
        %v3524 = vtanh.pop %v3520
        %v3525 = vtanh.pop %v3521
        %v3526 = vtanh.pop %v3522
        %v3527 = vadd.f32 %v3523, 1.0
        %v3528 = vadd.f32 %v3524, 1.0
        %v3529 = vadd.f32 %v3525, 1.0
        %v3530 = vadd.f32 %v3526, 1.0
        %v3531 = vmul.f32 %v3499, %v3527
        %v3532 = vmul.f32 %v3500, %v3528
        %v3533 = vmul.f32 %v3501, %v3529
        %v3534 = vmul.f32 %v3502, %v3530
        %v3535 = vld [vmem:[%s7] sm:$0xff]
        %v3536 = vld [vmem:[%s7 + $0x8] sm:$0xff]
        %v3537 = vld [vmem:[%s7 + $0x10] sm:$0xff]
        %v3538 = vld [vmem:[%s7 + $0x18] sm:$0xff]
        %v3539 = vld [vmem:[%s7 + $0x20] sm:$0xff]
        %v3540 = vld [vmem:[%s7 + $0x28] sm:$0xff]
        %v3541 = vld [vmem:[%s7 + $0x30] sm:$0xff]
        %v3542 = vld [vmem:[%s7 + $0x38] sm:$0xff]
        %v3543 = vld [vmem:[%s7 + $0x40] sm:$0xff]
        %v3544 = vld [vmem:[%s7 + $0x48] sm:$0xff]
        %v3545 = vld [vmem:[%s7 + $0x50] sm:$0xff]
        %v3546 = vld [vmem:[%s7 + $0x58] sm:$0xff]
        %v3547 = vld [vmem:[%s7 + $0x60] sm:$0xff]
        %v3548 = vld [vmem:[%s7 + $0x68] sm:$0xff]
        %v3549 = vld [vmem:[%s7 + $0x70] sm:$0xff]
        %v3550 = vld [vmem:[%s7 + $0x78] sm:$0xff]
        %v3551 = vlaneseq
        %v3552 = vshrl.u32 %v3551, 7
        %v3553 = vsub.s32 5, %v3552
        %v3554 = vrot.slane %v323, %v3553
        %3555 = vmatprep.subr.mxu0 0.0
        %3556 = vmatpush1.msra.mxu0 %v3535
        %3557 = vmatprep.subr.mxu0 0.0
        %3558 = vmatpush1.msra.mxu0 %v3536
        %3559 = vmatprep.subr.mxu0 0.0
        %3560 = vmatpush1.msra.mxu0 %v3537
        %3561 = vmatprep.subr.mxu0 0.0
        %3562 = vmatpush1.msra.mxu0 %v3538
        %3563 = vmatprep.subr.mxu0 0.0
        %3564 = vmatpush1.msra.mxu0 %v3539
        %3565 = vmatprep.subr.mxu0 0.0
        %3566 = vmatpush1.msra.mxu0 %v3540
        %3567 = vmatprep.subr.mxu0 0.0
        %3568 = vmatpush1.msra.mxu0 %v3541
        %3569 = vmatprep.subr.mxu0 0.0
        %3570 = vmatpush1.msra.mxu0 %v3542
        %3571 = vmatprep.subr.mxu0 0.0
        %3572 = vmatpush1.msra.mxu0 %v3543
        %3573 = vmatprep.subr.mxu0 0.0
        %3574 = vmatpush1.msra.mxu0 %v3544
        %3575 = vmatprep.subr.mxu0 0.0
        %3576 = vmatpush1.msra.mxu0 %v3545
        %3577 = vmatprep.subr.mxu0 0.0
        %3578 = vmatpush1.msra.mxu0 %v3546
        %3579 = vmatprep.subr.mxu0 0.0
        %3580 = vmatpush1.msra.mxu0 %v3547
        %3581 = vmatprep.subr.mxu0 0.0
        %3582 = vmatpush1.msra.mxu0 %v3548
        %3583 = vmatprep.subr.mxu0 0.0
        %3584 = vmatpush1.msra.mxu0 %v3549
        %3585 = vmatprep.subr.mxu0 0.0
        %3586 = vmatpush1.msra.mxu0 %v3550
        %3587 = vmatprep.subr.mxu0 0.0
        %3588 = vmatpush1.msra.mxu0 0.0
        %3589 = vmatprep.subr.mxu0 0.0
        %3590 = vmatpush1.msra.mxu0 0.0
        %3591 = vmatprep.subr.mxu0 0.0
        %3592 = vmatpush1.msra.mxu0 0.0
        %3593 = vmatprep.subr.mxu0 0.0
        %3594 = vmatpush1.msra.mxu0 0.0
        %3595 = vmatprep.subr.mxu0 0.0
        %3596 = vmatpush1.msra.mxu0 0.0
        %3597 = vmatprep.subr.mxu0 0.0
        %3598 = vmatpush1.msra.mxu0 0.0
        %3599 = vmatprep.subr.mxu0 0.0
        %3600 = vmatpush1.msra.mxu0 0.0
        %3601 = vmatprep.subr.mxu0 0.0
        %3602 = vmatpush1.msra.mxu0 0.0
        %3603 = vmatprep.subr.mxu0 0.0
        %3604 = vmatpush1.msra.mxu0 0.0
        %3605 = vmatprep.subr.mxu0 0.0
        %3606 = vmatpush1.msra.mxu0 0.0
        %3607 = vmatprep.subr.mxu0 0.0
        %3608 = vmatpush1.msra.mxu0 0.0
        %3609 = vmatprep.subr.mxu0 0.0
        %3610 = vmatpush1.msra.mxu0 0.0
        %3611 = vmatprep.subr.mxu0 0.0
        %3612 = vmatpush1.msra.mxu0 0.0
        %3613 = vmatprep.subr.mxu0 0.0
        %3614 = vmatpush1.msra.mxu0 0.0
        %3615 = vmatprep.subr.mxu0 0.0
        %3616 = vmatpush1.msra.mxu0 0.0
        %3617 = vmatprep.subr.mxu0 0.0
        %3618 = vmatpush1.msra.mxu0 0.0
        %3619 = vmatprep.mubr.f32.mxu0 0.0
        %3620 = vmatmul.mubr.f32.gmra.mrb[0].mxu0 %v3531
        %v3621 = vpop.f32.mrb[0].mxu0
        %v3622 = vadd.f32 %v3554, %v3621
        %v3623 = vpop.f32.mrb[0].mxu0
        %3624 = vmatprep.mubr.f32.mxu0 0.0
        %3625 = vmatmul.mubr.f32.gmra.mrb[0].mxu0 %v3532
        %v3626 = vpop.f32.mrb[0].mxu0
        %v3627 = vadd.f32 %v3554, %v3626
        %v3628 = vpop.f32.mrb[0].mxu0
        %3629 = vmatprep.mubr.f32.mxu0 0.0
        %3630 = vmatmul.mubr.f32.gmra.mrb[0].mxu0 %v3533
        %v3631 = vpop.f32.mrb[0].mxu0
        %v3632 = vadd.f32 %v3554, %v3631
        %v3633 = vpop.f32.mrb[0].mxu0
        %3634 = vmatprep.mubr.f32.mxu0 0.0
        %3635 = vmatmul.mubr.f32.gmra.mrb[0].mxu0 %v3534
        %v3636 = vpop.f32.mrb[0].mxu0
        %v3637 = vadd.f32 %v3554, %v3636
        %v3638 = vpop.f32.mrb[0].mxu0
        %3639 = vdwg.mxu0
        %v3640 = vadd.f32 %v3319, %v3622
        %v3641 = vadd.f32 %v3320, %v3627
        %v3642 = vadd.f32 %v3321, %v3632
        %v3643 = vadd.f32 %v3322, %v3637
        %3644 = vst.msk [vmem:[%s313] sm:$0xff] %vm324, %v3640
        %3645 = vst.msk [vmem:[%s313 + $0x8] sm:$0xff] %vm324, %v3641
        %3646 = vst.msk [vmem:[%s313 + $0x10] sm:$0xff] %vm324, %v3642
        %3647 = vst.msk [vmem:[%s313 + $0x18] sm:$0xff] %vm324, %v3643
        %s3648 = sand.u32 %s204, 1
        %s3649 = scalar_lea.sflag [#allocation4], %s3648
        %s3650 = sand.u32 %s204, 1
        %s3651 = smul.addr %s3650, 32
        %s3652 = scalar_lea.vmem [#allocation5], %s3651
        // Predicated region
        $region57: #{tpu_custom_call.1} parent=51 // pred_check
          %p3653 = pneg %p214
        $region58: #{tpu_custom_call.1} parent=51 // pred_check_branch
          %3655 = sbr.rel (%p3653) target = $region60
        $region59: #{tpu_custom_call.1} parent=51 // pred_region
          %s3657 = ssub.s32 512, 512
          %3658 = vsyncadd %s3649, %s3657
          %s3659 = smul.addr %s23, 4
          %s3660 = smul.addr %s3659, 128
          %s3661 = scalar_lea.hbm %s8, %s3660
          %s3662 = sshll.u32 %s3652, 4
          %s3663 = int_to_ptr.vmem [resolvable:$true] %s3662
          %3668 = dma.vmem_to_hbm [thread:$0]  %s3663, 512, %s3661, %s3649, 128, 128, 8
        $region60: #{tpu_custom_call.1} parent=51 // pred_fallthru
          _
      $region52: #{tpu_custom_call.1} parent=5 // pred_fallthru
        _
      %p3669 = scmp.le.s32.totalorder 2, %s18
      // Predicated region
      $region61: #{tpu_custom_call.1} parent=5 // pred_check
        %p3670 = pneg %p3669
      $region62: #{tpu_custom_call.1} parent=5 // pred_check_branch
        %3672 = sbr.rel (%p3670) target = $region64
      $region63: #{tpu_custom_call.1} parent=5 // pred_region
        %s3673 = ssub.s32 %s18, 2
        // Predicated region
        $region65: #{tpu_custom_call.1} parent=63 // pred_check
          %p3674 = pneg %p220
        $region66: #{tpu_custom_call.1} parent=63 // pred_check_branch
          %3676 = sbr.rel (%p3674) target = $region68
        $region67: #{tpu_custom_call.1} parent=63 // pred_region
          %s3677 = sand.u32 %s205, 1
          %s3678 = scalar_lea.sflag [#allocation4], %s3677
          %s3679 = sand.u32 %s205, 1
          %s3680 = smul.addr %s3679, 32
          %s3681 = scalar_lea.vmem [#allocation5], %s3680
          %3682 = dma.done %s3678, 512
        $region68: #{tpu_custom_call.1} parent=63 // pred_fallthru
          _
      $region64: #{tpu_custom_call.1} parent=5 // pred_fallthru
        _
    $region6: #{tpu_custom_call.1} parent=1 // loop_footer
      %s22 = sadd.s32 1, %s18
    $region7: #{tpu_custom_call.1} parent=1 // loop_footer_branch
      %17 = sbr.rel target = $region3
    $region8: #{tpu_custom_call.1} parent=1 // loop_exit
      _
    %3683 = vsyncpa [#allocation3], 1
    %s3684 = scalar_lea.sflag [#allocation3], 1
    %3685 = vsyncpa %s3684, 1
    %3686 = vsyncpa [#allocation4], 1
    %s3687 = scalar_lea.sflag [#allocation4], 1
    %3688 = vsyncpa %s3687, 1

</llo_original>
